<compile_context>
chip_gen: v5e
topology: v5e:2x2
jax: 0.10.0
libtpu: 0.0.40
codegen_flags: <defaults>
</compile_context>

<pallas_src>
import functools

import jax
import jax.numpy as jnp
from jax import lax
from jax.experimental import pallas as pl
from jax.experimental.pallas import tpu as pltpu


# --------------------------------------------------------------------------- kernels
def _im2col_dot(src_ref, slab_ref, w_ref, *, P):
    """One 'same' 3x3 conv as a single MXU matmul.

    src_ref : (R_in, C)     zero-padded image, rows flattened as (H+3)*(W+2)
    slab_ref: (R_out, 9*C)  bf16 scratch; column block t holds the row-shifted view
                            of tap t = kh*3+kw (uniform flat shift kh*P + kw)
    w_ref   : (9*C, N)      bf16 weights, row-ordered to match the slab
    returns : (R_out, N) f32
    """
    R_out = slab_ref.shape[0]
    C = src_ref.shape[1]
    for t in range(9):
        d = (t // 3) * P + (t % 3)
        slab_ref[:, pl.ds(t * C, C)] = src_ref[pl.ds(d, R_out), :].astype(jnp.bfloat16)
    return jnp.dot(slab_ref[...], w_ref[...], preferred_element_type=jnp.float32)


def _conv1_kernel(x_ref, imask_ref, s1_ref, b1_ref, w_ref, s2_ref, b2_ref, omask_ref,
                  h_ref, sc_ref, xbuf_ref, slab_ref, *, P, planes, fuse_sc):
    """conv1 for one batch image: fused relu(bn1(x)) prologue, 3x3 conv,
    relu(bn2(.)) epilogue, fused 1x1 shortcut; the conv output is emitted directly
    in conv2's zero-padded flat layout."""
    R_out = sc_ref.shape[0]
    D0 = P + 1                 # flat offset of real pixel (0,0) in the padded layout

    # fused relu(bn1(x)); re-zero the halo so the conv's zero padding is preserved
    xbuf_ref[...] = (jnp.maximum(x_ref[...] * s1_ref[...] + b1_ref[...], 0.0)
                     * imask_ref[...])

    # one big-K matmul; the 1x1 shortcut rides along as extra output columns
    big = _im2col_dot(xbuf_ref, slab_ref, w_ref, P=P)

    conv = (jnp.maximum(big[:, :planes] * s2_ref[...] + b2_ref[...], 0.0)
            * omask_ref[...])

    # write conv1 straight into conv2's zero-padded flat layout (shift by D0);
    # the zeroed junk columns land exactly on the left/right padding positions.
    h_ref[pl.ds(0, D0), :] = jnp.zeros((D0, planes), h_ref.dtype)
    h_ref[pl.ds(D0, R_out), :] = conv
    tail = h_ref.shape[0] - D0 - R_out
    h_ref[pl.ds(D0 + R_out, tail), :] = jnp.zeros((tail, planes), h_ref.dtype)

    if fuse_sc:
        sc_ref[...] = big[:, planes:]
    else:
        # identity shortcut: raw x at valid-pixel alignment (junk cols are padding = 0)
        sc_ref[...] = x_ref[pl.ds(D0, R_out), :]


def _conv2_kernel(x_ref, w_ref, pmask_ref, o_ref, pool_ref, slab_ref, *, P):
    """conv2 for one batch image (input already pre-activated and zero-padded by
    conv1's epilogue), plus the masked global-average pool for the SE branch."""
    acc = _im2col_dot(x_ref, slab_ref, w_ref, P=P)
    o_ref[...] = acc
    pool_ref[...] = jnp.sum(acc * pmask_ref[...], axis=0, keepdims=True)


def _se_residual_kernel(pool_ref, w1_ref, b1_ref, w2_ref, b2_ref, out_ref, sc_ref,
                        r_ref):
    """Fused SE gate (fc1 -> relu -> fc2 -> sigmoid) + out*gate + shortcut."""
    # broadcast the pooled row to 8 sublanes so the tiny FCs run as aligned matmuls
    g = jnp.broadcast_to(pool_ref[...], (8, pool_ref.shape[1])).astype(jnp.bfloat16)
    h = jnp.dot(g, w1_ref[...], preferred_element_type=jnp.float32) + b1_ref[...]
    h = jnp.maximum(h, 0.0).astype(jnp.bfloat16)
    z = jnp.dot(h, w2_ref[...], preferred_element_type=jnp.float32) + b2_ref[...]
    gate = 1.0 / (1.0 + jnp.exp(-z[0:1, :]))
    r_ref[...] = out_ref[...] * gate + sc_ref[...]


# --------------------------------------------------------------------------- wrappers
def _conv1_shortcut(xpad, imask, s1, b1, w1, s2, b2, omask, *, P, R_out, planes,
                    fuse_sc):
    B, R_in, Cin = xpad.shape
    return pl.pallas_call(
        functools.partial(_conv1_kernel, P=P, planes=planes, fuse_sc=fuse_sc),
        grid=(B,),
        in_specs=[
            pl.BlockSpec((None, R_in, Cin), lambda b: (b, 0, 0)),
            pl.BlockSpec((R_in, 1), lambda b: (0, 0)),
            pl.BlockSpec((1, Cin), lambda b: (0, 0)),
            pl.BlockSpec((1, Cin), lambda b: (0, 0)),
            pl.BlockSpec(w1.shape, lambda b: (0, 0)),
            pl.BlockSpec((1, planes), lambda b: (0, 0)),
            pl.BlockSpec((1, planes), lambda b: (0, 0)),
            pl.BlockSpec((R_out, 1), lambda b: (0, 0)),
        ],
        out_specs=(
            pl.BlockSpec((None, R_in, planes), lambda b: (b, 0, 0)),   # conv2's input
            pl.BlockSpec((None, R_out, planes), lambda b: (b, 0, 0)),  # shortcut
        ),
        out_shape=(
            jax.ShapeDtypeStruct((B, R_in, planes), jnp.float32),
            jax.ShapeDtypeStruct((B, R_out, planes), jnp.float32),
        ),
        scratch_shapes=[pltpu.VMEM((R_in, Cin), jnp.float32),
                        pltpu.VMEM((R_out, 9 * Cin), jnp.bfloat16)],
        compiler_params=pltpu.CompilerParams(dimension_semantics=("parallel",)),
    )(xpad, imask, s1, b1, w1, s2, b2, omask)


def _conv2_pool(h1pad, w2, pmask, *, P, R_out, planes):
    B, R_in, _ = h1pad.shape
    return pl.pallas_call(
        functools.partial(_conv2_kernel, P=P),
        grid=(B,),
        in_specs=[
            pl.BlockSpec((None, R_in, planes), lambda b: (b, 0, 0)),
            pl.BlockSpec((9 * planes, planes), lambda b: (0, 0)),
            pl.BlockSpec((R_out, 1), lambda b: (0, 0)),
        ],
        out_specs=(
            pl.BlockSpec((None, R_out, planes), lambda b: (b, 0, 0)),
            pl.BlockSpec((None, 1, planes), lambda b: (b, 0, 0)),
        ),
        out_shape=(
            jax.ShapeDtypeStruct((B, R_out, planes), jnp.float32),
            jax.ShapeDtypeStruct((B, 1, planes), jnp.float32),
        ),
        scratch_shapes=[pltpu.VMEM((R_out, 9 * planes), jnp.bfloat16)],
        compiler_params=pltpu.CompilerParams(dimension_semantics=("parallel",)),
    )(h1pad, w2, pmask)


def _se_gate_residual(pooled, wfc1, bfc1, wfc2, bfc2, out2, sc):
    B, R_out, planes = out2.shape
    hidden = wfc1.shape[1]
    return pl.pallas_call(
        _se_residual_kernel,
        grid=(B,),
        in_specs=[
            pl.BlockSpec((None, 1, planes), lambda b: (b, 0, 0)),
            pl.BlockSpec((planes, hidden), lambda b: (0, 0)),
            pl.BlockSpec((1, hidden), lambda b: (0, 0)),
            pl.BlockSpec((hidden, planes), lambda b: (0, 0)),
            pl.BlockSpec((1, planes), lambda b: (0, 0)),
            pl.BlockSpec((None, R_out, planes), lambda b: (b, 0, 0)),
            pl.BlockSpec((None, R_out, planes), lambda b: (b, 0, 0)),
        ],
        out_specs=pl.BlockSpec((None, R_out, planes), lambda b: (b, 0, 0)),
        out_shape=jax.ShapeDtypeStruct((B, R_out, planes), jnp.float32),
        compiler_params=pltpu.CompilerParams(dimension_semantics=("parallel",)),
    )(pooled, wfc1, bfc1, wfc2, bfc2, out2, sc)


# --------------------------------------------------------------------------- forward
@functools.partial(jax.jit, static_argnames=("stride", "has_shortcut"))
def preact_block_forward(params, x, *, stride, has_shortcut):
    B, H, W, Cin = x.shape
    planes = params["w2"].shape[-1]
    P = W + 2
    R_in = (H + 3) * P
    R_out = H * P

    xpad = jnp.pad(x, ((0, 0), (1, 2), (1, 1), (0, 0))).reshape(B, R_in, Cin)
    ones_hw = jnp.ones((H, W), jnp.float32)
    imask = jnp.pad(ones_hw, ((1, 2), (1, 1))).reshape(R_in, 1)
    omask = jnp.pad(ones_hw, ((0, 0), (0, 2))).reshape(R_out, 1)

    # conv1 (+ fused bn1/relu prologue, bn2/relu epilogue, fused 1x1 shortcut)
    h1pad, sc = _conv1_shortcut(
        xpad, imask, params["bn1_s"], params["bn1_b"], params["w1"],
        params["bn2_s"], params["bn2_b"], omask,
        P=P, R_out=R_out, planes=planes, fuse_sc=has_shortcut)

    if stride > 1:
        # TODO(synk): strided conv falls back to stride-1 conv + XLA subsample
        # (exact but wasteful; unused at the demo config where stride == 1).
        h1 = h1pad.reshape(B, H + 3, P, planes)[:, 1:1 + H, 1:1 + W, :]
        h1 = h1[:, ::stride, ::stride, :]
        scm = sc.reshape(B, H, P, planes)[:, :, :W, :][:, ::stride, ::stride, :]
        H, W = h1.shape[1], h1.shape[2]
        P = W + 2
        R_in = (H + 3) * P
        R_out = H * P
        h1pad = jnp.pad(h1, ((0, 0), (1, 2), (1, 1), (0, 0))).reshape(B, R_in, planes)
        sc = jnp.pad(scm, ((0, 0), (0, 0), (0, 2), (0, 0))).reshape(B, R_out, planes)
        ones_hw = jnp.ones((H, W), jnp.float32)
        omask = jnp.pad(ones_hw, ((0, 0), (0, 2))).reshape(R_out, 1)

    pmask = omask / float(H * W)

    # conv2 + fused masked global-average pool for the SE branch
    out2, pooled = _conv2_pool(h1pad, params["w2"], pmask,
                               P=P, R_out=R_out, planes=planes)

    # fused SE gate + out*gate + shortcut
    res = _se_gate_residual(pooled, params["wfc1"], params["bfc1"],
                            params["wfc2"], params["bfc2"], out2, sc)
    # one slice at the very end drops the 2 junk columns per row
    return res.reshape(B, H, P, planes)[:, :, :W, :]


# --------------------------------------------------------------------------- params
def make_raw_params(key, in_planes, planes, stride):
    ks = list(jax.random.split(key, 10))

    def conv_w(k, cout, cin, ksz):
        fan = cin * ksz * ksz
        return (2.0 / fan) ** 0.5 * jax.random.normal(k, (cout, cin, ksz, ksz),
                                                      jnp.float32)

    def bn_p(k, c):
        k1, k2, k3, k4 = jax.random.split(k, 4)
        return {"g": 1.0 + 0.1 * jax.random.normal(k1, (c,), jnp.float32),
                "b": 0.1 * jax.random.normal(k2, (c,), jnp.float32),
                "rm": 0.1 * jax.random.normal(k3, (c,), jnp.float32),
                "rv": 1.0 + 0.2 * jax.random.uniform(k4, (c,), jnp.float32)}

    raw = {"bn1": bn_p(ks[0], in_planes),
           "conv1": conv_w(ks[1], planes, in_planes, 3),
           "bn2": bn_p(ks[2], planes),
           "conv2": conv_w(ks[3], planes, planes, 3),
           "fc1_w": conv_w(ks[4], planes // 16, planes, 1),
           "fc1_b": 0.05 * jax.random.normal(ks[5], (planes // 16,), jnp.float32),
           "fc2_w": conv_w(ks[6], planes, planes // 16, 1),
           "fc2_b": 0.05 * jax.random.normal(ks[7], (planes,), jnp.float32)}
    if stride != 1 or in_planes != planes:
        raw["shortcut"] = conv_w(ks[8], planes, in_planes, 1)
    return raw


def prepare_params(raw, eps=1e-5):
    """Fold eval-mode BN into per-channel scale/shift, reorder conv weights into
    (9*Cin, Cout) im2col-matched slabs (with the 1x1 shortcut appended as extra
    output columns living in the centre-tap rows) and pre-cast to bf16 (once)."""
    def bn_fold(p):
        s = p["g"] / jnp.sqrt(p["rv"] + eps)
        return s.reshape(1, -1), (p["b"] - p["rm"] * s).reshape(1, -1)

    def conv9(w):   # torch (O, I, 3, 3) -> (9*I, O), row index = (kh*3+kw)*I + i
        o, i = w.shape[0], w.shape[1]
        return jnp.transpose(w, (2, 3, 1, 0)).reshape(9 * i, o)

    s1, t1 = bn_fold(raw["bn1"])
    s2, t2 = bn_fold(raw["bn2"])
    planes, cin = raw["conv1"].shape[0], raw["conv1"].shape[1]

    w1 = conv9(raw["conv1"])                               # (9*Cin, planes)
    if "shortcut" in raw:
        wsc = raw["shortcut"][:, :, 0, 0].T                # (Cin, planes)
        sc_block = jnp.zeros((9 * cin, planes), jnp.float32)
        sc_block = sc_block.at[4 * cin:5 * cin, :].set(wsc)   # centre tap = relu(bn1(x))
        w1 = jnp.concatenate([w1, sc_block], axis=1)       # (9*Cin, 2*planes)

    return {"bn1_s": s1, "bn1_b": t1, "bn2_s": s2, "bn2_b": t2,
            "w1": w1.astype(jnp.bfloat16),
            "w2": conv9(raw["conv2"]).astype(jnp.bfloat16),
            "wfc1": raw["fc1_w"][:, :, 0, 0].T.astype(jnp.bfloat16),
            "bfc1": raw["fc1_b"].reshape(1, -1),
            "wfc2": raw["fc2_w"][:, :, 0, 0].T.astype(jnp.bfloat16),
            "bfc2": raw["fc2_b"].reshape(1, -1)}


# --------------------------------------------------------------------------- reference
def reference_forward(raw, x, *, stride, has_shortcut, eps=1e-5):
    def bn(v, p):
        return (v - p["rm"]) / jnp.sqrt(p["rv"] + eps) * p["g"] + p["b"]

    def conv(v, w, s, pad):
        return lax.conv_general_dilated(
            v, jnp.transpose(w, (2, 3, 1, 0)), window_strides=(s, s),
            padding=((pad, pad), (pad, pad)),
            dimension_numbers=("NHWC", "HWIO", "NHWC"),
            precision=lax.Precision.HIGHEST)

    a = jax.nn.relu(bn(x, raw["bn1"]))
    sc = conv(a, raw["shortcut"], stride, 0) if has_shortcut else x
    out = conv(a, raw["conv1"], stride, 1)
    out = conv(jax.nn.relu(bn(out, raw["bn2"])), raw["conv2"], 1, 1)
    w = jnp.mean(out, axis=(1, 2))                 # avg_pool2d(out, H) with H == W
    w = jax.nn.relu(w @ raw["fc1_w"][:, :, 0, 0].T + raw["fc1_b"])
    w = jax.nn.sigmoid(w @ raw["fc2_w"][:, :, 0, 0].T + raw["fc2_b"])
    return out * w[:, None, None, :] + sc


# --------------------------------------------------------------------------- main
if __name__ == "__main__":
    IN_PLANES, PLANES, STRIDE = 32, 64, 1          # planes // 16 = 4 (SE bottleneck)
    B, H, W = 2, 16, 16
    has_shortcut = (STRIDE != 1) or (IN_PLANES != PLANES)

    root = jax.random.PRNGKey(0)
    kx, kp = jax.random.split(root)
    # NHWC input; the PyTorch module would see this as NCHW (2, 32, 16, 16).
    x = jax.random.normal(kx, (B, H, W, IN_PLANES), jnp.float32)

    raw = make_raw_params(kp, IN_PLANES, PLANES, STRIDE)
    params = prepare_params(raw)

    out = jax.block_until_ready(
        preact_block_forward(params, x, stride=STRIDE, has_shortcut=has_shortcut))
    ref = jax.block_until_ready(
        reference_forward(raw, x, stride=STRIDE, has_shortcut=has_shortcut))

    assert out.shape == (B, H, W, PLANES), out.shape
    assert bool(jnp.all(jnp.isfinite(out)))
    # bf16 MXU operands with f32 accumulation -> loose tolerance vs the f32 reference.
    assert bool(jnp.allclose(out, ref, rtol=5e-2, atol=2e-1)), \
        float(jnp.max(jnp.abs(out - ref)))
    print("KERNEL_OK")
</pallas_src>

<mosaic_0001>
module attributes {stable_mosaic.version = 11 : i64} {
  func.func @_conv1_kernel(%arg0: i32, %arg1: memref<1x342x32xf32, #tpu.memory_space<vmem>>, %arg2: memref<342x1xf32, #tpu.memory_space<vmem>>, %arg3: memref<1x32xf32, #tpu.memory_space<vmem>>, %arg4: memref<1x32xf32, #tpu.memory_space<vmem>>, %arg5: memref<288x128xbf16, #tpu.memory_space<vmem>>, %arg6: memref<1x64xf32, #tpu.memory_space<vmem>>, %arg7: memref<1x64xf32, #tpu.memory_space<vmem>>, %arg8: memref<288x1xf32, #tpu.memory_space<vmem>>, %arg9: memref<1x342x64xf32, #tpu.memory_space<vmem>>, %arg10: memref<1x288x64xf32, #tpu.memory_space<vmem>>, %arg11: memref<342x32xf32, #tpu.memory_space<vmem>>, %arg12: memref<288x288xbf16, #tpu.memory_space<vmem>>) attributes {dimension_semantics = [#tpu.dimension_semantics<parallel>], iteration_bounds = array<i64: 2>, scalar_prefetch = 0 : i64, scratch_operands = 2 : i64, tpu.core_type = #tpu.core_type<tc>, window_params = [{transform_indices = @transform_0, window_bounds = array<i64: 1, 342, 32>}, {pipeline_mode = #tpu.pipeline_mode<synchronous>, transform_indices = @transform_1, window_bounds = array<i64: 342, 1>}, {pipeline_mode = #tpu.pipeline_mode<synchronous>, transform_indices = @transform_2, window_bounds = array<i64: 1, 32>}, {pipeline_mode = #tpu.pipeline_mode<synchronous>, transform_indices = @transform_3, window_bounds = array<i64: 1, 32>}, {pipeline_mode = #tpu.pipeline_mode<synchronous>, transform_indices = @transform_4, window_bounds = array<i64: 288, 128>}, {pipeline_mode = #tpu.pipeline_mode<synchronous>, transform_indices = @transform_5, window_bounds = array<i64: 1, 64>}, {pipeline_mode = #tpu.pipeline_mode<synchronous>, transform_indices = @transform_6, window_bounds = array<i64: 1, 64>}, {pipeline_mode = #tpu.pipeline_mode<synchronous>, transform_indices = @transform_7, window_bounds = array<i64: 288, 1>}, {transform_indices = @transform_8, window_bounds = array<i64: 1, 342, 64>}, {transform_indices = @transform_9, window_bounds = array<i64: 1, 288, 64>}]} {
    %c0 = arith.constant 0 : index
    %c0_0 = arith.constant 0 : index
    %c0_1 = arith.constant 0 : index
    %0 = vector.load %arg1[%c0, %c0_0, %c0_1] : memref<1x342x32xf32, #tpu.memory_space<vmem>>, vector<1x342x32xf32>
    %1 = vector.shape_cast %0 : vector<1x342x32xf32> to vector<342x32xf32>
    %c0_2 = arith.constant 0 : index
    %c0_3 = arith.constant 0 : index
    %2 = vector.load %arg3[%c0_2, %c0_3] : memref<1x32xf32, #tpu.memory_space<vmem>>, vector<1x32xf32>
    %3 = vector.broadcast %2 : vector<1x32xf32> to vector<342x32xf32>
    %4 = arith.mulf %1, %3 : vector<342x32xf32>
    %c0_4 = arith.constant 0 : index
    %c0_5 = arith.constant 0 : index
    %5 = vector.load %arg4[%c0_4, %c0_5] : memref<1x32xf32, #tpu.memory_space<vmem>>, vector<1x32xf32>
    %6 = vector.broadcast %5 : vector<1x32xf32> to vector<342x32xf32>
    %7 = arith.addf %4, %6 : vector<342x32xf32>
    %cst = arith.constant 0.000000e+00 : f32
    %8 = vector.broadcast %cst : f32 to vector<342x32xf32>
    %9 = arith.maximumf %7, %8 : vector<342x32xf32>
    %c0_6 = arith.constant 0 : index
    %c0_7 = arith.constant 0 : index
    %10 = vector.load %arg2[%c0_6, %c0_7] : memref<342x1xf32, #tpu.memory_space<vmem>>, vector<342x1xf32>
    %11 = vector.broadcast %10 : vector<342x1xf32> to vector<342x32xf32>
    %12 = arith.mulf %9, %11 : vector<342x32xf32>
    %c0_8 = arith.constant 0 : index
    %c0_9 = arith.constant 0 : index
    %13 = vector.load %arg11[%c0_8, %c0_9] : memref<342x32xf32, #tpu.memory_space<vmem>>, vector<342x32xf32>
    tpu.vector_store %arg11[%c0_8, %c0_9], %12 {strides = array<i32>} : memref<342x32xf32, #tpu.memory_space<vmem>>, vector<342x32xf32>,
    %c0_10 = arith.constant 0 : index
    %c0_11 = arith.constant 0 : index
    %14 = vector.load %arg11[%c0_10, %c0_11] : memref<342x32xf32, #tpu.memory_space<vmem>>, vector<288x32xf32>
    %15 = arith.truncf %14 : vector<288x32xf32> to vector<288x32xbf16>
    %c0_12 = arith.constant 0 : index
    %c0_13 = arith.constant 0 : index
    %16 = vector.load %arg12[%c0_12, %c0_13] : memref<288x288xbf16, #tpu.memory_space<vmem>>, vector<288x32xbf16>
    tpu.vector_store %arg12[%c0_12, %c0_13], %15 {strides = array<i32>} : memref<288x288xbf16, #tpu.memory_space<vmem>>, vector<288x32xbf16>,
    %c1 = arith.constant 1 : index
    %c0_14 = arith.constant 0 : index
    %17 = vector.load %arg11[%c1, %c0_14] : memref<342x32xf32, #tpu.memory_space<vmem>>, vector<288x32xf32>
    %18 = arith.truncf %17 : vector<288x32xf32> to vector<288x32xbf16>
    %c0_15 = arith.constant 0 : index
    %c32 = arith.constant 32 : index
    %19 = vector.load %arg12[%c0_15, %c32] : memref<288x288xbf16, #tpu.memory_space<vmem>>, vector<288x32xbf16>
    tpu.vector_store %arg12[%c0_15, %c32], %18 {strides = array<i32>} : memref<288x288xbf16, #tpu.memory_space<vmem>>, vector<288x32xbf16>,
    %c2 = arith.constant 2 : index
    %c0_16 = arith.constant 0 : index
    %20 = vector.load %arg11[%c2, %c0_16] : memref<342x32xf32, #tpu.memory_space<vmem>>, vector<288x32xf32>
    %21 = arith.truncf %20 : vector<288x32xf32> to vector<288x32xbf16>
    %c0_17 = arith.constant 0 : index
    %c64 = arith.constant 64 : index
    %22 = vector.load %arg12[%c0_17, %c64] : memref<288x288xbf16, #tpu.memory_space<vmem>>, vector<288x32xbf16>
    tpu.vector_store %arg12[%c0_17, %c64], %21 {strides = array<i32>} : memref<288x288xbf16, #tpu.memory_space<vmem>>, vector<288x32xbf16>,
    %c18 = arith.constant 18 : index
    %c0_18 = arith.constant 0 : index
    %23 = vector.load %arg11[%c18, %c0_18] : memref<342x32xf32, #tpu.memory_space<vmem>>, vector<288x32xf32>
    %24 = arith.truncf %23 : vector<288x32xf32> to vector<288x32xbf16>
    %c0_19 = arith.constant 0 : index
    %c96 = arith.constant 96 : index
    %25 = vector.load %arg12[%c0_19, %c96] : memref<288x288xbf16, #tpu.memory_space<vmem>>, vector<288x32xbf16>
    tpu.vector_store %arg12[%c0_19, %c96], %24 {strides = array<i32>} : memref<288x288xbf16, #tpu.memory_space<vmem>>, vector<288x32xbf16>,
    %c19 = arith.constant 19 : index
    %c0_20 = arith.constant 0 : index
    %26 = vector.load %arg11[%c19, %c0_20] : memref<342x32xf32, #tpu.memory_space<vmem>>, vector<288x32xf32>
    %27 = arith.truncf %26 : vector<288x32xf32> to vector<288x32xbf16>
    %c0_21 = arith.constant 0 : index
    %c128 = arith.constant 128 : index
    %28 = vector.load %arg12[%c0_21, %c128] : memref<288x288xbf16, #tpu.memory_space<vmem>>, vector<288x32xbf16>
    tpu.vector_store %arg12[%c0_21, %c128], %27 {strides = array<i32>} : memref<288x288xbf16, #tpu.memory_space<vmem>>, vector<288x32xbf16>,
    %c20 = arith.constant 20 : index
    %c0_22 = arith.constant 0 : index
    %29 = vector.load %arg11[%c20, %c0_22] : memref<342x32xf32, #tpu.memory_space<vmem>>, vector<288x32xf32>
    %30 = arith.truncf %29 : vector<288x32xf32> to vector<288x32xbf16>
    %c0_23 = arith.constant 0 : index
    %c160 = arith.constant 160 : index
    %31 = vector.load %arg12[%c0_23, %c160] : memref<288x288xbf16, #tpu.memory_space<vmem>>, vector<288x32xbf16>
    tpu.vector_store %arg12[%c0_23, %c160], %30 {strides = array<i32>} : memref<288x288xbf16, #tpu.memory_space<vmem>>, vector<288x32xbf16>,
    %c36 = arith.constant 36 : index
    %c0_24 = arith.constant 0 : index
    %32 = vector.load %arg11[%c36, %c0_24] : memref<342x32xf32, #tpu.memory_space<vmem>>, vector<288x32xf32>
    %33 = arith.truncf %32 : vector<288x32xf32> to vector<288x32xbf16>
    %c0_25 = arith.constant 0 : index
    %c192 = arith.constant 192 : index
    %34 = vector.load %arg12[%c0_25, %c192] : memref<288x288xbf16, #tpu.memory_space<vmem>>, vector<288x32xbf16>
    tpu.vector_store %arg12[%c0_25, %c192], %33 {strides = array<i32>} : memref<288x288xbf16, #tpu.memory_space<vmem>>, vector<288x32xbf16>,
    %c37 = arith.constant 37 : index
    %c0_26 = arith.constant 0 : index
    %35 = vector.load %arg11[%c37, %c0_26] : memref<342x32xf32, #tpu.memory_space<vmem>>, vector<288x32xf32>
    %36 = arith.truncf %35 : vector<288x32xf32> to vector<288x32xbf16>
    %c0_27 = arith.constant 0 : index
    %c224 = arith.constant 224 : index
    %37 = vector.load %arg12[%c0_27, %c224] : memref<288x288xbf16, #tpu.memory_space<vmem>>, vector<288x32xbf16>
    tpu.vector_store %arg12[%c0_27, %c224], %36 {strides = array<i32>} : memref<288x288xbf16, #tpu.memory_space<vmem>>, vector<288x32xbf16>,
    %c38 = arith.constant 38 : index
    %c0_28 = arith.constant 0 : index
    %38 = vector.load %arg11[%c38, %c0_28] : memref<342x32xf32, #tpu.memory_space<vmem>>, vector<288x32xf32>
    %39 = arith.truncf %38 : vector<288x32xf32> to vector<288x32xbf16>
    %c0_29 = arith.constant 0 : index
    %c256 = arith.constant 256 : index
    %40 = vector.load %arg12[%c0_29, %c256] : memref<288x288xbf16, #tpu.memory_space<vmem>>, vector<288x32xbf16>
    tpu.vector_store %arg12[%c0_29, %c256], %39 {strides = array<i32>} : memref<288x288xbf16, #tpu.memory_space<vmem>>, vector<288x32xbf16>,
    %c0_30 = arith.constant 0 : index
    %c0_31 = arith.constant 0 : index
    %41 = vector.load %arg12[%c0_30, %c0_31] : memref<288x288xbf16, #tpu.memory_space<vmem>>, vector<288x288xbf16>
    %c0_32 = arith.constant 0 : index
    %c0_33 = arith.constant 0 : index
    %42 = vector.load %arg5[%c0_32, %c0_33] : memref<288x128xbf16, #tpu.memory_space<vmem>>, vector<288x128xbf16>
    %cst_34 = arith.constant dense<0.000000e+00> : vector<288x128xf32>
    %43 = tpu.matmul %41, %42, %cst_34 {dimension_numbers = #tpu.dot_dimension_numbers<[1], [0], [0], [1], [0, 0, 1, 1], [], []>} : vector<288x288xbf16>, vector<288x128xbf16>, vector<288x128xf32> -> vector<288x128xf32>
    %44 = vector.extract_strided_slice %43 {offsets = [0, 0], sizes = [288, 64], strides = [1, 1]} : vector<288x128xf32> to vector<288x64xf32>
    %c0_35 = arith.constant 0 : index
    %c0_36 = arith.constant 0 : index
    %45 = vector.load %arg6[%c0_35, %c0_36] : memref<1x64xf32, #tpu.memory_space<vmem>>, vector<1x64xf32>
    %46 = vector.broadcast %45 : vector<1x64xf32> to vector<288x64xf32>
    %47 = arith.mulf %44, %46 : vector<288x64xf32>
    %c0_37 = arith.constant 0 : index
    %c0_38 = arith.constant 0 : index
    %48 = vector.load %arg7[%c0_37, %c0_38] : memref<1x64xf32, #tpu.memory_space<vmem>>, vector<1x64xf32>
    %49 = vector.broadcast %48 : vector<1x64xf32> to vector<288x64xf32>
    %50 = arith.addf %47, %49 : vector<288x64xf32>
    %cst_39 = arith.constant 0.000000e+00 : f32
    %51 = vector.broadcast %cst_39 : f32 to vector<288x64xf32>
    %52 = arith.maximumf %50, %51 : vector<288x64xf32>
    %c0_40 = arith.constant 0 : index
    %c0_41 = arith.constant 0 : index
    %53 = vector.load %arg8[%c0_40, %c0_41] : memref<288x1xf32, #tpu.memory_space<vmem>>, vector<288x1xf32>
    %54 = vector.broadcast %53 : vector<288x1xf32> to vector<288x64xf32>
    %55 = arith.mulf %52, %54 : vector<288x64xf32>
    %cst_42 = arith.constant 0.000000e+00 : f32
    %56 = vector.broadcast %cst_42 : f32 to vector<19x64xf32>
    %c0_43 = arith.constant 0 : index
    %c0_44 = arith.constant 0 : index
    %c0_45 = arith.constant 0 : index
    %57 = vector.load %arg9[%c0_43, %c0_44, %c0_45] : memref<1x342x64xf32, #tpu.memory_space<vmem>>, vector<1x19x64xf32>
    %58 = vector.shape_cast %57 : vector<1x19x64xf32> to vector<19x64xf32>
    %59 = vector.shape_cast %56 : vector<19x64xf32> to vector<1x19x64xf32>
    tpu.vector_store %arg9[%c0_43, %c0_44, %c0_45], %59 {strides = array<i32>} : memref<1x342x64xf32, #tpu.memory_space<vmem>>, vector<1x19x64xf32>,
    %c0_46 = arith.constant 0 : index
    %c19_47 = arith.constant 19 : index
    %c0_48 = arith.constant 0 : index
    %60 = vector.load %arg9[%c0_46, %c19_47, %c0_48] : memref<1x342x64xf32, #tpu.memory_space<vmem>>, vector<1x288x64xf32>
    %61 = vector.shape_cast %60 : vector<1x288x64xf32> to vector<288x64xf32>
    %62 = vector.shape_cast %55 : vector<288x64xf32> to vector<1x288x64xf32>
    tpu.vector_store %arg9[%c0_46, %c19_47, %c0_48], %62 {strides = array<i32>} : memref<1x342x64xf32, #tpu.memory_space<vmem>>, vector<1x288x64xf32>,
    %cst_49 = arith.constant 0.000000e+00 : f32
    %63 = vector.broadcast %cst_49 : f32 to vector<35x64xf32>
    %c0_50 = arith.constant 0 : index
    %c307 = arith.constant 307 : index
    %c0_51 = arith.constant 0 : index
    %64 = vector.load %arg9[%c0_50, %c307, %c0_51] : memref<1x342x64xf32, #tpu.memory_space<vmem>>, vector<1x35x64xf32>
    %65 = vector.shape_cast %64 : vector<1x35x64xf32> to vector<35x64xf32>
    %66 = vector.shape_cast %63 : vector<35x64xf32> to vector<1x35x64xf32>
    tpu.vector_store %arg9[%c0_50, %c307, %c0_51], %66 {strides = array<i32>} : memref<1x342x64xf32, #tpu.memory_space<vmem>>, vector<1x35x64xf32>,
    %67 = vector.extract_strided_slice %43 {offsets = [0, 64], sizes = [288, 64], strides = [1, 1]} : vector<288x128xf32> to vector<288x64xf32>
    %c0_52 = arith.constant 0 : index
    %c0_53 = arith.constant 0 : index
    %c0_54 = arith.constant 0 : index
    %68 = vector.load %arg10[%c0_52, %c0_53, %c0_54] : memref<1x288x64xf32, #tpu.memory_space<vmem>>, vector<1x288x64xf32>
    %69 = vector.shape_cast %68 : vector<1x288x64xf32> to vector<288x64xf32>
    %70 = vector.shape_cast %67 : vector<288x64xf32> to vector<1x288x64xf32>
    tpu.vector_store %arg10[%c0_52, %c0_53, %c0_54], %70 {strides = array<i32>} : memref<1x288x64xf32, #tpu.memory_space<vmem>>, vector<1x288x64xf32>,
    return
  }
  func.func @transform_0(%arg0: i32) -> (i32, i32, i32) {
    %c0_i32 = arith.constant 0 : i32
    %c0_i32_0 = arith.constant 0 : i32
    %c0_i32_1 = arith.constant 0 : i32
    return %arg0, %c0_i32, %c0_i32_0 : i32, i32, i32
  }
  func.func @transform_1(%arg0: i32) -> (i32, i32) {
    %c0_i32 = arith.constant 0 : i32
    %c0_i32_0 = arith.constant 0 : i32
    %c0_i32_1 = arith.constant 0 : i32
    return %c0_i32, %c0_i32_0 : i32, i32
  }
  func.func @transform_2(%arg0: i32) -> (i32, i32) {
    %c0_i32 = arith.constant 0 : i32
    %c0_i32_0 = arith.constant 0 : i32
    %c0_i32_1 = arith.constant 0 : i32
    return %c0_i32, %c0_i32_0 : i32, i32
  }
  func.func @transform_3(%arg0: i32) -> (i32, i32) {
    %c0_i32 = arith.constant 0 : i32
    %c0_i32_0 = arith.constant 0 : i32
    %c0_i32_1 = arith.constant 0 : i32
    return %c0_i32, %c0_i32_0 : i32, i32
  }
  func.func @transform_4(%arg0: i32) -> (i32, i32) {
    %c0_i32 = arith.constant 0 : i32
    %c0_i32_0 = arith.constant 0 : i32
    %c0_i32_1 = arith.constant 0 : i32
    return %c0_i32, %c0_i32_0 : i32, i32
  }
  func.func @transform_5(%arg0: i32) -> (i32, i32) {
    %c0_i32 = arith.constant 0 : i32
    %c0_i32_0 = arith.constant 0 : i32
    %c0_i32_1 = arith.constant 0 : i32
    return %c0_i32, %c0_i32_0 : i32, i32
  }
  func.func @transform_6(%arg0: i32) -> (i32, i32) {
    %c0_i32 = arith.constant 0 : i32
    %c0_i32_0 = arith.constant 0 : i32
    %c0_i32_1 = arith.constant 0 : i32
    return %c0_i32, %c0_i32_0 : i32, i32
  }
  func.func @transform_7(%arg0: i32) -> (i32, i32) {
    %c0_i32 = arith.constant 0 : i32
    %c0_i32_0 = arith.constant 0 : i32
    %c0_i32_1 = arith.constant 0 : i32
    return %c0_i32, %c0_i32_0 : i32, i32
  }
  func.func @transform_8(%arg0: i32) -> (i32, i32, i32) {
    %c0_i32 = arith.constant 0 : i32
    %c0_i32_0 = arith.constant 0 : i32
    %c0_i32_1 = arith.constant 0 : i32
    return %arg0, %c0_i32, %c0_i32_0 : i32, i32, i32
  }
  func.func @transform_9(%arg0: i32) -> (i32, i32, i32) {
    %c0_i32 = arith.constant 0 : i32
    %c0_i32_0 = arith.constant 0 : i32
    %c0_i32_1 = arith.constant 0 : i32
    return %arg0, %c0_i32, %c0_i32_0 : i32, i32, i32
  }
}

module attributes {stable_mosaic.version = 11 : i64} {
  func.func @_conv2_kernel(%arg0: i32, %arg1: memref<1x342x64xf32, #tpu.memory_space<vmem>>, %arg2: memref<576x64xbf16, #tpu.memory_space<vmem>>, %arg3: memref<288x1xf32, #tpu.memory_space<vmem>>, %arg4: memref<1x288x64xf32, #tpu.memory_space<vmem>>, %arg5: memref<1x1x64xf32, #tpu.memory_space<vmem>>, %arg6: memref<288x576xbf16, #tpu.memory_space<vmem>>) attributes {dimension_semantics = [#tpu.dimension_semantics<parallel>], iteration_bounds = array<i64: 2>, scalar_prefetch = 0 : i64, scratch_operands = 1 : i64, tpu.core_type = #tpu.core_type<tc>, window_params = [{transform_indices = @transform_0, window_bounds = array<i64: 1, 342, 64>}, {pipeline_mode = #tpu.pipeline_mode<synchronous>, transform_indices = @transform_1, window_bounds = array<i64: 576, 64>}, {pipeline_mode = #tpu.pipeline_mode<synchronous>, transform_indices = @transform_2, window_bounds = array<i64: 288, 1>}, {transform_indices = @transform_3, window_bounds = array<i64: 1, 288, 64>}, {transform_indices = @transform_4, window_bounds = array<i64: 1, 1, 64>}]} {
    %c0 = arith.constant 0 : index
    %c0_0 = arith.constant 0 : index
    %c0_1 = arith.constant 0 : index
    %0 = vector.load %arg1[%c0, %c0_0, %c0_1] : memref<1x342x64xf32, #tpu.memory_space<vmem>>, vector<1x288x64xf32>
    %1 = vector.shape_cast %0 : vector<1x288x64xf32> to vector<288x64xf32>
    %2 = arith.truncf %1 : vector<288x64xf32> to vector<288x64xbf16>
    %c0_2 = arith.constant 0 : index
    %c0_3 = arith.constant 0 : index
    %3 = vector.load %arg6[%c0_2, %c0_3] : memref<288x576xbf16, #tpu.memory_space<vmem>>, vector<288x64xbf16>
    tpu.vector_store %arg6[%c0_2, %c0_3], %2 {strides = array<i32>} : memref<288x576xbf16, #tpu.memory_space<vmem>>, vector<288x64xbf16>,
    %c0_4 = arith.constant 0 : index
    %c1 = arith.constant 1 : index
    %c0_5 = arith.constant 0 : index
    %4 = vector.load %arg1[%c0_4, %c1, %c0_5] : memref<1x342x64xf32, #tpu.memory_space<vmem>>, vector<1x288x64xf32>
    %5 = vector.shape_cast %4 : vector<1x288x64xf32> to vector<288x64xf32>
    %6 = arith.truncf %5 : vector<288x64xf32> to vector<288x64xbf16>
    %c0_6 = arith.constant 0 : index
    %c64 = arith.constant 64 : index
    %7 = vector.load %arg6[%c0_6, %c64] : memref<288x576xbf16, #tpu.memory_space<vmem>>, vector<288x64xbf16>
    tpu.vector_store %arg6[%c0_6, %c64], %6 {strides = array<i32>} : memref<288x576xbf16, #tpu.memory_space<vmem>>, vector<288x64xbf16>,
    %c0_7 = arith.constant 0 : index
    %c2 = arith.constant 2 : index
    %c0_8 = arith.constant 0 : index
    %8 = vector.load %arg1[%c0_7, %c2, %c0_8] : memref<1x342x64xf32, #tpu.memory_space<vmem>>, vector<1x288x64xf32>
    %9 = vector.shape_cast %8 : vector<1x288x64xf32> to vector<288x64xf32>
    %10 = arith.truncf %9 : vector<288x64xf32> to vector<288x64xbf16>
    %c0_9 = arith.constant 0 : index
    %c128 = arith.constant 128 : index
    %11 = vector.load %arg6[%c0_9, %c128] : memref<288x576xbf16, #tpu.memory_space<vmem>>, vector<288x64xbf16>
    tpu.vector_store %arg6[%c0_9, %c128], %10 {strides = array<i32>} : memref<288x576xbf16, #tpu.memory_space<vmem>>, vector<288x64xbf16>,
    %c0_10 = arith.constant 0 : index
    %c18 = arith.constant 18 : index
    %c0_11 = arith.constant 0 : index
    %12 = vector.load %arg1[%c0_10, %c18, %c0_11] : memref<1x342x64xf32, #tpu.memory_space<vmem>>, vector<1x288x64xf32>
    %13 = vector.shape_cast %12 : vector<1x288x64xf32> to vector<288x64xf32>
    %14 = arith.truncf %13 : vector<288x64xf32> to vector<288x64xbf16>
    %c0_12 = arith.constant 0 : index
    %c192 = arith.constant 192 : index
    %15 = vector.load %arg6[%c0_12, %c192] : memref<288x576xbf16, #tpu.memory_space<vmem>>, vector<288x64xbf16>
    tpu.vector_store %arg6[%c0_12, %c192], %14 {strides = array<i32>} : memref<288x576xbf16, #tpu.memory_space<vmem>>, vector<288x64xbf16>,
    %c0_13 = arith.constant 0 : index
    %c19 = arith.constant 19 : index
    %c0_14 = arith.constant 0 : index
    %16 = vector.load %arg1[%c0_13, %c19, %c0_14] : memref<1x342x64xf32, #tpu.memory_space<vmem>>, vector<1x288x64xf32>
    %17 = vector.shape_cast %16 : vector<1x288x64xf32> to vector<288x64xf32>
    %18 = arith.truncf %17 : vector<288x64xf32> to vector<288x64xbf16>
    %c0_15 = arith.constant 0 : index
    %c256 = arith.constant 256 : index
    %19 = vector.load %arg6[%c0_15, %c256] : memref<288x576xbf16, #tpu.memory_space<vmem>>, vector<288x64xbf16>
    tpu.vector_store %arg6[%c0_15, %c256], %18 {strides = array<i32>} : memref<288x576xbf16, #tpu.memory_space<vmem>>, vector<288x64xbf16>,
    %c0_16 = arith.constant 0 : index
    %c20 = arith.constant 20 : index
    %c0_17 = arith.constant 0 : index
    %20 = vector.load %arg1[%c0_16, %c20, %c0_17] : memref<1x342x64xf32, #tpu.memory_space<vmem>>, vector<1x288x64xf32>
    %21 = vector.shape_cast %20 : vector<1x288x64xf32> to vector<288x64xf32>
    %22 = arith.truncf %21 : vector<288x64xf32> to vector<288x64xbf16>
    %c0_18 = arith.constant 0 : index
    %c320 = arith.constant 320 : index
    %23 = vector.load %arg6[%c0_18, %c320] : memref<288x576xbf16, #tpu.memory_space<vmem>>, vector<288x64xbf16>
    tpu.vector_store %arg6[%c0_18, %c320], %22 {strides = array<i32>} : memref<288x576xbf16, #tpu.memory_space<vmem>>, vector<288x64xbf16>,
    %c0_19 = arith.constant 0 : index
    %c36 = arith.constant 36 : index
    %c0_20 = arith.constant 0 : index
    %24 = vector.load %arg1[%c0_19, %c36, %c0_20] : memref<1x342x64xf32, #tpu.memory_space<vmem>>, vector<1x288x64xf32>
    %25 = vector.shape_cast %24 : vector<1x288x64xf32> to vector<288x64xf32>
    %26 = arith.truncf %25 : vector<288x64xf32> to vector<288x64xbf16>
    %c0_21 = arith.constant 0 : index
    %c384 = arith.constant 384 : index
    %27 = vector.load %arg6[%c0_21, %c384] : memref<288x576xbf16, #tpu.memory_space<vmem>>, vector<288x64xbf16>
    tpu.vector_store %arg6[%c0_21, %c384], %26 {strides = array<i32>} : memref<288x576xbf16, #tpu.memory_space<vmem>>, vector<288x64xbf16>,
    %c0_22 = arith.constant 0 : index
    %c37 = arith.constant 37 : index
    %c0_23 = arith.constant 0 : index
    %28 = vector.load %arg1[%c0_22, %c37, %c0_23] : memref<1x342x64xf32, #tpu.memory_space<vmem>>, vector<1x288x64xf32>
    %29 = vector.shape_cast %28 : vector<1x288x64xf32> to vector<288x64xf32>
    %30 = arith.truncf %29 : vector<288x64xf32> to vector<288x64xbf16>
    %c0_24 = arith.constant 0 : index
    %c448 = arith.constant 448 : index
    %31 = vector.load %arg6[%c0_24, %c448] : memref<288x576xbf16, #tpu.memory_space<vmem>>, vector<288x64xbf16>
    tpu.vector_store %arg6[%c0_24, %c448], %30 {strides = array<i32>} : memref<288x576xbf16, #tpu.memory_space<vmem>>, vector<288x64xbf16>,
    %c0_25 = arith.constant 0 : index
    %c38 = arith.constant 38 : index
    %c0_26 = arith.constant 0 : index
    %32 = vector.load %arg1[%c0_25, %c38, %c0_26] : memref<1x342x64xf32, #tpu.memory_space<vmem>>, vector<1x288x64xf32>
    %33 = vector.shape_cast %32 : vector<1x288x64xf32> to vector<288x64xf32>
    %34 = arith.truncf %33 : vector<288x64xf32> to vector<288x64xbf16>
    %c0_27 = arith.constant 0 : index
    %c512 = arith.constant 512 : index
    %35 = vector.load %arg6[%c0_27, %c512] : memref<288x576xbf16, #tpu.memory_space<vmem>>, vector<288x64xbf16>
    tpu.vector_store %arg6[%c0_27, %c512], %34 {strides = array<i32>} : memref<288x576xbf16, #tpu.memory_space<vmem>>, vector<288x64xbf16>,
    %c0_28 = arith.constant 0 : index
    %c0_29 = arith.constant 0 : index
    %36 = vector.load %arg6[%c0_28, %c0_29] : memref<288x576xbf16, #tpu.memory_space<vmem>>, vector<288x576xbf16>
    %c0_30 = arith.constant 0 : index
    %c0_31 = arith.constant 0 : index
    %37 = vector.load %arg2[%c0_30, %c0_31] : memref<576x64xbf16, #tpu.memory_space<vmem>>, vector<576x64xbf16>
    %cst = arith.constant dense<0.000000e+00> : vector<288x64xf32>
    %38 = tpu.matmul %36, %37, %cst {dimension_numbers = #tpu.dot_dimension_numbers<[1], [0], [0], [1], [0, 0, 1, 1], [], []>} : vector<288x576xbf16>, vector<576x64xbf16>, vector<288x64xf32> -> vector<288x64xf32>
    %c0_32 = arith.constant 0 : index
    %c0_33 = arith.constant 0 : index
    %c0_34 = arith.constant 0 : index
    %39 = vector.load %arg4[%c0_32, %c0_33, %c0_34] : memref<1x288x64xf32, #tpu.memory_space<vmem>>, vector<1x288x64xf32>
    %40 = vector.shape_cast %39 : vector<1x288x64xf32> to vector<288x64xf32>
    %41 = vector.shape_cast %38 : vector<288x64xf32> to vector<1x288x64xf32>
    tpu.vector_store %arg4[%c0_32, %c0_33, %c0_34], %41 {strides = array<i32>} : memref<1x288x64xf32, #tpu.memory_space<vmem>>, vector<1x288x64xf32>,
    %c0_35 = arith.constant 0 : index
    %c0_36 = arith.constant 0 : index
    %42 = vector.load %arg3[%c0_35, %c0_36] : memref<288x1xf32, #tpu.memory_space<vmem>>, vector<288x1xf32>
    %43 = vector.broadcast %42 : vector<288x1xf32> to vector<288x64xf32>
    %44 = arith.mulf %38, %43 : vector<288x64xf32>
    %cst_37 = arith.constant dense<0.000000e+00> : vector<64xf32>
    %45 = vector.multi_reduction <add>, %44, %cst_37 [0] : vector<288x64xf32> to vector<64xf32>
    %46 = vector.shape_cast %45 : vector<64xf32> to vector<1x64xf32>
    %c0_38 = arith.constant 0 : index
    %c0_39 = arith.constant 0 : index
    %c0_40 = arith.constant 0 : index
    %47 = vector.load %arg5[%c0_38, %c0_39, %c0_40] : memref<1x1x64xf32, #tpu.memory_space<vmem>>, vector<1x1x64xf32>
    %48 = vector.shape_cast %47 : vector<1x1x64xf32> to vector<1x64xf32>
    %49 = vector.shape_cast %46 : vector<1x64xf32> to vector<1x1x64xf32>
    tpu.vector_store %arg5[%c0_38, %c0_39, %c0_40], %49 {strides = array<i32>} : memref<1x1x64xf32, #tpu.memory_space<vmem>>, vector<1x1x64xf32>,
    return
  }
  func.func @transform_0(%arg0: i32) -> (i32, i32, i32) {
    %c0_i32 = arith.constant 0 : i32
    %c0_i32_0 = arith.constant 0 : i32
    %c0_i32_1 = arith.constant 0 : i32
    return %arg0, %c0_i32, %c0_i32_0 : i32, i32, i32
  }
  func.func @transform_1(%arg0: i32) -> (i32, i32) {
    %c0_i32 = arith.constant 0 : i32
    %c0_i32_0 = arith.constant 0 : i32
    %c0_i32_1 = arith.constant 0 : i32
    return %c0_i32, %c0_i32_0 : i32, i32
  }
  func.func @transform_2(%arg0: i32) -> (i32, i32) {
    %c0_i32 = arith.constant 0 : i32
    %c0_i32_0 = arith.constant 0 : i32
    %c0_i32_1 = arith.constant 0 : i32
    return %c0_i32, %c0_i32_0 : i32, i32
  }
  func.func @transform_3(%arg0: i32) -> (i32, i32, i32) {
    %c0_i32 = arith.constant 0 : i32
    %c0_i32_0 = arith.constant 0 : i32
    %c0_i32_1 = arith.constant 0 : i32
    return %arg0, %c0_i32, %c0_i32_0 : i32, i32, i32
  }
  func.func @transform_4(%arg0: i32) -> (i32, i32, i32) {
    %c0_i32 = arith.constant 0 : i32
    %c0_i32_0 = arith.constant 0 : i32
    %c0_i32_1 = arith.constant 0 : i32
    return %arg0, %c0_i32, %c0_i32_0 : i32, i32, i32
  }
}

module attributes {stable_mosaic.version = 11 : i64} {
  func.func @_se_residual_kernel(%arg0: i32, %arg1: memref<1x1x64xf32, #tpu.memory_space<vmem>>, %arg2: memref<64x4xbf16, #tpu.memory_space<vmem>>, %arg3: memref<1x4xf32, #tpu.memory_space<vmem>>, %arg4: memref<4x64xbf16, #tpu.memory_space<vmem>>, %arg5: memref<1x64xf32, #tpu.memory_space<vmem>>, %arg6: memref<1x288x64xf32, #tpu.memory_space<vmem>>, %arg7: memref<1x288x64xf32, #tpu.memory_space<vmem>>, %arg8: memref<1x288x64xf32, #tpu.memory_space<vmem>>) attributes {dimension_semantics = [#tpu.dimension_semantics<parallel>], iteration_bounds = array<i64: 2>, scalar_prefetch = 0 : i64, scratch_operands = 0 : i64, tpu.core_type = #tpu.core_type<tc>, window_params = [{transform_indices = @transform_0, window_bounds = array<i64: 1, 1, 64>}, {pipeline_mode = #tpu.pipeline_mode<synchronous>, transform_indices = @transform_1, window_bounds = array<i64: 64, 4>}, {pipeline_mode = #tpu.pipeline_mode<synchronous>, transform_indices = @transform_2, window_bounds = array<i64: 1, 4>}, {pipeline_mode = #tpu.pipeline_mode<synchronous>, transform_indices = @transform_3, window_bounds = array<i64: 4, 64>}, {pipeline_mode = #tpu.pipeline_mode<synchronous>, transform_indices = @transform_4, window_bounds = array<i64: 1, 64>}, {transform_indices = @transform_5, window_bounds = array<i64: 1, 288, 64>}, {transform_indices = @transform_6, window_bounds = array<i64: 1, 288, 64>}, {transform_indices = @transform_7, window_bounds = array<i64: 1, 288, 64>}]} {
    %c0 = arith.constant 0 : index
    %c0_0 = arith.constant 0 : index
    %c0_1 = arith.constant 0 : index
    %0 = vector.load %arg1[%c0, %c0_0, %c0_1] : memref<1x1x64xf32, #tpu.memory_space<vmem>>, vector<1x1x64xf32>
    %1 = vector.shape_cast %0 : vector<1x1x64xf32> to vector<1x64xf32>
    %2 = vector.shape_cast %1 : vector<1x64xf32> to vector<1x64xf32>
    %3 = vector.broadcast %2 : vector<1x64xf32> to vector<8x64xf32>
    %4 = arith.truncf %3 : vector<8x64xf32> to vector<8x64xbf16>
    %c0_2 = arith.constant 0 : index
    %c0_3 = arith.constant 0 : index
    %5 = vector.load %arg2[%c0_2, %c0_3] : memref<64x4xbf16, #tpu.memory_space<vmem>>, vector<64x4xbf16>
    %cst = arith.constant dense<0.000000e+00> : vector<8x4xf32>
    %6 = tpu.matmul %4, %5, %cst {dimension_numbers = #tpu.dot_dimension_numbers<[1], [0], [0], [1], [0, 0, 1, 1], [], []>} : vector<8x64xbf16>, vector<64x4xbf16>, vector<8x4xf32> -> vector<8x4xf32>
    %c0_4 = arith.constant 0 : index
    %c0_5 = arith.constant 0 : index
    %7 = vector.load %arg3[%c0_4, %c0_5] : memref<1x4xf32, #tpu.memory_space<vmem>>, vector<1x4xf32>
    %8 = vector.broadcast %7 : vector<1x4xf32> to vector<8x4xf32>
    %9 = arith.addf %6, %8 : vector<8x4xf32>
    %cst_6 = arith.constant 0.000000e+00 : f32
    %10 = vector.broadcast %cst_6 : f32 to vector<8x4xf32>
    %11 = arith.maximumf %9, %10 : vector<8x4xf32>
    %12 = arith.truncf %11 : vector<8x4xf32> to vector<8x4xbf16>
    %c0_7 = arith.constant 0 : index
    %c0_8 = arith.constant 0 : index
    %13 = vector.load %arg4[%c0_7, %c0_8] : memref<4x64xbf16, #tpu.memory_space<vmem>>, vector<4x64xbf16>
    %cst_9 = arith.constant dense<0.000000e+00> : vector<8x64xf32>
    %14 = tpu.matmul %12, %13, %cst_9 {dimension_numbers = #tpu.dot_dimension_numbers<[1], [0], [0], [1], [0, 0, 1, 1], [], []>} : vector<8x4xbf16>, vector<4x64xbf16>, vector<8x64xf32> -> vector<8x64xf32>
    %c0_10 = arith.constant 0 : index
    %c0_11 = arith.constant 0 : index
    %15 = vector.load %arg5[%c0_10, %c0_11] : memref<1x64xf32, #tpu.memory_space<vmem>>, vector<1x64xf32>
    %16 = vector.broadcast %15 : vector<1x64xf32> to vector<8x64xf32>
    %17 = arith.addf %14, %16 : vector<8x64xf32>
    %18 = vector.extract_strided_slice %17 {offsets = [0, 0], sizes = [1, 64], strides = [1, 1]} : vector<8x64xf32> to vector<1x64xf32>
    %cst_12 = arith.constant 0.000000e+00 : f32
    %19 = vector.broadcast %cst_12 : f32 to vector<1x64xf32>
    %20 = arith.subf %19, %18 : vector<1x64xf32>
    %21 = math.exp %20 : vector<1x64xf32>
    %cst_13 = arith.constant 1.000000e+00 : f32
    %22 = vector.broadcast %cst_13 : f32 to vector<1x64xf32>
    %23 = arith.addf %22, %21 : vector<1x64xf32>
    %cst_14 = arith.constant 1.000000e+00 : f32
    %24 = vector.broadcast %cst_14 : f32 to vector<1x64xf32>
    %25 = arith.divf %24, %23 : vector<1x64xf32>
    %c0_15 = arith.constant 0 : index
    %c0_16 = arith.constant 0 : index
    %c0_17 = arith.constant 0 : index
    %26 = vector.load %arg6[%c0_15, %c0_16, %c0_17] : memref<1x288x64xf32, #tpu.memory_space<vmem>>, vector<1x288x64xf32>
    %27 = vector.shape_cast %26 : vector<1x288x64xf32> to vector<288x64xf32>
    %28 = vector.broadcast %25 : vector<1x64xf32> to vector<288x64xf32>
    %29 = arith.mulf %27, %28 : vector<288x64xf32>
    %c0_18 = arith.constant 0 : index
    %c0_19 = arith.constant 0 : index
    %c0_20 = arith.constant 0 : index
    %30 = vector.load %arg7[%c0_18, %c0_19, %c0_20] : memref<1x288x64xf32, #tpu.memory_space<vmem>>, vector<1x288x64xf32>
    %31 = vector.shape_cast %30 : vector<1x288x64xf32> to vector<288x64xf32>
    %32 = arith.addf %29, %31 : vector<288x64xf32>
    %c0_21 = arith.constant 0 : index
    %c0_22 = arith.constant 0 : index
    %c0_23 = arith.constant 0 : index
    %33 = vector.load %arg8[%c0_21, %c0_22, %c0_23] : memref<1x288x64xf32, #tpu.memory_space<vmem>>, vector<1x288x64xf32>
    %34 = vector.shape_cast %33 : vector<1x288x64xf32> to vector<288x64xf32>
    %35 = vector.shape_cast %32 : vector<288x64xf32> to vector<1x288x64xf32>
    tpu.vector_store %arg8[%c0_21, %c0_22, %c0_23], %35 {strides = array<i32>} : memref<1x288x64xf32, #tpu.memory_space<vmem>>, vector<1x288x64xf32>,
    return
  }
  func.func @transform_0(%arg0: i32) -> (i32, i32, i32) {
    %c0_i32 = arith.constant 0 : i32
    %c0_i32_0 = arith.constant 0 : i32
    %c0_i32_1 = arith.constant 0 : i32
    return %arg0, %c0_i32, %c0_i32_0 : i32, i32, i32
  }
  func.func @transform_1(%arg0: i32) -> (i32, i32) {
    %c0_i32 = arith.constant 0 : i32
    %c0_i32_0 = arith.constant 0 : i32
    %c0_i32_1 = arith.constant 0 : i32
    return %c0_i32, %c0_i32_0 : i32, i32
  }
  func.func @transform_2(%arg0: i32) -> (i32, i32) {
    %c0_i32 = arith.constant 0 : i32
    %c0_i32_0 = arith.constant 0 : i32
    %c0_i32_1 = arith.constant 0 : i32
    return %c0_i32, %c0_i32_0 : i32, i32
  }
  func.func @transform_3(%arg0: i32) -> (i32, i32) {
    %c0_i32 = arith.constant 0 : i32
    %c0_i32_0 = arith.constant 0 : i32
    %c0_i32_1 = arith.constant 0 : i32
    return %c0_i32, %c0_i32_0 : i32, i32
  }
  func.func @transform_4(%arg0: i32) -> (i32, i32) {
    %c0_i32 = arith.constant 0 : i32
    %c0_i32_0 = arith.constant 0 : i32
    %c0_i32_1 = arith.constant 0 : i32
    return %c0_i32, %c0_i32_0 : i32, i32
  }
  func.func @transform_5(%arg0: i32) -> (i32, i32, i32) {
    %c0_i32 = arith.constant 0 : i32
    %c0_i32_0 = arith.constant 0 : i32
    %c0_i32_1 = arith.constant 0 : i32
    return %arg0, %c0_i32, %c0_i32_0 : i32, i32, i32
  }
  func.func @transform_6(%arg0: i32) -> (i32, i32, i32) {
    %c0_i32 = arith.constant 0 : i32
    %c0_i32_0 = arith.constant 0 : i32
    %c0_i32_1 = arith.constant 0 : i32
    return %arg0, %c0_i32, %c0_i32_0 : i32, i32, i32
  }
  func.func @transform_7(%arg0: i32) -> (i32, i32, i32) {
    %c0_i32 = arith.constant 0 : i32
    %c0_i32_0 = arith.constant 0 : i32
    %c0_i32_1 = arith.constant 0 : i32
    return %arg0, %c0_i32, %c0_i32_0 : i32, i32, i32
  }
}

</mosaic_0001>

<llo_original>
// kernel: preact_block_forward.5
$region0: #{preact_block_forward.5}
  #allocation0 [shape = 'u32[]', space=smem, size = 0x4, offset = 0x4, fixed_abs, tag = 'smem constant byte address 0x4 - core index']
  #allocation1 [shape = 'u32[72,128]{1,0:T(1,128)}', space=vmem, size = 0x9000, scoped, tag = 'internal scratch']
  %s0 = inlined_call_operand.vmem [shape: f32[2,1,64], index: 0, kind: input, shape index: {}]
  %s1 = inlined_call_operand.vmem [shape: bf16[64,4], index: 1, kind: input, shape index: {}]
  %s2 = inlined_call_operand.vmem [shape: f32[1,4], index: 2, kind: input, shape index: {}]
  %s3 = inlined_call_operand.vmem [shape: bf16[4,64], index: 3, kind: input, shape index: {}]
  %s4 = inlined_call_operand.vmem [shape: f32[1,64], index: 4, kind: input, shape index: {}]
  %s5 = inlined_call_operand.vmem [shape: f32[2,288,64], index: 5, kind: input, shape index: {}]
  %s6 = inlined_call_operand.vmem [shape: f32[2,288,64], index: 6, kind: input, shape index: {}]
  %s7 = inlined_call_operand.vmem [shape: f32[2,288,64], index: 7, kind: output, shape index: {}]
  %s8 = sld [smem:[#allocation0]]
  $region61: #{preact_block_forward.5} parent=0
    _
  %s10 = ssub.s32 1, %s8
  %s11 = scalar_select 0, %s10, %s8
  loop: start=0, step=1, limit=4
  $region2: #{preact_block_forward.5} parent=0 // loop_pre_header
    _
  $region3: #{preact_block_forward.5} parent=0 // loop_header
    %s13 = sphi 0, %s17
    %p14 = scmp.ge.s32.totalorder %s13, 4
    %s23 = sphi 0, %s25
    %s26 = sphi 0, %s23
    %s27 = sphi 0, %s26
    %s43 = sphi 0, %s27
    %s47 = sphi 0, %s47
    %s49 = sphi 0, %s47
    %s50 = sphi 0, %s49
    %s64 = sphi 0, %s50
    %s68 = sphi 0, %s68
    %s70 = sphi 0, %s68
    %s71 = sphi 0, %s70
    %s85 = sphi 0, %s71
    %s89 = sphi 0, %s89
    %s91 = sphi 0, %s89
    %s92 = sphi 0, %s91
    %s106 = sphi 0, %s92
    %s110 = sphi 0, %s110
    %s112 = sphi 0, %s110
    %s113 = sphi 0, %s112
    %s127 = sphi 0, %s113
    %s133 = sphi 0, %s135
    %s136 = sphi 0, %s133
    %s137 = sphi 0, %s136
    %s153 = sphi 0, %s137
    %s159 = sphi 0, %s161
    %s162 = sphi 0, %s159
    %s163 = sphi 0, %s162
    %s179 = sphi 0, %s163
    %s185 = sphi 0, %s187
    %s188 = sphi 0, %s185
    %s189 = sphi 0, %s188
    %s205 = sphi 0, %s189
  $region4: #{preact_block_forward.5} parent=0 // loop_header_branch
    %16 = sbr.rel (%p14) target = $region8
  $region5: #{preact_block_forward.5} parent=0 // loop_body
    %s18 = ssub.s32 %s13, 1
    %s19 = ssub.s32 %s13, 2
    %s20 = sadd.s32 %s13, 1
    %s21 = ssub.s32 %s13, %s20
    %p22 = scmp.eq.s32.totalorder %s21, 0
    %s24 = sadd.s32 %s23, 1
    %s25 = scalar_select %p22, %s23, %s24
    %p28 = pneg %p22
    %p29 = scmp.eq.s32.totalorder %s13, 1
    %p30 = por %p28, %p29
    %p31 = scmp.ne.s32.totalorder %s23, %s26
    %p32 = scmp.eq.s32.totalorder %s13, 0
    %p33 = por %p31, %p32
    %p34 = scmp.ne.s32.totalorder %s23, %s26
    %p35 = scmp.eq.s32.totalorder %s18, 1
    %p36 = por %p34, %p35
    %p37 = scmp.ne.s32.totalorder %s26, %s27
    %p38 = scmp.eq.s32.totalorder %s18, 0
    %p39 = por %p37, %p38
    %p40 = scmp.ne.s32.totalorder %s26, %s27
    %p41 = scmp.eq.s32.totalorder %s19, 1
    %p42 = por %p40, %p41
    %p44 = scmp.ne.s32.totalorder %s27, %s43
    %p45 = scmp.eq.s32.totalorder %s19, 0
    %p46 = por %p44, %p45
    %s48 = sadd.s32 %s47, 1
    %p51 = scmp.eq.s32.totalorder %s13, 1
    %p52 = scmp.ne.s32.totalorder %s47, %s49
    %p53 = scmp.eq.s32.totalorder %s13, 0
    %p54 = por %p52, %p53
    %p55 = scmp.ne.s32.totalorder %s47, %s49
    %p56 = scmp.eq.s32.totalorder %s18, 1
    %p57 = por %p55, %p56
    %p58 = scmp.ne.s32.totalorder %s49, %s50
    %p59 = scmp.eq.s32.totalorder %s18, 0
    %p60 = por %p58, %p59
    %p61 = scmp.ne.s32.totalorder %s49, %s50
    %p62 = scmp.eq.s32.totalorder %s19, 1
    %p63 = por %p61, %p62
    %p65 = scmp.ne.s32.totalorder %s50, %s64
    %p66 = scmp.eq.s32.totalorder %s19, 0
    %p67 = por %p65, %p66
    %s69 = sadd.s32 %s68, 1
    %p72 = scmp.eq.s32.totalorder %s13, 1
    %p73 = scmp.ne.s32.totalorder %s68, %s70
    %p74 = scmp.eq.s32.totalorder %s13, 0
    %p75 = por %p73, %p74
    %p76 = scmp.ne.s32.totalorder %s68, %s70
    %p77 = scmp.eq.s32.totalorder %s18, 1
    %p78 = por %p76, %p77
    %p79 = scmp.ne.s32.totalorder %s70, %s71
    %p80 = scmp.eq.s32.totalorder %s18, 0
    %p81 = por %p79, %p80
    %p82 = scmp.ne.s32.totalorder %s70, %s71
    %p83 = scmp.eq.s32.totalorder %s19, 1
    %p84 = por %p82, %p83
    %p86 = scmp.ne.s32.totalorder %s71, %s85
    %p87 = scmp.eq.s32.totalorder %s19, 0
    %p88 = por %p86, %p87
    %s90 = sadd.s32 %s89, 1
    %p93 = scmp.eq.s32.totalorder %s13, 1
    %p94 = scmp.ne.s32.totalorder %s89, %s91
    %p95 = scmp.eq.s32.totalorder %s13, 0
    %p96 = por %p94, %p95
    %p97 = scmp.ne.s32.totalorder %s89, %s91
    %p98 = scmp.eq.s32.totalorder %s18, 1
    %p99 = por %p97, %p98
    %p100 = scmp.ne.s32.totalorder %s91, %s92
    %p101 = scmp.eq.s32.totalorder %s18, 0
    %p102 = por %p100, %p101
    %p103 = scmp.ne.s32.totalorder %s91, %s92
    %p104 = scmp.eq.s32.totalorder %s19, 1
    %p105 = por %p103, %p104
    %p107 = scmp.ne.s32.totalorder %s92, %s106
    %p108 = scmp.eq.s32.totalorder %s19, 0
    %p109 = por %p107, %p108
    %s111 = sadd.s32 %s110, 1
    %p114 = scmp.eq.s32.totalorder %s13, 1
    %p115 = scmp.ne.s32.totalorder %s110, %s112
    %p116 = scmp.eq.s32.totalorder %s13, 0
    %p117 = por %p115, %p116
    %p118 = scmp.ne.s32.totalorder %s110, %s112
    %p119 = scmp.eq.s32.totalorder %s18, 1
    %p120 = por %p118, %p119
    %p121 = scmp.ne.s32.totalorder %s112, %s113
    %p122 = scmp.eq.s32.totalorder %s18, 0
    %p123 = por %p121, %p122
    %p124 = scmp.ne.s32.totalorder %s112, %s113
    %p125 = scmp.eq.s32.totalorder %s19, 1
    %p126 = por %p124, %p125
    %p128 = scmp.ne.s32.totalorder %s113, %s127
    %p129 = scmp.eq.s32.totalorder %s19, 0
    %p130 = por %p128, %p129
    %s131 = ssub.s32 %s13, %s20
    %p132 = scmp.eq.s32.totalorder %s131, 0
    %s134 = sadd.s32 %s133, 1
    %s135 = scalar_select %p132, %s133, %s134
    %p138 = pneg %p132
    %p139 = scmp.eq.s32.totalorder %s13, 1
    %p140 = por %p138, %p139
    %p141 = scmp.ne.s32.totalorder %s133, %s136
    %p142 = scmp.eq.s32.totalorder %s13, 0
    %p143 = por %p141, %p142
    %p144 = scmp.ne.s32.totalorder %s133, %s136
    %p145 = scmp.eq.s32.totalorder %s18, 1
    %p146 = por %p144, %p145
    %p147 = scmp.ne.s32.totalorder %s136, %s137
    %p148 = scmp.eq.s32.totalorder %s18, 0
    %p149 = por %p147, %p148
    %p150 = scmp.ne.s32.totalorder %s136, %s137
    %p151 = scmp.eq.s32.totalorder %s19, 1
    %p152 = por %p150, %p151
    %p154 = scmp.ne.s32.totalorder %s137, %s153
    %p155 = scmp.eq.s32.totalorder %s19, 0
    %p156 = por %p154, %p155
    %s157 = ssub.s32 %s13, %s20
    %p158 = scmp.eq.s32.totalorder %s157, 0
    %s160 = sadd.s32 %s159, 1
    %s161 = scalar_select %p158, %s159, %s160
    %p164 = pneg %p158
    %p165 = scmp.eq.s32.totalorder %s13, 1
    %p166 = por %p164, %p165
    %p167 = scmp.ne.s32.totalorder %s159, %s162
    %p168 = scmp.eq.s32.totalorder %s13, 0
    %p169 = por %p167, %p168
    %p170 = scmp.ne.s32.totalorder %s159, %s162
    %p171 = scmp.eq.s32.totalorder %s18, 1
    %p172 = por %p170, %p171
    %p173 = scmp.ne.s32.totalorder %s162, %s163
    %p174 = scmp.eq.s32.totalorder %s18, 0
    %p175 = por %p173, %p174
    %p176 = scmp.ne.s32.totalorder %s162, %s163
    %p177 = scmp.eq.s32.totalorder %s19, 1
    %p178 = por %p176, %p177
    %p180 = scmp.ne.s32.totalorder %s163, %s179
    %p181 = scmp.eq.s32.totalorder %s19, 0
    %p182 = por %p180, %p181
    %s183 = ssub.s32 %s13, %s20
    %p184 = scmp.eq.s32.totalorder %s183, 0
    %s186 = sadd.s32 %s185, 1
    %s187 = scalar_select %p184, %s185, %s186
    %p190 = pneg %p184
    %p191 = scmp.eq.s32.totalorder %s13, 1
    %p192 = por %p190, %p191
    %p193 = scmp.ne.s32.totalorder %s185, %s188
    %p194 = scmp.eq.s32.totalorder %s13, 0
    %p195 = por %p193, %p194
    %p196 = scmp.ne.s32.totalorder %s185, %s188
    %p197 = scmp.eq.s32.totalorder %s18, 1
    %p198 = por %p196, %p197
    %p199 = scmp.ne.s32.totalorder %s188, %s189
    %p200 = scmp.eq.s32.totalorder %s18, 0
    %p201 = por %p199, %p200
    %p202 = scmp.ne.s32.totalorder %s188, %s189
    %p203 = scmp.eq.s32.totalorder %s19, 1
    %p204 = por %p202, %p203
    %p206 = scmp.ne.s32.totalorder %s189, %s205
    %p207 = scmp.eq.s32.totalorder %s19, 0
    %p208 = por %p206, %p207
    %p209 = scmp.le.s32.totalorder 1, %s13
    %p210 = scmp.lt.s32.totalorder %s13, 3
    %p211 = pnand %p209, %p210
    %p212 = pneg %p211
    // Predicated region
    $region9: #{preact_block_forward.5} parent=5 // pred_check
      _
    $region10: #{preact_block_forward.5} parent=5 // pred_check_branch
      %214 = sbr.rel (%p211) target = $region12
    $region11: #{preact_block_forward.5} parent=5 // pred_region
      %s215 = ssub.s32 %s13, 1
      // Predicated region
      $region13: #{preact_block_forward.5} parent=11 // pred_check
        %p216 = pneg %p60
      $region14: #{preact_block_forward.5} parent=11 // pred_check_branch
        %218 = sbr.rel (%p216) target = $region16
      $region15: #{preact_block_forward.5} parent=11 // pred_region
        _
      $region16: #{preact_block_forward.5} parent=11 // pred_fallthru
        _
      // Predicated region
      $region17: #{preact_block_forward.5} parent=11 // pred_check
        %p219 = pneg %p81
      $region18: #{preact_block_forward.5} parent=11 // pred_check_branch
        %221 = sbr.rel (%p219) target = $region20
      $region19: #{preact_block_forward.5} parent=11 // pred_region
        _
      $region20: #{preact_block_forward.5} parent=11 // pred_fallthru
        _
      // Predicated region
      $region21: #{preact_block_forward.5} parent=11 // pred_check
        %p222 = pneg %p102
      $region22: #{preact_block_forward.5} parent=11 // pred_check_branch
        %224 = sbr.rel (%p222) target = $region24
      $region23: #{preact_block_forward.5} parent=11 // pred_region
        _
      $region24: #{preact_block_forward.5} parent=11 // pred_fallthru
        _
      // Predicated region
      $region25: #{preact_block_forward.5} parent=11 // pred_check
        %p225 = pneg %p123
      $region26: #{preact_block_forward.5} parent=11 // pred_check_branch
        %227 = sbr.rel (%p225) target = $region28
      $region27: #{preact_block_forward.5} parent=11 // pred_region
        _
      $region28: #{preact_block_forward.5} parent=11 // pred_fallthru
        _
    $region12: #{preact_block_forward.5} parent=5 // pred_fallthru
      _
    %p228 = scmp.lt.s32.totalorder %s13, 2
    // Predicated region
    $region29: #{preact_block_forward.5} parent=5 // pred_check
      %p229 = pneg %p228
    $region30: #{preact_block_forward.5} parent=5 // pred_check_branch
      %231 = sbr.rel (%p229) target = $region32
    $region31: #{preact_block_forward.5} parent=5 // pred_region
      // Predicated region
      $region33: #{preact_block_forward.5} parent=31 // pred_check
        %p232 = pneg %p33
      $region34: #{preact_block_forward.5} parent=31 // pred_check_branch
        %234 = sbr.rel (%p232) target = $region36
      $region35: #{preact_block_forward.5} parent=31 // pred_region
        %p235 = scmp.lt.s32.totalorder %s13, 1
        %s236 = scalar_select %p235, %s13, 1
        %s237 = scalar_lea.vmem %s0, %s236
      $region36: #{preact_block_forward.5} parent=31 // pred_fallthru
        _
      // Predicated region
      $region37: #{preact_block_forward.5} parent=31 // pred_check
        %p238 = pneg %p143
      $region38: #{preact_block_forward.5} parent=31 // pred_check_branch
        %240 = sbr.rel (%p238) target = $region40
      $region39: #{preact_block_forward.5} parent=31 // pred_region
        %p241 = scmp.lt.s32.totalorder %s13, 1
        %s242 = scalar_select %p241, %s13, 1
        %s243 = smul.addr %s242, 36
        %s244 = smul.addr %s243, 8
        %s245 = scalar_lea.vmem %s5, %s244
      $region40: #{preact_block_forward.5} parent=31 // pred_fallthru
        _
      // Predicated region
      $region41: #{preact_block_forward.5} parent=31 // pred_check
        %p246 = pneg %p169
      $region42: #{preact_block_forward.5} parent=31 // pred_check_branch
        %248 = sbr.rel (%p246) target = $region44
      $region43: #{preact_block_forward.5} parent=31 // pred_region
        %p249 = scmp.lt.s32.totalorder %s13, 1
        %s250 = scalar_select %p249, %s13, 1
        %s251 = smul.addr %s250, 36
        %s252 = smul.addr %s251, 8
        %s253 = scalar_lea.vmem %s6, %s252
      $region44: #{preact_block_forward.5} parent=31 // pred_fallthru
        _
    $region32: #{preact_block_forward.5} parent=5 // pred_fallthru
      _
    %p254 = scmp.le.s32.totalorder 1, %s13
    %p255 = scmp.lt.s32.totalorder %s13, 3
    %p256 = pnand %p254, %p255
    %p257 = pneg %p256
    // Predicated region
    $region45: #{preact_block_forward.5} parent=5 // pred_check
      _
    $region46: #{preact_block_forward.5} parent=5 // pred_check_branch
      %259 = sbr.rel (%p256) target = $region48
    $region47: #{preact_block_forward.5} parent=5 // pred_region
      %s260 = ssub.s32 %s13, 1
      %p261 = scmp.lt.s32.totalorder %s18, 1
      %s262 = scalar_select %p261, %s18, 1
      %s263 = scalar_lea.vmem %s0, %s262
      %p264 = pneg %p39
      %p265 = pneg %p36
      %p266 = pneg %p60
      %p267 = pneg %p57
      %p268 = pneg %p81
      %p269 = pneg %p78
      %p270 = pneg %p102
      %p271 = pneg %p99
      %p272 = pneg %p123
      %p273 = pneg %p120
      %p274 = scmp.lt.s32.totalorder %s18, 1
      %s275 = scalar_select %p274, %s18, 1
      %s276 = smul.addr %s275, 36
      %s277 = smul.addr %s276, 8
      %s278 = scalar_lea.vmem %s5, %s277
      %p279 = pneg %p149
      %p280 = pneg %p146
      %p281 = scmp.lt.s32.totalorder %s18, 1
      %s282 = scalar_select %p281, %s18, 1
      %s283 = smul.addr %s282, 36
      %s284 = smul.addr %s283, 8
      %s285 = scalar_lea.vmem %s6, %s284
      %p286 = pneg %p175
      %p287 = pneg %p172
      %p288 = pneg %p201
      %p289 = pneg %p198
      %p290 = scmp.lt.s32.totalorder %s18, 1
      %s291 = scalar_select %p290, %s18, 1
      %s292 = smul.addr %s291, 36
      %s293 = smul.addr %s292, 8
      %s294 = scalar_lea.vmem %s7, %s293
      %p295 = scmp.lt.s32.totalorder %s18, 1
      %s296 = scalar_select %p295, %s18, 1
      %s297 = scalar_lea.vmem %s0, %s296
      %p298 = scmp.lt.s32.totalorder %s18, 1
      %s299 = scalar_select %p298, %s18, 1
      %s300 = smul.addr %s299, 36
      %s301 = smul.addr %s300, 8
      %s302 = scalar_lea.vmem %s5, %s301
      %p303 = scmp.lt.s32.totalorder %s18, 1
      %s304 = scalar_select %p303, %s18, 1
      %s305 = smul.addr %s304, 36
      %s306 = smul.addr %s305, 8
      %s307 = scalar_lea.vmem %s6, %s306
      %p308 = scmp.lt.s32.totalorder %s18, 1
      %s309 = scalar_select %p308, %s18, 1
      %s310 = smul.addr %s309, 36
      %s311 = smul.addr %s310, 8
      %s312 = scalar_lea.vmem %s7, %s311
      %v314 = vld [vmem:[%s297] sm:$0x1]
      %v316 = vperm.slane %v314, 0
      %v318 = vpack.c.bf16 %v316, %v316
      %v319 = vld [vmem:[%s1] sm:$0xf]
      %v320 = vld [vmem:[%s1 + $0x4] sm:$0xf]
      %v321 = vld [vmem:[%s1 + $0x8] sm:$0xf]
      %v322 = vld [vmem:[%s1 + $0xc] sm:$0xf]
      %v323 = vld [vmem:[%s1 + $0x10] sm:$0xf]
      %v324 = vld [vmem:[%s1 + $0x14] sm:$0xf]
      %v325 = vld [vmem:[%s1 + $0x18] sm:$0xf]
      %v326 = vld [vmem:[%s1 + $0x1c] sm:$0xf]
      %v327 = vld [vmem:[%s2] sm:$0x1]
      %v329 = vperm.slane %v327, 0
      %v339 = vunpack.c.l.b16 %v319
      %v340 = vunpack.c.l.b16 %v320
      %v341 = vunpack.c.l.b16 %v321
      %v342 = vunpack.c.l.b16 %v322
      %v343 = vunpack.c.l.b16 %v323
      %v344 = vunpack.c.l.b16 %v324
      %v345 = vunpack.c.l.b16 %v325
      %v346 = vunpack.c.l.b16 %v326
      %v347 = vpack.c.b16 %v340, %v339
      %v348 = vpack.c.b16 %v342, %v341
      %v349 = vpack.c.b16 %v344, %v343
      %v350 = vpack.c.b16 %v346, %v345
      %vm355 = vcmask 523264
      %v357 = vsel %vm355, %v318, 0
      %359 = vmatpush.bf16.msra.mxu0 0
      %360 = vmatpush.bf16.msra.mxu0 0
      %361 = vmatpush.bf16.msra.mxu0 0
      %362 = vmatpush.bf16.msra.mxu0 0
      %363 = vmatpush.bf16.msra.mxu0 %v350
      %364 = vmatpush.bf16.msra.mxu0 %v349
      %365 = vmatpush.bf16.msra.mxu0 %v348
      %366 = vmatpush.bf16.msra.mxu0 %v347
      %367 = vmatmul.bf16.gmra.mxu0 %v357
      %v368 = vpop.f32.mrf.mxu0
      %v369 = vadd.f32 %v329, %v368
      %v370 = vpop.f32.mrf.mxu0
      %371 = vdwg.mxu0
      %v372 = vmax.f32 %v369, 0.0
      %v373 = vpack.c.bf16 %v372, %v372
      %v374 = vld [vmem:[%s3] sm:$0x3]
      %v375 = vld [vmem:[%s4] sm:$0x1]
      %v377 = vperm.slane %v375, 0
      %vm379 = vcmask 31744
      %v381 = vsel %vm379, %v373, 0
      %vm383 = vcmask 1041408
      %v385 = vsel %vm383, %v374, 0
      %387 = vmatpush.bf16.msra.mxu0 0
      %388 = vmatpush.bf16.msra.mxu0 0
      %389 = vmatpush.bf16.msra.mxu0 0
      %390 = vmatpush.bf16.msra.mxu0 0
      %391 = vmatpush.bf16.msra.mxu0 0
      %392 = vmatpush.bf16.msra.mxu0 0
      %393 = vmatpush.bf16.msra.mxu0 0
      %394 = vmatpush.bf16.msra.mxu0 %v385
      %395 = vmatmul.bf16.gmra.mxu0 %v381
      %v396 = vpop.f32.mrf.mxu0
      %v397 = vadd.f32 %v377, %v396
      %v398 = vpop.f32.mrf.mxu0
      %399 = vdwg.mxu0
      %v400 = vsub.f32 0.0, %v397
      %v401 = vmul.f32 %v400, 1.442695
      %v402 = vpow.pop %v401
      %v403 = vadd.f32 %v402, 1.0
      %v404 = vrcp.pop %v403
      %v405 = vmul.f32 %v403, %v404
      %v406 = vsub.f32 1.0, %v405
      %v407 = vmul.f32 %v404, %v406
      %v408 = vadd.f32 %v404, %v407
      %vm409 = vweird.f32 %v403
      %vm410 = vweird.f32 %v404
      %vm411 = vmor %vm409, %vm410
      %v412 = vsel %vm411, %v404, %v408
      %v413 = vand.u32 2147483647, %v403
      %vm414 = vcmp.eq.f32.partialorder %v413, 8.507059e+37
      %v415 = vand.u32 %v403, 2147483648
      %v416 = vor.u32 1.1754944e-38, %v415
      %v417 = vsel %vm414, %v416, %v412
      %v418 = vmul.f32 1.0, %v417
      %v419 = vld [vmem:[%s302] sm:$0xff]
      %v420 = vld [vmem:[%s302 + $0x8] sm:$0xff]
      %v421 = vld [vmem:[%s302 + $0x10] sm:$0xff]
      %v422 = vld [vmem:[%s302 + $0x18] sm:$0xff]
      %v423 = vld [vmem:[%s302 + $0x20] sm:$0xff]
      %v424 = vld [vmem:[%s302 + $0x28] sm:$0xff]
      %v425 = vld [vmem:[%s302 + $0x30] sm:$0xff]
      %v426 = vld [vmem:[%s302 + $0x38] sm:$0xff]
      %v427 = vld [vmem:[%s302 + $0x40] sm:$0xff]
      %v428 = vld [vmem:[%s302 + $0x48] sm:$0xff]
      %v429 = vld [vmem:[%s302 + $0x50] sm:$0xff]
      %v430 = vld [vmem:[%s302 + $0x58] sm:$0xff]
      %v431 = vld [vmem:[%s302 + $0x60] sm:$0xff]
      %v432 = vld [vmem:[%s302 + $0x68] sm:$0xff]
      %v433 = vld [vmem:[%s302 + $0x70] sm:$0xff]
      %v434 = vld [vmem:[%s302 + $0x78] sm:$0xff]
      %v435 = vld [vmem:[%s302 + $0x80] sm:$0xff]
      %v436 = vld [vmem:[%s302 + $0x88] sm:$0xff]
      %v437 = vld [vmem:[%s302 + $0x90] sm:$0xff]
      %v438 = vld [vmem:[%s302 + $0x98] sm:$0xff]
      %v439 = vld [vmem:[%s302 + $0xa0] sm:$0xff]
      %v440 = vld [vmem:[%s302 + $0xa8] sm:$0xff]
      %v441 = vld [vmem:[%s302 + $0xb0] sm:$0xff]
      %v442 = vld [vmem:[%s302 + $0xb8] sm:$0xff]
      %v443 = vld [vmem:[%s302 + $0xc0] sm:$0xff]
      %v444 = vld [vmem:[%s302 + $0xc8] sm:$0xff]
      %v445 = vld [vmem:[%s302 + $0xd0] sm:$0xff]
      %v446 = vld [vmem:[%s302 + $0xd8] sm:$0xff]
      %v447 = vld [vmem:[%s302 + $0xe0] sm:$0xff]
      %v448 = vld [vmem:[%s302 + $0xe8] sm:$0xff]
      %v449 = vld [vmem:[%s302 + $0xf0] sm:$0xff]
      %v450 = vld [vmem:[%s302 + $0xf8] sm:$0xff]
      %v451 = vld [vmem:[%s302 + $0x100] sm:$0xff]
      %v452 = vld [vmem:[%s302 + $0x108] sm:$0xff]
      %v453 = vld [vmem:[%s302 + $0x110] sm:$0xff]
      %v454 = vld [vmem:[%s302 + $0x118] sm:$0xff]
      %v455 = vperm.slane %v418, 0
      %v456 = vmul.f32 %v419, %v455
      %v457 = vmul.f32 %v420, %v455
      %v458 = vmul.f32 %v421, %v455
      %v459 = vmul.f32 %v422, %v455
      %v460 = vmul.f32 %v423, %v455
      %v461 = vmul.f32 %v424, %v455
      %v462 = vmul.f32 %v425, %v455
      %v463 = vmul.f32 %v426, %v455
      %v464 = vmul.f32 %v427, %v455
      %v465 = vmul.f32 %v428, %v455
      %v466 = vmul.f32 %v429, %v455
      %v467 = vmul.f32 %v430, %v455
      %v468 = vmul.f32 %v431, %v455
      %v469 = vmul.f32 %v432, %v455
      %v470 = vmul.f32 %v433, %v455
      %v471 = vmul.f32 %v434, %v455
      %v472 = vmul.f32 %v435, %v455
      %v473 = vmul.f32 %v436, %v455
      %v474 = vmul.f32 %v437, %v455
      %v475 = vmul.f32 %v438, %v455
      %v476 = vmul.f32 %v439, %v455
      %v477 = vmul.f32 %v440, %v455
      %v478 = vmul.f32 %v441, %v455
      %v479 = vmul.f32 %v442, %v455
      %v480 = vmul.f32 %v443, %v455
      %v481 = vmul.f32 %v444, %v455
      %v482 = vmul.f32 %v445, %v455
      %v483 = vmul.f32 %v446, %v455
      %v484 = vmul.f32 %v447, %v455
      %v485 = vmul.f32 %v448, %v455
      %v486 = vmul.f32 %v449, %v455
      %v487 = vmul.f32 %v450, %v455
      %v488 = vmul.f32 %v451, %v455
      %v489 = vmul.f32 %v452, %v455
      %v490 = vmul.f32 %v453, %v455
      %v491 = vmul.f32 %v454, %v455
      %v492 = vld [vmem:[%s307] sm:$0xff]
      %v493 = vld [vmem:[%s307 + $0x8] sm:$0xff]
      %v494 = vld [vmem:[%s307 + $0x10] sm:$0xff]
      %v495 = vld [vmem:[%s307 + $0x18] sm:$0xff]
      %v496 = vld [vmem:[%s307 + $0x20] sm:$0xff]
      %v497 = vld [vmem:[%s307 + $0x28] sm:$0xff]
      %v498 = vld [vmem:[%s307 + $0x30] sm:$0xff]
      %v499 = vld [vmem:[%s307 + $0x38] sm:$0xff]
      %v500 = vld [vmem:[%s307 + $0x40] sm:$0xff]
      %v501 = vld [vmem:[%s307 + $0x48] sm:$0xff]
      %v502 = vld [vmem:[%s307 + $0x50] sm:$0xff]
      %v503 = vld [vmem:[%s307 + $0x58] sm:$0xff]
      %v504 = vld [vmem:[%s307 + $0x60] sm:$0xff]
      %v505 = vld [vmem:[%s307 + $0x68] sm:$0xff]
      %v506 = vld [vmem:[%s307 + $0x70] sm:$0xff]
      %v507 = vld [vmem:[%s307 + $0x78] sm:$0xff]
      %v508 = vld [vmem:[%s307 + $0x80] sm:$0xff]
      %v509 = vld [vmem:[%s307 + $0x88] sm:$0xff]
      %v510 = vld [vmem:[%s307 + $0x90] sm:$0xff]
      %v511 = vld [vmem:[%s307 + $0x98] sm:$0xff]
      %v512 = vld [vmem:[%s307 + $0xa0] sm:$0xff]
      %v513 = vld [vmem:[%s307 + $0xa8] sm:$0xff]
      %v514 = vld [vmem:[%s307 + $0xb0] sm:$0xff]
      %v515 = vld [vmem:[%s307 + $0xb8] sm:$0xff]
      %v516 = vld [vmem:[%s307 + $0xc0] sm:$0xff]
      %v517 = vld [vmem:[%s307 + $0xc8] sm:$0xff]
      %v518 = vld [vmem:[%s307 + $0xd0] sm:$0xff]
      %v519 = vld [vmem:[%s307 + $0xd8] sm:$0xff]
      %v520 = vld [vmem:[%s307 + $0xe0] sm:$0xff]
      %v521 = vld [vmem:[%s307 + $0xe8] sm:$0xff]
      %v522 = vld [vmem:[%s307 + $0xf0] sm:$0xff]
      %v523 = vld [vmem:[%s307 + $0xf8] sm:$0xff]
      %v524 = vld [vmem:[%s307 + $0x100] sm:$0xff]
      %v525 = vld [vmem:[%s307 + $0x108] sm:$0xff]
      %v526 = vld [vmem:[%s307 + $0x110] sm:$0xff]
      %v527 = vld [vmem:[%s307 + $0x118] sm:$0xff]
      %v528 = vadd.f32 %v456, %v492
      %v529 = vadd.f32 %v457, %v493
      %v530 = vadd.f32 %v458, %v494
      %v531 = vadd.f32 %v459, %v495
      %v532 = vadd.f32 %v460, %v496
      %v533 = vadd.f32 %v461, %v497
      %v534 = vadd.f32 %v462, %v498
      %v535 = vadd.f32 %v463, %v499
      %v536 = vadd.f32 %v464, %v500
      %v537 = vadd.f32 %v465, %v501
      %v538 = vadd.f32 %v466, %v502
      %v539 = vadd.f32 %v467, %v503
      %v540 = vadd.f32 %v468, %v504
      %v541 = vadd.f32 %v469, %v505
      %v542 = vadd.f32 %v470, %v506
      %v543 = vadd.f32 %v471, %v507
      %v544 = vadd.f32 %v472, %v508
      %v545 = vadd.f32 %v473, %v509
      %v546 = vadd.f32 %v474, %v510
      %v547 = vadd.f32 %v475, %v511
      %v548 = vadd.f32 %v476, %v512
      %v549 = vadd.f32 %v477, %v513
      %v550 = vadd.f32 %v478, %v514
      %v551 = vadd.f32 %v479, %v515
      %v552 = vadd.f32 %v480, %v516
      %v553 = vadd.f32 %v481, %v517
      %v554 = vadd.f32 %v482, %v518
      %v555 = vadd.f32 %v483, %v519
      %v556 = vadd.f32 %v484, %v520
      %v557 = vadd.f32 %v485, %v521
      %v558 = vadd.f32 %v486, %v522
      %v559 = vadd.f32 %v487, %v523
      %v560 = vadd.f32 %v488, %v524
      %v561 = vadd.f32 %v489, %v525
      %v562 = vadd.f32 %v490, %v526
      %v563 = vadd.f32 %v491, %v527
      %564 = vst.msk [vmem:[%s312] sm:$0xff] %vm355, %v528
      %565 = vst.msk [vmem:[%s312 + $0x8] sm:$0xff] %vm355, %v529
      %566 = vst.msk [vmem:[%s312 + $0x10] sm:$0xff] %vm355, %v530
      %567 = vst.msk [vmem:[%s312 + $0x18] sm:$0xff] %vm355, %v531
      %568 = vst.msk [vmem:[%s312 + $0x20] sm:$0xff] %vm355, %v532
      %569 = vst.msk [vmem:[%s312 + $0x28] sm:$0xff] %vm355, %v533
      %570 = vst.msk [vmem:[%s312 + $0x30] sm:$0xff] %vm355, %v534
      %571 = vst.msk [vmem:[%s312 + $0x38] sm:$0xff] %vm355, %v535
      %572 = vst.msk [vmem:[%s312 + $0x40] sm:$0xff] %vm355, %v536
      %573 = vst.msk [vmem:[%s312 + $0x48] sm:$0xff] %vm355, %v537
      %574 = vst.msk [vmem:[%s312 + $0x50] sm:$0xff] %vm355, %v538
      %575 = vst.msk [vmem:[%s312 + $0x58] sm:$0xff] %vm355, %v539
      %576 = vst.msk [vmem:[%s312 + $0x60] sm:$0xff] %vm355, %v540
      %577 = vst.msk [vmem:[%s312 + $0x68] sm:$0xff] %vm355, %v541
      %578 = vst.msk [vmem:[%s312 + $0x70] sm:$0xff] %vm355, %v542
      %579 = vst.msk [vmem:[%s312 + $0x78] sm:$0xff] %vm355, %v543
      %580 = vst.msk [vmem:[%s312 + $0x80] sm:$0xff] %vm355, %v544
      %581 = vst.msk [vmem:[%s312 + $0x88] sm:$0xff] %vm355, %v545
      %582 = vst.msk [vmem:[%s312 + $0x90] sm:$0xff] %vm355, %v546
      %583 = vst.msk [vmem:[%s312 + $0x98] sm:$0xff] %vm355, %v547
      %584 = vst.msk [vmem:[%s312 + $0xa0] sm:$0xff] %vm355, %v548
      %585 = vst.msk [vmem:[%s312 + $0xa8] sm:$0xff] %vm355, %v549
      %586 = vst.msk [vmem:[%s312 + $0xb0] sm:$0xff] %vm355, %v550
      %587 = vst.msk [vmem:[%s312 + $0xb8] sm:$0xff] %vm355, %v551
      %588 = vst.msk [vmem:[%s312 + $0xc0] sm:$0xff] %vm355, %v552
      %589 = vst.msk [vmem:[%s312 + $0xc8] sm:$0xff] %vm355, %v553
      %590 = vst.msk [vmem:[%s312 + $0xd0] sm:$0xff] %vm355, %v554
      %591 = vst.msk [vmem:[%s312 + $0xd8] sm:$0xff] %vm355, %v555
      %592 = vst.msk [vmem:[%s312 + $0xe0] sm:$0xff] %vm355, %v556
      %593 = vst.msk [vmem:[%s312 + $0xe8] sm:$0xff] %vm355, %v557
      %594 = vst.msk [vmem:[%s312 + $0xf0] sm:$0xff] %vm355, %v558
      %595 = vst.msk [vmem:[%s312 + $0xf8] sm:$0xff] %vm355, %v559
      %596 = vst.msk [vmem:[%s312 + $0x100] sm:$0xff] %vm355, %v560
      %597 = vst.msk [vmem:[%s312 + $0x108] sm:$0xff] %vm355, %v561
      %598 = vst.msk [vmem:[%s312 + $0x110] sm:$0xff] %vm355, %v562
      %599 = vst.msk [vmem:[%s312 + $0x118] sm:$0xff] %vm355, %v563
      %p600 = scmp.lt.s32.totalorder %s18, 1
      %s601 = scalar_select %p600, %s18, 1
      %s602 = smul.addr %s601, 36
      %s603 = smul.addr %s602, 8
      %s604 = scalar_lea.vmem %s7, %s603
      // Predicated region
      $region49: #{preact_block_forward.5} parent=47 // pred_check
        %p605 = pneg %p198
      $region50: #{preact_block_forward.5} parent=47 // pred_check_branch
        %607 = sbr.rel (%p605) target = $region52
      $region51: #{preact_block_forward.5} parent=47 // pred_region
        _
      $region52: #{preact_block_forward.5} parent=47 // pred_fallthru
        _
    $region48: #{preact_block_forward.5} parent=5 // pred_fallthru
      _
    %p608 = scmp.le.s32.totalorder 2, %s13
    // Predicated region
    $region53: #{preact_block_forward.5} parent=5 // pred_check
      %p609 = pneg %p608
    $region54: #{preact_block_forward.5} parent=5 // pred_check_branch
      %611 = sbr.rel (%p609) target = $region56
    $region55: #{preact_block_forward.5} parent=5 // pred_region
      %s612 = ssub.s32 %s13, 2
      // Predicated region
      $region57: #{preact_block_forward.5} parent=55 // pred_check
        %p613 = pneg %p204
      $region58: #{preact_block_forward.5} parent=55 // pred_check_branch
        %615 = sbr.rel (%p613) target = $region60
      $region59: #{preact_block_forward.5} parent=55 // pred_region
        %p616 = scmp.lt.s32.totalorder %s19, 1
        %s617 = scalar_select %p616, %s19, 1
        %s618 = smul.addr %s617, 36
        %s619 = smul.addr %s618, 8
        %s620 = scalar_lea.vmem %s7, %s619
      $region60: #{preact_block_forward.5} parent=55 // pred_fallthru
        _
    $region56: #{preact_block_forward.5} parent=5 // pred_fallthru
      _
  $region6: #{preact_block_forward.5} parent=0 // loop_footer
    %s17 = sadd.s32 1, %s13
  $region7: #{preact_block_forward.5} parent=0 // loop_footer_branch
    %12 = sbr.rel target = $region3
  $region8: #{preact_block_forward.5} parent=0 // loop_exit
    _

// kernel: preact_block_forward.4
$region0: #{preact_block_forward.4}
  #allocation0 [shape = 'u32[]', space=smem, size = 0x4, offset = 0x4, fixed_abs, tag = 'smem constant byte address 0x4 - core index']
  #allocation1 [shape = 'u32[72,128]{1,0:T(1,128)}', space=vmem, size = 0x9000, scoped, tag = 'internal scratch']
  #allocation2 [shape = 'bf16[288,576]{1,0:T(8,128)(2,1)}', space=vmem, size = 0x5a000, scoped, tag = 'scratch operand']
  %s0 = inlined_call_operand.vmem [shape: f32[2,342,64], index: 0, kind: input, shape index: {}]
  %s1 = inlined_call_operand.vmem [shape: bf16[576,64], index: 1, kind: input, shape index: {}]
  %s2 = inlined_call_operand.vmem [shape: f32[288,1], index: 2, kind: input, shape index: {}]
  %s3 = inlined_call_operand.vmem [shape: f32[2,288,64], index: 3, kind: output, shape index: {0}]
  %s4 = inlined_call_operand.vmem [shape: f32[2,1,64], index: 4, kind: output, shape index: {1}]
  %5 = xla_tuple %s3, %s4
  %s6 = sld [smem:[#allocation0]]
  $region53: #{preact_block_forward.4} parent=0
    _
  %s8 = ssub.s32 1, %s6
  %s9 = scalar_select 0, %s8, %s6
  loop: start=0, step=1, limit=4
  $region2: #{preact_block_forward.4} parent=0 // loop_pre_header
    _
  $region3: #{preact_block_forward.4} parent=0 // loop_header
    %s11 = sphi 0, %s15
    %p12 = scmp.ge.s32.totalorder %s11, 4
    %s21 = sphi 0, %s23
    %s24 = sphi 0, %s21
    %s25 = sphi 0, %s24
    %s41 = sphi 0, %s25
    %s45 = sphi 0, %s45
    %s47 = sphi 0, %s45
    %s48 = sphi 0, %s47
    %s62 = sphi 0, %s48
    %s66 = sphi 0, %s66
    %s68 = sphi 0, %s66
    %s69 = sphi 0, %s68
    %s83 = sphi 0, %s69
    %s89 = sphi 0, %s91
    %s92 = sphi 0, %s89
    %s93 = sphi 0, %s92
    %s109 = sphi 0, %s93
    %s115 = sphi 0, %s117
    %s118 = sphi 0, %s115
    %s119 = sphi 0, %s118
    %s135 = sphi 0, %s119
  $region4: #{preact_block_forward.4} parent=0 // loop_header_branch
    %14 = sbr.rel (%p12) target = $region8
  $region5: #{preact_block_forward.4} parent=0 // loop_body
    %s16 = ssub.s32 %s11, 1
    %s17 = ssub.s32 %s11, 2
    %s18 = sadd.s32 %s11, 1
    %s19 = ssub.s32 %s11, %s18
    %p20 = scmp.eq.s32.totalorder %s19, 0
    %s22 = sadd.s32 %s21, 1
    %s23 = scalar_select %p20, %s21, %s22
    %p26 = pneg %p20
    %p27 = scmp.eq.s32.totalorder %s11, 1
    %p28 = por %p26, %p27
    %p29 = scmp.ne.s32.totalorder %s21, %s24
    %p30 = scmp.eq.s32.totalorder %s11, 0
    %p31 = por %p29, %p30
    %p32 = scmp.ne.s32.totalorder %s21, %s24
    %p33 = scmp.eq.s32.totalorder %s16, 1
    %p34 = por %p32, %p33
    %p35 = scmp.ne.s32.totalorder %s24, %s25
    %p36 = scmp.eq.s32.totalorder %s16, 0
    %p37 = por %p35, %p36
    %p38 = scmp.ne.s32.totalorder %s24, %s25
    %p39 = scmp.eq.s32.totalorder %s17, 1
    %p40 = por %p38, %p39
    %p42 = scmp.ne.s32.totalorder %s25, %s41
    %p43 = scmp.eq.s32.totalorder %s17, 0
    %p44 = por %p42, %p43
    %s46 = sadd.s32 %s45, 1
    %p49 = scmp.eq.s32.totalorder %s11, 1
    %p50 = scmp.ne.s32.totalorder %s45, %s47
    %p51 = scmp.eq.s32.totalorder %s11, 0
    %p52 = por %p50, %p51
    %p53 = scmp.ne.s32.totalorder %s45, %s47
    %p54 = scmp.eq.s32.totalorder %s16, 1
    %p55 = por %p53, %p54
    %p56 = scmp.ne.s32.totalorder %s47, %s48
    %p57 = scmp.eq.s32.totalorder %s16, 0
    %p58 = por %p56, %p57
    %p59 = scmp.ne.s32.totalorder %s47, %s48
    %p60 = scmp.eq.s32.totalorder %s17, 1
    %p61 = por %p59, %p60
    %p63 = scmp.ne.s32.totalorder %s48, %s62
    %p64 = scmp.eq.s32.totalorder %s17, 0
    %p65 = por %p63, %p64
    %s67 = sadd.s32 %s66, 1
    %p70 = scmp.eq.s32.totalorder %s11, 1
    %p71 = scmp.ne.s32.totalorder %s66, %s68
    %p72 = scmp.eq.s32.totalorder %s11, 0
    %p73 = por %p71, %p72
    %p74 = scmp.ne.s32.totalorder %s66, %s68
    %p75 = scmp.eq.s32.totalorder %s16, 1
    %p76 = por %p74, %p75
    %p77 = scmp.ne.s32.totalorder %s68, %s69
    %p78 = scmp.eq.s32.totalorder %s16, 0
    %p79 = por %p77, %p78
    %p80 = scmp.ne.s32.totalorder %s68, %s69
    %p81 = scmp.eq.s32.totalorder %s17, 1
    %p82 = por %p80, %p81
    %p84 = scmp.ne.s32.totalorder %s69, %s83
    %p85 = scmp.eq.s32.totalorder %s17, 0
    %p86 = por %p84, %p85
    %s87 = ssub.s32 %s11, %s18
    %p88 = scmp.eq.s32.totalorder %s87, 0
    %s90 = sadd.s32 %s89, 1
    %s91 = scalar_select %p88, %s89, %s90
    %p94 = pneg %p88
    %p95 = scmp.eq.s32.totalorder %s11, 1
    %p96 = por %p94, %p95
    %p97 = scmp.ne.s32.totalorder %s89, %s92
    %p98 = scmp.eq.s32.totalorder %s11, 0
    %p99 = por %p97, %p98
    %p100 = scmp.ne.s32.totalorder %s89, %s92
    %p101 = scmp.eq.s32.totalorder %s16, 1
    %p102 = por %p100, %p101
    %p103 = scmp.ne.s32.totalorder %s92, %s93
    %p104 = scmp.eq.s32.totalorder %s16, 0
    %p105 = por %p103, %p104
    %p106 = scmp.ne.s32.totalorder %s92, %s93
    %p107 = scmp.eq.s32.totalorder %s17, 1
    %p108 = por %p106, %p107
    %p110 = scmp.ne.s32.totalorder %s93, %s109
    %p111 = scmp.eq.s32.totalorder %s17, 0
    %p112 = por %p110, %p111
    %s113 = ssub.s32 %s11, %s18
    %p114 = scmp.eq.s32.totalorder %s113, 0
    %s116 = sadd.s32 %s115, 1
    %s117 = scalar_select %p114, %s115, %s116
    %p120 = pneg %p114
    %p121 = scmp.eq.s32.totalorder %s11, 1
    %p122 = por %p120, %p121
    %p123 = scmp.ne.s32.totalorder %s115, %s118
    %p124 = scmp.eq.s32.totalorder %s11, 0
    %p125 = por %p123, %p124
    %p126 = scmp.ne.s32.totalorder %s115, %s118
    %p127 = scmp.eq.s32.totalorder %s16, 1
    %p128 = por %p126, %p127
    %p129 = scmp.ne.s32.totalorder %s118, %s119
    %p130 = scmp.eq.s32.totalorder %s16, 0
    %p131 = por %p129, %p130
    %p132 = scmp.ne.s32.totalorder %s118, %s119
    %p133 = scmp.eq.s32.totalorder %s17, 1
    %p134 = por %p132, %p133
    %p136 = scmp.ne.s32.totalorder %s119, %s135
    %p137 = scmp.eq.s32.totalorder %s17, 0
    %p138 = por %p136, %p137
    %p139 = scmp.le.s32.totalorder 1, %s11
    %p140 = scmp.lt.s32.totalorder %s11, 3
    %p141 = pnand %p139, %p140
    %p142 = pneg %p141
    // Predicated region
    $region9: #{preact_block_forward.4} parent=5 // pred_check
      _
    $region10: #{preact_block_forward.4} parent=5 // pred_check_branch
      %144 = sbr.rel (%p141) target = $region12
    $region11: #{preact_block_forward.4} parent=5 // pred_region
      %s145 = ssub.s32 %s11, 1
      // Predicated region
      $region13: #{preact_block_forward.4} parent=11 // pred_check
        %p146 = pneg %p58
      $region14: #{preact_block_forward.4} parent=11 // pred_check_branch
        %148 = sbr.rel (%p146) target = $region16
      $region15: #{preact_block_forward.4} parent=11 // pred_region
        _
      $region16: #{preact_block_forward.4} parent=11 // pred_fallthru
        _
      // Predicated region
      $region17: #{preact_block_forward.4} parent=11 // pred_check
        %p149 = pneg %p79
      $region18: #{preact_block_forward.4} parent=11 // pred_check_branch
        %151 = sbr.rel (%p149) target = $region20
      $region19: #{preact_block_forward.4} parent=11 // pred_region
        _
      $region20: #{preact_block_forward.4} parent=11 // pred_fallthru
        _
    $region12: #{preact_block_forward.4} parent=5 // pred_fallthru
      _
    %p152 = scmp.lt.s32.totalorder %s11, 2
    // Predicated region
    $region21: #{preact_block_forward.4} parent=5 // pred_check
      %p153 = pneg %p152
    $region22: #{preact_block_forward.4} parent=5 // pred_check_branch
      %155 = sbr.rel (%p153) target = $region24
    $region23: #{preact_block_forward.4} parent=5 // pred_region
      // Predicated region
      $region25: #{preact_block_forward.4} parent=23 // pred_check
        %p156 = pneg %p31
      $region26: #{preact_block_forward.4} parent=23 // pred_check_branch
        %158 = sbr.rel (%p156) target = $region28
      $region27: #{preact_block_forward.4} parent=23 // pred_region
        %p159 = scmp.lt.s32.totalorder %s11, 1
        %s160 = scalar_select %p159, %s11, 1
        %s161 = smul.addr %s160, 43
        %s162 = smul.addr %s161, 8
        %s163 = scalar_lea.vmem %s0, %s162
      $region28: #{preact_block_forward.4} parent=23 // pred_fallthru
        _
    $region24: #{preact_block_forward.4} parent=5 // pred_fallthru
      _
    %p164 = scmp.le.s32.totalorder 1, %s11
    %p165 = scmp.lt.s32.totalorder %s11, 3
    %p166 = pnand %p164, %p165
    %p167 = pneg %p166
    // Predicated region
    $region29: #{preact_block_forward.4} parent=5 // pred_check
      _
    $region30: #{preact_block_forward.4} parent=5 // pred_check_branch
      %169 = sbr.rel (%p166) target = $region32
    $region31: #{preact_block_forward.4} parent=5 // pred_region
      %s170 = ssub.s32 %s11, 1
      %p171 = scmp.lt.s32.totalorder %s16, 1
      %s172 = scalar_select %p171, %s16, 1
      %s173 = smul.addr %s172, 43
      %s174 = smul.addr %s173, 8
      %s175 = scalar_lea.vmem %s0, %s174
      %p176 = pneg %p37
      %p177 = pneg %p34
      %p178 = pneg %p58
      %p179 = pneg %p55
      %p180 = pneg %p79
      %p181 = pneg %p76
      %p182 = pneg %p105
      %p183 = pneg %p102
      %p184 = scmp.lt.s32.totalorder %s16, 1
      %s185 = scalar_select %p184, %s16, 1
      %s186 = smul.addr %s185, 36
      %s187 = smul.addr %s186, 8
      %s188 = scalar_lea.vmem %s3, %s187
      %p189 = pneg %p131
      %p190 = pneg %p128
      %p191 = scmp.lt.s32.totalorder %s16, 1
      %s192 = scalar_select %p191, %s16, 1
      %s193 = scalar_lea.vmem %s4, %s192
      %p194 = scmp.lt.s32.totalorder %s16, 1
      %s195 = scalar_select %p194, %s16, 1
      %s196 = smul.addr %s195, 43
      %s197 = smul.addr %s196, 8
      %s198 = scalar_lea.vmem %s0, %s197
      %p199 = scmp.lt.s32.totalorder %s16, 1
      %s200 = scalar_select %p199, %s16, 1
      %s201 = smul.addr %s200, 36
      %s202 = smul.addr %s201, 8
      %s203 = scalar_lea.vmem %s3, %s202
      %p204 = scmp.lt.s32.totalorder %s16, 1
      %s205 = scalar_select %p204, %s16, 1
      %s206 = scalar_lea.vmem %s4, %s205
      %v208 = vld [vmem:[%s198] sm:$0xff]
      %v209 = vld [vmem:[%s198 + $0x8] sm:$0xff]
      %v210 = vld [vmem:[%s198 + $0x10] sm:$0xff]
      %v211 = vld [vmem:[%s198 + $0x18] sm:$0xff]
      %v212 = vld [vmem:[%s198 + $0x20] sm:$0xff]
      %v213 = vld [vmem:[%s198 + $0x28] sm:$0xff]
      %v214 = vld [vmem:[%s198 + $0x30] sm:$0xff]
      %v215 = vld [vmem:[%s198 + $0x38] sm:$0xff]
      %v216 = vld [vmem:[%s198 + $0x40] sm:$0xff]
      %v217 = vld [vmem:[%s198 + $0x48] sm:$0xff]
      %v218 = vld [vmem:[%s198 + $0x50] sm:$0xff]
      %v219 = vld [vmem:[%s198 + $0x58] sm:$0xff]
      %v220 = vld [vmem:[%s198 + $0x60] sm:$0xff]
      %v221 = vld [vmem:[%s198 + $0x68] sm:$0xff]
      %v222 = vld [vmem:[%s198 + $0x70] sm:$0xff]
      %v223 = vld [vmem:[%s198 + $0x78] sm:$0xff]
      %v224 = vld [vmem:[%s198 + $0x80] sm:$0xff]
      %v225 = vld [vmem:[%s198 + $0x88] sm:$0xff]
      %v226 = vld [vmem:[%s198 + $0x90] sm:$0xff]
      %v227 = vld [vmem:[%s198 + $0x98] sm:$0xff]
      %v228 = vld [vmem:[%s198 + $0xa0] sm:$0xff]
      %v229 = vld [vmem:[%s198 + $0xa8] sm:$0xff]
      %v230 = vld [vmem:[%s198 + $0xb0] sm:$0xff]
      %v231 = vld [vmem:[%s198 + $0xb8] sm:$0xff]
      %v232 = vld [vmem:[%s198 + $0xc0] sm:$0xff]
      %v233 = vld [vmem:[%s198 + $0xc8] sm:$0xff]
      %v234 = vld [vmem:[%s198 + $0xd0] sm:$0xff]
      %v235 = vld [vmem:[%s198 + $0xd8] sm:$0xff]
      %v236 = vld [vmem:[%s198 + $0xe0] sm:$0xff]
      %v237 = vld [vmem:[%s198 + $0xe8] sm:$0xff]
      %v238 = vld [vmem:[%s198 + $0xf0] sm:$0xff]
      %v239 = vld [vmem:[%s198 + $0xf8] sm:$0xff]
      %v240 = vld [vmem:[%s198 + $0x100] sm:$0xff]
      %v241 = vld [vmem:[%s198 + $0x108] sm:$0xff]
      %v242 = vld [vmem:[%s198 + $0x110] sm:$0xff]
      %v243 = vld [vmem:[%s198 + $0x118] sm:$0xff]
      %v244 = vpack.c.bf16 %v208, %v208
      %v245 = vpack.c.bf16 %v209, %v209
      %v246 = vpack.c.bf16 %v210, %v210
      %v247 = vpack.c.bf16 %v211, %v211
      %v248 = vpack.c.bf16 %v212, %v212
      %v249 = vpack.c.bf16 %v213, %v213
      %v250 = vpack.c.bf16 %v214, %v214
      %v251 = vpack.c.bf16 %v215, %v215
      %v252 = vpack.c.bf16 %v216, %v216
      %v253 = vpack.c.bf16 %v217, %v217
      %v254 = vpack.c.bf16 %v218, %v218
      %v255 = vpack.c.bf16 %v219, %v219
      %v256 = vpack.c.bf16 %v220, %v220
      %v257 = vpack.c.bf16 %v221, %v221
      %v258 = vpack.c.bf16 %v222, %v222
      %v259 = vpack.c.bf16 %v223, %v223
      %v260 = vpack.c.bf16 %v224, %v224
      %v261 = vpack.c.bf16 %v225, %v225
      %v262 = vpack.c.bf16 %v226, %v226
      %v263 = vpack.c.bf16 %v227, %v227
      %v264 = vpack.c.bf16 %v228, %v228
      %v265 = vpack.c.bf16 %v229, %v229
      %v266 = vpack.c.bf16 %v230, %v230
      %v267 = vpack.c.bf16 %v231, %v231
      %v268 = vpack.c.bf16 %v232, %v232
      %v269 = vpack.c.bf16 %v233, %v233
      %v270 = vpack.c.bf16 %v234, %v234
      %v271 = vpack.c.bf16 %v235, %v235
      %v272 = vpack.c.bf16 %v236, %v236
      %v273 = vpack.c.bf16 %v237, %v237
      %v274 = vpack.c.bf16 %v238, %v238
      %v275 = vpack.c.bf16 %v239, %v239
      %v276 = vpack.c.bf16 %v240, %v240
      %v277 = vpack.c.bf16 %v241, %v241
      %v278 = vpack.c.bf16 %v242, %v242
      %v279 = vpack.c.bf16 %v243, %v243
      %vm280 = vcmask 519168
      %281 = vst.msk [vmem:[#allocation2] sm:$0xf] %vm280, %v244
      %282 = vst.msk [vmem:[#allocation2 + $0x14] sm:$0xf] %vm280, %v245
      %283 = vst.msk [vmem:[#allocation2 + $0x28] sm:$0xf] %vm280, %v246
      %284 = vst.msk [vmem:[#allocation2 + $0x3c] sm:$0xf] %vm280, %v247
      %285 = vst.msk [vmem:[#allocation2 + $0x50] sm:$0xf] %vm280, %v248
      %286 = vst.msk [vmem:[#allocation2 + $0x64] sm:$0xf] %vm280, %v249
      %287 = vst.msk [vmem:[#allocation2 + $0x78] sm:$0xf] %vm280, %v250
      %288 = vst.msk [vmem:[#allocation2 + $0x8c] sm:$0xf] %vm280, %v251
      %289 = vst.msk [vmem:[#allocation2 + $0xa0] sm:$0xf] %vm280, %v252
      %290 = vst.msk [vmem:[#allocation2 + $0xb4] sm:$0xf] %vm280, %v253
      %291 = vst.msk [vmem:[#allocation2 + $0xc8] sm:$0xf] %vm280, %v254
      %292 = vst.msk [vmem:[#allocation2 + $0xdc] sm:$0xf] %vm280, %v255
      %293 = vst.msk [vmem:[#allocation2 + $0xf0] sm:$0xf] %vm280, %v256
      %294 = vst.msk [vmem:[#allocation2 + $0x104] sm:$0xf] %vm280, %v257
      %295 = vst.msk [vmem:[#allocation2 + $0x118] sm:$0xf] %vm280, %v258
      %296 = vst.msk [vmem:[#allocation2 + $0x12c] sm:$0xf] %vm280, %v259
      %297 = vst.msk [vmem:[#allocation2 + $0x140] sm:$0xf] %vm280, %v260
      %298 = vst.msk [vmem:[#allocation2 + $0x154] sm:$0xf] %vm280, %v261
      %299 = vst.msk [vmem:[#allocation2 + $0x168] sm:$0xf] %vm280, %v262
      %300 = vst.msk [vmem:[#allocation2 + $0x17c] sm:$0xf] %vm280, %v263
      %301 = vst.msk [vmem:[#allocation2 + $0x190] sm:$0xf] %vm280, %v264
      %302 = vst.msk [vmem:[#allocation2 + $0x1a4] sm:$0xf] %vm280, %v265
      %303 = vst.msk [vmem:[#allocation2 + $0x1b8] sm:$0xf] %vm280, %v266
      %304 = vst.msk [vmem:[#allocation2 + $0x1cc] sm:$0xf] %vm280, %v267
      %305 = vst.msk [vmem:[#allocation2 + $0x1e0] sm:$0xf] %vm280, %v268
      %306 = vst.msk [vmem:[#allocation2 + $0x1f4] sm:$0xf] %vm280, %v269
      %307 = vst.msk [vmem:[#allocation2 + $0x208] sm:$0xf] %vm280, %v270
      %308 = vst.msk [vmem:[#allocation2 + $0x21c] sm:$0xf] %vm280, %v271
      %309 = vst.msk [vmem:[#allocation2 + $0x230] sm:$0xf] %vm280, %v272
      %310 = vst.msk [vmem:[#allocation2 + $0x244] sm:$0xf] %vm280, %v273
      %311 = vst.msk [vmem:[#allocation2 + $0x258] sm:$0xf] %vm280, %v274
      %312 = vst.msk [vmem:[#allocation2 + $0x26c] sm:$0xf] %vm280, %v275
      %313 = vst.msk [vmem:[#allocation2 + $0x280] sm:$0xf] %vm280, %v276
      %314 = vst.msk [vmem:[#allocation2 + $0x294] sm:$0xf] %vm280, %v277
      %315 = vst.msk [vmem:[#allocation2 + $0x2a8] sm:$0xf] %vm280, %v278
      %316 = vst.msk [vmem:[#allocation2 + $0x2bc] sm:$0xf] %vm280, %v279
      %v317 = vld [vmem:[%s198 + $0x1] sm:$0xff]
      %v318 = vld [vmem:[%s198 + $0x9] sm:$0xff]
      %v319 = vld [vmem:[%s198 + $0x11] sm:$0xff]
      %v320 = vld [vmem:[%s198 + $0x19] sm:$0xff]
      %v321 = vld [vmem:[%s198 + $0x21] sm:$0xff]
      %v322 = vld [vmem:[%s198 + $0x29] sm:$0xff]
      %v323 = vld [vmem:[%s198 + $0x31] sm:$0xff]
      %v324 = vld [vmem:[%s198 + $0x39] sm:$0xff]
      %v325 = vld [vmem:[%s198 + $0x41] sm:$0xff]
      %v326 = vld [vmem:[%s198 + $0x49] sm:$0xff]
      %v327 = vld [vmem:[%s198 + $0x51] sm:$0xff]
      %v328 = vld [vmem:[%s198 + $0x59] sm:$0xff]
      %v329 = vld [vmem:[%s198 + $0x61] sm:$0xff]
      %v330 = vld [vmem:[%s198 + $0x69] sm:$0xff]
      %v331 = vld [vmem:[%s198 + $0x71] sm:$0xff]
      %v332 = vld [vmem:[%s198 + $0x79] sm:$0xff]
      %v333 = vld [vmem:[%s198 + $0x81] sm:$0xff]
      %v334 = vld [vmem:[%s198 + $0x89] sm:$0xff]
      %v335 = vld [vmem:[%s198 + $0x91] sm:$0xff]
      %v336 = vld [vmem:[%s198 + $0x99] sm:$0xff]
      %v337 = vld [vmem:[%s198 + $0xa1] sm:$0xff]
      %v338 = vld [vmem:[%s198 + $0xa9] sm:$0xff]
      %v339 = vld [vmem:[%s198 + $0xb1] sm:$0xff]
      %v340 = vld [vmem:[%s198 + $0xb9] sm:$0xff]
      %v341 = vld [vmem:[%s198 + $0xc1] sm:$0xff]
      %v342 = vld [vmem:[%s198 + $0xc9] sm:$0xff]
      %v343 = vld [vmem:[%s198 + $0xd1] sm:$0xff]
      %v344 = vld [vmem:[%s198 + $0xd9] sm:$0xff]
      %v345 = vld [vmem:[%s198 + $0xe1] sm:$0xff]
      %v346 = vld [vmem:[%s198 + $0xe9] sm:$0xff]
      %v347 = vld [vmem:[%s198 + $0xf1] sm:$0xff]
      %v348 = vld [vmem:[%s198 + $0xf9] sm:$0xff]
      %v349 = vld [vmem:[%s198 + $0x101] sm:$0xff]
      %v350 = vld [vmem:[%s198 + $0x109] sm:$0xff]
      %v351 = vld [vmem:[%s198 + $0x111] sm:$0xff]
      %v352 = vld [vmem:[%s198 + $0x119] sm:$0xff]
      %v353 = vpack.c.bf16 %v317, %v317
      %v354 = vpack.c.bf16 %v318, %v318
      %v355 = vpack.c.bf16 %v319, %v319
      %v356 = vpack.c.bf16 %v320, %v320
      %v357 = vpack.c.bf16 %v321, %v321
      %v358 = vpack.c.bf16 %v322, %v322
      %v359 = vpack.c.bf16 %v323, %v323
      %v360 = vpack.c.bf16 %v324, %v324
      %v361 = vpack.c.bf16 %v325, %v325
      %v362 = vpack.c.bf16 %v326, %v326
      %v363 = vpack.c.bf16 %v327, %v327
      %v364 = vpack.c.bf16 %v328, %v328
      %v365 = vpack.c.bf16 %v329, %v329
      %v366 = vpack.c.bf16 %v330, %v330
      %v367 = vpack.c.bf16 %v331, %v331
      %v368 = vpack.c.bf16 %v332, %v332
      %v369 = vpack.c.bf16 %v333, %v333
      %v370 = vpack.c.bf16 %v334, %v334
      %v371 = vpack.c.bf16 %v335, %v335
      %v372 = vpack.c.bf16 %v336, %v336
      %v373 = vpack.c.bf16 %v337, %v337
      %v374 = vpack.c.bf16 %v338, %v338
      %v375 = vpack.c.bf16 %v339, %v339
      %v376 = vpack.c.bf16 %v340, %v340
      %v377 = vpack.c.bf16 %v341, %v341
      %v378 = vpack.c.bf16 %v342, %v342
      %v379 = vpack.c.bf16 %v343, %v343
      %v380 = vpack.c.bf16 %v344, %v344
      %v381 = vpack.c.bf16 %v345, %v345
      %v382 = vpack.c.bf16 %v346, %v346
      %v383 = vpack.c.bf16 %v347, %v347
      %v384 = vpack.c.bf16 %v348, %v348
      %v385 = vpack.c.bf16 %v349, %v349
      %v386 = vpack.c.bf16 %v350, %v350
      %v387 = vpack.c.bf16 %v351, %v351
      %v388 = vpack.c.bf16 %v352, %v352
      %425 = vrot.lane.b32.xlu0 %v353, 64
      %v426 = vpop.permute.xlu0 %425
      %427 = vrot.lane.b32.xlu0 %v354, 64
      %v428 = vpop.permute.xlu0 %427
      %429 = vrot.lane.b32.xlu0 %v355, 64
      %v430 = vpop.permute.xlu0 %429
      %431 = vrot.lane.b32.xlu0 %v356, 64
      %v432 = vpop.permute.xlu0 %431
      %433 = vrot.lane.b32.xlu0 %v357, 64
      %v434 = vpop.permute.xlu0 %433
      %435 = vrot.lane.b32.xlu0 %v358, 64
      %v436 = vpop.permute.xlu0 %435
      %437 = vrot.lane.b32.xlu0 %v359, 64
      %v438 = vpop.permute.xlu0 %437
      %439 = vrot.lane.b32.xlu0 %v360, 64
      %v440 = vpop.permute.xlu0 %439
      %441 = vrot.lane.b32.xlu0 %v361, 64
      %v442 = vpop.permute.xlu0 %441
      %443 = vrot.lane.b32.xlu0 %v362, 64
      %v444 = vpop.permute.xlu0 %443
      %445 = vrot.lane.b32.xlu0 %v363, 64
      %v446 = vpop.permute.xlu0 %445
      %447 = vrot.lane.b32.xlu0 %v364, 64
      %v448 = vpop.permute.xlu0 %447
      %449 = vrot.lane.b32.xlu0 %v365, 64
      %v450 = vpop.permute.xlu0 %449
      %451 = vrot.lane.b32.xlu0 %v366, 64
      %v452 = vpop.permute.xlu0 %451
      %453 = vrot.lane.b32.xlu0 %v367, 64
      %v454 = vpop.permute.xlu0 %453
      %455 = vrot.lane.b32.xlu0 %v368, 64
      %v456 = vpop.permute.xlu0 %455
      %457 = vrot.lane.b32.xlu0 %v369, 64
      %v458 = vpop.permute.xlu0 %457
      %459 = vrot.lane.b32.xlu0 %v370, 64
      %v460 = vpop.permute.xlu0 %459
      %461 = vrot.lane.b32.xlu0 %v371, 64
      %v462 = vpop.permute.xlu0 %461
      %463 = vrot.lane.b32.xlu0 %v372, 64
      %v464 = vpop.permute.xlu0 %463
      %465 = vrot.lane.b32.xlu0 %v373, 64
      %v466 = vpop.permute.xlu0 %465
      %467 = vrot.lane.b32.xlu0 %v374, 64
      %v468 = vpop.permute.xlu0 %467
      %469 = vrot.lane.b32.xlu0 %v375, 64
      %v470 = vpop.permute.xlu0 %469
      %471 = vrot.lane.b32.xlu0 %v376, 64
      %v472 = vpop.permute.xlu0 %471
      %473 = vrot.lane.b32.xlu0 %v377, 64
      %v474 = vpop.permute.xlu0 %473
      %475 = vrot.lane.b32.xlu0 %v378, 64
      %v476 = vpop.permute.xlu0 %475
      %477 = vrot.lane.b32.xlu0 %v379, 64
      %v478 = vpop.permute.xlu0 %477
      %479 = vrot.lane.b32.xlu0 %v380, 64
      %v480 = vpop.permute.xlu0 %479
      %481 = vrot.lane.b32.xlu0 %v381, 64
      %v482 = vpop.permute.xlu0 %481
      %483 = vrot.lane.b32.xlu0 %v382, 64
      %v484 = vpop.permute.xlu0 %483
      %485 = vrot.lane.b32.xlu0 %v383, 64
      %v486 = vpop.permute.xlu0 %485
      %487 = vrot.lane.b32.xlu0 %v384, 64
      %v488 = vpop.permute.xlu0 %487
      %489 = vrot.lane.b32.xlu0 %v385, 64
      %v490 = vpop.permute.xlu0 %489
      %491 = vrot.lane.b32.xlu0 %v386, 64
      %v492 = vpop.permute.xlu0 %491
      %493 = vrot.lane.b32.xlu0 %v387, 64
      %v494 = vpop.permute.xlu0 %493
      %495 = vrot.lane.b32.xlu0 %v388, 64
      %v496 = vpop.permute.xlu0 %495
      %vm533 = vcmask 1043968
      %534 = vst.msk [vmem:[#allocation2] sm:$0xf] %vm533, %v426
      %535 = vst.msk [vmem:[#allocation2 + $0x14] sm:$0xf] %vm533, %v428
      %536 = vst.msk [vmem:[#allocation2 + $0x28] sm:$0xf] %vm533, %v430
      %537 = vst.msk [vmem:[#allocation2 + $0x3c] sm:$0xf] %vm533, %v432
      %538 = vst.msk [vmem:[#allocation2 + $0x50] sm:$0xf] %vm533, %v434
      %539 = vst.msk [vmem:[#allocation2 + $0x64] sm:$0xf] %vm533, %v436
      %540 = vst.msk [vmem:[#allocation2 + $0x78] sm:$0xf] %vm533, %v438
      %541 = vst.msk [vmem:[#allocation2 + $0x8c] sm:$0xf] %vm533, %v440
      %542 = vst.msk [vmem:[#allocation2 + $0xa0] sm:$0xf] %vm533, %v442
      %543 = vst.msk [vmem:[#allocation2 + $0xb4] sm:$0xf] %vm533, %v444
      %544 = vst.msk [vmem:[#allocation2 + $0xc8] sm:$0xf] %vm533, %v446
      %545 = vst.msk [vmem:[#allocation2 + $0xdc] sm:$0xf] %vm533, %v448
      %546 = vst.msk [vmem:[#allocation2 + $0xf0] sm:$0xf] %vm533, %v450
      %547 = vst.msk [vmem:[#allocation2 + $0x104] sm:$0xf] %vm533, %v452
      %548 = vst.msk [vmem:[#allocation2 + $0x118] sm:$0xf] %vm533, %v454
      %549 = vst.msk [vmem:[#allocation2 + $0x12c] sm:$0xf] %vm533, %v456
      %550 = vst.msk [vmem:[#allocation2 + $0x140] sm:$0xf] %vm533, %v458
      %551 = vst.msk [vmem:[#allocation2 + $0x154] sm:$0xf] %vm533, %v460
      %552 = vst.msk [vmem:[#allocation2 + $0x168] sm:$0xf] %vm533, %v462
      %553 = vst.msk [vmem:[#allocation2 + $0x17c] sm:$0xf] %vm533, %v464
      %554 = vst.msk [vmem:[#allocation2 + $0x190] sm:$0xf] %vm533, %v466
      %555 = vst.msk [vmem:[#allocation2 + $0x1a4] sm:$0xf] %vm533, %v468
      %556 = vst.msk [vmem:[#allocation2 + $0x1b8] sm:$0xf] %vm533, %v470
      %557 = vst.msk [vmem:[#allocation2 + $0x1cc] sm:$0xf] %vm533, %v472
      %558 = vst.msk [vmem:[#allocation2 + $0x1e0] sm:$0xf] %vm533, %v474
      %559 = vst.msk [vmem:[#allocation2 + $0x1f4] sm:$0xf] %vm533, %v476
      %560 = vst.msk [vmem:[#allocation2 + $0x208] sm:$0xf] %vm533, %v478
      %561 = vst.msk [vmem:[#allocation2 + $0x21c] sm:$0xf] %vm533, %v480
      %562 = vst.msk [vmem:[#allocation2 + $0x230] sm:$0xf] %vm533, %v482
      %563 = vst.msk [vmem:[#allocation2 + $0x244] sm:$0xf] %vm533, %v484
      %564 = vst.msk [vmem:[#allocation2 + $0x258] sm:$0xf] %vm533, %v486
      %565 = vst.msk [vmem:[#allocation2 + $0x26c] sm:$0xf] %vm533, %v488
      %566 = vst.msk [vmem:[#allocation2 + $0x280] sm:$0xf] %vm533, %v490
      %567 = vst.msk [vmem:[#allocation2 + $0x294] sm:$0xf] %vm533, %v492
      %568 = vst.msk [vmem:[#allocation2 + $0x2a8] sm:$0xf] %vm533, %v494
      %569 = vst.msk [vmem:[#allocation2 + $0x2bc] sm:$0xf] %vm533, %v496
      %v570 = vld [vmem:[%s198 + $0x2] sm:$0xff]
      %v571 = vld [vmem:[%s198 + $0xa] sm:$0xff]
      %v572 = vld [vmem:[%s198 + $0x12] sm:$0xff]
      %v573 = vld [vmem:[%s198 + $0x1a] sm:$0xff]
      %v574 = vld [vmem:[%s198 + $0x22] sm:$0xff]
      %v575 = vld [vmem:[%s198 + $0x2a] sm:$0xff]
      %v576 = vld [vmem:[%s198 + $0x32] sm:$0xff]
      %v577 = vld [vmem:[%s198 + $0x3a] sm:$0xff]
      %v578 = vld [vmem:[%s198 + $0x42] sm:$0xff]
      %v579 = vld [vmem:[%s198 + $0x4a] sm:$0xff]
      %v580 = vld [vmem:[%s198 + $0x52] sm:$0xff]
      %v581 = vld [vmem:[%s198 + $0x5a] sm:$0xff]
      %v582 = vld [vmem:[%s198 + $0x62] sm:$0xff]
      %v583 = vld [vmem:[%s198 + $0x6a] sm:$0xff]
      %v584 = vld [vmem:[%s198 + $0x72] sm:$0xff]
      %v585 = vld [vmem:[%s198 + $0x7a] sm:$0xff]
      %v586 = vld [vmem:[%s198 + $0x82] sm:$0xff]
      %v587 = vld [vmem:[%s198 + $0x8a] sm:$0xff]
      %v588 = vld [vmem:[%s198 + $0x92] sm:$0xff]
      %v589 = vld [vmem:[%s198 + $0x9a] sm:$0xff]
      %v590 = vld [vmem:[%s198 + $0xa2] sm:$0xff]
      %v591 = vld [vmem:[%s198 + $0xaa] sm:$0xff]
      %v592 = vld [vmem:[%s198 + $0xb2] sm:$0xff]
      %v593 = vld [vmem:[%s198 + $0xba] sm:$0xff]
      %v594 = vld [vmem:[%s198 + $0xc2] sm:$0xff]
      %v595 = vld [vmem:[%s198 + $0xca] sm:$0xff]
      %v596 = vld [vmem:[%s198 + $0xd2] sm:$0xff]
      %v597 = vld [vmem:[%s198 + $0xda] sm:$0xff]
      %v598 = vld [vmem:[%s198 + $0xe2] sm:$0xff]
      %v599 = vld [vmem:[%s198 + $0xea] sm:$0xff]
      %v600 = vld [vmem:[%s198 + $0xf2] sm:$0xff]
      %v601 = vld [vmem:[%s198 + $0xfa] sm:$0xff]
      %v602 = vld [vmem:[%s198 + $0x102] sm:$0xff]
      %v603 = vld [vmem:[%s198 + $0x10a] sm:$0xff]
      %v604 = vld [vmem:[%s198 + $0x112] sm:$0xff]
      %v605 = vld [vmem:[%s198 + $0x11a] sm:$0xff]
      %v606 = vpack.c.bf16 %v570, %v570
      %v607 = vpack.c.bf16 %v571, %v571
      %v608 = vpack.c.bf16 %v572, %v572
      %v609 = vpack.c.bf16 %v573, %v573
      %v610 = vpack.c.bf16 %v574, %v574
      %v611 = vpack.c.bf16 %v575, %v575
      %v612 = vpack.c.bf16 %v576, %v576
      %v613 = vpack.c.bf16 %v577, %v577
      %v614 = vpack.c.bf16 %v578, %v578
      %v615 = vpack.c.bf16 %v579, %v579
      %v616 = vpack.c.bf16 %v580, %v580
      %v617 = vpack.c.bf16 %v581, %v581
      %v618 = vpack.c.bf16 %v582, %v582
      %v619 = vpack.c.bf16 %v583, %v583
      %v620 = vpack.c.bf16 %v584, %v584
      %v621 = vpack.c.bf16 %v585, %v585
      %v622 = vpack.c.bf16 %v586, %v586
      %v623 = vpack.c.bf16 %v587, %v587
      %v624 = vpack.c.bf16 %v588, %v588
      %v625 = vpack.c.bf16 %v589, %v589
      %v626 = vpack.c.bf16 %v590, %v590
      %v627 = vpack.c.bf16 %v591, %v591
      %v628 = vpack.c.bf16 %v592, %v592
      %v629 = vpack.c.bf16 %v593, %v593
      %v630 = vpack.c.bf16 %v594, %v594
      %v631 = vpack.c.bf16 %v595, %v595
      %v632 = vpack.c.bf16 %v596, %v596
      %v633 = vpack.c.bf16 %v597, %v597
      %v634 = vpack.c.bf16 %v598, %v598
      %v635 = vpack.c.bf16 %v599, %v599
      %v636 = vpack.c.bf16 %v600, %v600
      %v637 = vpack.c.bf16 %v601, %v601
      %v638 = vpack.c.bf16 %v602, %v602
      %v639 = vpack.c.bf16 %v603, %v603
      %v640 = vpack.c.bf16 %v604, %v604
      %v641 = vpack.c.bf16 %v605, %v605
      %642 = vst.msk [vmem:[#allocation2 + $0x4] sm:$0xf] %vm280, %v606
      %643 = vst.msk [vmem:[#allocation2 + $0x18] sm:$0xf] %vm280, %v607
      %644 = vst.msk [vmem:[#allocation2 + $0x2c] sm:$0xf] %vm280, %v608
      %645 = vst.msk [vmem:[#allocation2 + $0x40] sm:$0xf] %vm280, %v609
      %646 = vst.msk [vmem:[#allocation2 + $0x54] sm:$0xf] %vm280, %v610
      %647 = vst.msk [vmem:[#allocation2 + $0x68] sm:$0xf] %vm280, %v611
      %648 = vst.msk [vmem:[#allocation2 + $0x7c] sm:$0xf] %vm280, %v612
      %649 = vst.msk [vmem:[#allocation2 + $0x90] sm:$0xf] %vm280, %v613
      %650 = vst.msk [vmem:[#allocation2 + $0xa4] sm:$0xf] %vm280, %v614
      %651 = vst.msk [vmem:[#allocation2 + $0xb8] sm:$0xf] %vm280, %v615
      %652 = vst.msk [vmem:[#allocation2 + $0xcc] sm:$0xf] %vm280, %v616
      %653 = vst.msk [vmem:[#allocation2 + $0xe0] sm:$0xf] %vm280, %v617
      %654 = vst.msk [vmem:[#allocation2 + $0xf4] sm:$0xf] %vm280, %v618
      %655 = vst.msk [vmem:[#allocation2 + $0x108] sm:$0xf] %vm280, %v619
      %656 = vst.msk [vmem:[#allocation2 + $0x11c] sm:$0xf] %vm280, %v620
      %657 = vst.msk [vmem:[#allocation2 + $0x130] sm:$0xf] %vm280, %v621
      %658 = vst.msk [vmem:[#allocation2 + $0x144] sm:$0xf] %vm280, %v622
      %659 = vst.msk [vmem:[#allocation2 + $0x158] sm:$0xf] %vm280, %v623
      %660 = vst.msk [vmem:[#allocation2 + $0x16c] sm:$0xf] %vm280, %v624
      %661 = vst.msk [vmem:[#allocation2 + $0x180] sm:$0xf] %vm280, %v625
      %662 = vst.msk [vmem:[#allocation2 + $0x194] sm:$0xf] %vm280, %v626
      %663 = vst.msk [vmem:[#allocation2 + $0x1a8] sm:$0xf] %vm280, %v627
      %664 = vst.msk [vmem:[#allocation2 + $0x1bc] sm:$0xf] %vm280, %v628
      %665 = vst.msk [vmem:[#allocation2 + $0x1d0] sm:$0xf] %vm280, %v629
      %666 = vst.msk [vmem:[#allocation2 + $0x1e4] sm:$0xf] %vm280, %v630
      %667 = vst.msk [vmem:[#allocation2 + $0x1f8] sm:$0xf] %vm280, %v631
      %668 = vst.msk [vmem:[#allocation2 + $0x20c] sm:$0xf] %vm280, %v632
      %669 = vst.msk [vmem:[#allocation2 + $0x220] sm:$0xf] %vm280, %v633
      %670 = vst.msk [vmem:[#allocation2 + $0x234] sm:$0xf] %vm280, %v634
      %671 = vst.msk [vmem:[#allocation2 + $0x248] sm:$0xf] %vm280, %v635
      %672 = vst.msk [vmem:[#allocation2 + $0x25c] sm:$0xf] %vm280, %v636
      %673 = vst.msk [vmem:[#allocation2 + $0x270] sm:$0xf] %vm280, %v637
      %674 = vst.msk [vmem:[#allocation2 + $0x284] sm:$0xf] %vm280, %v638
      %675 = vst.msk [vmem:[#allocation2 + $0x298] sm:$0xf] %vm280, %v639
      %676 = vst.msk [vmem:[#allocation2 + $0x2ac] sm:$0xf] %vm280, %v640
      %677 = vst.msk [vmem:[#allocation2 + $0x2c0] sm:$0xf] %vm280, %v641
      %v678 = vld [vmem:[%s198 + $0x12] sm:$0xff]
      %v679 = vld [vmem:[%s198 + $0x1a] sm:$0xff]
      %v680 = vld [vmem:[%s198 + $0x22] sm:$0xff]
      %v681 = vld [vmem:[%s198 + $0x2a] sm:$0xff]
      %v682 = vld [vmem:[%s198 + $0x32] sm:$0xff]
      %v683 = vld [vmem:[%s198 + $0x3a] sm:$0xff]
      %v684 = vld [vmem:[%s198 + $0x42] sm:$0xff]
      %v685 = vld [vmem:[%s198 + $0x4a] sm:$0xff]
      %v686 = vld [vmem:[%s198 + $0x52] sm:$0xff]
      %v687 = vld [vmem:[%s198 + $0x5a] sm:$0xff]
      %v688 = vld [vmem:[%s198 + $0x62] sm:$0xff]
      %v689 = vld [vmem:[%s198 + $0x6a] sm:$0xff]
      %v690 = vld [vmem:[%s198 + $0x72] sm:$0xff]
      %v691 = vld [vmem:[%s198 + $0x7a] sm:$0xff]
      %v692 = vld [vmem:[%s198 + $0x82] sm:$0xff]
      %v693 = vld [vmem:[%s198 + $0x8a] sm:$0xff]
      %v694 = vld [vmem:[%s198 + $0x92] sm:$0xff]
      %v695 = vld [vmem:[%s198 + $0x9a] sm:$0xff]
      %v696 = vld [vmem:[%s198 + $0xa2] sm:$0xff]
      %v697 = vld [vmem:[%s198 + $0xaa] sm:$0xff]
      %v698 = vld [vmem:[%s198 + $0xb2] sm:$0xff]
      %v699 = vld [vmem:[%s198 + $0xba] sm:$0xff]
      %v700 = vld [vmem:[%s198 + $0xc2] sm:$0xff]
      %v701 = vld [vmem:[%s198 + $0xca] sm:$0xff]
      %v702 = vld [vmem:[%s198 + $0xd2] sm:$0xff]
      %v703 = vld [vmem:[%s198 + $0xda] sm:$0xff]
      %v704 = vld [vmem:[%s198 + $0xe2] sm:$0xff]
      %v705 = vld [vmem:[%s198 + $0xea] sm:$0xff]
      %v706 = vld [vmem:[%s198 + $0xf2] sm:$0xff]
      %v707 = vld [vmem:[%s198 + $0xfa] sm:$0xff]
      %v708 = vld [vmem:[%s198 + $0x102] sm:$0xff]
      %v709 = vld [vmem:[%s198 + $0x10a] sm:$0xff]
      %v710 = vld [vmem:[%s198 + $0x112] sm:$0xff]
      %v711 = vld [vmem:[%s198 + $0x11a] sm:$0xff]
      %v712 = vld [vmem:[%s198 + $0x122] sm:$0xff]
      %v713 = vld [vmem:[%s198 + $0x12a] sm:$0xff]
      %v714 = vpack.c.bf16 %v678, %v678
      %v715 = vpack.c.bf16 %v679, %v679
      %v716 = vpack.c.bf16 %v680, %v680
      %v717 = vpack.c.bf16 %v681, %v681
      %v718 = vpack.c.bf16 %v682, %v682
      %v719 = vpack.c.bf16 %v683, %v683
      %v720 = vpack.c.bf16 %v684, %v684
      %v721 = vpack.c.bf16 %v685, %v685
      %v722 = vpack.c.bf16 %v686, %v686
      %v723 = vpack.c.bf16 %v687, %v687
      %v724 = vpack.c.bf16 %v688, %v688
      %v725 = vpack.c.bf16 %v689, %v689
      %v726 = vpack.c.bf16 %v690, %v690
      %v727 = vpack.c.bf16 %v691, %v691
      %v728 = vpack.c.bf16 %v692, %v692
      %v729 = vpack.c.bf16 %v693, %v693
      %v730 = vpack.c.bf16 %v694, %v694
      %v731 = vpack.c.bf16 %v695, %v695
      %v732 = vpack.c.bf16 %v696, %v696
      %v733 = vpack.c.bf16 %v697, %v697
      %v734 = vpack.c.bf16 %v698, %v698
      %v735 = vpack.c.bf16 %v699, %v699
      %v736 = vpack.c.bf16 %v700, %v700
      %v737 = vpack.c.bf16 %v701, %v701
      %v738 = vpack.c.bf16 %v702, %v702
      %v739 = vpack.c.bf16 %v703, %v703
      %v740 = vpack.c.bf16 %v704, %v704
      %v741 = vpack.c.bf16 %v705, %v705
      %v742 = vpack.c.bf16 %v706, %v706
      %v743 = vpack.c.bf16 %v707, %v707
      %v744 = vpack.c.bf16 %v708, %v708
      %v745 = vpack.c.bf16 %v709, %v709
      %v746 = vpack.c.bf16 %v710, %v710
      %v747 = vpack.c.bf16 %v711, %v711
      %v748 = vpack.c.bf16 %v712, %v712
      %v749 = vpack.c.bf16 %v713, %v713
      %786 = vrot.lane.b32.xlu0 %v714, 64
      %v787 = vpop.permute.xlu0 %786
      %788 = vrot.lane.b32.xlu0 %v715, 64
      %v789 = vpop.permute.xlu0 %788
      %790 = vrot.lane.b32.xlu0 %v716, 64
      %v791 = vpop.permute.xlu0 %790
      %792 = vrot.lane.b32.xlu0 %v717, 64
      %v793 = vpop.permute.xlu0 %792
      %794 = vrot.lane.b32.xlu0 %v718, 64
      %v795 = vpop.permute.xlu0 %794
      %796 = vrot.lane.b32.xlu0 %v719, 64
      %v797 = vpop.permute.xlu0 %796
      %798 = vrot.lane.b32.xlu0 %v720, 64
      %v799 = vpop.permute.xlu0 %798
      %800 = vrot.lane.b32.xlu0 %v721, 64
      %v801 = vpop.permute.xlu0 %800
      %802 = vrot.lane.b32.xlu0 %v722, 64
      %v803 = vpop.permute.xlu0 %802
      %804 = vrot.lane.b32.xlu0 %v723, 64
      %v805 = vpop.permute.xlu0 %804
      %806 = vrot.lane.b32.xlu0 %v724, 64
      %v807 = vpop.permute.xlu0 %806
      %808 = vrot.lane.b32.xlu0 %v725, 64
      %v809 = vpop.permute.xlu0 %808
      %810 = vrot.lane.b32.xlu0 %v726, 64
      %v811 = vpop.permute.xlu0 %810
      %812 = vrot.lane.b32.xlu0 %v727, 64
      %v813 = vpop.permute.xlu0 %812
      %814 = vrot.lane.b32.xlu0 %v728, 64
      %v815 = vpop.permute.xlu0 %814
      %816 = vrot.lane.b32.xlu0 %v729, 64
      %v817 = vpop.permute.xlu0 %816
      %818 = vrot.lane.b32.xlu0 %v730, 64
      %v819 = vpop.permute.xlu0 %818
      %820 = vrot.lane.b32.xlu0 %v731, 64
      %v821 = vpop.permute.xlu0 %820
      %822 = vrot.lane.b32.xlu0 %v732, 64
      %v823 = vpop.permute.xlu0 %822
      %824 = vrot.lane.b32.xlu0 %v733, 64
      %v825 = vpop.permute.xlu0 %824
      %826 = vrot.lane.b32.xlu0 %v734, 64
      %v827 = vpop.permute.xlu0 %826
      %828 = vrot.lane.b32.xlu0 %v735, 64
      %v829 = vpop.permute.xlu0 %828
      %830 = vrot.lane.b32.xlu0 %v736, 64
      %v831 = vpop.permute.xlu0 %830
      %832 = vrot.lane.b32.xlu0 %v737, 64
      %v833 = vpop.permute.xlu0 %832
      %834 = vrot.lane.b32.xlu0 %v738, 64
      %v835 = vpop.permute.xlu0 %834
      %836 = vrot.lane.b32.xlu0 %v739, 64
      %v837 = vpop.permute.xlu0 %836
      %838 = vrot.lane.b32.xlu0 %v740, 64
      %v839 = vpop.permute.xlu0 %838
      %840 = vrot.lane.b32.xlu0 %v741, 64
      %v841 = vpop.permute.xlu0 %840
      %842 = vrot.lane.b32.xlu0 %v742, 64
      %v843 = vpop.permute.xlu0 %842
      %844 = vrot.lane.b32.xlu0 %v743, 64
      %v845 = vpop.permute.xlu0 %844
      %846 = vrot.lane.b32.xlu0 %v744, 64
      %v847 = vpop.permute.xlu0 %846
      %848 = vrot.lane.b32.xlu0 %v745, 64
      %v849 = vpop.permute.xlu0 %848
      %850 = vrot.lane.b32.xlu0 %v746, 64
      %v851 = vpop.permute.xlu0 %850
      %852 = vrot.lane.b32.xlu0 %v747, 64
      %v853 = vpop.permute.xlu0 %852
      %854 = vrot.lane.b32.xlu0 %v748, 64
      %v855 = vpop.permute.xlu0 %854
      %856 = vrot.lane.b32.xlu0 %v749, 64
      %v857 = vpop.permute.xlu0 %856
      %894 = vst.msk [vmem:[#allocation2 + $0x4] sm:$0xf] %vm533, %v787
      %895 = vst.msk [vmem:[#allocation2 + $0x18] sm:$0xf] %vm533, %v789
      %896 = vst.msk [vmem:[#allocation2 + $0x2c] sm:$0xf] %vm533, %v791
      %897 = vst.msk [vmem:[#allocation2 + $0x40] sm:$0xf] %vm533, %v793
      %898 = vst.msk [vmem:[#allocation2 + $0x54] sm:$0xf] %vm533, %v795
      %899 = vst.msk [vmem:[#allocation2 + $0x68] sm:$0xf] %vm533, %v797
      %900 = vst.msk [vmem:[#allocation2 + $0x7c] sm:$0xf] %vm533, %v799
      %901 = vst.msk [vmem:[#allocation2 + $0x90] sm:$0xf] %vm533, %v801
      %902 = vst.msk [vmem:[#allocation2 + $0xa4] sm:$0xf] %vm533, %v803
      %903 = vst.msk [vmem:[#allocation2 + $0xb8] sm:$0xf] %vm533, %v805
      %904 = vst.msk [vmem:[#allocation2 + $0xcc] sm:$0xf] %vm533, %v807
      %905 = vst.msk [vmem:[#allocation2 + $0xe0] sm:$0xf] %vm533, %v809
      %906 = vst.msk [vmem:[#allocation2 + $0xf4] sm:$0xf] %vm533, %v811
      %907 = vst.msk [vmem:[#allocation2 + $0x108] sm:$0xf] %vm533, %v813
      %908 = vst.msk [vmem:[#allocation2 + $0x11c] sm:$0xf] %vm533, %v815
      %909 = vst.msk [vmem:[#allocation2 + $0x130] sm:$0xf] %vm533, %v817
      %910 = vst.msk [vmem:[#allocation2 + $0x144] sm:$0xf] %vm533, %v819
      %911 = vst.msk [vmem:[#allocation2 + $0x158] sm:$0xf] %vm533, %v821
      %912 = vst.msk [vmem:[#allocation2 + $0x16c] sm:$0xf] %vm533, %v823
      %913 = vst.msk [vmem:[#allocation2 + $0x180] sm:$0xf] %vm533, %v825
      %914 = vst.msk [vmem:[#allocation2 + $0x194] sm:$0xf] %vm533, %v827
      %915 = vst.msk [vmem:[#allocation2 + $0x1a8] sm:$0xf] %vm533, %v829
      %916 = vst.msk [vmem:[#allocation2 + $0x1bc] sm:$0xf] %vm533, %v831
      %917 = vst.msk [vmem:[#allocation2 + $0x1d0] sm:$0xf] %vm533, %v833
      %918 = vst.msk [vmem:[#allocation2 + $0x1e4] sm:$0xf] %vm533, %v835
      %919 = vst.msk [vmem:[#allocation2 + $0x1f8] sm:$0xf] %vm533, %v837
      %920 = vst.msk [vmem:[#allocation2 + $0x20c] sm:$0xf] %vm533, %v839
      %921 = vst.msk [vmem:[#allocation2 + $0x220] sm:$0xf] %vm533, %v841
      %922 = vst.msk [vmem:[#allocation2 + $0x234] sm:$0xf] %vm533, %v843
      %923 = vst.msk [vmem:[#allocation2 + $0x248] sm:$0xf] %vm533, %v845
      %924 = vst.msk [vmem:[#allocation2 + $0x25c] sm:$0xf] %vm533, %v847
      %925 = vst.msk [vmem:[#allocation2 + $0x270] sm:$0xf] %vm533, %v849
      %926 = vst.msk [vmem:[#allocation2 + $0x284] sm:$0xf] %vm533, %v851
      %927 = vst.msk [vmem:[#allocation2 + $0x298] sm:$0xf] %vm533, %v853
      %928 = vst.msk [vmem:[#allocation2 + $0x2ac] sm:$0xf] %vm533, %v855
      %929 = vst.msk [vmem:[#allocation2 + $0x2c0] sm:$0xf] %vm533, %v857
      %v930 = vld [vmem:[%s198 + $0x13] sm:$0xff]
      %v931 = vld [vmem:[%s198 + $0x1b] sm:$0xff]
      %v932 = vld [vmem:[%s198 + $0x23] sm:$0xff]
      %v933 = vld [vmem:[%s198 + $0x2b] sm:$0xff]
      %v934 = vld [vmem:[%s198 + $0x33] sm:$0xff]
      %v935 = vld [vmem:[%s198 + $0x3b] sm:$0xff]
      %v936 = vld [vmem:[%s198 + $0x43] sm:$0xff]
      %v937 = vld [vmem:[%s198 + $0x4b] sm:$0xff]
      %v938 = vld [vmem:[%s198 + $0x53] sm:$0xff]
      %v939 = vld [vmem:[%s198 + $0x5b] sm:$0xff]
      %v940 = vld [vmem:[%s198 + $0x63] sm:$0xff]
      %v941 = vld [vmem:[%s198 + $0x6b] sm:$0xff]
      %v942 = vld [vmem:[%s198 + $0x73] sm:$0xff]
      %v943 = vld [vmem:[%s198 + $0x7b] sm:$0xff]
      %v944 = vld [vmem:[%s198 + $0x83] sm:$0xff]
      %v945 = vld [vmem:[%s198 + $0x8b] sm:$0xff]
      %v946 = vld [vmem:[%s198 + $0x93] sm:$0xff]
      %v947 = vld [vmem:[%s198 + $0x9b] sm:$0xff]
      %v948 = vld [vmem:[%s198 + $0xa3] sm:$0xff]
      %v949 = vld [vmem:[%s198 + $0xab] sm:$0xff]
      %v950 = vld [vmem:[%s198 + $0xb3] sm:$0xff]
      %v951 = vld [vmem:[%s198 + $0xbb] sm:$0xff]
      %v952 = vld [vmem:[%s198 + $0xc3] sm:$0xff]
      %v953 = vld [vmem:[%s198 + $0xcb] sm:$0xff]
      %v954 = vld [vmem:[%s198 + $0xd3] sm:$0xff]
      %v955 = vld [vmem:[%s198 + $0xdb] sm:$0xff]
      %v956 = vld [vmem:[%s198 + $0xe3] sm:$0xff]
      %v957 = vld [vmem:[%s198 + $0xeb] sm:$0xff]
      %v958 = vld [vmem:[%s198 + $0xf3] sm:$0xff]
      %v959 = vld [vmem:[%s198 + $0xfb] sm:$0xff]
      %v960 = vld [vmem:[%s198 + $0x103] sm:$0xff]
      %v961 = vld [vmem:[%s198 + $0x10b] sm:$0xff]
      %v962 = vld [vmem:[%s198 + $0x113] sm:$0xff]
      %v963 = vld [vmem:[%s198 + $0x11b] sm:$0xff]
      %v964 = vld [vmem:[%s198 + $0x123] sm:$0xff]
      %v965 = vld [vmem:[%s198 + $0x12b] sm:$0xff]
      %v966 = vpack.c.bf16 %v930, %v930
      %v967 = vpack.c.bf16 %v931, %v931
      %v968 = vpack.c.bf16 %v932, %v932
      %v969 = vpack.c.bf16 %v933, %v933
      %v970 = vpack.c.bf16 %v934, %v934
      %v971 = vpack.c.bf16 %v935, %v935
      %v972 = vpack.c.bf16 %v936, %v936
      %v973 = vpack.c.bf16 %v937, %v937
      %v974 = vpack.c.bf16 %v938, %v938
      %v975 = vpack.c.bf16 %v939, %v939
      %v976 = vpack.c.bf16 %v940, %v940
      %v977 = vpack.c.bf16 %v941, %v941
      %v978 = vpack.c.bf16 %v942, %v942
      %v979 = vpack.c.bf16 %v943, %v943
      %v980 = vpack.c.bf16 %v944, %v944
      %v981 = vpack.c.bf16 %v945, %v945
      %v982 = vpack.c.bf16 %v946, %v946
      %v983 = vpack.c.bf16 %v947, %v947
      %v984 = vpack.c.bf16 %v948, %v948
      %v985 = vpack.c.bf16 %v949, %v949
      %v986 = vpack.c.bf16 %v950, %v950
      %v987 = vpack.c.bf16 %v951, %v951
      %v988 = vpack.c.bf16 %v952, %v952
      %v989 = vpack.c.bf16 %v953, %v953
      %v990 = vpack.c.bf16 %v954, %v954
      %v991 = vpack.c.bf16 %v955, %v955
      %v992 = vpack.c.bf16 %v956, %v956
      %v993 = vpack.c.bf16 %v957, %v957
      %v994 = vpack.c.bf16 %v958, %v958
      %v995 = vpack.c.bf16 %v959, %v959
      %v996 = vpack.c.bf16 %v960, %v960
      %v997 = vpack.c.bf16 %v961, %v961
      %v998 = vpack.c.bf16 %v962, %v962
      %v999 = vpack.c.bf16 %v963, %v963
      %v1000 = vpack.c.bf16 %v964, %v964
      %v1001 = vpack.c.bf16 %v965, %v965
      %1002 = vst.msk [vmem:[#allocation2 + $0x8] sm:$0xf] %vm280, %v966
      %1003 = vst.msk [vmem:[#allocation2 + $0x1c] sm:$0xf] %vm280, %v967
      %1004 = vst.msk [vmem:[#allocation2 + $0x30] sm:$0xf] %vm280, %v968
      %1005 = vst.msk [vmem:[#allocation2 + $0x44] sm:$0xf] %vm280, %v969
      %1006 = vst.msk [vmem:[#allocation2 + $0x58] sm:$0xf] %vm280, %v970
      %1007 = vst.msk [vmem:[#allocation2 + $0x6c] sm:$0xf] %vm280, %v971
      %1008 = vst.msk [vmem:[#allocation2 + $0x80] sm:$0xf] %vm280, %v972
      %1009 = vst.msk [vmem:[#allocation2 + $0x94] sm:$0xf] %vm280, %v973
      %1010 = vst.msk [vmem:[#allocation2 + $0xa8] sm:$0xf] %vm280, %v974
      %1011 = vst.msk [vmem:[#allocation2 + $0xbc] sm:$0xf] %vm280, %v975
      %1012 = vst.msk [vmem:[#allocation2 + $0xd0] sm:$0xf] %vm280, %v976
      %1013 = vst.msk [vmem:[#allocation2 + $0xe4] sm:$0xf] %vm280, %v977
      %1014 = vst.msk [vmem:[#allocation2 + $0xf8] sm:$0xf] %vm280, %v978
      %1015 = vst.msk [vmem:[#allocation2 + $0x10c] sm:$0xf] %vm280, %v979
      %1016 = vst.msk [vmem:[#allocation2 + $0x120] sm:$0xf] %vm280, %v980
      %1017 = vst.msk [vmem:[#allocation2 + $0x134] sm:$0xf] %vm280, %v981
      %1018 = vst.msk [vmem:[#allocation2 + $0x148] sm:$0xf] %vm280, %v982
      %1019 = vst.msk [vmem:[#allocation2 + $0x15c] sm:$0xf] %vm280, %v983
      %1020 = vst.msk [vmem:[#allocation2 + $0x170] sm:$0xf] %vm280, %v984
      %1021 = vst.msk [vmem:[#allocation2 + $0x184] sm:$0xf] %vm280, %v985
      %1022 = vst.msk [vmem:[#allocation2 + $0x198] sm:$0xf] %vm280, %v986
      %1023 = vst.msk [vmem:[#allocation2 + $0x1ac] sm:$0xf] %vm280, %v987
      %1024 = vst.msk [vmem:[#allocation2 + $0x1c0] sm:$0xf] %vm280, %v988
      %1025 = vst.msk [vmem:[#allocation2 + $0x1d4] sm:$0xf] %vm280, %v989
      %1026 = vst.msk [vmem:[#allocation2 + $0x1e8] sm:$0xf] %vm280, %v990
      %1027 = vst.msk [vmem:[#allocation2 + $0x1fc] sm:$0xf] %vm280, %v991
      %1028 = vst.msk [vmem:[#allocation2 + $0x210] sm:$0xf] %vm280, %v992
      %1029 = vst.msk [vmem:[#allocation2 + $0x224] sm:$0xf] %vm280, %v993
      %1030 = vst.msk [vmem:[#allocation2 + $0x238] sm:$0xf] %vm280, %v994
      %1031 = vst.msk [vmem:[#allocation2 + $0x24c] sm:$0xf] %vm280, %v995
      %1032 = vst.msk [vmem:[#allocation2 + $0x260] sm:$0xf] %vm280, %v996
      %1033 = vst.msk [vmem:[#allocation2 + $0x274] sm:$0xf] %vm280, %v997
      %1034 = vst.msk [vmem:[#allocation2 + $0x288] sm:$0xf] %vm280, %v998
      %1035 = vst.msk [vmem:[#allocation2 + $0x29c] sm:$0xf] %vm280, %v999
      %1036 = vst.msk [vmem:[#allocation2 + $0x2b0] sm:$0xf] %vm280, %v1000
      %1037 = vst.msk [vmem:[#allocation2 + $0x2c4] sm:$0xf] %vm280, %v1001
      %v1038 = vld [vmem:[%s198 + $0x14] sm:$0xff]
      %v1039 = vld [vmem:[%s198 + $0x1c] sm:$0xff]
      %v1040 = vld [vmem:[%s198 + $0x24] sm:$0xff]
      %v1041 = vld [vmem:[%s198 + $0x2c] sm:$0xff]
      %v1042 = vld [vmem:[%s198 + $0x34] sm:$0xff]
      %v1043 = vld [vmem:[%s198 + $0x3c] sm:$0xff]
      %v1044 = vld [vmem:[%s198 + $0x44] sm:$0xff]
      %v1045 = vld [vmem:[%s198 + $0x4c] sm:$0xff]
      %v1046 = vld [vmem:[%s198 + $0x54] sm:$0xff]
      %v1047 = vld [vmem:[%s198 + $0x5c] sm:$0xff]
      %v1048 = vld [vmem:[%s198 + $0x64] sm:$0xff]
      %v1049 = vld [vmem:[%s198 + $0x6c] sm:$0xff]
      %v1050 = vld [vmem:[%s198 + $0x74] sm:$0xff]
      %v1051 = vld [vmem:[%s198 + $0x7c] sm:$0xff]
      %v1052 = vld [vmem:[%s198 + $0x84] sm:$0xff]
      %v1053 = vld [vmem:[%s198 + $0x8c] sm:$0xff]
      %v1054 = vld [vmem:[%s198 + $0x94] sm:$0xff]
      %v1055 = vld [vmem:[%s198 + $0x9c] sm:$0xff]
      %v1056 = vld [vmem:[%s198 + $0xa4] sm:$0xff]
      %v1057 = vld [vmem:[%s198 + $0xac] sm:$0xff]
      %v1058 = vld [vmem:[%s198 + $0xb4] sm:$0xff]
      %v1059 = vld [vmem:[%s198 + $0xbc] sm:$0xff]
      %v1060 = vld [vmem:[%s198 + $0xc4] sm:$0xff]
      %v1061 = vld [vmem:[%s198 + $0xcc] sm:$0xff]
      %v1062 = vld [vmem:[%s198 + $0xd4] sm:$0xff]
      %v1063 = vld [vmem:[%s198 + $0xdc] sm:$0xff]
      %v1064 = vld [vmem:[%s198 + $0xe4] sm:$0xff]
      %v1065 = vld [vmem:[%s198 + $0xec] sm:$0xff]
      %v1066 = vld [vmem:[%s198 + $0xf4] sm:$0xff]
      %v1067 = vld [vmem:[%s198 + $0xfc] sm:$0xff]
      %v1068 = vld [vmem:[%s198 + $0x104] sm:$0xff]
      %v1069 = vld [vmem:[%s198 + $0x10c] sm:$0xff]
      %v1070 = vld [vmem:[%s198 + $0x114] sm:$0xff]
      %v1071 = vld [vmem:[%s198 + $0x11c] sm:$0xff]
      %v1072 = vld [vmem:[%s198 + $0x124] sm:$0xff]
      %v1073 = vld [vmem:[%s198 + $0x12c] sm:$0xff]
      %v1074 = vpack.c.bf16 %v1038, %v1038
      %v1075 = vpack.c.bf16 %v1039, %v1039
      %v1076 = vpack.c.bf16 %v1040, %v1040
      %v1077 = vpack.c.bf16 %v1041, %v1041
      %v1078 = vpack.c.bf16 %v1042, %v1042
      %v1079 = vpack.c.bf16 %v1043, %v1043
      %v1080 = vpack.c.bf16 %v1044, %v1044
      %v1081 = vpack.c.bf16 %v1045, %v1045
      %v1082 = vpack.c.bf16 %v1046, %v1046
      %v1083 = vpack.c.bf16 %v1047, %v1047
      %v1084 = vpack.c.bf16 %v1048, %v1048
      %v1085 = vpack.c.bf16 %v1049, %v1049
      %v1086 = vpack.c.bf16 %v1050, %v1050
      %v1087 = vpack.c.bf16 %v1051, %v1051
      %v1088 = vpack.c.bf16 %v1052, %v1052
      %v1089 = vpack.c.bf16 %v1053, %v1053
      %v1090 = vpack.c.bf16 %v1054, %v1054
      %v1091 = vpack.c.bf16 %v1055, %v1055
      %v1092 = vpack.c.bf16 %v1056, %v1056
      %v1093 = vpack.c.bf16 %v1057, %v1057
      %v1094 = vpack.c.bf16 %v1058, %v1058
      %v1095 = vpack.c.bf16 %v1059, %v1059
      %v1096 = vpack.c.bf16 %v1060, %v1060
      %v1097 = vpack.c.bf16 %v1061, %v1061
      %v1098 = vpack.c.bf16 %v1062, %v1062
      %v1099 = vpack.c.bf16 %v1063, %v1063
      %v1100 = vpack.c.bf16 %v1064, %v1064
      %v1101 = vpack.c.bf16 %v1065, %v1065
      %v1102 = vpack.c.bf16 %v1066, %v1066
      %v1103 = vpack.c.bf16 %v1067, %v1067
      %v1104 = vpack.c.bf16 %v1068, %v1068
      %v1105 = vpack.c.bf16 %v1069, %v1069
      %v1106 = vpack.c.bf16 %v1070, %v1070
      %v1107 = vpack.c.bf16 %v1071, %v1071
      %v1108 = vpack.c.bf16 %v1072, %v1072
      %v1109 = vpack.c.bf16 %v1073, %v1073
      %1146 = vrot.lane.b32.xlu0 %v1074, 64
      %v1147 = vpop.permute.xlu0 %1146
      %1148 = vrot.lane.b32.xlu0 %v1075, 64
      %v1149 = vpop.permute.xlu0 %1148
      %1150 = vrot.lane.b32.xlu0 %v1076, 64
      %v1151 = vpop.permute.xlu0 %1150
      %1152 = vrot.lane.b32.xlu0 %v1077, 64
      %v1153 = vpop.permute.xlu0 %1152
      %1154 = vrot.lane.b32.xlu0 %v1078, 64
      %v1155 = vpop.permute.xlu0 %1154
      %1156 = vrot.lane.b32.xlu0 %v1079, 64
      %v1157 = vpop.permute.xlu0 %1156
      %1158 = vrot.lane.b32.xlu0 %v1080, 64
      %v1159 = vpop.permute.xlu0 %1158
      %1160 = vrot.lane.b32.xlu0 %v1081, 64
      %v1161 = vpop.permute.xlu0 %1160
      %1162 = vrot.lane.b32.xlu0 %v1082, 64
      %v1163 = vpop.permute.xlu0 %1162
      %1164 = vrot.lane.b32.xlu0 %v1083, 64
      %v1165 = vpop.permute.xlu0 %1164
      %1166 = vrot.lane.b32.xlu0 %v1084, 64
      %v1167 = vpop.permute.xlu0 %1166
      %1168 = vrot.lane.b32.xlu0 %v1085, 64
      %v1169 = vpop.permute.xlu0 %1168
      %1170 = vrot.lane.b32.xlu0 %v1086, 64
      %v1171 = vpop.permute.xlu0 %1170
      %1172 = vrot.lane.b32.xlu0 %v1087, 64
      %v1173 = vpop.permute.xlu0 %1172
      %1174 = vrot.lane.b32.xlu0 %v1088, 64
      %v1175 = vpop.permute.xlu0 %1174
      %1176 = vrot.lane.b32.xlu0 %v1089, 64
      %v1177 = vpop.permute.xlu0 %1176
      %1178 = vrot.lane.b32.xlu0 %v1090, 64
      %v1179 = vpop.permute.xlu0 %1178
      %1180 = vrot.lane.b32.xlu0 %v1091, 64
      %v1181 = vpop.permute.xlu0 %1180
      %1182 = vrot.lane.b32.xlu0 %v1092, 64
      %v1183 = vpop.permute.xlu0 %1182
      %1184 = vrot.lane.b32.xlu0 %v1093, 64
      %v1185 = vpop.permute.xlu0 %1184
      %1186 = vrot.lane.b32.xlu0 %v1094, 64
      %v1187 = vpop.permute.xlu0 %1186
      %1188 = vrot.lane.b32.xlu0 %v1095, 64
      %v1189 = vpop.permute.xlu0 %1188
      %1190 = vrot.lane.b32.xlu0 %v1096, 64
      %v1191 = vpop.permute.xlu0 %1190
      %1192 = vrot.lane.b32.xlu0 %v1097, 64
      %v1193 = vpop.permute.xlu0 %1192
      %1194 = vrot.lane.b32.xlu0 %v1098, 64
      %v1195 = vpop.permute.xlu0 %1194
      %1196 = vrot.lane.b32.xlu0 %v1099, 64
      %v1197 = vpop.permute.xlu0 %1196
      %1198 = vrot.lane.b32.xlu0 %v1100, 64
      %v1199 = vpop.permute.xlu0 %1198
      %1200 = vrot.lane.b32.xlu0 %v1101, 64
      %v1201 = vpop.permute.xlu0 %1200
      %1202 = vrot.lane.b32.xlu0 %v1102, 64
      %v1203 = vpop.permute.xlu0 %1202
      %1204 = vrot.lane.b32.xlu0 %v1103, 64
      %v1205 = vpop.permute.xlu0 %1204
      %1206 = vrot.lane.b32.xlu0 %v1104, 64
      %v1207 = vpop.permute.xlu0 %1206
      %1208 = vrot.lane.b32.xlu0 %v1105, 64
      %v1209 = vpop.permute.xlu0 %1208
      %1210 = vrot.lane.b32.xlu0 %v1106, 64
      %v1211 = vpop.permute.xlu0 %1210
      %1212 = vrot.lane.b32.xlu0 %v1107, 64
      %v1213 = vpop.permute.xlu0 %1212
      %1214 = vrot.lane.b32.xlu0 %v1108, 64
      %v1215 = vpop.permute.xlu0 %1214
      %1216 = vrot.lane.b32.xlu0 %v1109, 64
      %v1217 = vpop.permute.xlu0 %1216
      %1254 = vst.msk [vmem:[#allocation2 + $0x8] sm:$0xf] %vm533, %v1147
      %1255 = vst.msk [vmem:[#allocation2 + $0x1c] sm:$0xf] %vm533, %v1149
      %1256 = vst.msk [vmem:[#allocation2 + $0x30] sm:$0xf] %vm533, %v1151
      %1257 = vst.msk [vmem:[#allocation2 + $0x44] sm:$0xf] %vm533, %v1153
      %1258 = vst.msk [vmem:[#allocation2 + $0x58] sm:$0xf] %vm533, %v1155
      %1259 = vst.msk [vmem:[#allocation2 + $0x6c] sm:$0xf] %vm533, %v1157
      %1260 = vst.msk [vmem:[#allocation2 + $0x80] sm:$0xf] %vm533, %v1159
      %1261 = vst.msk [vmem:[#allocation2 + $0x94] sm:$0xf] %vm533, %v1161
      %1262 = vst.msk [vmem:[#allocation2 + $0xa8] sm:$0xf] %vm533, %v1163
      %1263 = vst.msk [vmem:[#allocation2 + $0xbc] sm:$0xf] %vm533, %v1165
      %1264 = vst.msk [vmem:[#allocation2 + $0xd0] sm:$0xf] %vm533, %v1167
      %1265 = vst.msk [vmem:[#allocation2 + $0xe4] sm:$0xf] %vm533, %v1169
      %1266 = vst.msk [vmem:[#allocation2 + $0xf8] sm:$0xf] %vm533, %v1171
      %1267 = vst.msk [vmem:[#allocation2 + $0x10c] sm:$0xf] %vm533, %v1173
      %1268 = vst.msk [vmem:[#allocation2 + $0x120] sm:$0xf] %vm533, %v1175
      %1269 = vst.msk [vmem:[#allocation2 + $0x134] sm:$0xf] %vm533, %v1177
      %1270 = vst.msk [vmem:[#allocation2 + $0x148] sm:$0xf] %vm533, %v1179
      %1271 = vst.msk [vmem:[#allocation2 + $0x15c] sm:$0xf] %vm533, %v1181
      %1272 = vst.msk [vmem:[#allocation2 + $0x170] sm:$0xf] %vm533, %v1183
      %1273 = vst.msk [vmem:[#allocation2 + $0x184] sm:$0xf] %vm533, %v1185
      %1274 = vst.msk [vmem:[#allocation2 + $0x198] sm:$0xf] %vm533, %v1187
      %1275 = vst.msk [vmem:[#allocation2 + $0x1ac] sm:$0xf] %vm533, %v1189
      %1276 = vst.msk [vmem:[#allocation2 + $0x1c0] sm:$0xf] %vm533, %v1191
      %1277 = vst.msk [vmem:[#allocation2 + $0x1d4] sm:$0xf] %vm533, %v1193
      %1278 = vst.msk [vmem:[#allocation2 + $0x1e8] sm:$0xf] %vm533, %v1195
      %1279 = vst.msk [vmem:[#allocation2 + $0x1fc] sm:$0xf] %vm533, %v1197
      %1280 = vst.msk [vmem:[#allocation2 + $0x210] sm:$0xf] %vm533, %v1199
      %1281 = vst.msk [vmem:[#allocation2 + $0x224] sm:$0xf] %vm533, %v1201
      %1282 = vst.msk [vmem:[#allocation2 + $0x238] sm:$0xf] %vm533, %v1203
      %1283 = vst.msk [vmem:[#allocation2 + $0x24c] sm:$0xf] %vm533, %v1205
      %1284 = vst.msk [vmem:[#allocation2 + $0x260] sm:$0xf] %vm533, %v1207
      %1285 = vst.msk [vmem:[#allocation2 + $0x274] sm:$0xf] %vm533, %v1209
      %1286 = vst.msk [vmem:[#allocation2 + $0x288] sm:$0xf] %vm533, %v1211
      %1287 = vst.msk [vmem:[#allocation2 + $0x29c] sm:$0xf] %vm533, %v1213
      %1288 = vst.msk [vmem:[#allocation2 + $0x2b0] sm:$0xf] %vm533, %v1215
      %1289 = vst.msk [vmem:[#allocation2 + $0x2c4] sm:$0xf] %vm533, %v1217
      %v1290 = vld [vmem:[%s198 + $0x24] sm:$0xff]
      %v1291 = vld [vmem:[%s198 + $0x2c] sm:$0xff]
      %v1292 = vld [vmem:[%s198 + $0x34] sm:$0xff]
      %v1293 = vld [vmem:[%s198 + $0x3c] sm:$0xff]
      %v1294 = vld [vmem:[%s198 + $0x44] sm:$0xff]
      %v1295 = vld [vmem:[%s198 + $0x4c] sm:$0xff]
      %v1296 = vld [vmem:[%s198 + $0x54] sm:$0xff]
      %v1297 = vld [vmem:[%s198 + $0x5c] sm:$0xff]
      %v1298 = vld [vmem:[%s198 + $0x64] sm:$0xff]
      %v1299 = vld [vmem:[%s198 + $0x6c] sm:$0xff]
      %v1300 = vld [vmem:[%s198 + $0x74] sm:$0xff]
      %v1301 = vld [vmem:[%s198 + $0x7c] sm:$0xff]
      %v1302 = vld [vmem:[%s198 + $0x84] sm:$0xff]
      %v1303 = vld [vmem:[%s198 + $0x8c] sm:$0xff]
      %v1304 = vld [vmem:[%s198 + $0x94] sm:$0xff]
      %v1305 = vld [vmem:[%s198 + $0x9c] sm:$0xff]
      %v1306 = vld [vmem:[%s198 + $0xa4] sm:$0xff]
      %v1307 = vld [vmem:[%s198 + $0xac] sm:$0xff]
      %v1308 = vld [vmem:[%s198 + $0xb4] sm:$0xff]
      %v1309 = vld [vmem:[%s198 + $0xbc] sm:$0xff]
      %v1310 = vld [vmem:[%s198 + $0xc4] sm:$0xff]
      %v1311 = vld [vmem:[%s198 + $0xcc] sm:$0xff]
      %v1312 = vld [vmem:[%s198 + $0xd4] sm:$0xff]
      %v1313 = vld [vmem:[%s198 + $0xdc] sm:$0xff]
      %v1314 = vld [vmem:[%s198 + $0xe4] sm:$0xff]
      %v1315 = vld [vmem:[%s198 + $0xec] sm:$0xff]
      %v1316 = vld [vmem:[%s198 + $0xf4] sm:$0xff]
      %v1317 = vld [vmem:[%s198 + $0xfc] sm:$0xff]
      %v1318 = vld [vmem:[%s198 + $0x104] sm:$0xff]
      %v1319 = vld [vmem:[%s198 + $0x10c] sm:$0xff]
      %v1320 = vld [vmem:[%s198 + $0x114] sm:$0xff]
      %v1321 = vld [vmem:[%s198 + $0x11c] sm:$0xff]
      %v1322 = vld [vmem:[%s198 + $0x124] sm:$0xff]
      %v1323 = vld [vmem:[%s198 + $0x12c] sm:$0xff]
      %v1324 = vld [vmem:[%s198 + $0x134] sm:$0xff]
      %v1325 = vld [vmem:[%s198 + $0x13c] sm:$0xff]
      %v1326 = vpack.c.bf16 %v1290, %v1290
      %v1327 = vpack.c.bf16 %v1291, %v1291
      %v1328 = vpack.c.bf16 %v1292, %v1292
      %v1329 = vpack.c.bf16 %v1293, %v1293
      %v1330 = vpack.c.bf16 %v1294, %v1294
      %v1331 = vpack.c.bf16 %v1295, %v1295
      %v1332 = vpack.c.bf16 %v1296, %v1296
      %v1333 = vpack.c.bf16 %v1297, %v1297
      %v1334 = vpack.c.bf16 %v1298, %v1298
      %v1335 = vpack.c.bf16 %v1299, %v1299
      %v1336 = vpack.c.bf16 %v1300, %v1300
      %v1337 = vpack.c.bf16 %v1301, %v1301
      %v1338 = vpack.c.bf16 %v1302, %v1302
      %v1339 = vpack.c.bf16 %v1303, %v1303
      %v1340 = vpack.c.bf16 %v1304, %v1304
      %v1341 = vpack.c.bf16 %v1305, %v1305
      %v1342 = vpack.c.bf16 %v1306, %v1306
      %v1343 = vpack.c.bf16 %v1307, %v1307
      %v1344 = vpack.c.bf16 %v1308, %v1308
      %v1345 = vpack.c.bf16 %v1309, %v1309
      %v1346 = vpack.c.bf16 %v1310, %v1310
      %v1347 = vpack.c.bf16 %v1311, %v1311
      %v1348 = vpack.c.bf16 %v1312, %v1312
      %v1349 = vpack.c.bf16 %v1313, %v1313
      %v1350 = vpack.c.bf16 %v1314, %v1314
      %v1351 = vpack.c.bf16 %v1315, %v1315
      %v1352 = vpack.c.bf16 %v1316, %v1316
      %v1353 = vpack.c.bf16 %v1317, %v1317
      %v1354 = vpack.c.bf16 %v1318, %v1318
      %v1355 = vpack.c.bf16 %v1319, %v1319
      %v1356 = vpack.c.bf16 %v1320, %v1320
      %v1357 = vpack.c.bf16 %v1321, %v1321
      %v1358 = vpack.c.bf16 %v1322, %v1322
      %v1359 = vpack.c.bf16 %v1323, %v1323
      %v1360 = vpack.c.bf16 %v1324, %v1324
      %v1361 = vpack.c.bf16 %v1325, %v1325
      %1362 = vst.msk [vmem:[#allocation2 + $0xc] sm:$0xf] %vm280, %v1326
      %1363 = vst.msk [vmem:[#allocation2 + $0x20] sm:$0xf] %vm280, %v1327
      %1364 = vst.msk [vmem:[#allocation2 + $0x34] sm:$0xf] %vm280, %v1328
      %1365 = vst.msk [vmem:[#allocation2 + $0x48] sm:$0xf] %vm280, %v1329
      %1366 = vst.msk [vmem:[#allocation2 + $0x5c] sm:$0xf] %vm280, %v1330
      %1367 = vst.msk [vmem:[#allocation2 + $0x70] sm:$0xf] %vm280, %v1331
      %1368 = vst.msk [vmem:[#allocation2 + $0x84] sm:$0xf] %vm280, %v1332
      %1369 = vst.msk [vmem:[#allocation2 + $0x98] sm:$0xf] %vm280, %v1333
      %1370 = vst.msk [vmem:[#allocation2 + $0xac] sm:$0xf] %vm280, %v1334
      %1371 = vst.msk [vmem:[#allocation2 + $0xc0] sm:$0xf] %vm280, %v1335
      %1372 = vst.msk [vmem:[#allocation2 + $0xd4] sm:$0xf] %vm280, %v1336
      %1373 = vst.msk [vmem:[#allocation2 + $0xe8] sm:$0xf] %vm280, %v1337
      %1374 = vst.msk [vmem:[#allocation2 + $0xfc] sm:$0xf] %vm280, %v1338
      %1375 = vst.msk [vmem:[#allocation2 + $0x110] sm:$0xf] %vm280, %v1339
      %1376 = vst.msk [vmem:[#allocation2 + $0x124] sm:$0xf] %vm280, %v1340
      %1377 = vst.msk [vmem:[#allocation2 + $0x138] sm:$0xf] %vm280, %v1341
      %1378 = vst.msk [vmem:[#allocation2 + $0x14c] sm:$0xf] %vm280, %v1342
      %1379 = vst.msk [vmem:[#allocation2 + $0x160] sm:$0xf] %vm280, %v1343
      %1380 = vst.msk [vmem:[#allocation2 + $0x174] sm:$0xf] %vm280, %v1344
      %1381 = vst.msk [vmem:[#allocation2 + $0x188] sm:$0xf] %vm280, %v1345
      %1382 = vst.msk [vmem:[#allocation2 + $0x19c] sm:$0xf] %vm280, %v1346
      %1383 = vst.msk [vmem:[#allocation2 + $0x1b0] sm:$0xf] %vm280, %v1347
      %1384 = vst.msk [vmem:[#allocation2 + $0x1c4] sm:$0xf] %vm280, %v1348
      %1385 = vst.msk [vmem:[#allocation2 + $0x1d8] sm:$0xf] %vm280, %v1349
      %1386 = vst.msk [vmem:[#allocation2 + $0x1ec] sm:$0xf] %vm280, %v1350
      %1387 = vst.msk [vmem:[#allocation2 + $0x200] sm:$0xf] %vm280, %v1351
      %1388 = vst.msk [vmem:[#allocation2 + $0x214] sm:$0xf] %vm280, %v1352
      %1389 = vst.msk [vmem:[#allocation2 + $0x228] sm:$0xf] %vm280, %v1353
      %1390 = vst.msk [vmem:[#allocation2 + $0x23c] sm:$0xf] %vm280, %v1354
      %1391 = vst.msk [vmem:[#allocation2 + $0x250] sm:$0xf] %vm280, %v1355
      %1392 = vst.msk [vmem:[#allocation2 + $0x264] sm:$0xf] %vm280, %v1356
      %1393 = vst.msk [vmem:[#allocation2 + $0x278] sm:$0xf] %vm280, %v1357
      %1394 = vst.msk [vmem:[#allocation2 + $0x28c] sm:$0xf] %vm280, %v1358
      %1395 = vst.msk [vmem:[#allocation2 + $0x2a0] sm:$0xf] %vm280, %v1359
      %1396 = vst.msk [vmem:[#allocation2 + $0x2b4] sm:$0xf] %vm280, %v1360
      %1397 = vst.msk [vmem:[#allocation2 + $0x2c8] sm:$0xf] %vm280, %v1361
      %v1398 = vld [vmem:[%s198 + $0x25] sm:$0xff]
      %v1399 = vld [vmem:[%s198 + $0x2d] sm:$0xff]
      %v1400 = vld [vmem:[%s198 + $0x35] sm:$0xff]
      %v1401 = vld [vmem:[%s198 + $0x3d] sm:$0xff]
      %v1402 = vld [vmem:[%s198 + $0x45] sm:$0xff]
      %v1403 = vld [vmem:[%s198 + $0x4d] sm:$0xff]
      %v1404 = vld [vmem:[%s198 + $0x55] sm:$0xff]
      %v1405 = vld [vmem:[%s198 + $0x5d] sm:$0xff]
      %v1406 = vld [vmem:[%s198 + $0x65] sm:$0xff]
      %v1407 = vld [vmem:[%s198 + $0x6d] sm:$0xff]
      %v1408 = vld [vmem:[%s198 + $0x75] sm:$0xff]
      %v1409 = vld [vmem:[%s198 + $0x7d] sm:$0xff]
      %v1410 = vld [vmem:[%s198 + $0x85] sm:$0xff]
      %v1411 = vld [vmem:[%s198 + $0x8d] sm:$0xff]
      %v1412 = vld [vmem:[%s198 + $0x95] sm:$0xff]
      %v1413 = vld [vmem:[%s198 + $0x9d] sm:$0xff]
      %v1414 = vld [vmem:[%s198 + $0xa5] sm:$0xff]
      %v1415 = vld [vmem:[%s198 + $0xad] sm:$0xff]
      %v1416 = vld [vmem:[%s198 + $0xb5] sm:$0xff]
      %v1417 = vld [vmem:[%s198 + $0xbd] sm:$0xff]
      %v1418 = vld [vmem:[%s198 + $0xc5] sm:$0xff]
      %v1419 = vld [vmem:[%s198 + $0xcd] sm:$0xff]
      %v1420 = vld [vmem:[%s198 + $0xd5] sm:$0xff]
      %v1421 = vld [vmem:[%s198 + $0xdd] sm:$0xff]
      %v1422 = vld [vmem:[%s198 + $0xe5] sm:$0xff]
      %v1423 = vld [vmem:[%s198 + $0xed] sm:$0xff]
      %v1424 = vld [vmem:[%s198 + $0xf5] sm:$0xff]
      %v1425 = vld [vmem:[%s198 + $0xfd] sm:$0xff]
      %v1426 = vld [vmem:[%s198 + $0x105] sm:$0xff]
      %v1427 = vld [vmem:[%s198 + $0x10d] sm:$0xff]
      %v1428 = vld [vmem:[%s198 + $0x115] sm:$0xff]
      %v1429 = vld [vmem:[%s198 + $0x11d] sm:$0xff]
      %v1430 = vld [vmem:[%s198 + $0x125] sm:$0xff]
      %v1431 = vld [vmem:[%s198 + $0x12d] sm:$0xff]
      %v1432 = vld [vmem:[%s198 + $0x135] sm:$0xff]
      %v1433 = vld [vmem:[%s198 + $0x13d] sm:$0xff]
      %v1434 = vpack.c.bf16 %v1398, %v1398
      %v1435 = vpack.c.bf16 %v1399, %v1399
      %v1436 = vpack.c.bf16 %v1400, %v1400
      %v1437 = vpack.c.bf16 %v1401, %v1401
      %v1438 = vpack.c.bf16 %v1402, %v1402
      %v1439 = vpack.c.bf16 %v1403, %v1403
      %v1440 = vpack.c.bf16 %v1404, %v1404
      %v1441 = vpack.c.bf16 %v1405, %v1405
      %v1442 = vpack.c.bf16 %v1406, %v1406
      %v1443 = vpack.c.bf16 %v1407, %v1407
      %v1444 = vpack.c.bf16 %v1408, %v1408
      %v1445 = vpack.c.bf16 %v1409, %v1409
      %v1446 = vpack.c.bf16 %v1410, %v1410
      %v1447 = vpack.c.bf16 %v1411, %v1411
      %v1448 = vpack.c.bf16 %v1412, %v1412
      %v1449 = vpack.c.bf16 %v1413, %v1413
      %v1450 = vpack.c.bf16 %v1414, %v1414
      %v1451 = vpack.c.bf16 %v1415, %v1415
      %v1452 = vpack.c.bf16 %v1416, %v1416
      %v1453 = vpack.c.bf16 %v1417, %v1417
      %v1454 = vpack.c.bf16 %v1418, %v1418
      %v1455 = vpack.c.bf16 %v1419, %v1419
      %v1456 = vpack.c.bf16 %v1420, %v1420
      %v1457 = vpack.c.bf16 %v1421, %v1421
      %v1458 = vpack.c.bf16 %v1422, %v1422
      %v1459 = vpack.c.bf16 %v1423, %v1423
      %v1460 = vpack.c.bf16 %v1424, %v1424
      %v1461 = vpack.c.bf16 %v1425, %v1425
      %v1462 = vpack.c.bf16 %v1426, %v1426
      %v1463 = vpack.c.bf16 %v1427, %v1427
      %v1464 = vpack.c.bf16 %v1428, %v1428
      %v1465 = vpack.c.bf16 %v1429, %v1429
      %v1466 = vpack.c.bf16 %v1430, %v1430
      %v1467 = vpack.c.bf16 %v1431, %v1431
      %v1468 = vpack.c.bf16 %v1432, %v1432
      %v1469 = vpack.c.bf16 %v1433, %v1433
      %1506 = vrot.lane.b32.xlu0 %v1434, 64
      %v1507 = vpop.permute.xlu0 %1506
      %1508 = vrot.lane.b32.xlu0 %v1435, 64
      %v1509 = vpop.permute.xlu0 %1508
      %1510 = vrot.lane.b32.xlu0 %v1436, 64
      %v1511 = vpop.permute.xlu0 %1510
      %1512 = vrot.lane.b32.xlu0 %v1437, 64
      %v1513 = vpop.permute.xlu0 %1512
      %1514 = vrot.lane.b32.xlu0 %v1438, 64
      %v1515 = vpop.permute.xlu0 %1514
      %1516 = vrot.lane.b32.xlu0 %v1439, 64
      %v1517 = vpop.permute.xlu0 %1516
      %1518 = vrot.lane.b32.xlu0 %v1440, 64
      %v1519 = vpop.permute.xlu0 %1518
      %1520 = vrot.lane.b32.xlu0 %v1441, 64
      %v1521 = vpop.permute.xlu0 %1520
      %1522 = vrot.lane.b32.xlu0 %v1442, 64
      %v1523 = vpop.permute.xlu0 %1522
      %1524 = vrot.lane.b32.xlu0 %v1443, 64
      %v1525 = vpop.permute.xlu0 %1524
      %1526 = vrot.lane.b32.xlu0 %v1444, 64
      %v1527 = vpop.permute.xlu0 %1526
      %1528 = vrot.lane.b32.xlu0 %v1445, 64
      %v1529 = vpop.permute.xlu0 %1528
      %1530 = vrot.lane.b32.xlu0 %v1446, 64
      %v1531 = vpop.permute.xlu0 %1530
      %1532 = vrot.lane.b32.xlu0 %v1447, 64
      %v1533 = vpop.permute.xlu0 %1532
      %1534 = vrot.lane.b32.xlu0 %v1448, 64
      %v1535 = vpop.permute.xlu0 %1534
      %1536 = vrot.lane.b32.xlu0 %v1449, 64
      %v1537 = vpop.permute.xlu0 %1536
      %1538 = vrot.lane.b32.xlu0 %v1450, 64
      %v1539 = vpop.permute.xlu0 %1538
      %1540 = vrot.lane.b32.xlu0 %v1451, 64
      %v1541 = vpop.permute.xlu0 %1540
      %1542 = vrot.lane.b32.xlu0 %v1452, 64
      %v1543 = vpop.permute.xlu0 %1542
      %1544 = vrot.lane.b32.xlu0 %v1453, 64
      %v1545 = vpop.permute.xlu0 %1544
      %1546 = vrot.lane.b32.xlu0 %v1454, 64
      %v1547 = vpop.permute.xlu0 %1546
      %1548 = vrot.lane.b32.xlu0 %v1455, 64
      %v1549 = vpop.permute.xlu0 %1548
      %1550 = vrot.lane.b32.xlu0 %v1456, 64
      %v1551 = vpop.permute.xlu0 %1550
      %1552 = vrot.lane.b32.xlu0 %v1457, 64
      %v1553 = vpop.permute.xlu0 %1552
      %1554 = vrot.lane.b32.xlu0 %v1458, 64
      %v1555 = vpop.permute.xlu0 %1554
      %1556 = vrot.lane.b32.xlu0 %v1459, 64
      %v1557 = vpop.permute.xlu0 %1556
      %1558 = vrot.lane.b32.xlu0 %v1460, 64
      %v1559 = vpop.permute.xlu0 %1558
      %1560 = vrot.lane.b32.xlu0 %v1461, 64
      %v1561 = vpop.permute.xlu0 %1560
      %1562 = vrot.lane.b32.xlu0 %v1462, 64
      %v1563 = vpop.permute.xlu0 %1562
      %1564 = vrot.lane.b32.xlu0 %v1463, 64
      %v1565 = vpop.permute.xlu0 %1564
      %1566 = vrot.lane.b32.xlu0 %v1464, 64
      %v1567 = vpop.permute.xlu0 %1566
      %1568 = vrot.lane.b32.xlu0 %v1465, 64
      %v1569 = vpop.permute.xlu0 %1568
      %1570 = vrot.lane.b32.xlu0 %v1466, 64
      %v1571 = vpop.permute.xlu0 %1570
      %1572 = vrot.lane.b32.xlu0 %v1467, 64
      %v1573 = vpop.permute.xlu0 %1572
      %1574 = vrot.lane.b32.xlu0 %v1468, 64
      %v1575 = vpop.permute.xlu0 %1574
      %1576 = vrot.lane.b32.xlu0 %v1469, 64
      %v1577 = vpop.permute.xlu0 %1576
      %1614 = vst.msk [vmem:[#allocation2 + $0xc] sm:$0xf] %vm533, %v1507
      %1615 = vst.msk [vmem:[#allocation2 + $0x20] sm:$0xf] %vm533, %v1509
      %1616 = vst.msk [vmem:[#allocation2 + $0x34] sm:$0xf] %vm533, %v1511
      %1617 = vst.msk [vmem:[#allocation2 + $0x48] sm:$0xf] %vm533, %v1513
      %1618 = vst.msk [vmem:[#allocation2 + $0x5c] sm:$0xf] %vm533, %v1515
      %1619 = vst.msk [vmem:[#allocation2 + $0x70] sm:$0xf] %vm533, %v1517
      %1620 = vst.msk [vmem:[#allocation2 + $0x84] sm:$0xf] %vm533, %v1519
      %1621 = vst.msk [vmem:[#allocation2 + $0x98] sm:$0xf] %vm533, %v1521
      %1622 = vst.msk [vmem:[#allocation2 + $0xac] sm:$0xf] %vm533, %v1523
      %1623 = vst.msk [vmem:[#allocation2 + $0xc0] sm:$0xf] %vm533, %v1525
      %1624 = vst.msk [vmem:[#allocation2 + $0xd4] sm:$0xf] %vm533, %v1527
      %1625 = vst.msk [vmem:[#allocation2 + $0xe8] sm:$0xf] %vm533, %v1529
      %1626 = vst.msk [vmem:[#allocation2 + $0xfc] sm:$0xf] %vm533, %v1531
      %1627 = vst.msk [vmem:[#allocation2 + $0x110] sm:$0xf] %vm533, %v1533
      %1628 = vst.msk [vmem:[#allocation2 + $0x124] sm:$0xf] %vm533, %v1535
      %1629 = vst.msk [vmem:[#allocation2 + $0x138] sm:$0xf] %vm533, %v1537
      %1630 = vst.msk [vmem:[#allocation2 + $0x14c] sm:$0xf] %vm533, %v1539
      %1631 = vst.msk [vmem:[#allocation2 + $0x160] sm:$0xf] %vm533, %v1541
      %1632 = vst.msk [vmem:[#allocation2 + $0x174] sm:$0xf] %vm533, %v1543
      %1633 = vst.msk [vmem:[#allocation2 + $0x188] sm:$0xf] %vm533, %v1545
      %1634 = vst.msk [vmem:[#allocation2 + $0x19c] sm:$0xf] %vm533, %v1547
      %1635 = vst.msk [vmem:[#allocation2 + $0x1b0] sm:$0xf] %vm533, %v1549
      %1636 = vst.msk [vmem:[#allocation2 + $0x1c4] sm:$0xf] %vm533, %v1551
      %1637 = vst.msk [vmem:[#allocation2 + $0x1d8] sm:$0xf] %vm533, %v1553
      %1638 = vst.msk [vmem:[#allocation2 + $0x1ec] sm:$0xf] %vm533, %v1555
      %1639 = vst.msk [vmem:[#allocation2 + $0x200] sm:$0xf] %vm533, %v1557
      %1640 = vst.msk [vmem:[#allocation2 + $0x214] sm:$0xf] %vm533, %v1559
      %1641 = vst.msk [vmem:[#allocation2 + $0x228] sm:$0xf] %vm533, %v1561
      %1642 = vst.msk [vmem:[#allocation2 + $0x23c] sm:$0xf] %vm533, %v1563
      %1643 = vst.msk [vmem:[#allocation2 + $0x250] sm:$0xf] %vm533, %v1565
      %1644 = vst.msk [vmem:[#allocation2 + $0x264] sm:$0xf] %vm533, %v1567
      %1645 = vst.msk [vmem:[#allocation2 + $0x278] sm:$0xf] %vm533, %v1569
      %1646 = vst.msk [vmem:[#allocation2 + $0x28c] sm:$0xf] %vm533, %v1571
      %1647 = vst.msk [vmem:[#allocation2 + $0x2a0] sm:$0xf] %vm533, %v1573
      %1648 = vst.msk [vmem:[#allocation2 + $0x2b4] sm:$0xf] %vm533, %v1575
      %1649 = vst.msk [vmem:[#allocation2 + $0x2c8] sm:$0xf] %vm533, %v1577
      %v1650 = vld [vmem:[%s198 + $0x26] sm:$0xff]
      %v1651 = vld [vmem:[%s198 + $0x2e] sm:$0xff]
      %v1652 = vld [vmem:[%s198 + $0x36] sm:$0xff]
      %v1653 = vld [vmem:[%s198 + $0x3e] sm:$0xff]
      %v1654 = vld [vmem:[%s198 + $0x46] sm:$0xff]
      %v1655 = vld [vmem:[%s198 + $0x4e] sm:$0xff]
      %v1656 = vld [vmem:[%s198 + $0x56] sm:$0xff]
      %v1657 = vld [vmem:[%s198 + $0x5e] sm:$0xff]
      %v1658 = vld [vmem:[%s198 + $0x66] sm:$0xff]
      %v1659 = vld [vmem:[%s198 + $0x6e] sm:$0xff]
      %v1660 = vld [vmem:[%s198 + $0x76] sm:$0xff]
      %v1661 = vld [vmem:[%s198 + $0x7e] sm:$0xff]
      %v1662 = vld [vmem:[%s198 + $0x86] sm:$0xff]
      %v1663 = vld [vmem:[%s198 + $0x8e] sm:$0xff]
      %v1664 = vld [vmem:[%s198 + $0x96] sm:$0xff]
      %v1665 = vld [vmem:[%s198 + $0x9e] sm:$0xff]
      %v1666 = vld [vmem:[%s198 + $0xa6] sm:$0xff]
      %v1667 = vld [vmem:[%s198 + $0xae] sm:$0xff]
      %v1668 = vld [vmem:[%s198 + $0xb6] sm:$0xff]
      %v1669 = vld [vmem:[%s198 + $0xbe] sm:$0xff]
      %v1670 = vld [vmem:[%s198 + $0xc6] sm:$0xff]
      %v1671 = vld [vmem:[%s198 + $0xce] sm:$0xff]
      %v1672 = vld [vmem:[%s198 + $0xd6] sm:$0xff]
      %v1673 = vld [vmem:[%s198 + $0xde] sm:$0xff]
      %v1674 = vld [vmem:[%s198 + $0xe6] sm:$0xff]
      %v1675 = vld [vmem:[%s198 + $0xee] sm:$0xff]
      %v1676 = vld [vmem:[%s198 + $0xf6] sm:$0xff]
      %v1677 = vld [vmem:[%s198 + $0xfe] sm:$0xff]
      %v1678 = vld [vmem:[%s198 + $0x106] sm:$0xff]
      %v1679 = vld [vmem:[%s198 + $0x10e] sm:$0xff]
      %v1680 = vld [vmem:[%s198 + $0x116] sm:$0xff]
      %v1681 = vld [vmem:[%s198 + $0x11e] sm:$0xff]
      %v1682 = vld [vmem:[%s198 + $0x126] sm:$0xff]
      %v1683 = vld [vmem:[%s198 + $0x12e] sm:$0xff]
      %v1684 = vld [vmem:[%s198 + $0x136] sm:$0xff]
      %v1685 = vld [vmem:[%s198 + $0x13e] sm:$0xff]
      %v1686 = vpack.c.bf16 %v1650, %v1650
      %v1687 = vpack.c.bf16 %v1651, %v1651
      %v1688 = vpack.c.bf16 %v1652, %v1652
      %v1689 = vpack.c.bf16 %v1653, %v1653
      %v1690 = vpack.c.bf16 %v1654, %v1654
      %v1691 = vpack.c.bf16 %v1655, %v1655
      %v1692 = vpack.c.bf16 %v1656, %v1656
      %v1693 = vpack.c.bf16 %v1657, %v1657
      %v1694 = vpack.c.bf16 %v1658, %v1658
      %v1695 = vpack.c.bf16 %v1659, %v1659
      %v1696 = vpack.c.bf16 %v1660, %v1660
      %v1697 = vpack.c.bf16 %v1661, %v1661
      %v1698 = vpack.c.bf16 %v1662, %v1662
      %v1699 = vpack.c.bf16 %v1663, %v1663
      %v1700 = vpack.c.bf16 %v1664, %v1664
      %v1701 = vpack.c.bf16 %v1665, %v1665
      %v1702 = vpack.c.bf16 %v1666, %v1666
      %v1703 = vpack.c.bf16 %v1667, %v1667
      %v1704 = vpack.c.bf16 %v1668, %v1668
      %v1705 = vpack.c.bf16 %v1669, %v1669
      %v1706 = vpack.c.bf16 %v1670, %v1670
      %v1707 = vpack.c.bf16 %v1671, %v1671
      %v1708 = vpack.c.bf16 %v1672, %v1672
      %v1709 = vpack.c.bf16 %v1673, %v1673
      %v1710 = vpack.c.bf16 %v1674, %v1674
      %v1711 = vpack.c.bf16 %v1675, %v1675
      %v1712 = vpack.c.bf16 %v1676, %v1676
      %v1713 = vpack.c.bf16 %v1677, %v1677
      %v1714 = vpack.c.bf16 %v1678, %v1678
      %v1715 = vpack.c.bf16 %v1679, %v1679
      %v1716 = vpack.c.bf16 %v1680, %v1680
      %v1717 = vpack.c.bf16 %v1681, %v1681
      %v1718 = vpack.c.bf16 %v1682, %v1682
      %v1719 = vpack.c.bf16 %v1683, %v1683
      %v1720 = vpack.c.bf16 %v1684, %v1684
      %v1721 = vpack.c.bf16 %v1685, %v1685
      %1722 = vst.msk [vmem:[#allocation2 + $0x10] sm:$0xf] %vm280, %v1686
      %1723 = vst.msk [vmem:[#allocation2 + $0x24] sm:$0xf] %vm280, %v1687
      %1724 = vst.msk [vmem:[#allocation2 + $0x38] sm:$0xf] %vm280, %v1688
      %1725 = vst.msk [vmem:[#allocation2 + $0x4c] sm:$0xf] %vm280, %v1689
      %1726 = vst.msk [vmem:[#allocation2 + $0x60] sm:$0xf] %vm280, %v1690
      %1727 = vst.msk [vmem:[#allocation2 + $0x74] sm:$0xf] %vm280, %v1691
      %1728 = vst.msk [vmem:[#allocation2 + $0x88] sm:$0xf] %vm280, %v1692
      %1729 = vst.msk [vmem:[#allocation2 + $0x9c] sm:$0xf] %vm280, %v1693
      %1730 = vst.msk [vmem:[#allocation2 + $0xb0] sm:$0xf] %vm280, %v1694
      %1731 = vst.msk [vmem:[#allocation2 + $0xc4] sm:$0xf] %vm280, %v1695
      %1732 = vst.msk [vmem:[#allocation2 + $0xd8] sm:$0xf] %vm280, %v1696
      %1733 = vst.msk [vmem:[#allocation2 + $0xec] sm:$0xf] %vm280, %v1697
      %1734 = vst.msk [vmem:[#allocation2 + $0x100] sm:$0xf] %vm280, %v1698
      %1735 = vst.msk [vmem:[#allocation2 + $0x114] sm:$0xf] %vm280, %v1699
      %1736 = vst.msk [vmem:[#allocation2 + $0x128] sm:$0xf] %vm280, %v1700
      %1737 = vst.msk [vmem:[#allocation2 + $0x13c] sm:$0xf] %vm280, %v1701
      %1738 = vst.msk [vmem:[#allocation2 + $0x150] sm:$0xf] %vm280, %v1702
      %1739 = vst.msk [vmem:[#allocation2 + $0x164] sm:$0xf] %vm280, %v1703
      %1740 = vst.msk [vmem:[#allocation2 + $0x178] sm:$0xf] %vm280, %v1704
      %1741 = vst.msk [vmem:[#allocation2 + $0x18c] sm:$0xf] %vm280, %v1705
      %1742 = vst.msk [vmem:[#allocation2 + $0x1a0] sm:$0xf] %vm280, %v1706
      %1743 = vst.msk [vmem:[#allocation2 + $0x1b4] sm:$0xf] %vm280, %v1707
      %1744 = vst.msk [vmem:[#allocation2 + $0x1c8] sm:$0xf] %vm280, %v1708
      %1745 = vst.msk [vmem:[#allocation2 + $0x1dc] sm:$0xf] %vm280, %v1709
      %1746 = vst.msk [vmem:[#allocation2 + $0x1f0] sm:$0xf] %vm280, %v1710
      %1747 = vst.msk [vmem:[#allocation2 + $0x204] sm:$0xf] %vm280, %v1711
      %1748 = vst.msk [vmem:[#allocation2 + $0x218] sm:$0xf] %vm280, %v1712
      %1749 = vst.msk [vmem:[#allocation2 + $0x22c] sm:$0xf] %vm280, %v1713
      %1750 = vst.msk [vmem:[#allocation2 + $0x240] sm:$0xf] %vm280, %v1714
      %1751 = vst.msk [vmem:[#allocation2 + $0x254] sm:$0xf] %vm280, %v1715
      %1752 = vst.msk [vmem:[#allocation2 + $0x268] sm:$0xf] %vm280, %v1716
      %1753 = vst.msk [vmem:[#allocation2 + $0x27c] sm:$0xf] %vm280, %v1717
      %1754 = vst.msk [vmem:[#allocation2 + $0x290] sm:$0xf] %vm280, %v1718
      %1755 = vst.msk [vmem:[#allocation2 + $0x2a4] sm:$0xf] %vm280, %v1719
      %1756 = vst.msk [vmem:[#allocation2 + $0x2b8] sm:$0xf] %vm280, %v1720
      %1757 = vst.msk [vmem:[#allocation2 + $0x2cc] sm:$0xf] %vm280, %v1721
      %v1758 = vld [vmem:[#allocation2] sm:$0xff]
      %v1759 = vld [vmem:[#allocation2 + $0x8] sm:$0xff]
      %v1760 = vld [vmem:[#allocation2 + $0x10] sm:$0xf]
      %v1761 = vld [vmem:[#allocation2 + $0x14] sm:$0xff]
      %v1762 = vld [vmem:[#allocation2 + $0x1c] sm:$0xff]
      %v1763 = vld [vmem:[#allocation2 + $0x24] sm:$0xf]
      %v1764 = vld [vmem:[#allocation2 + $0x28] sm:$0xff]
      %v1765 = vld [vmem:[#allocation2 + $0x30] sm:$0xff]
      %v1766 = vld [vmem:[#allocation2 + $0x38] sm:$0xf]
      %v1767 = vld [vmem:[#allocation2 + $0x3c] sm:$0xff]
      %v1768 = vld [vmem:[#allocation2 + $0x44] sm:$0xff]
      %v1769 = vld [vmem:[#allocation2 + $0x4c] sm:$0xf]
      %v1770 = vld [vmem:[#allocation2 + $0x50] sm:$0xff]
      %v1771 = vld [vmem:[#allocation2 + $0x58] sm:$0xff]
      %v1772 = vld [vmem:[#allocation2 + $0x60] sm:$0xf]
      %v1773 = vld [vmem:[#allocation2 + $0x64] sm:$0xff]
      %v1774 = vld [vmem:[#allocation2 + $0x6c] sm:$0xff]
      %v1775 = vld [vmem:[#allocation2 + $0x74] sm:$0xf]
      %v1776 = vld [vmem:[#allocation2 + $0x78] sm:$0xff]
      %v1777 = vld [vmem:[#allocation2 + $0x80] sm:$0xff]
      %v1778 = vld [vmem:[#allocation2 + $0x88] sm:$0xf]
      %v1779 = vld [vmem:[#allocation2 + $0x8c] sm:$0xff]
      %v1780 = vld [vmem:[#allocation2 + $0x94] sm:$0xff]
      %v1781 = vld [vmem:[#allocation2 + $0x9c] sm:$0xf]
      %v1782 = vld [vmem:[#allocation2 + $0xa0] sm:$0xff]
      %v1783 = vld [vmem:[#allocation2 + $0xa8] sm:$0xff]
      %v1784 = vld [vmem:[#allocation2 + $0xb0] sm:$0xf]
      %v1785 = vld [vmem:[#allocation2 + $0xb4] sm:$0xff]
      %v1786 = vld [vmem:[#allocation2 + $0xbc] sm:$0xff]
      %v1787 = vld [vmem:[#allocation2 + $0xc4] sm:$0xf]
      %v1788 = vld [vmem:[#allocation2 + $0xc8] sm:$0xff]
      %v1789 = vld [vmem:[#allocation2 + $0xd0] sm:$0xff]
      %v1790 = vld [vmem:[#allocation2 + $0xd8] sm:$0xf]
      %v1791 = vld [vmem:[#allocation2 + $0xdc] sm:$0xff]
      %v1792 = vld [vmem:[#allocation2 + $0xe4] sm:$0xff]
      %v1793 = vld [vmem:[#allocation2 + $0xec] sm:$0xf]
      %v1794 = vld [vmem:[#allocation2 + $0xf0] sm:$0xff]
      %v1795 = vld [vmem:[#allocation2 + $0xf8] sm:$0xff]
      %v1796 = vld [vmem:[#allocation2 + $0x100] sm:$0xf]
      %v1797 = vld [vmem:[#allocation2 + $0x104] sm:$0xff]
      %v1798 = vld [vmem:[#allocation2 + $0x10c] sm:$0xff]
      %v1799 = vld [vmem:[#allocation2 + $0x114] sm:$0xf]
      %v1800 = vld [vmem:[#allocation2 + $0x118] sm:$0xff]
      %v1801 = vld [vmem:[#allocation2 + $0x120] sm:$0xff]
      %v1802 = vld [vmem:[#allocation2 + $0x128] sm:$0xf]
      %v1803 = vld [vmem:[#allocation2 + $0x12c] sm:$0xff]
      %v1804 = vld [vmem:[#allocation2 + $0x134] sm:$0xff]
      %v1805 = vld [vmem:[#allocation2 + $0x13c] sm:$0xf]
      %v1806 = vld [vmem:[#allocation2 + $0x140] sm:$0xff]
      %v1807 = vld [vmem:[#allocation2 + $0x148] sm:$0xff]
      %v1808 = vld [vmem:[#allocation2 + $0x150] sm:$0xf]
      %v1809 = vld [vmem:[#allocation2 + $0x154] sm:$0xff]
      %v1810 = vld [vmem:[#allocation2 + $0x15c] sm:$0xff]
      %v1811 = vld [vmem:[#allocation2 + $0x164] sm:$0xf]
      %v1812 = vld [vmem:[#allocation2 + $0x168] sm:$0xff]
      %v1813 = vld [vmem:[#allocation2 + $0x170] sm:$0xff]
      %v1814 = vld [vmem:[#allocation2 + $0x178] sm:$0xf]
      %v1815 = vld [vmem:[#allocation2 + $0x17c] sm:$0xff]
      %v1816 = vld [vmem:[#allocation2 + $0x184] sm:$0xff]
      %v1817 = vld [vmem:[#allocation2 + $0x18c] sm:$0xf]
      %v1818 = vld [vmem:[#allocation2 + $0x190] sm:$0xff]
      %v1819 = vld [vmem:[#allocation2 + $0x198] sm:$0xff]
      %v1820 = vld [vmem:[#allocation2 + $0x1a0] sm:$0xf]
      %v1821 = vld [vmem:[#allocation2 + $0x1a4] sm:$0xff]
      %v1822 = vld [vmem:[#allocation2 + $0x1ac] sm:$0xff]
      %v1823 = vld [vmem:[#allocation2 + $0x1b4] sm:$0xf]
      %v1824 = vld [vmem:[#allocation2 + $0x1b8] sm:$0xff]
      %v1825 = vld [vmem:[#allocation2 + $0x1c0] sm:$0xff]
      %v1826 = vld [vmem:[#allocation2 + $0x1c8] sm:$0xf]
      %v1827 = vld [vmem:[#allocation2 + $0x1cc] sm:$0xff]
      %v1828 = vld [vmem:[#allocation2 + $0x1d4] sm:$0xff]
      %v1829 = vld [vmem:[#allocation2 + $0x1dc] sm:$0xf]
      %v1830 = vld [vmem:[#allocation2 + $0x1e0] sm:$0xff]
      %v1831 = vld [vmem:[#allocation2 + $0x1e8] sm:$0xff]
      %v1832 = vld [vmem:[#allocation2 + $0x1f0] sm:$0xf]
      %v1833 = vld [vmem:[#allocation2 + $0x1f4] sm:$0xff]
      %v1834 = vld [vmem:[#allocation2 + $0x1fc] sm:$0xff]
      %v1835 = vld [vmem:[#allocation2 + $0x204] sm:$0xf]
      %v1836 = vld [vmem:[#allocation2 + $0x208] sm:$0xff]
      %v1837 = vld [vmem:[#allocation2 + $0x210] sm:$0xff]
      %v1838 = vld [vmem:[#allocation2 + $0x218] sm:$0xf]
      %v1839 = vld [vmem:[#allocation2 + $0x21c] sm:$0xff]
      %v1840 = vld [vmem:[#allocation2 + $0x224] sm:$0xff]
      %v1841 = vld [vmem:[#allocation2 + $0x22c] sm:$0xf]
      %v1842 = vld [vmem:[#allocation2 + $0x230] sm:$0xff]
      %v1843 = vld [vmem:[#allocation2 + $0x238] sm:$0xff]
      %v1844 = vld [vmem:[#allocation2 + $0x240] sm:$0xf]
      %v1845 = vld [vmem:[#allocation2 + $0x244] sm:$0xff]
      %v1846 = vld [vmem:[#allocation2 + $0x24c] sm:$0xff]
      %v1847 = vld [vmem:[#allocation2 + $0x254] sm:$0xf]
      %v1848 = vld [vmem:[#allocation2 + $0x258] sm:$0xff]
      %v1849 = vld [vmem:[#allocation2 + $0x260] sm:$0xff]
      %v1850 = vld [vmem:[#allocation2 + $0x268] sm:$0xf]
      %v1851 = vld [vmem:[#allocation2 + $0x26c] sm:$0xff]
      %v1852 = vld [vmem:[#allocation2 + $0x274] sm:$0xff]
      %v1853 = vld [vmem:[#allocation2 + $0x27c] sm:$0xf]
      %v1854 = vld [vmem:[#allocation2 + $0x280] sm:$0xff]
      %v1855 = vld [vmem:[#allocation2 + $0x288] sm:$0xff]
      %v1856 = vld [vmem:[#allocation2 + $0x290] sm:$0xf]
      %v1857 = vld [vmem:[#allocation2 + $0x294] sm:$0xff]
      %v1858 = vld [vmem:[#allocation2 + $0x29c] sm:$0xff]
      %v1859 = vld [vmem:[#allocation2 + $0x2a4] sm:$0xf]
      %v1860 = vld [vmem:[#allocation2 + $0x2a8] sm:$0xff]
      %v1861 = vld [vmem:[#allocation2 + $0x2b0] sm:$0xff]
      %v1862 = vld [vmem:[#allocation2 + $0x2b8] sm:$0xf]
      %v1863 = vld [vmem:[#allocation2 + $0x2bc] sm:$0xff]
      %v1864 = vld [vmem:[#allocation2 + $0x2c4] sm:$0xff]
      %v1865 = vld [vmem:[#allocation2 + $0x2cc] sm:$0xf]
      %v1866 = vld [vmem:[%s1] sm:$0xf]
      %v1867 = vld [vmem:[%s1 + $0x4] sm:$0xf]
      %v1868 = vld [vmem:[%s1 + $0x8] sm:$0xf]
      %v1869 = vld [vmem:[%s1 + $0xc] sm:$0xf]
      %v1870 = vld [vmem:[%s1 + $0x10] sm:$0xf]
      %v1871 = vld [vmem:[%s1 + $0x14] sm:$0xf]
      %v1872 = vld [vmem:[%s1 + $0x18] sm:$0xf]
      %v1873 = vld [vmem:[%s1 + $0x1c] sm:$0xf]
      %v1874 = vld [vmem:[%s1 + $0x20] sm:$0xf]
      %v1875 = vld [vmem:[%s1 + $0x24] sm:$0xf]
      %v1876 = vld [vmem:[%s1 + $0x28] sm:$0xf]
      %v1877 = vld [vmem:[%s1 + $0x2c] sm:$0xf]
      %v1878 = vld [vmem:[%s1 + $0x30] sm:$0xf]
      %v1879 = vld [vmem:[%s1 + $0x34] sm:$0xf]
      %v1880 = vld [vmem:[%s1 + $0x38] sm:$0xf]
      %v1881 = vld [vmem:[%s1 + $0x3c] sm:$0xf]
      %v1882 = vld [vmem:[%s1 + $0x40] sm:$0xf]
      %v1883 = vld [vmem:[%s1 + $0x44] sm:$0xf]
      %v1884 = vld [vmem:[%s1 + $0x48] sm:$0xf]
      %v1885 = vld [vmem:[%s1 + $0x4c] sm:$0xf]
      %v1886 = vld [vmem:[%s1 + $0x50] sm:$0xf]
      %v1887 = vld [vmem:[%s1 + $0x54] sm:$0xf]
      %v1888 = vld [vmem:[%s1 + $0x58] sm:$0xf]
      %v1889 = vld [vmem:[%s1 + $0x5c] sm:$0xf]
      %v1890 = vld [vmem:[%s1 + $0x60] sm:$0xf]
      %v1891 = vld [vmem:[%s1 + $0x64] sm:$0xf]
      %v1892 = vld [vmem:[%s1 + $0x68] sm:$0xf]
      %v1893 = vld [vmem:[%s1 + $0x6c] sm:$0xf]
      %v1894 = vld [vmem:[%s1 + $0x70] sm:$0xf]
      %v1895 = vld [vmem:[%s1 + $0x74] sm:$0xf]
      %v1896 = vld [vmem:[%s1 + $0x78] sm:$0xf]
      %v1897 = vld [vmem:[%s1 + $0x7c] sm:$0xf]
      %v1898 = vld [vmem:[%s1 + $0x80] sm:$0xf]
      %v1899 = vld [vmem:[%s1 + $0x84] sm:$0xf]
      %v1900 = vld [vmem:[%s1 + $0x88] sm:$0xf]
      %v1901 = vld [vmem:[%s1 + $0x8c] sm:$0xf]
      %v1902 = vld [vmem:[%s1 + $0x90] sm:$0xf]
      %v1903 = vld [vmem:[%s1 + $0x94] sm:$0xf]
      %v1904 = vld [vmem:[%s1 + $0x98] sm:$0xf]
      %v1905 = vld [vmem:[%s1 + $0x9c] sm:$0xf]
      %v1906 = vld [vmem:[%s1 + $0xa0] sm:$0xf]
      %v1907 = vld [vmem:[%s1 + $0xa4] sm:$0xf]
      %v1908 = vld [vmem:[%s1 + $0xa8] sm:$0xf]
      %v1909 = vld [vmem:[%s1 + $0xac] sm:$0xf]
      %v1910 = vld [vmem:[%s1 + $0xb0] sm:$0xf]
      %v1911 = vld [vmem:[%s1 + $0xb4] sm:$0xf]
      %v1912 = vld [vmem:[%s1 + $0xb8] sm:$0xf]
      %v1913 = vld [vmem:[%s1 + $0xbc] sm:$0xf]
      %v1914 = vld [vmem:[%s1 + $0xc0] sm:$0xf]
      %v1915 = vld [vmem:[%s1 + $0xc4] sm:$0xf]
      %v1916 = vld [vmem:[%s1 + $0xc8] sm:$0xf]
      %v1917 = vld [vmem:[%s1 + $0xcc] sm:$0xf]
      %v1918 = vld [vmem:[%s1 + $0xd0] sm:$0xf]
      %v1919 = vld [vmem:[%s1 + $0xd4] sm:$0xf]
      %v1920 = vld [vmem:[%s1 + $0xd8] sm:$0xf]
      %v1921 = vld [vmem:[%s1 + $0xdc] sm:$0xf]
      %v1922 = vld [vmem:[%s1 + $0xe0] sm:$0xf]
      %v1923 = vld [vmem:[%s1 + $0xe4] sm:$0xf]
      %v1924 = vld [vmem:[%s1 + $0xe8] sm:$0xf]
      %v1925 = vld [vmem:[%s1 + $0xec] sm:$0xf]
      %v1926 = vld [vmem:[%s1 + $0xf0] sm:$0xf]
      %v1927 = vld [vmem:[%s1 + $0xf4] sm:$0xf]
      %v1928 = vld [vmem:[%s1 + $0xf8] sm:$0xf]
      %v1929 = vld [vmem:[%s1 + $0xfc] sm:$0xf]
      %v1930 = vld [vmem:[%s1 + $0x100] sm:$0xf]
      %v1931 = vld [vmem:[%s1 + $0x104] sm:$0xf]
      %v1932 = vld [vmem:[%s1 + $0x108] sm:$0xf]
      %v1933 = vld [vmem:[%s1 + $0x10c] sm:$0xf]
      %v1934 = vld [vmem:[%s1 + $0x110] sm:$0xf]
      %v1935 = vld [vmem:[%s1 + $0x114] sm:$0xf]
      %v1936 = vld [vmem:[%s1 + $0x118] sm:$0xf]
      %v1937 = vld [vmem:[%s1 + $0x11c] sm:$0xf]
      %v2046 = vunpack.c.l.b16 %v1758
      %v2047 = vunpack.c.h.b16 %v1758
      %v2048 = vunpack.c.l.b16 %v1759
      %v2049 = vunpack.c.h.b16 %v1759
      %v2050 = vunpack.c.l.b16 %v1760
      %v2051 = vunpack.c.l.b16 %v1761
      %v2052 = vunpack.c.h.b16 %v1761
      %v2053 = vunpack.c.l.b16 %v1762
      %v2054 = vunpack.c.h.b16 %v1762
      %v2055 = vunpack.c.l.b16 %v1763
      %v2056 = vunpack.c.l.b16 %v1764
      %v2057 = vunpack.c.h.b16 %v1764
      %v2058 = vunpack.c.l.b16 %v1765
      %v2059 = vunpack.c.h.b16 %v1765
      %v2060 = vunpack.c.l.b16 %v1766
      %v2061 = vunpack.c.l.b16 %v1767
      %v2062 = vunpack.c.h.b16 %v1767
      %v2063 = vunpack.c.l.b16 %v1768
      %v2064 = vunpack.c.h.b16 %v1768
      %v2065 = vunpack.c.l.b16 %v1769
      %v2066 = vunpack.c.l.b16 %v1770
      %v2067 = vunpack.c.h.b16 %v1770
      %v2068 = vunpack.c.l.b16 %v1771
      %v2069 = vunpack.c.h.b16 %v1771
      %v2070 = vunpack.c.l.b16 %v1772
      %v2071 = vunpack.c.l.b16 %v1773
      %v2072 = vunpack.c.h.b16 %v1773
      %v2073 = vunpack.c.l.b16 %v1774
      %v2074 = vunpack.c.h.b16 %v1774
      %v2075 = vunpack.c.l.b16 %v1775
      %v2076 = vunpack.c.l.b16 %v1776
      %v2077 = vunpack.c.h.b16 %v1776
      %v2078 = vunpack.c.l.b16 %v1777
      %v2079 = vunpack.c.h.b16 %v1777
      %v2080 = vunpack.c.l.b16 %v1778
      %v2081 = vunpack.c.l.b16 %v1779
      %v2082 = vunpack.c.h.b16 %v1779
      %v2083 = vunpack.c.l.b16 %v1780
      %v2084 = vunpack.c.h.b16 %v1780
      %v2085 = vunpack.c.l.b16 %v1781
      %v2086 = vunpack.c.l.b16 %v1782
      %v2087 = vunpack.c.h.b16 %v1782
      %v2088 = vunpack.c.l.b16 %v1783
      %v2089 = vunpack.c.h.b16 %v1783
      %v2090 = vunpack.c.l.b16 %v1784
      %v2091 = vunpack.c.l.b16 %v1785
      %v2092 = vunpack.c.h.b16 %v1785
      %v2093 = vunpack.c.l.b16 %v1786
      %v2094 = vunpack.c.h.b16 %v1786
      %v2095 = vunpack.c.l.b16 %v1787
      %v2096 = vunpack.c.l.b16 %v1788
      %v2097 = vunpack.c.h.b16 %v1788
      %v2098 = vunpack.c.l.b16 %v1789
      %v2099 = vunpack.c.h.b16 %v1789
      %v2100 = vunpack.c.l.b16 %v1790
      %v2101 = vunpack.c.l.b16 %v1791
      %v2102 = vunpack.c.h.b16 %v1791
      %v2103 = vunpack.c.l.b16 %v1792
      %v2104 = vunpack.c.h.b16 %v1792
      %v2105 = vunpack.c.l.b16 %v1793
      %v2106 = vunpack.c.l.b16 %v1794
      %v2107 = vunpack.c.h.b16 %v1794
      %v2108 = vunpack.c.l.b16 %v1795
      %v2109 = vunpack.c.h.b16 %v1795
      %v2110 = vunpack.c.l.b16 %v1796
      %v2111 = vunpack.c.l.b16 %v1797
      %v2112 = vunpack.c.h.b16 %v1797
      %v2113 = vunpack.c.l.b16 %v1798
      %v2114 = vunpack.c.h.b16 %v1798
      %v2115 = vunpack.c.l.b16 %v1799
      %v2116 = vunpack.c.l.b16 %v1800
      %v2117 = vunpack.c.h.b16 %v1800
      %v2118 = vunpack.c.l.b16 %v1801
      %v2119 = vunpack.c.h.b16 %v1801
      %v2120 = vunpack.c.l.b16 %v1802
      %v2121 = vunpack.c.l.b16 %v1803
      %v2122 = vunpack.c.h.b16 %v1803
      %v2123 = vunpack.c.l.b16 %v1804
      %v2124 = vunpack.c.h.b16 %v1804
      %v2125 = vunpack.c.l.b16 %v1805
      %v2126 = vunpack.c.l.b16 %v1806
      %v2127 = vunpack.c.h.b16 %v1806
      %v2128 = vunpack.c.l.b16 %v1807
      %v2129 = vunpack.c.h.b16 %v1807
      %v2130 = vunpack.c.l.b16 %v1808
      %v2131 = vunpack.c.l.b16 %v1809
      %v2132 = vunpack.c.h.b16 %v1809
      %v2133 = vunpack.c.l.b16 %v1810
      %v2134 = vunpack.c.h.b16 %v1810
      %v2135 = vunpack.c.l.b16 %v1811
      %v2136 = vunpack.c.l.b16 %v1812
      %v2137 = vunpack.c.h.b16 %v1812
      %v2138 = vunpack.c.l.b16 %v1813
      %v2139 = vunpack.c.h.b16 %v1813
      %v2140 = vunpack.c.l.b16 %v1814
      %v2141 = vunpack.c.l.b16 %v1815
      %v2142 = vunpack.c.h.b16 %v1815
      %v2143 = vunpack.c.l.b16 %v1816
      %v2144 = vunpack.c.h.b16 %v1816
      %v2145 = vunpack.c.l.b16 %v1817
      %v2146 = vunpack.c.l.b16 %v1818
      %v2147 = vunpack.c.h.b16 %v1818
      %v2148 = vunpack.c.l.b16 %v1819
      %v2149 = vunpack.c.h.b16 %v1819
      %v2150 = vunpack.c.l.b16 %v1820
      %v2151 = vunpack.c.l.b16 %v1821
      %v2152 = vunpack.c.h.b16 %v1821
      %v2153 = vunpack.c.l.b16 %v1822
      %v2154 = vunpack.c.h.b16 %v1822
      %v2155 = vunpack.c.l.b16 %v1823
      %v2156 = vunpack.c.l.b16 %v1824
      %v2157 = vunpack.c.h.b16 %v1824
      %v2158 = vunpack.c.l.b16 %v1825
      %v2159 = vunpack.c.h.b16 %v1825
      %v2160 = vunpack.c.l.b16 %v1826
      %v2161 = vunpack.c.l.b16 %v1827
      %v2162 = vunpack.c.h.b16 %v1827
      %v2163 = vunpack.c.l.b16 %v1828
      %v2164 = vunpack.c.h.b16 %v1828
      %v2165 = vunpack.c.l.b16 %v1829
      %v2166 = vunpack.c.l.b16 %v1830
      %v2167 = vunpack.c.h.b16 %v1830
      %v2168 = vunpack.c.l.b16 %v1831
      %v2169 = vunpack.c.h.b16 %v1831
      %v2170 = vunpack.c.l.b16 %v1832
      %v2171 = vunpack.c.l.b16 %v1833
      %v2172 = vunpack.c.h.b16 %v1833
      %v2173 = vunpack.c.l.b16 %v1834
      %v2174 = vunpack.c.h.b16 %v1834
      %v2175 = vunpack.c.l.b16 %v1835
      %v2176 = vunpack.c.l.b16 %v1836
      %v2177 = vunpack.c.h.b16 %v1836
      %v2178 = vunpack.c.l.b16 %v1837
      %v2179 = vunpack.c.h.b16 %v1837
      %v2180 = vunpack.c.l.b16 %v1838
      %v2181 = vunpack.c.l.b16 %v1839
      %v2182 = vunpack.c.h.b16 %v1839
      %v2183 = vunpack.c.l.b16 %v1840
      %v2184 = vunpack.c.h.b16 %v1840
      %v2185 = vunpack.c.l.b16 %v1841
      %v2186 = vunpack.c.l.b16 %v1842
      %v2187 = vunpack.c.h.b16 %v1842
      %v2188 = vunpack.c.l.b16 %v1843
      %v2189 = vunpack.c.h.b16 %v1843
      %v2190 = vunpack.c.l.b16 %v1844
      %v2191 = vunpack.c.l.b16 %v1845
      %v2192 = vunpack.c.h.b16 %v1845
      %v2193 = vunpack.c.l.b16 %v1846
      %v2194 = vunpack.c.h.b16 %v1846
      %v2195 = vunpack.c.l.b16 %v1847
      %v2196 = vunpack.c.l.b16 %v1848
      %v2197 = vunpack.c.h.b16 %v1848
      %v2198 = vunpack.c.l.b16 %v1849
      %v2199 = vunpack.c.h.b16 %v1849
      %v2200 = vunpack.c.l.b16 %v1850
      %v2201 = vunpack.c.l.b16 %v1851
      %v2202 = vunpack.c.h.b16 %v1851
      %v2203 = vunpack.c.l.b16 %v1852
      %v2204 = vunpack.c.h.b16 %v1852
      %v2205 = vunpack.c.l.b16 %v1853
      %v2206 = vunpack.c.l.b16 %v1854
      %v2207 = vunpack.c.h.b16 %v1854
      %v2208 = vunpack.c.l.b16 %v1855
      %v2209 = vunpack.c.h.b16 %v1855
      %v2210 = vunpack.c.l.b16 %v1856
      %v2211 = vunpack.c.l.b16 %v1857
      %v2212 = vunpack.c.h.b16 %v1857
      %v2213 = vunpack.c.l.b16 %v1858
      %v2214 = vunpack.c.h.b16 %v1858
      %v2215 = vunpack.c.l.b16 %v1859
      %v2216 = vunpack.c.l.b16 %v1860
      %v2217 = vunpack.c.h.b16 %v1860
      %v2218 = vunpack.c.l.b16 %v1861
      %v2219 = vunpack.c.h.b16 %v1861
      %v2220 = vunpack.c.l.b16 %v1862
      %v2221 = vunpack.c.l.b16 %v1863
      %v2222 = vunpack.c.h.b16 %v1863
      %v2223 = vunpack.c.l.b16 %v1864
      %v2224 = vunpack.c.h.b16 %v1864
      %v2225 = vunpack.c.l.b16 %v1865
      %v2226 = vpack.c.b16 %v2051, %v2046
      %v2227 = vpack.c.b16 %v2052, %v2047
      %v2228 = vpack.c.b16 %v2053, %v2048
      %v2229 = vpack.c.b16 %v2054, %v2049
      %v2230 = vpack.c.b16 %v2055, %v2050
      %v2231 = vpack.c.b16 %v2061, %v2056
      %v2232 = vpack.c.b16 %v2062, %v2057
      %v2233 = vpack.c.b16 %v2063, %v2058
      %v2234 = vpack.c.b16 %v2064, %v2059
      %v2235 = vpack.c.b16 %v2065, %v2060
      %v2236 = vpack.c.b16 %v2071, %v2066
      %v2237 = vpack.c.b16 %v2072, %v2067
      %v2238 = vpack.c.b16 %v2073, %v2068
      %v2239 = vpack.c.b16 %v2074, %v2069
      %v2240 = vpack.c.b16 %v2075, %v2070
      %v2241 = vpack.c.b16 %v2081, %v2076
      %v2242 = vpack.c.b16 %v2082, %v2077
      %v2243 = vpack.c.b16 %v2083, %v2078
      %v2244 = vpack.c.b16 %v2084, %v2079
      %v2245 = vpack.c.b16 %v2085, %v2080
      %v2246 = vpack.c.b16 %v2091, %v2086
      %v2247 = vpack.c.b16 %v2092, %v2087
      %v2248 = vpack.c.b16 %v2093, %v2088
      %v2249 = vpack.c.b16 %v2094, %v2089
      %v2250 = vpack.c.b16 %v2095, %v2090
      %v2251 = vpack.c.b16 %v2101, %v2096
      %v2252 = vpack.c.b16 %v2102, %v2097
      %v2253 = vpack.c.b16 %v2103, %v2098
      %v2254 = vpack.c.b16 %v2104, %v2099
      %v2255 = vpack.c.b16 %v2105, %v2100
      %v2256 = vpack.c.b16 %v2111, %v2106
      %v2257 = vpack.c.b16 %v2112, %v2107
      %v2258 = vpack.c.b16 %v2113, %v2108
      %v2259 = vpack.c.b16 %v2114, %v2109
      %v2260 = vpack.c.b16 %v2115, %v2110
      %v2261 = vpack.c.b16 %v2121, %v2116
      %v2262 = vpack.c.b16 %v2122, %v2117
      %v2263 = vpack.c.b16 %v2123, %v2118
      %v2264 = vpack.c.b16 %v2124, %v2119
      %v2265 = vpack.c.b16 %v2125, %v2120
      %v2266 = vpack.c.b16 %v2131, %v2126
      %v2267 = vpack.c.b16 %v2132, %v2127
      %v2268 = vpack.c.b16 %v2133, %v2128
      %v2269 = vpack.c.b16 %v2134, %v2129
      %v2270 = vpack.c.b16 %v2135, %v2130
      %v2271 = vpack.c.b16 %v2141, %v2136
      %v2272 = vpack.c.b16 %v2142, %v2137
      %v2273 = vpack.c.b16 %v2143, %v2138
      %v2274 = vpack.c.b16 %v2144, %v2139
      %v2275 = vpack.c.b16 %v2145, %v2140
      %v2276 = vpack.c.b16 %v2151, %v2146
      %v2277 = vpack.c.b16 %v2152, %v2147
      %v2278 = vpack.c.b16 %v2153, %v2148
      %v2279 = vpack.c.b16 %v2154, %v2149
      %v2280 = vpack.c.b16 %v2155, %v2150
      %v2281 = vpack.c.b16 %v2161, %v2156
      %v2282 = vpack.c.b16 %v2162, %v2157
      %v2283 = vpack.c.b16 %v2163, %v2158
      %v2284 = vpack.c.b16 %v2164, %v2159
      %v2285 = vpack.c.b16 %v2165, %v2160
      %v2286 = vpack.c.b16 %v2171, %v2166
      %v2287 = vpack.c.b16 %v2172, %v2167
      %v2288 = vpack.c.b16 %v2173, %v2168
      %v2289 = vpack.c.b16 %v2174, %v2169
      %v2290 = vpack.c.b16 %v2175, %v2170
      %v2291 = vpack.c.b16 %v2181, %v2176
      %v2292 = vpack.c.b16 %v2182, %v2177
      %v2293 = vpack.c.b16 %v2183, %v2178
      %v2294 = vpack.c.b16 %v2184, %v2179
      %v2295 = vpack.c.b16 %v2185, %v2180
      %v2296 = vpack.c.b16 %v2191, %v2186
      %v2297 = vpack.c.b16 %v2192, %v2187
      %v2298 = vpack.c.b16 %v2193, %v2188
      %v2299 = vpack.c.b16 %v2194, %v2189
      %v2300 = vpack.c.b16 %v2195, %v2190
      %v2301 = vpack.c.b16 %v2201, %v2196
      %v2302 = vpack.c.b16 %v2202, %v2197
      %v2303 = vpack.c.b16 %v2203, %v2198
      %v2304 = vpack.c.b16 %v2204, %v2199
      %v2305 = vpack.c.b16 %v2205, %v2200
      %v2306 = vpack.c.b16 %v2211, %v2206
      %v2307 = vpack.c.b16 %v2212, %v2207
      %v2308 = vpack.c.b16 %v2213, %v2208
      %v2309 = vpack.c.b16 %v2214, %v2209
      %v2310 = vpack.c.b16 %v2215, %v2210
      %v2311 = vpack.c.b16 %v2221, %v2216
      %v2312 = vpack.c.b16 %v2222, %v2217
      %v2313 = vpack.c.b16 %v2223, %v2218
      %v2314 = vpack.c.b16 %v2224, %v2219
      %v2315 = vpack.c.b16 %v2225, %v2220
      %v2460 = vunpack.c.l.b16 %v1866
      %v2461 = vunpack.c.l.b16 %v1867
      %v2462 = vunpack.c.l.b16 %v1868
      %v2463 = vunpack.c.l.b16 %v1869
      %v2464 = vunpack.c.l.b16 %v1870
      %v2465 = vunpack.c.l.b16 %v1871
      %v2466 = vunpack.c.l.b16 %v1872
      %v2467 = vunpack.c.l.b16 %v1873
      %v2468 = vunpack.c.l.b16 %v1874
      %v2469 = vunpack.c.l.b16 %v1875
      %v2470 = vunpack.c.l.b16 %v1876
      %v2471 = vunpack.c.l.b16 %v1877
      %v2472 = vunpack.c.l.b16 %v1878
      %v2473 = vunpack.c.l.b16 %v1879
      %v2474 = vunpack.c.l.b16 %v1880
      %v2475 = vunpack.c.l.b16 %v1881
      %v2476 = vunpack.c.l.b16 %v1882
      %v2477 = vunpack.c.l.b16 %v1883
      %v2478 = vunpack.c.l.b16 %v1884
      %v2479 = vunpack.c.l.b16 %v1885
      %v2480 = vunpack.c.l.b16 %v1886
      %v2481 = vunpack.c.l.b16 %v1887
      %v2482 = vunpack.c.l.b16 %v1888
      %v2483 = vunpack.c.l.b16 %v1889
      %v2484 = vunpack.c.l.b16 %v1890
      %v2485 = vunpack.c.l.b16 %v1891
      %v2486 = vunpack.c.l.b16 %v1892
      %v2487 = vunpack.c.l.b16 %v1893
      %v2488 = vunpack.c.l.b16 %v1894
      %v2489 = vunpack.c.l.b16 %v1895
      %v2490 = vunpack.c.l.b16 %v1896
      %v2491 = vunpack.c.l.b16 %v1897
      %v2492 = vunpack.c.l.b16 %v1898
      %v2493 = vunpack.c.l.b16 %v1899
      %v2494 = vunpack.c.l.b16 %v1900
      %v2495 = vunpack.c.l.b16 %v1901
      %v2496 = vunpack.c.l.b16 %v1902
      %v2497 = vunpack.c.l.b16 %v1903
      %v2498 = vunpack.c.l.b16 %v1904
      %v2499 = vunpack.c.l.b16 %v1905
      %v2500 = vunpack.c.l.b16 %v1906
      %v2501 = vunpack.c.l.b16 %v1907
      %v2502 = vunpack.c.l.b16 %v1908
      %v2503 = vunpack.c.l.b16 %v1909
      %v2504 = vunpack.c.l.b16 %v1910
      %v2505 = vunpack.c.l.b16 %v1911
      %v2506 = vunpack.c.l.b16 %v1912
      %v2507 = vunpack.c.l.b16 %v1913
      %v2508 = vunpack.c.l.b16 %v1914
      %v2509 = vunpack.c.l.b16 %v1915
      %v2510 = vunpack.c.l.b16 %v1916
      %v2511 = vunpack.c.l.b16 %v1917
      %v2512 = vunpack.c.l.b16 %v1918
      %v2513 = vunpack.c.l.b16 %v1919
      %v2514 = vunpack.c.l.b16 %v1920
      %v2515 = vunpack.c.l.b16 %v1921
      %v2516 = vunpack.c.l.b16 %v1922
      %v2517 = vunpack.c.l.b16 %v1923
      %v2518 = vunpack.c.l.b16 %v1924
      %v2519 = vunpack.c.l.b16 %v1925
      %v2520 = vunpack.c.l.b16 %v1926
      %v2521 = vunpack.c.l.b16 %v1927
      %v2522 = vunpack.c.l.b16 %v1928
      %v2523 = vunpack.c.l.b16 %v1929
      %v2524 = vunpack.c.l.b16 %v1930
      %v2525 = vunpack.c.l.b16 %v1931
      %v2526 = vunpack.c.l.b16 %v1932
      %v2527 = vunpack.c.l.b16 %v1933
      %v2528 = vunpack.c.l.b16 %v1934
      %v2529 = vunpack.c.l.b16 %v1935
      %v2530 = vunpack.c.l.b16 %v1936
      %v2531 = vunpack.c.l.b16 %v1937
      %v2532 = vpack.c.b16 %v2461, %v2460
      %v2533 = vpack.c.b16 %v2463, %v2462
      %v2534 = vpack.c.b16 %v2465, %v2464
      %v2535 = vpack.c.b16 %v2467, %v2466
      %v2536 = vpack.c.b16 %v2469, %v2468
      %v2537 = vpack.c.b16 %v2471, %v2470
      %v2538 = vpack.c.b16 %v2473, %v2472
      %v2539 = vpack.c.b16 %v2475, %v2474
      %v2540 = vpack.c.b16 %v2477, %v2476
      %v2541 = vpack.c.b16 %v2479, %v2478
      %v2542 = vpack.c.b16 %v2481, %v2480
      %v2543 = vpack.c.b16 %v2483, %v2482
      %v2544 = vpack.c.b16 %v2485, %v2484
      %v2545 = vpack.c.b16 %v2487, %v2486
      %v2546 = vpack.c.b16 %v2489, %v2488
      %v2547 = vpack.c.b16 %v2491, %v2490
      %v2548 = vpack.c.b16 %v2493, %v2492
      %v2549 = vpack.c.b16 %v2495, %v2494
      %v2550 = vpack.c.b16 %v2497, %v2496
      %v2551 = vpack.c.b16 %v2499, %v2498
      %v2552 = vpack.c.b16 %v2501, %v2500
      %v2553 = vpack.c.b16 %v2503, %v2502
      %v2554 = vpack.c.b16 %v2505, %v2504
      %v2555 = vpack.c.b16 %v2507, %v2506
      %v2556 = vpack.c.b16 %v2509, %v2508
      %v2557 = vpack.c.b16 %v2511, %v2510
      %v2558 = vpack.c.b16 %v2513, %v2512
      %v2559 = vpack.c.b16 %v2515, %v2514
      %v2560 = vpack.c.b16 %v2517, %v2516
      %v2561 = vpack.c.b16 %v2519, %v2518
      %v2562 = vpack.c.b16 %v2521, %v2520
      %v2563 = vpack.c.b16 %v2523, %v2522
      %v2564 = vpack.c.b16 %v2525, %v2524
      %v2565 = vpack.c.b16 %v2527, %v2526
      %v2566 = vpack.c.b16 %v2529, %v2528
      %v2567 = vpack.c.b16 %v2531, %v2530
      %vm2604 = vcmask 523264
      %v2606 = vsel %vm2604, %v2230, 0
      %v2609 = vsel %vm2604, %v2235, 0
      %v2612 = vsel %vm2604, %v2240, 0
      %v2615 = vsel %vm2604, %v2245, 0
      %v2618 = vsel %vm2604, %v2250, 0
      %v2621 = vsel %vm2604, %v2255, 0
      %v2624 = vsel %vm2604, %v2260, 0
      %v2627 = vsel %vm2604, %v2265, 0
      %v2630 = vsel %vm2604, %v2270, 0
      %v2633 = vsel %vm2604, %v2275, 0
      %v2636 = vsel %vm2604, %v2280, 0
      %v2639 = vsel %vm2604, %v2285, 0
      %v2642 = vsel %vm2604, %v2290, 0
      %v2645 = vsel %vm2604, %v2295, 0
      %v2648 = vsel %vm2604, %v2300, 0
      %v2651 = vsel %vm2604, %v2305, 0
      %v2654 = vsel %vm2604, %v2310, 0
      %v2657 = vsel %vm2604, %v2315, 0
      %2659 = vmatpush.bf16.msra.mxu0 %v2539
      %2660 = vmatpush.bf16.msra.mxu0 %v2538
      %2661 = vmatpush.bf16.msra.mxu0 %v2537
      %2662 = vmatpush.bf16.msra.mxu0 %v2536
      %2663 = vmatpush.bf16.msra.mxu0 %v2535
      %2664 = vmatpush.bf16.msra.mxu0 %v2534
      %2665 = vmatpush.bf16.msra.mxu0 %v2533
      %2666 = vmatpush.bf16.msra.mxu0 %v2532
      %2667 = vmatmul.bf16.gmra.mxu0 %v2226
      %v2668 = vpop.f32.mrf.mxu0
      %v2669 = vadd.f32 0.0, %v2668
      %v2670 = vpop.f32.mrf.mxu0
      %v2671 = vadd.f32 0.0, %v2670
      %2672 = vmatmul.bf16.gmra.mxu0 %v2231
      %v2673 = vpop.f32.mrf.mxu0
      %v2674 = vadd.f32 0.0, %v2673
      %v2675 = vpop.f32.mrf.mxu0
      %v2676 = vadd.f32 0.0, %v2675
      %2677 = vmatmul.bf16.gmra.mxu0 %v2236
      %v2678 = vpop.f32.mrf.mxu0
      %v2679 = vadd.f32 0.0, %v2678
      %v2680 = vpop.f32.mrf.mxu0
      %v2681 = vadd.f32 0.0, %v2680
      %2682 = vmatmul.bf16.gmra.mxu0 %v2241
      %v2683 = vpop.f32.mrf.mxu0
      %v2684 = vadd.f32 0.0, %v2683
      %v2685 = vpop.f32.mrf.mxu0
      %v2686 = vadd.f32 0.0, %v2685
      %2687 = vmatmul.bf16.gmra.mxu0 %v2246
      %v2688 = vpop.f32.mrf.mxu0
      %v2689 = vadd.f32 0.0, %v2688
      %v2690 = vpop.f32.mrf.mxu0
      %v2691 = vadd.f32 0.0, %v2690
      %2692 = vmatmul.bf16.gmra.mxu0 %v2251
      %v2693 = vpop.f32.mrf.mxu0
      %v2694 = vadd.f32 0.0, %v2693
      %v2695 = vpop.f32.mrf.mxu0
      %v2696 = vadd.f32 0.0, %v2695
      %2697 = vmatmul.bf16.gmra.mxu0 %v2256
      %v2698 = vpop.f32.mrf.mxu0
      %v2699 = vadd.f32 0.0, %v2698
      %v2700 = vpop.f32.mrf.mxu0
      %v2701 = vadd.f32 0.0, %v2700
      %2702 = vmatmul.bf16.gmra.mxu0 %v2261
      %v2703 = vpop.f32.mrf.mxu0
      %v2704 = vadd.f32 0.0, %v2703
      %v2705 = vpop.f32.mrf.mxu0
      %v2706 = vadd.f32 0.0, %v2705
      %2707 = vmatmul.bf16.gmra.mxu0 %v2266
      %v2708 = vpop.f32.mrf.mxu0
      %v2709 = vadd.f32 0.0, %v2708
      %v2710 = vpop.f32.mrf.mxu0
      %v2711 = vadd.f32 0.0, %v2710
      %2712 = vmatmul.bf16.gmra.mxu0 %v2271
      %v2713 = vpop.f32.mrf.mxu0
      %v2714 = vadd.f32 0.0, %v2713
      %v2715 = vpop.f32.mrf.mxu0
      %v2716 = vadd.f32 0.0, %v2715
      %2717 = vmatmul.bf16.gmra.mxu0 %v2276
      %v2718 = vpop.f32.mrf.mxu0
      %v2719 = vadd.f32 0.0, %v2718
      %v2720 = vpop.f32.mrf.mxu0
      %v2721 = vadd.f32 0.0, %v2720
      %2722 = vmatmul.bf16.gmra.mxu0 %v2281
      %v2723 = vpop.f32.mrf.mxu0
      %v2724 = vadd.f32 0.0, %v2723
      %v2725 = vpop.f32.mrf.mxu0
      %v2726 = vadd.f32 0.0, %v2725
      %2727 = vmatmul.bf16.gmra.mxu0 %v2286
      %v2728 = vpop.f32.mrf.mxu0
      %v2729 = vadd.f32 0.0, %v2728
      %v2730 = vpop.f32.mrf.mxu0
      %v2731 = vadd.f32 0.0, %v2730
      %2732 = vmatmul.bf16.gmra.mxu0 %v2291
      %v2733 = vpop.f32.mrf.mxu0
      %v2734 = vadd.f32 0.0, %v2733
      %v2735 = vpop.f32.mrf.mxu0
      %v2736 = vadd.f32 0.0, %v2735
      %2737 = vmatmul.bf16.gmra.mxu0 %v2296
      %v2738 = vpop.f32.mrf.mxu0
      %v2739 = vadd.f32 0.0, %v2738
      %v2740 = vpop.f32.mrf.mxu0
      %v2741 = vadd.f32 0.0, %v2740
      %2742 = vmatmul.bf16.gmra.mxu0 %v2301
      %v2743 = vpop.f32.mrf.mxu0
      %v2744 = vadd.f32 0.0, %v2743
      %v2745 = vpop.f32.mrf.mxu0
      %v2746 = vadd.f32 0.0, %v2745
      %2747 = vmatmul.bf16.gmra.mxu0 %v2306
      %v2748 = vpop.f32.mrf.mxu0
      %v2749 = vadd.f32 0.0, %v2748
      %v2750 = vpop.f32.mrf.mxu0
      %v2751 = vadd.f32 0.0, %v2750
      %2752 = vmatmul.bf16.gmra.mxu0 %v2311
      %v2753 = vpop.f32.mrf.mxu0
      %v2754 = vadd.f32 0.0, %v2753
      %v2755 = vpop.f32.mrf.mxu0
      %v2756 = vadd.f32 0.0, %v2755
      %2757 = vdwg.mxu0
      %2758 = vmatpush.bf16.msra.mxu0 %v2547
      %2759 = vmatpush.bf16.msra.mxu0 %v2546
      %2760 = vmatpush.bf16.msra.mxu0 %v2545
      %2761 = vmatpush.bf16.msra.mxu0 %v2544
      %2762 = vmatpush.bf16.msra.mxu0 %v2543
      %2763 = vmatpush.bf16.msra.mxu0 %v2542
      %2764 = vmatpush.bf16.msra.mxu0 %v2541
      %2765 = vmatpush.bf16.msra.mxu0 %v2540
      %2766 = vmatmul.bf16.gmra.mxu0 %v2227
      %v2767 = vpop.f32.mrf.mxu0
      %v2768 = vadd.f32 %v2669, %v2767
      %v2769 = vpop.f32.mrf.mxu0
      %v2770 = vadd.f32 %v2671, %v2769
      %2771 = vmatmul.bf16.gmra.mxu0 %v2232
      %v2772 = vpop.f32.mrf.mxu0
      %v2773 = vadd.f32 %v2674, %v2772
      %v2774 = vpop.f32.mrf.mxu0
      %v2775 = vadd.f32 %v2676, %v2774
      %2776 = vmatmul.bf16.gmra.mxu0 %v2237
      %v2777 = vpop.f32.mrf.mxu0
      %v2778 = vadd.f32 %v2679, %v2777
      %v2779 = vpop.f32.mrf.mxu0
      %v2780 = vadd.f32 %v2681, %v2779
      %2781 = vmatmul.bf16.gmra.mxu0 %v2242
      %v2782 = vpop.f32.mrf.mxu0
      %v2783 = vadd.f32 %v2684, %v2782
      %v2784 = vpop.f32.mrf.mxu0
      %v2785 = vadd.f32 %v2686, %v2784
      %2786 = vmatmul.bf16.gmra.mxu0 %v2247
      %v2787 = vpop.f32.mrf.mxu0
      %v2788 = vadd.f32 %v2689, %v2787
      %v2789 = vpop.f32.mrf.mxu0
      %v2790 = vadd.f32 %v2691, %v2789
      %2791 = vmatmul.bf16.gmra.mxu0 %v2252
      %v2792 = vpop.f32.mrf.mxu0
      %v2793 = vadd.f32 %v2694, %v2792
      %v2794 = vpop.f32.mrf.mxu0
      %v2795 = vadd.f32 %v2696, %v2794
      %2796 = vmatmul.bf16.gmra.mxu0 %v2257
      %v2797 = vpop.f32.mrf.mxu0
      %v2798 = vadd.f32 %v2699, %v2797
      %v2799 = vpop.f32.mrf.mxu0
      %v2800 = vadd.f32 %v2701, %v2799
      %2801 = vmatmul.bf16.gmra.mxu0 %v2262
      %v2802 = vpop.f32.mrf.mxu0
      %v2803 = vadd.f32 %v2704, %v2802
      %v2804 = vpop.f32.mrf.mxu0
      %v2805 = vadd.f32 %v2706, %v2804
      %2806 = vmatmul.bf16.gmra.mxu0 %v2267
      %v2807 = vpop.f32.mrf.mxu0
      %v2808 = vadd.f32 %v2709, %v2807
      %v2809 = vpop.f32.mrf.mxu0
      %v2810 = vadd.f32 %v2711, %v2809
      %2811 = vmatmul.bf16.gmra.mxu0 %v2272
      %v2812 = vpop.f32.mrf.mxu0
      %v2813 = vadd.f32 %v2714, %v2812
      %v2814 = vpop.f32.mrf.mxu0
      %v2815 = vadd.f32 %v2716, %v2814
      %2816 = vmatmul.bf16.gmra.mxu0 %v2277
      %v2817 = vpop.f32.mrf.mxu0
      %v2818 = vadd.f32 %v2719, %v2817
      %v2819 = vpop.f32.mrf.mxu0
      %v2820 = vadd.f32 %v2721, %v2819
      %2821 = vmatmul.bf16.gmra.mxu0 %v2282
      %v2822 = vpop.f32.mrf.mxu0
      %v2823 = vadd.f32 %v2724, %v2822
      %v2824 = vpop.f32.mrf.mxu0
      %v2825 = vadd.f32 %v2726, %v2824
      %2826 = vmatmul.bf16.gmra.mxu0 %v2287
      %v2827 = vpop.f32.mrf.mxu0
      %v2828 = vadd.f32 %v2729, %v2827
      %v2829 = vpop.f32.mrf.mxu0
      %v2830 = vadd.f32 %v2731, %v2829
      %2831 = vmatmul.bf16.gmra.mxu0 %v2292
      %v2832 = vpop.f32.mrf.mxu0
      %v2833 = vadd.f32 %v2734, %v2832
      %v2834 = vpop.f32.mrf.mxu0
      %v2835 = vadd.f32 %v2736, %v2834
      %2836 = vmatmul.bf16.gmra.mxu0 %v2297
      %v2837 = vpop.f32.mrf.mxu0
      %v2838 = vadd.f32 %v2739, %v2837
      %v2839 = vpop.f32.mrf.mxu0
      %v2840 = vadd.f32 %v2741, %v2839
      %2841 = vmatmul.bf16.gmra.mxu0 %v2302
      %v2842 = vpop.f32.mrf.mxu0
      %v2843 = vadd.f32 %v2744, %v2842
      %v2844 = vpop.f32.mrf.mxu0
      %v2845 = vadd.f32 %v2746, %v2844
      %2846 = vmatmul.bf16.gmra.mxu0 %v2307
      %v2847 = vpop.f32.mrf.mxu0
      %v2848 = vadd.f32 %v2749, %v2847
      %v2849 = vpop.f32.mrf.mxu0
      %v2850 = vadd.f32 %v2751, %v2849
      %2851 = vmatmul.bf16.gmra.mxu0 %v2312
      %v2852 = vpop.f32.mrf.mxu0
      %v2853 = vadd.f32 %v2754, %v2852
      %v2854 = vpop.f32.mrf.mxu0
      %v2855 = vadd.f32 %v2756, %v2854
      %2856 = vdwg.mxu0
      %2857 = vmatpush.bf16.msra.mxu0 %v2555
      %2858 = vmatpush.bf16.msra.mxu0 %v2554
      %2859 = vmatpush.bf16.msra.mxu0 %v2553
      %2860 = vmatpush.bf16.msra.mxu0 %v2552
      %2861 = vmatpush.bf16.msra.mxu0 %v2551
      %2862 = vmatpush.bf16.msra.mxu0 %v2550
      %2863 = vmatpush.bf16.msra.mxu0 %v2549
      %2864 = vmatpush.bf16.msra.mxu0 %v2548
      %2865 = vmatmul.bf16.gmra.mxu0 %v2228
      %v2866 = vpop.f32.mrf.mxu0
      %v2867 = vadd.f32 %v2768, %v2866
      %v2868 = vpop.f32.mrf.mxu0
      %v2869 = vadd.f32 %v2770, %v2868
      %2870 = vmatmul.bf16.gmra.mxu0 %v2233
      %v2871 = vpop.f32.mrf.mxu0
      %v2872 = vadd.f32 %v2773, %v2871
      %v2873 = vpop.f32.mrf.mxu0
      %v2874 = vadd.f32 %v2775, %v2873
      %2875 = vmatmul.bf16.gmra.mxu0 %v2238
      %v2876 = vpop.f32.mrf.mxu0
      %v2877 = vadd.f32 %v2778, %v2876
      %v2878 = vpop.f32.mrf.mxu0
      %v2879 = vadd.f32 %v2780, %v2878
      %2880 = vmatmul.bf16.gmra.mxu0 %v2243
      %v2881 = vpop.f32.mrf.mxu0
      %v2882 = vadd.f32 %v2783, %v2881
      %v2883 = vpop.f32.mrf.mxu0
      %v2884 = vadd.f32 %v2785, %v2883
      %2885 = vmatmul.bf16.gmra.mxu0 %v2248
      %v2886 = vpop.f32.mrf.mxu0
      %v2887 = vadd.f32 %v2788, %v2886
      %v2888 = vpop.f32.mrf.mxu0
      %v2889 = vadd.f32 %v2790, %v2888
      %2890 = vmatmul.bf16.gmra.mxu0 %v2253
      %v2891 = vpop.f32.mrf.mxu0
      %v2892 = vadd.f32 %v2793, %v2891
      %v2893 = vpop.f32.mrf.mxu0
      %v2894 = vadd.f32 %v2795, %v2893
      %2895 = vmatmul.bf16.gmra.mxu0 %v2258
      %v2896 = vpop.f32.mrf.mxu0
      %v2897 = vadd.f32 %v2798, %v2896
      %v2898 = vpop.f32.mrf.mxu0
      %v2899 = vadd.f32 %v2800, %v2898
      %2900 = vmatmul.bf16.gmra.mxu0 %v2263
      %v2901 = vpop.f32.mrf.mxu0
      %v2902 = vadd.f32 %v2803, %v2901
      %v2903 = vpop.f32.mrf.mxu0
      %v2904 = vadd.f32 %v2805, %v2903
      %2905 = vmatmul.bf16.gmra.mxu0 %v2268
      %v2906 = vpop.f32.mrf.mxu0
      %v2907 = vadd.f32 %v2808, %v2906
      %v2908 = vpop.f32.mrf.mxu0
      %v2909 = vadd.f32 %v2810, %v2908
      %2910 = vmatmul.bf16.gmra.mxu0 %v2273
      %v2911 = vpop.f32.mrf.mxu0
      %v2912 = vadd.f32 %v2813, %v2911
      %v2913 = vpop.f32.mrf.mxu0
      %v2914 = vadd.f32 %v2815, %v2913
      %2915 = vmatmul.bf16.gmra.mxu0 %v2278
      %v2916 = vpop.f32.mrf.mxu0
      %v2917 = vadd.f32 %v2818, %v2916
      %v2918 = vpop.f32.mrf.mxu0
      %v2919 = vadd.f32 %v2820, %v2918
      %2920 = vmatmul.bf16.gmra.mxu0 %v2283
      %v2921 = vpop.f32.mrf.mxu0
      %v2922 = vadd.f32 %v2823, %v2921
      %v2923 = vpop.f32.mrf.mxu0
      %v2924 = vadd.f32 %v2825, %v2923
      %2925 = vmatmul.bf16.gmra.mxu0 %v2288
      %v2926 = vpop.f32.mrf.mxu0
      %v2927 = vadd.f32 %v2828, %v2926
      %v2928 = vpop.f32.mrf.mxu0
      %v2929 = vadd.f32 %v2830, %v2928
      %2930 = vmatmul.bf16.gmra.mxu0 %v2293
      %v2931 = vpop.f32.mrf.mxu0
      %v2932 = vadd.f32 %v2833, %v2931
      %v2933 = vpop.f32.mrf.mxu0
      %v2934 = vadd.f32 %v2835, %v2933
      %2935 = vmatmul.bf16.gmra.mxu0 %v2298
      %v2936 = vpop.f32.mrf.mxu0
      %v2937 = vadd.f32 %v2838, %v2936
      %v2938 = vpop.f32.mrf.mxu0
      %v2939 = vadd.f32 %v2840, %v2938
      %2940 = vmatmul.bf16.gmra.mxu0 %v2303
      %v2941 = vpop.f32.mrf.mxu0
      %v2942 = vadd.f32 %v2843, %v2941
      %v2943 = vpop.f32.mrf.mxu0
      %v2944 = vadd.f32 %v2845, %v2943
      %2945 = vmatmul.bf16.gmra.mxu0 %v2308
      %v2946 = vpop.f32.mrf.mxu0
      %v2947 = vadd.f32 %v2848, %v2946
      %v2948 = vpop.f32.mrf.mxu0
      %v2949 = vadd.f32 %v2850, %v2948
      %2950 = vmatmul.bf16.gmra.mxu0 %v2313
      %v2951 = vpop.f32.mrf.mxu0
      %v2952 = vadd.f32 %v2853, %v2951
      %v2953 = vpop.f32.mrf.mxu0
      %v2954 = vadd.f32 %v2855, %v2953
      %2955 = vdwg.mxu0
      %2956 = vmatpush.bf16.msra.mxu0 %v2563
      %2957 = vmatpush.bf16.msra.mxu0 %v2562
      %2958 = vmatpush.bf16.msra.mxu0 %v2561
      %2959 = vmatpush.bf16.msra.mxu0 %v2560
      %2960 = vmatpush.bf16.msra.mxu0 %v2559
      %2961 = vmatpush.bf16.msra.mxu0 %v2558
      %2962 = vmatpush.bf16.msra.mxu0 %v2557
      %2963 = vmatpush.bf16.msra.mxu0 %v2556
      %2964 = vmatmul.bf16.gmra.mxu0 %v2229
      %v2965 = vpop.f32.mrf.mxu0
      %v2966 = vadd.f32 %v2867, %v2965
      %v2967 = vpop.f32.mrf.mxu0
      %v2968 = vadd.f32 %v2869, %v2967
      %2969 = vmatmul.bf16.gmra.mxu0 %v2234
      %v2970 = vpop.f32.mrf.mxu0
      %v2971 = vadd.f32 %v2872, %v2970
      %v2972 = vpop.f32.mrf.mxu0
      %v2973 = vadd.f32 %v2874, %v2972
      %2974 = vmatmul.bf16.gmra.mxu0 %v2239
      %v2975 = vpop.f32.mrf.mxu0
      %v2976 = vadd.f32 %v2877, %v2975
      %v2977 = vpop.f32.mrf.mxu0
      %v2978 = vadd.f32 %v2879, %v2977
      %2979 = vmatmul.bf16.gmra.mxu0 %v2244
      %v2980 = vpop.f32.mrf.mxu0
      %v2981 = vadd.f32 %v2882, %v2980
      %v2982 = vpop.f32.mrf.mxu0
      %v2983 = vadd.f32 %v2884, %v2982
      %2984 = vmatmul.bf16.gmra.mxu0 %v2249
      %v2985 = vpop.f32.mrf.mxu0
      %v2986 = vadd.f32 %v2887, %v2985
      %v2987 = vpop.f32.mrf.mxu0
      %v2988 = vadd.f32 %v2889, %v2987
      %2989 = vmatmul.bf16.gmra.mxu0 %v2254
      %v2990 = vpop.f32.mrf.mxu0
      %v2991 = vadd.f32 %v2892, %v2990
      %v2992 = vpop.f32.mrf.mxu0
      %v2993 = vadd.f32 %v2894, %v2992
      %2994 = vmatmul.bf16.gmra.mxu0 %v2259
      %v2995 = vpop.f32.mrf.mxu0
      %v2996 = vadd.f32 %v2897, %v2995
      %v2997 = vpop.f32.mrf.mxu0
      %v2998 = vadd.f32 %v2899, %v2997
      %2999 = vmatmul.bf16.gmra.mxu0 %v2264
      %v3000 = vpop.f32.mrf.mxu0
      %v3001 = vadd.f32 %v2902, %v3000
      %v3002 = vpop.f32.mrf.mxu0
      %v3003 = vadd.f32 %v2904, %v3002
      %3004 = vmatmul.bf16.gmra.mxu0 %v2269
      %v3005 = vpop.f32.mrf.mxu0
      %v3006 = vadd.f32 %v2907, %v3005
      %v3007 = vpop.f32.mrf.mxu0
      %v3008 = vadd.f32 %v2909, %v3007
      %3009 = vmatmul.bf16.gmra.mxu0 %v2274
      %v3010 = vpop.f32.mrf.mxu0
      %v3011 = vadd.f32 %v2912, %v3010
      %v3012 = vpop.f32.mrf.mxu0
      %v3013 = vadd.f32 %v2914, %v3012
      %3014 = vmatmul.bf16.gmra.mxu0 %v2279
      %v3015 = vpop.f32.mrf.mxu0
      %v3016 = vadd.f32 %v2917, %v3015
      %v3017 = vpop.f32.mrf.mxu0
      %v3018 = vadd.f32 %v2919, %v3017
      %3019 = vmatmul.bf16.gmra.mxu0 %v2284
      %v3020 = vpop.f32.mrf.mxu0
      %v3021 = vadd.f32 %v2922, %v3020
      %v3022 = vpop.f32.mrf.mxu0
      %v3023 = vadd.f32 %v2924, %v3022
      %3024 = vmatmul.bf16.gmra.mxu0 %v2289
      %v3025 = vpop.f32.mrf.mxu0
      %v3026 = vadd.f32 %v2927, %v3025
      %v3027 = vpop.f32.mrf.mxu0
      %v3028 = vadd.f32 %v2929, %v3027
      %3029 = vmatmul.bf16.gmra.mxu0 %v2294
      %v3030 = vpop.f32.mrf.mxu0
      %v3031 = vadd.f32 %v2932, %v3030
      %v3032 = vpop.f32.mrf.mxu0
      %v3033 = vadd.f32 %v2934, %v3032
      %3034 = vmatmul.bf16.gmra.mxu0 %v2299
      %v3035 = vpop.f32.mrf.mxu0
      %v3036 = vadd.f32 %v2937, %v3035
      %v3037 = vpop.f32.mrf.mxu0
      %v3038 = vadd.f32 %v2939, %v3037
      %3039 = vmatmul.bf16.gmra.mxu0 %v2304
      %v3040 = vpop.f32.mrf.mxu0
      %v3041 = vadd.f32 %v2942, %v3040
      %v3042 = vpop.f32.mrf.mxu0
      %v3043 = vadd.f32 %v2944, %v3042
      %3044 = vmatmul.bf16.gmra.mxu0 %v2309
      %v3045 = vpop.f32.mrf.mxu0
      %v3046 = vadd.f32 %v2947, %v3045
      %v3047 = vpop.f32.mrf.mxu0
      %v3048 = vadd.f32 %v2949, %v3047
      %3049 = vmatmul.bf16.gmra.mxu0 %v2314
      %v3050 = vpop.f32.mrf.mxu0
      %v3051 = vadd.f32 %v2952, %v3050
      %v3052 = vpop.f32.mrf.mxu0
      %v3053 = vadd.f32 %v2954, %v3052
      %3054 = vdwg.mxu0
      %3055 = vmatpush.bf16.msra.mxu0 0
      %3056 = vmatpush.bf16.msra.mxu0 0
      %3057 = vmatpush.bf16.msra.mxu0 0
      %3058 = vmatpush.bf16.msra.mxu0 0
      %3059 = vmatpush.bf16.msra.mxu0 %v2567
      %3060 = vmatpush.bf16.msra.mxu0 %v2566
      %3061 = vmatpush.bf16.msra.mxu0 %v2565
      %3062 = vmatpush.bf16.msra.mxu0 %v2564
      %3063 = vmatmul.bf16.gmra.mxu0 %v2606
      %v3064 = vpop.f32.mrf.mxu0
      %v3065 = vadd.f32 %v2966, %v3064
      %v3066 = vpop.f32.mrf.mxu0
      %v3067 = vadd.f32 %v2968, %v3066
      %3068 = vmatmul.bf16.gmra.mxu0 %v2609
      %v3069 = vpop.f32.mrf.mxu0
      %v3070 = vadd.f32 %v2971, %v3069
      %v3071 = vpop.f32.mrf.mxu0
      %v3072 = vadd.f32 %v2973, %v3071
      %3073 = vmatmul.bf16.gmra.mxu0 %v2612
      %v3074 = vpop.f32.mrf.mxu0
      %v3075 = vadd.f32 %v2976, %v3074
      %v3076 = vpop.f32.mrf.mxu0
      %v3077 = vadd.f32 %v2978, %v3076
      %3078 = vmatmul.bf16.gmra.mxu0 %v2615
      %v3079 = vpop.f32.mrf.mxu0
      %v3080 = vadd.f32 %v2981, %v3079
      %v3081 = vpop.f32.mrf.mxu0
      %v3082 = vadd.f32 %v2983, %v3081
      %3083 = vmatmul.bf16.gmra.mxu0 %v2618
      %v3084 = vpop.f32.mrf.mxu0
      %v3085 = vadd.f32 %v2986, %v3084
      %v3086 = vpop.f32.mrf.mxu0
      %v3087 = vadd.f32 %v2988, %v3086
      %3088 = vmatmul.bf16.gmra.mxu0 %v2621
      %v3089 = vpop.f32.mrf.mxu0
      %v3090 = vadd.f32 %v2991, %v3089
      %v3091 = vpop.f32.mrf.mxu0
      %v3092 = vadd.f32 %v2993, %v3091
      %3093 = vmatmul.bf16.gmra.mxu0 %v2624
      %v3094 = vpop.f32.mrf.mxu0
      %v3095 = vadd.f32 %v2996, %v3094
      %v3096 = vpop.f32.mrf.mxu0
      %v3097 = vadd.f32 %v2998, %v3096
      %3098 = vmatmul.bf16.gmra.mxu0 %v2627
      %v3099 = vpop.f32.mrf.mxu0
      %v3100 = vadd.f32 %v3001, %v3099
      %v3101 = vpop.f32.mrf.mxu0
      %v3102 = vadd.f32 %v3003, %v3101
      %3103 = vmatmul.bf16.gmra.mxu0 %v2630
      %v3104 = vpop.f32.mrf.mxu0
      %v3105 = vadd.f32 %v3006, %v3104
      %v3106 = vpop.f32.mrf.mxu0
      %v3107 = vadd.f32 %v3008, %v3106
      %3108 = vmatmul.bf16.gmra.mxu0 %v2633
      %v3109 = vpop.f32.mrf.mxu0
      %v3110 = vadd.f32 %v3011, %v3109
      %v3111 = vpop.f32.mrf.mxu0
      %v3112 = vadd.f32 %v3013, %v3111
      %3113 = vmatmul.bf16.gmra.mxu0 %v2636
      %v3114 = vpop.f32.mrf.mxu0
      %v3115 = vadd.f32 %v3016, %v3114
      %v3116 = vpop.f32.mrf.mxu0
      %v3117 = vadd.f32 %v3018, %v3116
      %3118 = vmatmul.bf16.gmra.mxu0 %v2639
      %v3119 = vpop.f32.mrf.mxu0
      %v3120 = vadd.f32 %v3021, %v3119
      %v3121 = vpop.f32.mrf.mxu0
      %v3122 = vadd.f32 %v3023, %v3121
      %3123 = vmatmul.bf16.gmra.mxu0 %v2642
      %v3124 = vpop.f32.mrf.mxu0
      %v3125 = vadd.f32 %v3026, %v3124
      %v3126 = vpop.f32.mrf.mxu0
      %v3127 = vadd.f32 %v3028, %v3126
      %3128 = vmatmul.bf16.gmra.mxu0 %v2645
      %v3129 = vpop.f32.mrf.mxu0
      %v3130 = vadd.f32 %v3031, %v3129
      %v3131 = vpop.f32.mrf.mxu0
      %v3132 = vadd.f32 %v3033, %v3131
      %3133 = vmatmul.bf16.gmra.mxu0 %v2648
      %v3134 = vpop.f32.mrf.mxu0
      %v3135 = vadd.f32 %v3036, %v3134
      %v3136 = vpop.f32.mrf.mxu0
      %v3137 = vadd.f32 %v3038, %v3136
      %3138 = vmatmul.bf16.gmra.mxu0 %v2651
      %v3139 = vpop.f32.mrf.mxu0
      %v3140 = vadd.f32 %v3041, %v3139
      %v3141 = vpop.f32.mrf.mxu0
      %v3142 = vadd.f32 %v3043, %v3141
      %3143 = vmatmul.bf16.gmra.mxu0 %v2654
      %v3144 = vpop.f32.mrf.mxu0
      %v3145 = vadd.f32 %v3046, %v3144
      %v3146 = vpop.f32.mrf.mxu0
      %v3147 = vadd.f32 %v3048, %v3146
      %3148 = vmatmul.bf16.gmra.mxu0 %v2657
      %v3149 = vpop.f32.mrf.mxu0
      %v3150 = vadd.f32 %v3051, %v3149
      %v3151 = vpop.f32.mrf.mxu0
      %v3152 = vadd.f32 %v3053, %v3151
      %3153 = vdwg.mxu0
      %3154 = vst.msk [vmem:[%s203] sm:$0xff] %vm2604, %v3065
      %3155 = vst.msk [vmem:[%s203 + $0x8] sm:$0xff] %vm2604, %v3067
      %3156 = vst.msk [vmem:[%s203 + $0x10] sm:$0xff] %vm2604, %v3070
      %3157 = vst.msk [vmem:[%s203 + $0x18] sm:$0xff] %vm2604, %v3072
      %3158 = vst.msk [vmem:[%s203 + $0x20] sm:$0xff] %vm2604, %v3075
      %3159 = vst.msk [vmem:[%s203 + $0x28] sm:$0xff] %vm2604, %v3077
      %3160 = vst.msk [vmem:[%s203 + $0x30] sm:$0xff] %vm2604, %v3080
      %3161 = vst.msk [vmem:[%s203 + $0x38] sm:$0xff] %vm2604, %v3082
      %3162 = vst.msk [vmem:[%s203 + $0x40] sm:$0xff] %vm2604, %v3085
      %3163 = vst.msk [vmem:[%s203 + $0x48] sm:$0xff] %vm2604, %v3087
      %3164 = vst.msk [vmem:[%s203 + $0x50] sm:$0xff] %vm2604, %v3090
      %3165 = vst.msk [vmem:[%s203 + $0x58] sm:$0xff] %vm2604, %v3092
      %3166 = vst.msk [vmem:[%s203 + $0x60] sm:$0xff] %vm2604, %v3095
      %3167 = vst.msk [vmem:[%s203 + $0x68] sm:$0xff] %vm2604, %v3097
      %3168 = vst.msk [vmem:[%s203 + $0x70] sm:$0xff] %vm2604, %v3100
      %3169 = vst.msk [vmem:[%s203 + $0x78] sm:$0xff] %vm2604, %v3102
      %3170 = vst.msk [vmem:[%s203 + $0x80] sm:$0xff] %vm2604, %v3105
      %3171 = vst.msk [vmem:[%s203 + $0x88] sm:$0xff] %vm2604, %v3107
      %3172 = vst.msk [vmem:[%s203 + $0x90] sm:$0xff] %vm2604, %v3110
      %3173 = vst.msk [vmem:[%s203 + $0x98] sm:$0xff] %vm2604, %v3112
      %3174 = vst.msk [vmem:[%s203 + $0xa0] sm:$0xff] %vm2604, %v3115
      %3175 = vst.msk [vmem:[%s203 + $0xa8] sm:$0xff] %vm2604, %v3117
      %3176 = vst.msk [vmem:[%s203 + $0xb0] sm:$0xff] %vm2604, %v3120
      %3177 = vst.msk [vmem:[%s203 + $0xb8] sm:$0xff] %vm2604, %v3122
      %3178 = vst.msk [vmem:[%s203 + $0xc0] sm:$0xff] %vm2604, %v3125
      %3179 = vst.msk [vmem:[%s203 + $0xc8] sm:$0xff] %vm2604, %v3127
      %3180 = vst.msk [vmem:[%s203 + $0xd0] sm:$0xff] %vm2604, %v3130
      %3181 = vst.msk [vmem:[%s203 + $0xd8] sm:$0xff] %vm2604, %v3132
      %3182 = vst.msk [vmem:[%s203 + $0xe0] sm:$0xff] %vm2604, %v3135
      %3183 = vst.msk [vmem:[%s203 + $0xe8] sm:$0xff] %vm2604, %v3137
      %3184 = vst.msk [vmem:[%s203 + $0xf0] sm:$0xff] %vm2604, %v3140
      %3185 = vst.msk [vmem:[%s203 + $0xf8] sm:$0xff] %vm2604, %v3142
      %3186 = vst.msk [vmem:[%s203 + $0x100] sm:$0xff] %vm2604, %v3145
      %3187 = vst.msk [vmem:[%s203 + $0x108] sm:$0xff] %vm2604, %v3147
      %3188 = vst.msk [vmem:[%s203 + $0x110] sm:$0xff] %vm2604, %v3150
      %3189 = vst.msk [vmem:[%s203 + $0x118] sm:$0xff] %vm2604, %v3152
      %v3190 = vld [vmem:[%s2] sm:$0xff]
      %v3191 = vld [vmem:[%s2 + $0x8] sm:$0xff]
      %v3192 = vld [vmem:[%s2 + $0x10] sm:$0xff]
      %v3193 = vld [vmem:[%s2 + $0x18] sm:$0xff]
      %v3194 = vld [vmem:[%s2 + $0x20] sm:$0xff]
      %v3195 = vld [vmem:[%s2 + $0x28] sm:$0xff]
      %v3196 = vld [vmem:[%s2 + $0x30] sm:$0xff]
      %v3197 = vld [vmem:[%s2 + $0x38] sm:$0xff]
      %v3198 = vld [vmem:[%s2 + $0x40] sm:$0xff]
      %v3199 = vld [vmem:[%s2 + $0x48] sm:$0xff]
      %v3200 = vld [vmem:[%s2 + $0x50] sm:$0xff]
      %v3201 = vld [vmem:[%s2 + $0x58] sm:$0xff]
      %v3202 = vld [vmem:[%s2 + $0x60] sm:$0xff]
      %v3203 = vld [vmem:[%s2 + $0x68] sm:$0xff]
      %v3204 = vld [vmem:[%s2 + $0x70] sm:$0xff]
      %v3205 = vld [vmem:[%s2 + $0x78] sm:$0xff]
      %v3206 = vld [vmem:[%s2 + $0x80] sm:$0xff]
      %v3207 = vld [vmem:[%s2 + $0x88] sm:$0xff]
      %v3208 = vld [vmem:[%s2 + $0x90] sm:$0xff]
      %v3209 = vld [vmem:[%s2 + $0x98] sm:$0xff]
      %v3210 = vld [vmem:[%s2 + $0xa0] sm:$0xff]
      %v3211 = vld [vmem:[%s2 + $0xa8] sm:$0xff]
      %v3212 = vld [vmem:[%s2 + $0xb0] sm:$0xff]
      %v3213 = vld [vmem:[%s2 + $0xb8] sm:$0xff]
      %v3214 = vld [vmem:[%s2 + $0xc0] sm:$0xff]
      %v3215 = vld [vmem:[%s2 + $0xc8] sm:$0xff]
      %v3216 = vld [vmem:[%s2 + $0xd0] sm:$0xff]
      %v3217 = vld [vmem:[%s2 + $0xd8] sm:$0xff]
      %v3218 = vld [vmem:[%s2 + $0xe0] sm:$0xff]
      %v3219 = vld [vmem:[%s2 + $0xe8] sm:$0xff]
      %v3220 = vld [vmem:[%s2 + $0xf0] sm:$0xff]
      %v3221 = vld [vmem:[%s2 + $0xf8] sm:$0xff]
      %v3222 = vld [vmem:[%s2 + $0x100] sm:$0xff]
      %v3223 = vld [vmem:[%s2 + $0x108] sm:$0xff]
      %v3224 = vld [vmem:[%s2 + $0x110] sm:$0xff]
      %v3225 = vld [vmem:[%s2 + $0x118] sm:$0xff]
      %3227 = vset.pattern.permute.xlu0 0
      %3228 = vperm.xlu0 %3227, %v3190
      %v3229 = vpop.permute.xlu0 %3228
      %3232 = vset.pattern.permute.xlu0 0
      %3233 = vperm.xlu0 %3232, %v3191
      %v3234 = vpop.permute.xlu0 %3233
      %3237 = vset.pattern.permute.xlu0 0
      %3238 = vperm.xlu0 %3237, %v3192
      %v3239 = vpop.permute.xlu0 %3238
      %3242 = vset.pattern.permute.xlu0 0
      %3243 = vperm.xlu0 %3242, %v3193
      %v3244 = vpop.permute.xlu0 %3243
      %3247 = vset.pattern.permute.xlu0 0
      %3248 = vperm.xlu0 %3247, %v3194
      %v3249 = vpop.permute.xlu0 %3248
      %3252 = vset.pattern.permute.xlu0 0
      %3253 = vperm.xlu0 %3252, %v3195
      %v3254 = vpop.permute.xlu0 %3253
      %3257 = vset.pattern.permute.xlu0 0
      %3258 = vperm.xlu0 %3257, %v3196
      %v3259 = vpop.permute.xlu0 %3258
      %3262 = vset.pattern.permute.xlu0 0
      %3263 = vperm.xlu0 %3262, %v3197
      %v3264 = vpop.permute.xlu0 %3263
      %3267 = vset.pattern.permute.xlu0 0
      %3268 = vperm.xlu0 %3267, %v3198
      %v3269 = vpop.permute.xlu0 %3268
      %3272 = vset.pattern.permute.xlu0 0
      %3273 = vperm.xlu0 %3272, %v3199
      %v3274 = vpop.permute.xlu0 %3273
      %3277 = vset.pattern.permute.xlu0 0
      %3278 = vperm.xlu0 %3277, %v3200
      %v3279 = vpop.permute.xlu0 %3278
      %3282 = vset.pattern.permute.xlu0 0
      %3283 = vperm.xlu0 %3282, %v3201
      %v3284 = vpop.permute.xlu0 %3283
      %3287 = vset.pattern.permute.xlu0 0
      %3288 = vperm.xlu0 %3287, %v3202
      %v3289 = vpop.permute.xlu0 %3288
      %3292 = vset.pattern.permute.xlu0 0
      %3293 = vperm.xlu0 %3292, %v3203
      %v3294 = vpop.permute.xlu0 %3293
      %3297 = vset.pattern.permute.xlu0 0
      %3298 = vperm.xlu0 %3297, %v3204
      %v3299 = vpop.permute.xlu0 %3298
      %3302 = vset.pattern.permute.xlu0 0
      %3303 = vperm.xlu0 %3302, %v3205
      %v3304 = vpop.permute.xlu0 %3303
      %3307 = vset.pattern.permute.xlu0 0
      %3308 = vperm.xlu0 %3307, %v3206
      %v3309 = vpop.permute.xlu0 %3308
      %3312 = vset.pattern.permute.xlu0 0
      %3313 = vperm.xlu0 %3312, %v3207
      %v3314 = vpop.permute.xlu0 %3313
      %3317 = vset.pattern.permute.xlu0 0
      %3318 = vperm.xlu0 %3317, %v3208
      %v3319 = vpop.permute.xlu0 %3318
      %3322 = vset.pattern.permute.xlu0 0
      %3323 = vperm.xlu0 %3322, %v3209
      %v3324 = vpop.permute.xlu0 %3323
      %3327 = vset.pattern.permute.xlu0 0
      %3328 = vperm.xlu0 %3327, %v3210
      %v3329 = vpop.permute.xlu0 %3328
      %3332 = vset.pattern.permute.xlu0 0
      %3333 = vperm.xlu0 %3332, %v3211
      %v3334 = vpop.permute.xlu0 %3333
      %3337 = vset.pattern.permute.xlu0 0
      %3338 = vperm.xlu0 %3337, %v3212
      %v3339 = vpop.permute.xlu0 %3338
      %3342 = vset.pattern.permute.xlu0 0
      %3343 = vperm.xlu0 %3342, %v3213
      %v3344 = vpop.permute.xlu0 %3343
      %3347 = vset.pattern.permute.xlu0 0
      %3348 = vperm.xlu0 %3347, %v3214
      %v3349 = vpop.permute.xlu0 %3348
      %3352 = vset.pattern.permute.xlu0 0
      %3353 = vperm.xlu0 %3352, %v3215
      %v3354 = vpop.permute.xlu0 %3353
      %3357 = vset.pattern.permute.xlu0 0
      %3358 = vperm.xlu0 %3357, %v3216
      %v3359 = vpop.permute.xlu0 %3358
      %3362 = vset.pattern.permute.xlu0 0
      %3363 = vperm.xlu0 %3362, %v3217
      %v3364 = vpop.permute.xlu0 %3363
      %3367 = vset.pattern.permute.xlu0 0
      %3368 = vperm.xlu0 %3367, %v3218
      %v3369 = vpop.permute.xlu0 %3368
      %3372 = vset.pattern.permute.xlu0 0
      %3373 = vperm.xlu0 %3372, %v3219
      %v3374 = vpop.permute.xlu0 %3373
      %3377 = vset.pattern.permute.xlu0 0
      %3378 = vperm.xlu0 %3377, %v3220
      %v3379 = vpop.permute.xlu0 %3378
      %3382 = vset.pattern.permute.xlu0 0
      %3383 = vperm.xlu0 %3382, %v3221
      %v3384 = vpop.permute.xlu0 %3383
      %3387 = vset.pattern.permute.xlu0 0
      %3388 = vperm.xlu0 %3387, %v3222
      %v3389 = vpop.permute.xlu0 %3388
      %3392 = vset.pattern.permute.xlu0 0
      %3393 = vperm.xlu0 %3392, %v3223
      %v3394 = vpop.permute.xlu0 %3393
      %3397 = vset.pattern.permute.xlu0 0
      %3398 = vperm.xlu0 %3397, %v3224
      %v3399 = vpop.permute.xlu0 %3398
      %3402 = vset.pattern.permute.xlu0 0
      %3403 = vperm.xlu0 %3402, %v3225
      %v3404 = vpop.permute.xlu0 %3403
      %v3406 = vmul.f32 %v3065, %v3229
      %v3407 = vmul.f32 %v3067, %v3234
      %v3408 = vmul.f32 %v3070, %v3239
      %v3409 = vmul.f32 %v3072, %v3244
      %v3410 = vmul.f32 %v3075, %v3249
      %v3411 = vmul.f32 %v3077, %v3254
      %v3412 = vmul.f32 %v3080, %v3259
      %v3413 = vmul.f32 %v3082, %v3264
      %v3414 = vmul.f32 %v3085, %v3269
      %v3415 = vmul.f32 %v3087, %v3274
      %v3416 = vmul.f32 %v3090, %v3279
      %v3417 = vmul.f32 %v3092, %v3284
      %v3418 = vmul.f32 %v3095, %v3289
      %v3419 = vmul.f32 %v3097, %v3294
      %v3420 = vmul.f32 %v3100, %v3299
      %v3421 = vmul.f32 %v3102, %v3304
      %v3422 = vmul.f32 %v3105, %v3309
      %v3423 = vmul.f32 %v3107, %v3314
      %v3424 = vmul.f32 %v3110, %v3319
      %v3425 = vmul.f32 %v3112, %v3324
      %v3426 = vmul.f32 %v3115, %v3329
      %v3427 = vmul.f32 %v3117, %v3334
      %v3428 = vmul.f32 %v3120, %v3339
      %v3429 = vmul.f32 %v3122, %v3344
      %v3430 = vmul.f32 %v3125, %v3349
      %v3431 = vmul.f32 %v3127, %v3354
      %v3432 = vmul.f32 %v3130, %v3359
      %v3433 = vmul.f32 %v3132, %v3364
      %v3434 = vmul.f32 %v3135, %v3369
      %v3435 = vmul.f32 %v3137, %v3374
      %v3436 = vmul.f32 %v3140, %v3379
      %v3437 = vmul.f32 %v3142, %v3384
      %v3438 = vmul.f32 %v3145, %v3389
      %v3439 = vmul.f32 %v3147, %v3394
      %v3440 = vmul.f32 %v3150, %v3399
      %v3441 = vmul.f32 %v3152, %v3404
      %v3442 = vsel %vm2604, %v3406, 0.0
      %v3443 = vsel %vm2604, %v3407, 0.0
      %v3444 = vadd.f32 %v3442, %v3443
      %v3445 = vsel %vm2604, %v3408, 0.0
      %v3446 = vadd.f32 %v3444, %v3445
      %v3447 = vsel %vm2604, %v3409, 0.0
      %v3448 = vadd.f32 %v3446, %v3447
      %v3449 = vsel %vm2604, %v3410, 0.0
      %v3450 = vadd.f32 %v3448, %v3449
      %v3451 = vsel %vm2604, %v3411, 0.0
      %v3452 = vadd.f32 %v3450, %v3451
      %v3453 = vsel %vm2604, %v3412, 0.0
      %v3454 = vadd.f32 %v3452, %v3453
      %v3455 = vsel %vm2604, %v3413, 0.0
      %v3456 = vadd.f32 %v3454, %v3455
      %v3457 = vsel %vm2604, %v3414, 0.0
      %v3458 = vadd.f32 %v3456, %v3457
      %v3459 = vsel %vm2604, %v3415, 0.0
      %v3460 = vadd.f32 %v3458, %v3459
      %v3461 = vsel %vm2604, %v3416, 0.0
      %v3462 = vadd.f32 %v3460, %v3461
      %v3463 = vsel %vm2604, %v3417, 0.0
      %v3464 = vadd.f32 %v3462, %v3463
      %v3465 = vsel %vm2604, %v3418, 0.0
      %v3466 = vadd.f32 %v3464, %v3465
      %v3467 = vsel %vm2604, %v3419, 0.0
      %v3468 = vadd.f32 %v3466, %v3467
      %v3469 = vsel %vm2604, %v3420, 0.0
      %v3470 = vadd.f32 %v3468, %v3469
      %v3471 = vsel %vm2604, %v3421, 0.0
      %v3472 = vadd.f32 %v3470, %v3471
      %v3473 = vsel %vm2604, %v3422, 0.0
      %v3474 = vadd.f32 %v3472, %v3473
      %v3475 = vsel %vm2604, %v3423, 0.0
      %v3476 = vadd.f32 %v3474, %v3475
      %v3477 = vsel %vm2604, %v3424, 0.0
      %v3478 = vadd.f32 %v3476, %v3477
      %v3479 = vsel %vm2604, %v3425, 0.0
      %v3480 = vadd.f32 %v3478, %v3479
      %v3481 = vsel %vm2604, %v3426, 0.0
      %v3482 = vadd.f32 %v3480, %v3481
      %v3483 = vsel %vm2604, %v3427, 0.0
      %v3484 = vadd.f32 %v3482, %v3483
      %v3485 = vsel %vm2604, %v3428, 0.0
      %v3486 = vadd.f32 %v3484, %v3485
      %v3487 = vsel %vm2604, %v3429, 0.0
      %v3488 = vadd.f32 %v3486, %v3487
      %v3489 = vsel %vm2604, %v3430, 0.0
      %v3490 = vadd.f32 %v3488, %v3489
      %v3491 = vsel %vm2604, %v3431, 0.0
      %v3492 = vadd.f32 %v3490, %v3491
      %v3493 = vsel %vm2604, %v3432, 0.0
      %v3494 = vadd.f32 %v3492, %v3493
      %v3495 = vsel %vm2604, %v3433, 0.0
      %v3496 = vadd.f32 %v3494, %v3495
      %v3497 = vsel %vm2604, %v3434, 0.0
      %v3498 = vadd.f32 %v3496, %v3497
      %v3499 = vsel %vm2604, %v3435, 0.0
      %v3500 = vadd.f32 %v3498, %v3499
      %v3501 = vsel %vm2604, %v3436, 0.0
      %v3502 = vadd.f32 %v3500, %v3501
      %v3503 = vsel %vm2604, %v3437, 0.0
      %v3504 = vadd.f32 %v3502, %v3503
      %v3505 = vsel %vm2604, %v3438, 0.0
      %v3506 = vadd.f32 %v3504, %v3505
      %v3507 = vsel %vm2604, %v3439, 0.0
      %v3508 = vadd.f32 %v3506, %v3507
      %v3509 = vsel %vm2604, %v3440, 0.0
      %v3510 = vadd.f32 %v3508, %v3509
      %v3511 = vsel %vm2604, %v3441, 0.0
      %v3512 = vadd.f32 %v3510, %v3511
      %v3513 = vrot.slane %v3512, 4
      %v3514 = vadd.f32 %v3512, %v3513
      %v3515 = vrot.slane %v3514, 2
      %v3516 = vadd.f32 %v3514, %v3515
      %v3517 = vrot.slane %v3516, 1
      %v3518 = vadd.f32 %v3516, %v3517
      %vm3519 = vcmask 516096
      %3520 = vst.msk [vmem:[%s206] sm:$0x1] %vm3519, %v3518
      %p3521 = scmp.lt.s32.totalorder %s16, 1
      %s3522 = scalar_select %p3521, %s16, 1
      %s3523 = smul.addr %s3522, 36
      %s3524 = smul.addr %s3523, 8
      %s3525 = scalar_lea.vmem %s3, %s3524
      %p3526 = scmp.lt.s32.totalorder %s16, 1
      %s3527 = scalar_select %p3526, %s16, 1
      %s3528 = scalar_lea.vmem %s4, %s3527
      // Predicated region
      $region33: #{preact_block_forward.4} parent=31 // pred_check
        %p3529 = pneg %p102
      $region34: #{preact_block_forward.4} parent=31 // pred_check_branch
        %3531 = sbr.rel (%p3529) target = $region36
      $region35: #{preact_block_forward.4} parent=31 // pred_region
        _
      $region36: #{preact_block_forward.4} parent=31 // pred_fallthru
        _
      // Predicated region
      $region37: #{preact_block_forward.4} parent=31 // pred_check
        %p3532 = pneg %p128
      $region38: #{preact_block_forward.4} parent=31 // pred_check_branch
        %3534 = sbr.rel (%p3532) target = $region40
      $region39: #{preact_block_forward.4} parent=31 // pred_region
        _
      $region40: #{preact_block_forward.4} parent=31 // pred_fallthru
        _
    $region32: #{preact_block_forward.4} parent=5 // pred_fallthru
      _
    %p3535 = scmp.le.s32.totalorder 2, %s11
    // Predicated region
    $region41: #{preact_block_forward.4} parent=5 // pred_check
      %p3536 = pneg %p3535
    $region42: #{preact_block_forward.4} parent=5 // pred_check_branch
      %3538 = sbr.rel (%p3536) target = $region44
    $region43: #{preact_block_forward.4} parent=5 // pred_region
      %s3539 = ssub.s32 %s11, 2
      // Predicated region
      $region45: #{preact_block_forward.4} parent=43 // pred_check
        %p3540 = pneg %p108
      $region46: #{preact_block_forward.4} parent=43 // pred_check_branch
        %3542 = sbr.rel (%p3540) target = $region48
      $region47: #{preact_block_forward.4} parent=43 // pred_region
        %p3543 = scmp.lt.s32.totalorder %s17, 1
        %s3544 = scalar_select %p3543, %s17, 1
        %s3545 = smul.addr %s3544, 36
        %s3546 = smul.addr %s3545, 8
        %s3547 = scalar_lea.vmem %s3, %s3546
      $region48: #{preact_block_forward.4} parent=43 // pred_fallthru
        _
      // Predicated region
      $region49: #{preact_block_forward.4} parent=43 // pred_check
        %p3548 = pneg %p134
      $region50: #{preact_block_forward.4} parent=43 // pred_check_branch
        %3550 = sbr.rel (%p3548) target = $region52
      $region51: #{preact_block_forward.4} parent=43 // pred_region
        %p3551 = scmp.lt.s32.totalorder %s17, 1
        %s3552 = scalar_select %p3551, %s17, 1
        %s3553 = scalar_lea.vmem %s4, %s3552
      $region52: #{preact_block_forward.4} parent=43 // pred_fallthru
        _
    $region44: #{preact_block_forward.4} parent=5 // pred_fallthru
      _
  $region6: #{preact_block_forward.4} parent=0 // loop_footer
    %s15 = sadd.s32 1, %s11
  $region7: #{preact_block_forward.4} parent=0 // loop_footer_branch
    %10 = sbr.rel target = $region3
  $region8: #{preact_block_forward.4} parent=0 // loop_exit
    _

// kernel: preact_block_forward.3
$region0: #{preact_block_forward.3}
  #allocation0 [shape = 'u32[]', space=smem, size = 0x4, offset = 0x4, fixed_abs, tag = 'smem constant byte address 0x4 - core index']
  #allocation1 [shape = 'u32[72,128]{1,0:T(1,128)}', space=vmem, size = 0x9000, scoped, tag = 'internal scratch']
  #allocation2 [shape = 'f32[342,32]{1,0:T(8,128)}', space=vmem, size = 0x2b000, scoped, tag = 'scratch operand']
  #allocation3 [shape = 'bf16[288,288]{1,0:T(8,128)(2,1)}', space=vmem, size = 0x36000, scoped, tag = 'scratch operand']
  %s0 = inlined_call_operand.vmem [shape: f32[2,342,32], index: 0, kind: input, shape index: {}]
  %s1 = inlined_call_operand.vmem [shape: f32[342,1], index: 1, kind: input, shape index: {}]
  %s2 = inlined_call_operand.vmem [shape: f32[1,32], index: 2, kind: input, shape index: {}]
  %s3 = inlined_call_operand.vmem [shape: f32[1,32], index: 3, kind: input, shape index: {}]
  %s4 = inlined_call_operand.vmem [shape: bf16[288,128], index: 4, kind: input, shape index: {}]
  %s5 = inlined_call_operand.vmem [shape: f32[1,64], index: 5, kind: input, shape index: {}]
  %s6 = inlined_call_operand.vmem [shape: f32[1,64], index: 6, kind: input, shape index: {}]
  %s7 = inlined_call_operand.vmem [shape: f32[288,1], index: 7, kind: input, shape index: {}]
  %s8 = inlined_call_operand.vmem [shape: f32[2,342,64], index: 8, kind: output, shape index: {0}]
  %s9 = inlined_call_operand.vmem [shape: f32[2,288,64], index: 9, kind: output, shape index: {1}]
  %10 = xla_tuple %s8, %s9
  %s11 = sld [smem:[#allocation0]]
  $region73: #{preact_block_forward.3} parent=0
    _
  %s13 = ssub.s32 1, %s11
  %s14 = scalar_select 0, %s13, %s11
  loop: start=0, step=1, limit=4
  $region2: #{preact_block_forward.3} parent=0 // loop_pre_header
    _
  $region3: #{preact_block_forward.3} parent=0 // loop_header
    %s16 = sphi 0, %s20
    %p17 = scmp.ge.s32.totalorder %s16, 4
    %s26 = sphi 0, %s28
    %s29 = sphi 0, %s26
    %s30 = sphi 0, %s29
    %s46 = sphi 0, %s30
    %s50 = sphi 0, %s50
    %s52 = sphi 0, %s50
    %s53 = sphi 0, %s52
    %s67 = sphi 0, %s53
    %s71 = sphi 0, %s71
    %s73 = sphi 0, %s71
    %s74 = sphi 0, %s73
    %s88 = sphi 0, %s74
    %s92 = sphi 0, %s92
    %s94 = sphi 0, %s92
    %s95 = sphi 0, %s94
    %s109 = sphi 0, %s95
    %s113 = sphi 0, %s113
    %s115 = sphi 0, %s113
    %s116 = sphi 0, %s115
    %s130 = sphi 0, %s116
    %s134 = sphi 0, %s134
    %s136 = sphi 0, %s134
    %s137 = sphi 0, %s136
    %s151 = sphi 0, %s137
    %s155 = sphi 0, %s155
    %s157 = sphi 0, %s155
    %s158 = sphi 0, %s157
    %s172 = sphi 0, %s158
    %s176 = sphi 0, %s176
    %s178 = sphi 0, %s176
    %s179 = sphi 0, %s178
    %s193 = sphi 0, %s179
    %s199 = sphi 0, %s201
    %s202 = sphi 0, %s199
    %s203 = sphi 0, %s202
    %s219 = sphi 0, %s203
    %s225 = sphi 0, %s227
    %s228 = sphi 0, %s225
    %s229 = sphi 0, %s228
    %s245 = sphi 0, %s229
  $region4: #{preact_block_forward.3} parent=0 // loop_header_branch
    %19 = sbr.rel (%p17) target = $region8
  $region5: #{preact_block_forward.3} parent=0 // loop_body
    %s21 = ssub.s32 %s16, 1
    %s22 = ssub.s32 %s16, 2
    %s23 = sadd.s32 %s16, 1
    %s24 = ssub.s32 %s16, %s23
    %p25 = scmp.eq.s32.totalorder %s24, 0
    %s27 = sadd.s32 %s26, 1
    %s28 = scalar_select %p25, %s26, %s27
    %p31 = pneg %p25
    %p32 = scmp.eq.s32.totalorder %s16, 1
    %p33 = por %p31, %p32
    %p34 = scmp.ne.s32.totalorder %s26, %s29
    %p35 = scmp.eq.s32.totalorder %s16, 0
    %p36 = por %p34, %p35
    %p37 = scmp.ne.s32.totalorder %s26, %s29
    %p38 = scmp.eq.s32.totalorder %s21, 1
    %p39 = por %p37, %p38
    %p40 = scmp.ne.s32.totalorder %s29, %s30
    %p41 = scmp.eq.s32.totalorder %s21, 0
    %p42 = por %p40, %p41
    %p43 = scmp.ne.s32.totalorder %s29, %s30
    %p44 = scmp.eq.s32.totalorder %s22, 1
    %p45 = por %p43, %p44
    %p47 = scmp.ne.s32.totalorder %s30, %s46
    %p48 = scmp.eq.s32.totalorder %s22, 0
    %p49 = por %p47, %p48
    %s51 = sadd.s32 %s50, 1
    %p54 = scmp.eq.s32.totalorder %s16, 1
    %p55 = scmp.ne.s32.totalorder %s50, %s52
    %p56 = scmp.eq.s32.totalorder %s16, 0
    %p57 = por %p55, %p56
    %p58 = scmp.ne.s32.totalorder %s50, %s52
    %p59 = scmp.eq.s32.totalorder %s21, 1
    %p60 = por %p58, %p59
    %p61 = scmp.ne.s32.totalorder %s52, %s53
    %p62 = scmp.eq.s32.totalorder %s21, 0
    %p63 = por %p61, %p62
    %p64 = scmp.ne.s32.totalorder %s52, %s53
    %p65 = scmp.eq.s32.totalorder %s22, 1
    %p66 = por %p64, %p65
    %p68 = scmp.ne.s32.totalorder %s53, %s67
    %p69 = scmp.eq.s32.totalorder %s22, 0
    %p70 = por %p68, %p69
    %s72 = sadd.s32 %s71, 1
    %p75 = scmp.eq.s32.totalorder %s16, 1
    %p76 = scmp.ne.s32.totalorder %s71, %s73
    %p77 = scmp.eq.s32.totalorder %s16, 0
    %p78 = por %p76, %p77
    %p79 = scmp.ne.s32.totalorder %s71, %s73
    %p80 = scmp.eq.s32.totalorder %s21, 1
    %p81 = por %p79, %p80
    %p82 = scmp.ne.s32.totalorder %s73, %s74
    %p83 = scmp.eq.s32.totalorder %s21, 0
    %p84 = por %p82, %p83
    %p85 = scmp.ne.s32.totalorder %s73, %s74
    %p86 = scmp.eq.s32.totalorder %s22, 1
    %p87 = por %p85, %p86
    %p89 = scmp.ne.s32.totalorder %s74, %s88
    %p90 = scmp.eq.s32.totalorder %s22, 0
    %p91 = por %p89, %p90
    %s93 = sadd.s32 %s92, 1
    %p96 = scmp.eq.s32.totalorder %s16, 1
    %p97 = scmp.ne.s32.totalorder %s92, %s94
    %p98 = scmp.eq.s32.totalorder %s16, 0
    %p99 = por %p97, %p98
    %p100 = scmp.ne.s32.totalorder %s92, %s94
    %p101 = scmp.eq.s32.totalorder %s21, 1
    %p102 = por %p100, %p101
    %p103 = scmp.ne.s32.totalorder %s94, %s95
    %p104 = scmp.eq.s32.totalorder %s21, 0
    %p105 = por %p103, %p104
    %p106 = scmp.ne.s32.totalorder %s94, %s95
    %p107 = scmp.eq.s32.totalorder %s22, 1
    %p108 = por %p106, %p107
    %p110 = scmp.ne.s32.totalorder %s95, %s109
    %p111 = scmp.eq.s32.totalorder %s22, 0
    %p112 = por %p110, %p111
    %s114 = sadd.s32 %s113, 1
    %p117 = scmp.eq.s32.totalorder %s16, 1
    %p118 = scmp.ne.s32.totalorder %s113, %s115
    %p119 = scmp.eq.s32.totalorder %s16, 0
    %p120 = por %p118, %p119
    %p121 = scmp.ne.s32.totalorder %s113, %s115
    %p122 = scmp.eq.s32.totalorder %s21, 1
    %p123 = por %p121, %p122
    %p124 = scmp.ne.s32.totalorder %s115, %s116
    %p125 = scmp.eq.s32.totalorder %s21, 0
    %p126 = por %p124, %p125
    %p127 = scmp.ne.s32.totalorder %s115, %s116
    %p128 = scmp.eq.s32.totalorder %s22, 1
    %p129 = por %p127, %p128
    %p131 = scmp.ne.s32.totalorder %s116, %s130
    %p132 = scmp.eq.s32.totalorder %s22, 0
    %p133 = por %p131, %p132
    %s135 = sadd.s32 %s134, 1
    %p138 = scmp.eq.s32.totalorder %s16, 1
    %p139 = scmp.ne.s32.totalorder %s134, %s136
    %p140 = scmp.eq.s32.totalorder %s16, 0
    %p141 = por %p139, %p140
    %p142 = scmp.ne.s32.totalorder %s134, %s136
    %p143 = scmp.eq.s32.totalorder %s21, 1
    %p144 = por %p142, %p143
    %p145 = scmp.ne.s32.totalorder %s136, %s137
    %p146 = scmp.eq.s32.totalorder %s21, 0
    %p147 = por %p145, %p146
    %p148 = scmp.ne.s32.totalorder %s136, %s137
    %p149 = scmp.eq.s32.totalorder %s22, 1
    %p150 = por %p148, %p149
    %p152 = scmp.ne.s32.totalorder %s137, %s151
    %p153 = scmp.eq.s32.totalorder %s22, 0
    %p154 = por %p152, %p153
    %s156 = sadd.s32 %s155, 1
    %p159 = scmp.eq.s32.totalorder %s16, 1
    %p160 = scmp.ne.s32.totalorder %s155, %s157
    %p161 = scmp.eq.s32.totalorder %s16, 0
    %p162 = por %p160, %p161
    %p163 = scmp.ne.s32.totalorder %s155, %s157
    %p164 = scmp.eq.s32.totalorder %s21, 1
    %p165 = por %p163, %p164
    %p166 = scmp.ne.s32.totalorder %s157, %s158
    %p167 = scmp.eq.s32.totalorder %s21, 0
    %p168 = por %p166, %p167
    %p169 = scmp.ne.s32.totalorder %s157, %s158
    %p170 = scmp.eq.s32.totalorder %s22, 1
    %p171 = por %p169, %p170
    %p173 = scmp.ne.s32.totalorder %s158, %s172
    %p174 = scmp.eq.s32.totalorder %s22, 0
    %p175 = por %p173, %p174
    %s177 = sadd.s32 %s176, 1
    %p180 = scmp.eq.s32.totalorder %s16, 1
    %p181 = scmp.ne.s32.totalorder %s176, %s178
    %p182 = scmp.eq.s32.totalorder %s16, 0
    %p183 = por %p181, %p182
    %p184 = scmp.ne.s32.totalorder %s176, %s178
    %p185 = scmp.eq.s32.totalorder %s21, 1
    %p186 = por %p184, %p185
    %p187 = scmp.ne.s32.totalorder %s178, %s179
    %p188 = scmp.eq.s32.totalorder %s21, 0
    %p189 = por %p187, %p188
    %p190 = scmp.ne.s32.totalorder %s178, %s179
    %p191 = scmp.eq.s32.totalorder %s22, 1
    %p192 = por %p190, %p191
    %p194 = scmp.ne.s32.totalorder %s179, %s193
    %p195 = scmp.eq.s32.totalorder %s22, 0
    %p196 = por %p194, %p195
    %s197 = ssub.s32 %s16, %s23
    %p198 = scmp.eq.s32.totalorder %s197, 0
    %s200 = sadd.s32 %s199, 1
    %s201 = scalar_select %p198, %s199, %s200
    %p204 = pneg %p198
    %p205 = scmp.eq.s32.totalorder %s16, 1
    %p206 = por %p204, %p205
    %p207 = scmp.ne.s32.totalorder %s199, %s202
    %p208 = scmp.eq.s32.totalorder %s16, 0
    %p209 = por %p207, %p208
    %p210 = scmp.ne.s32.totalorder %s199, %s202
    %p211 = scmp.eq.s32.totalorder %s21, 1
    %p212 = por %p210, %p211
    %p213 = scmp.ne.s32.totalorder %s202, %s203
    %p214 = scmp.eq.s32.totalorder %s21, 0
    %p215 = por %p213, %p214
    %p216 = scmp.ne.s32.totalorder %s202, %s203
    %p217 = scmp.eq.s32.totalorder %s22, 1
    %p218 = por %p216, %p217
    %p220 = scmp.ne.s32.totalorder %s203, %s219
    %p221 = scmp.eq.s32.totalorder %s22, 0
    %p222 = por %p220, %p221
    %s223 = ssub.s32 %s16, %s23
    %p224 = scmp.eq.s32.totalorder %s223, 0
    %s226 = sadd.s32 %s225, 1
    %s227 = scalar_select %p224, %s225, %s226
    %p230 = pneg %p224
    %p231 = scmp.eq.s32.totalorder %s16, 1
    %p232 = por %p230, %p231
    %p233 = scmp.ne.s32.totalorder %s225, %s228
    %p234 = scmp.eq.s32.totalorder %s16, 0
    %p235 = por %p233, %p234
    %p236 = scmp.ne.s32.totalorder %s225, %s228
    %p237 = scmp.eq.s32.totalorder %s21, 1
    %p238 = por %p236, %p237
    %p239 = scmp.ne.s32.totalorder %s228, %s229
    %p240 = scmp.eq.s32.totalorder %s21, 0
    %p241 = por %p239, %p240
    %p242 = scmp.ne.s32.totalorder %s228, %s229
    %p243 = scmp.eq.s32.totalorder %s22, 1
    %p244 = por %p242, %p243
    %p246 = scmp.ne.s32.totalorder %s229, %s245
    %p247 = scmp.eq.s32.totalorder %s22, 0
    %p248 = por %p246, %p247
    %p249 = scmp.le.s32.totalorder 1, %s16
    %p250 = scmp.lt.s32.totalorder %s16, 3
    %p251 = pnand %p249, %p250
    %p252 = pneg %p251
    // Predicated region
    $region9: #{preact_block_forward.3} parent=5 // pred_check
      _
    $region10: #{preact_block_forward.3} parent=5 // pred_check_branch
      %254 = sbr.rel (%p251) target = $region12
    $region11: #{preact_block_forward.3} parent=5 // pred_region
      %s255 = ssub.s32 %s16, 1
      // Predicated region
      $region13: #{preact_block_forward.3} parent=11 // pred_check
        %p256 = pneg %p63
      $region14: #{preact_block_forward.3} parent=11 // pred_check_branch
        %258 = sbr.rel (%p256) target = $region16
      $region15: #{preact_block_forward.3} parent=11 // pred_region
        _
      $region16: #{preact_block_forward.3} parent=11 // pred_fallthru
        _
      // Predicated region
      $region17: #{preact_block_forward.3} parent=11 // pred_check
        %p259 = pneg %p84
      $region18: #{preact_block_forward.3} parent=11 // pred_check_branch
        %261 = sbr.rel (%p259) target = $region20
      $region19: #{preact_block_forward.3} parent=11 // pred_region
        _
      $region20: #{preact_block_forward.3} parent=11 // pred_fallthru
        _
      // Predicated region
      $region21: #{preact_block_forward.3} parent=11 // pred_check
        %p262 = pneg %p105
      $region22: #{preact_block_forward.3} parent=11 // pred_check_branch
        %264 = sbr.rel (%p262) target = $region24
      $region23: #{preact_block_forward.3} parent=11 // pred_region
        _
      $region24: #{preact_block_forward.3} parent=11 // pred_fallthru
        _
      // Predicated region
      $region25: #{preact_block_forward.3} parent=11 // pred_check
        %p265 = pneg %p126
      $region26: #{preact_block_forward.3} parent=11 // pred_check_branch
        %267 = sbr.rel (%p265) target = $region28
      $region27: #{preact_block_forward.3} parent=11 // pred_region
        _
      $region28: #{preact_block_forward.3} parent=11 // pred_fallthru
        _
      // Predicated region
      $region29: #{preact_block_forward.3} parent=11 // pred_check
        %p268 = pneg %p147
      $region30: #{preact_block_forward.3} parent=11 // pred_check_branch
        %270 = sbr.rel (%p268) target = $region32
      $region31: #{preact_block_forward.3} parent=11 // pred_region
        _
      $region32: #{preact_block_forward.3} parent=11 // pred_fallthru
        _
      // Predicated region
      $region33: #{preact_block_forward.3} parent=11 // pred_check
        %p271 = pneg %p168
      $region34: #{preact_block_forward.3} parent=11 // pred_check_branch
        %273 = sbr.rel (%p271) target = $region36
      $region35: #{preact_block_forward.3} parent=11 // pred_region
        _
      $region36: #{preact_block_forward.3} parent=11 // pred_fallthru
        _
      // Predicated region
      $region37: #{preact_block_forward.3} parent=11 // pred_check
        %p274 = pneg %p189
      $region38: #{preact_block_forward.3} parent=11 // pred_check_branch
        %276 = sbr.rel (%p274) target = $region40
      $region39: #{preact_block_forward.3} parent=11 // pred_region
        _
      $region40: #{preact_block_forward.3} parent=11 // pred_fallthru
        _
    $region12: #{preact_block_forward.3} parent=5 // pred_fallthru
      _
    %p277 = scmp.lt.s32.totalorder %s16, 2
    // Predicated region
    $region41: #{preact_block_forward.3} parent=5 // pred_check
      %p278 = pneg %p277
    $region42: #{preact_block_forward.3} parent=5 // pred_check_branch
      %280 = sbr.rel (%p278) target = $region44
    $region43: #{preact_block_forward.3} parent=5 // pred_region
      // Predicated region
      $region45: #{preact_block_forward.3} parent=43 // pred_check
        %p281 = pneg %p36
      $region46: #{preact_block_forward.3} parent=43 // pred_check_branch
        %283 = sbr.rel (%p281) target = $region48
      $region47: #{preact_block_forward.3} parent=43 // pred_region
        %p284 = scmp.lt.s32.totalorder %s16, 1
        %s285 = scalar_select %p284, %s16, 1
        %s286 = smul.addr %s285, 43
        %s287 = smul.addr %s286, 8
        %s288 = scalar_lea.vmem %s0, %s287
      $region48: #{preact_block_forward.3} parent=43 // pred_fallthru
        _
    $region44: #{preact_block_forward.3} parent=5 // pred_fallthru
      _
    %p289 = scmp.le.s32.totalorder 1, %s16
    %p290 = scmp.lt.s32.totalorder %s16, 3
    %p291 = pnand %p289, %p290
    %p292 = pneg %p291
    // Predicated region
    $region49: #{preact_block_forward.3} parent=5 // pred_check
      _
    $region50: #{preact_block_forward.3} parent=5 // pred_check_branch
      %294 = sbr.rel (%p291) target = $region52
    $region51: #{preact_block_forward.3} parent=5 // pred_region
      %s295 = ssub.s32 %s16, 1
      %p296 = scmp.lt.s32.totalorder %s21, 1
      %s297 = scalar_select %p296, %s21, 1
      %s298 = smul.addr %s297, 43
      %s299 = smul.addr %s298, 8
      %s300 = scalar_lea.vmem %s0, %s299
      %p301 = pneg %p42
      %p302 = pneg %p39
      %p303 = pneg %p63
      %p304 = pneg %p60
      %p305 = pneg %p84
      %p306 = pneg %p81
      %p307 = pneg %p105
      %p308 = pneg %p102
      %p309 = pneg %p126
      %p310 = pneg %p123
      %p311 = pneg %p147
      %p312 = pneg %p144
      %p313 = pneg %p168
      %p314 = pneg %p165
      %p315 = pneg %p189
      %p316 = pneg %p186
      %p317 = pneg %p215
      %p318 = pneg %p212
      %p319 = scmp.lt.s32.totalorder %s21, 1
      %s320 = scalar_select %p319, %s21, 1
      %s321 = smul.addr %s320, 43
      %s322 = smul.addr %s321, 8
      %s323 = scalar_lea.vmem %s8, %s322
      %p324 = pneg %p241
      %p325 = pneg %p238
      %p326 = scmp.lt.s32.totalorder %s21, 1
      %s327 = scalar_select %p326, %s21, 1
      %s328 = smul.addr %s327, 36
      %s329 = smul.addr %s328, 8
      %s330 = scalar_lea.vmem %s9, %s329
      %p331 = scmp.lt.s32.totalorder %s21, 1
      %s332 = scalar_select %p331, %s21, 1
      %s333 = smul.addr %s332, 43
      %s334 = smul.addr %s333, 8
      %s335 = scalar_lea.vmem %s0, %s334
      %p336 = scmp.lt.s32.totalorder %s21, 1
      %s337 = scalar_select %p336, %s21, 1
      %s338 = smul.addr %s337, 43
      %s339 = smul.addr %s338, 8
      %s340 = scalar_lea.vmem %s8, %s339
      %p341 = scmp.lt.s32.totalorder %s21, 1
      %s342 = scalar_select %p341, %s21, 1
      %s343 = smul.addr %s342, 36
      %s344 = smul.addr %s343, 8
      %s345 = scalar_lea.vmem %s9, %s344
      %v347 = vld [vmem:[%s335] sm:$0xff]
      %v348 = vld [vmem:[%s335 + $0x8] sm:$0xff]
      %v349 = vld [vmem:[%s335 + $0x10] sm:$0xff]
      %v350 = vld [vmem:[%s335 + $0x18] sm:$0xff]
      %v351 = vld [vmem:[%s335 + $0x20] sm:$0xff]
      %v352 = vld [vmem:[%s335 + $0x28] sm:$0xff]
      %v353 = vld [vmem:[%s335 + $0x30] sm:$0xff]
      %v354 = vld [vmem:[%s335 + $0x38] sm:$0xff]
      %v355 = vld [vmem:[%s335 + $0x40] sm:$0xff]
      %v356 = vld [vmem:[%s335 + $0x48] sm:$0xff]
      %v357 = vld [vmem:[%s335 + $0x50] sm:$0xff]
      %v358 = vld [vmem:[%s335 + $0x58] sm:$0xff]
      %v359 = vld [vmem:[%s335 + $0x60] sm:$0xff]
      %v360 = vld [vmem:[%s335 + $0x68] sm:$0xff]
      %v361 = vld [vmem:[%s335 + $0x70] sm:$0xff]
      %v362 = vld [vmem:[%s335 + $0x78] sm:$0xff]
      %v363 = vld [vmem:[%s335 + $0x80] sm:$0xff]
      %v364 = vld [vmem:[%s335 + $0x88] sm:$0xff]
      %v365 = vld [vmem:[%s335 + $0x90] sm:$0xff]
      %v366 = vld [vmem:[%s335 + $0x98] sm:$0xff]
      %v367 = vld [vmem:[%s335 + $0xa0] sm:$0xff]
      %v368 = vld [vmem:[%s335 + $0xa8] sm:$0xff]
      %v369 = vld [vmem:[%s335 + $0xb0] sm:$0xff]
      %v370 = vld [vmem:[%s335 + $0xb8] sm:$0xff]
      %v371 = vld [vmem:[%s335 + $0xc0] sm:$0xff]
      %v372 = vld [vmem:[%s335 + $0xc8] sm:$0xff]
      %v373 = vld [vmem:[%s335 + $0xd0] sm:$0xff]
      %v374 = vld [vmem:[%s335 + $0xd8] sm:$0xff]
      %v375 = vld [vmem:[%s335 + $0xe0] sm:$0xff]
      %v376 = vld [vmem:[%s335 + $0xe8] sm:$0xff]
      %v377 = vld [vmem:[%s335 + $0xf0] sm:$0xff]
      %v378 = vld [vmem:[%s335 + $0xf8] sm:$0xff]
      %v379 = vld [vmem:[%s335 + $0x100] sm:$0xff]
      %v380 = vld [vmem:[%s335 + $0x108] sm:$0xff]
      %v381 = vld [vmem:[%s335 + $0x110] sm:$0xff]
      %v382 = vld [vmem:[%s335 + $0x118] sm:$0xff]
      %v383 = vld [vmem:[%s335 + $0x120] sm:$0xff]
      %v384 = vld [vmem:[%s335 + $0x128] sm:$0xff]
      %v385 = vld [vmem:[%s335 + $0x130] sm:$0xff]
      %v386 = vld [vmem:[%s335 + $0x138] sm:$0xff]
      %v387 = vld [vmem:[%s335 + $0x140] sm:$0xff]
      %v388 = vld [vmem:[%s335 + $0x148] sm:$0xff]
      %v389 = vld [vmem:[%s335 + $0x150] sm:$0x3f]
      %v390 = vld [vmem:[%s2] sm:$0x1]
      %v392 = vperm.slane %v390, 0
      %v394 = vmul.f32 %v347, %v392
      %v395 = vmul.f32 %v348, %v392
      %v396 = vmul.f32 %v349, %v392
      %v397 = vmul.f32 %v350, %v392
      %v398 = vmul.f32 %v351, %v392
      %v399 = vmul.f32 %v352, %v392
      %v400 = vmul.f32 %v353, %v392
      %v401 = vmul.f32 %v354, %v392
      %v402 = vmul.f32 %v355, %v392
      %v403 = vmul.f32 %v356, %v392
      %v404 = vmul.f32 %v357, %v392
      %v405 = vmul.f32 %v358, %v392
      %v406 = vmul.f32 %v359, %v392
      %v407 = vmul.f32 %v360, %v392
      %v408 = vmul.f32 %v361, %v392
      %v409 = vmul.f32 %v362, %v392
      %v410 = vmul.f32 %v363, %v392
      %v411 = vmul.f32 %v364, %v392
      %v412 = vmul.f32 %v365, %v392
      %v413 = vmul.f32 %v366, %v392
      %v414 = vmul.f32 %v367, %v392
      %v415 = vmul.f32 %v368, %v392
      %v416 = vmul.f32 %v369, %v392
      %v417 = vmul.f32 %v370, %v392
      %v418 = vmul.f32 %v371, %v392
      %v419 = vmul.f32 %v372, %v392
      %v420 = vmul.f32 %v373, %v392
      %v421 = vmul.f32 %v374, %v392
      %v422 = vmul.f32 %v375, %v392
      %v423 = vmul.f32 %v376, %v392
      %v424 = vmul.f32 %v377, %v392
      %v425 = vmul.f32 %v378, %v392
      %v426 = vmul.f32 %v379, %v392
      %v427 = vmul.f32 %v380, %v392
      %v428 = vmul.f32 %v381, %v392
      %v429 = vmul.f32 %v382, %v392
      %v430 = vmul.f32 %v383, %v392
      %v431 = vmul.f32 %v384, %v392
      %v432 = vmul.f32 %v385, %v392
      %v433 = vmul.f32 %v386, %v392
      %v434 = vmul.f32 %v387, %v392
      %v435 = vmul.f32 %v388, %v392
      %v436 = vmul.f32 %v389, %v392
      %v437 = vld [vmem:[%s3] sm:$0x1]
      %v439 = vperm.slane %v437, 0
      %v441 = vadd.f32 %v394, %v439
      %v442 = vadd.f32 %v395, %v439
      %v443 = vadd.f32 %v396, %v439
      %v444 = vadd.f32 %v397, %v439
      %v445 = vadd.f32 %v398, %v439
      %v446 = vadd.f32 %v399, %v439
      %v447 = vadd.f32 %v400, %v439
      %v448 = vadd.f32 %v401, %v439
      %v449 = vadd.f32 %v402, %v439
      %v450 = vadd.f32 %v403, %v439
      %v451 = vadd.f32 %v404, %v439
      %v452 = vadd.f32 %v405, %v439
      %v453 = vadd.f32 %v406, %v439
      %v454 = vadd.f32 %v407, %v439
      %v455 = vadd.f32 %v408, %v439
      %v456 = vadd.f32 %v409, %v439
      %v457 = vadd.f32 %v410, %v439
      %v458 = vadd.f32 %v411, %v439
      %v459 = vadd.f32 %v412, %v439
      %v460 = vadd.f32 %v413, %v439
      %v461 = vadd.f32 %v414, %v439
      %v462 = vadd.f32 %v415, %v439
      %v463 = vadd.f32 %v416, %v439
      %v464 = vadd.f32 %v417, %v439
      %v465 = vadd.f32 %v418, %v439
      %v466 = vadd.f32 %v419, %v439
      %v467 = vadd.f32 %v420, %v439
      %v468 = vadd.f32 %v421, %v439
      %v469 = vadd.f32 %v422, %v439
      %v470 = vadd.f32 %v423, %v439
      %v471 = vadd.f32 %v424, %v439
      %v472 = vadd.f32 %v425, %v439
      %v473 = vadd.f32 %v426, %v439
      %v474 = vadd.f32 %v427, %v439
      %v475 = vadd.f32 %v428, %v439
      %v476 = vadd.f32 %v429, %v439
      %v477 = vadd.f32 %v430, %v439
      %v478 = vadd.f32 %v431, %v439
      %v479 = vadd.f32 %v432, %v439
      %v480 = vadd.f32 %v433, %v439
      %v481 = vadd.f32 %v434, %v439
      %v482 = vadd.f32 %v435, %v439
      %v483 = vadd.f32 %v436, %v439
      %v484 = vmax.f32 %v441, 0.0
      %v485 = vmax.f32 %v442, 0.0
      %v486 = vmax.f32 %v443, 0.0
      %v487 = vmax.f32 %v444, 0.0
      %v488 = vmax.f32 %v445, 0.0
      %v489 = vmax.f32 %v446, 0.0
      %v490 = vmax.f32 %v447, 0.0
      %v491 = vmax.f32 %v448, 0.0
      %v492 = vmax.f32 %v449, 0.0
      %v493 = vmax.f32 %v450, 0.0
      %v494 = vmax.f32 %v451, 0.0
      %v495 = vmax.f32 %v452, 0.0
      %v496 = vmax.f32 %v453, 0.0
      %v497 = vmax.f32 %v454, 0.0
      %v498 = vmax.f32 %v455, 0.0
      %v499 = vmax.f32 %v456, 0.0
      %v500 = vmax.f32 %v457, 0.0
      %v501 = vmax.f32 %v458, 0.0
      %v502 = vmax.f32 %v459, 0.0
      %v503 = vmax.f32 %v460, 0.0
      %v504 = vmax.f32 %v461, 0.0
      %v505 = vmax.f32 %v462, 0.0
      %v506 = vmax.f32 %v463, 0.0
      %v507 = vmax.f32 %v464, 0.0
      %v508 = vmax.f32 %v465, 0.0
      %v509 = vmax.f32 %v466, 0.0
      %v510 = vmax.f32 %v467, 0.0
      %v511 = vmax.f32 %v468, 0.0
      %v512 = vmax.f32 %v469, 0.0
      %v513 = vmax.f32 %v470, 0.0
      %v514 = vmax.f32 %v471, 0.0
      %v515 = vmax.f32 %v472, 0.0
      %v516 = vmax.f32 %v473, 0.0
      %v517 = vmax.f32 %v474, 0.0
      %v518 = vmax.f32 %v475, 0.0
      %v519 = vmax.f32 %v476, 0.0
      %v520 = vmax.f32 %v477, 0.0
      %v521 = vmax.f32 %v478, 0.0
      %v522 = vmax.f32 %v479, 0.0
      %v523 = vmax.f32 %v480, 0.0
      %v524 = vmax.f32 %v481, 0.0
      %v525 = vmax.f32 %v482, 0.0
      %v526 = vmax.f32 %v483, 0.0
      %v527 = vld [vmem:[%s1] sm:$0xff]
      %v528 = vld [vmem:[%s1 + $0x8] sm:$0xff]
      %v529 = vld [vmem:[%s1 + $0x10] sm:$0xff]
      %v530 = vld [vmem:[%s1 + $0x18] sm:$0xff]
      %v531 = vld [vmem:[%s1 + $0x20] sm:$0xff]
      %v532 = vld [vmem:[%s1 + $0x28] sm:$0xff]
      %v533 = vld [vmem:[%s1 + $0x30] sm:$0xff]
      %v534 = vld [vmem:[%s1 + $0x38] sm:$0xff]
      %v535 = vld [vmem:[%s1 + $0x40] sm:$0xff]
      %v536 = vld [vmem:[%s1 + $0x48] sm:$0xff]
      %v537 = vld [vmem:[%s1 + $0x50] sm:$0xff]
      %v538 = vld [vmem:[%s1 + $0x58] sm:$0xff]
      %v539 = vld [vmem:[%s1 + $0x60] sm:$0xff]
      %v540 = vld [vmem:[%s1 + $0x68] sm:$0xff]
      %v541 = vld [vmem:[%s1 + $0x70] sm:$0xff]
      %v542 = vld [vmem:[%s1 + $0x78] sm:$0xff]
      %v543 = vld [vmem:[%s1 + $0x80] sm:$0xff]
      %v544 = vld [vmem:[%s1 + $0x88] sm:$0xff]
      %v545 = vld [vmem:[%s1 + $0x90] sm:$0xff]
      %v546 = vld [vmem:[%s1 + $0x98] sm:$0xff]
      %v547 = vld [vmem:[%s1 + $0xa0] sm:$0xff]
      %v548 = vld [vmem:[%s1 + $0xa8] sm:$0xff]
      %v549 = vld [vmem:[%s1 + $0xb0] sm:$0xff]
      %v550 = vld [vmem:[%s1 + $0xb8] sm:$0xff]
      %v551 = vld [vmem:[%s1 + $0xc0] sm:$0xff]
      %v552 = vld [vmem:[%s1 + $0xc8] sm:$0xff]
      %v553 = vld [vmem:[%s1 + $0xd0] sm:$0xff]
      %v554 = vld [vmem:[%s1 + $0xd8] sm:$0xff]
      %v555 = vld [vmem:[%s1 + $0xe0] sm:$0xff]
      %v556 = vld [vmem:[%s1 + $0xe8] sm:$0xff]
      %v557 = vld [vmem:[%s1 + $0xf0] sm:$0xff]
      %v558 = vld [vmem:[%s1 + $0xf8] sm:$0xff]
      %v559 = vld [vmem:[%s1 + $0x100] sm:$0xff]
      %v560 = vld [vmem:[%s1 + $0x108] sm:$0xff]
      %v561 = vld [vmem:[%s1 + $0x110] sm:$0xff]
      %v562 = vld [vmem:[%s1 + $0x118] sm:$0xff]
      %v563 = vld [vmem:[%s1 + $0x120] sm:$0xff]
      %v564 = vld [vmem:[%s1 + $0x128] sm:$0xff]
      %v565 = vld [vmem:[%s1 + $0x130] sm:$0xff]
      %v566 = vld [vmem:[%s1 + $0x138] sm:$0xff]
      %v567 = vld [vmem:[%s1 + $0x140] sm:$0xff]
      %v568 = vld [vmem:[%s1 + $0x148] sm:$0xff]
      %v569 = vld [vmem:[%s1 + $0x150] sm:$0x3f]
      %571 = vset.pattern.permute.xlu0 0
      %572 = vperm.xlu0 %571, %v527
      %v573 = vpop.permute.xlu0 %572
      %576 = vset.pattern.permute.xlu0 0
      %577 = vperm.xlu0 %576, %v528
      %v578 = vpop.permute.xlu0 %577
      %581 = vset.pattern.permute.xlu0 0
      %582 = vperm.xlu0 %581, %v529
      %v583 = vpop.permute.xlu0 %582
      %586 = vset.pattern.permute.xlu0 0
      %587 = vperm.xlu0 %586, %v530
      %v588 = vpop.permute.xlu0 %587
      %591 = vset.pattern.permute.xlu0 0
      %592 = vperm.xlu0 %591, %v531
      %v593 = vpop.permute.xlu0 %592
      %596 = vset.pattern.permute.xlu0 0
      %597 = vperm.xlu0 %596, %v532
      %v598 = vpop.permute.xlu0 %597
      %601 = vset.pattern.permute.xlu0 0
      %602 = vperm.xlu0 %601, %v533
      %v603 = vpop.permute.xlu0 %602
      %606 = vset.pattern.permute.xlu0 0
      %607 = vperm.xlu0 %606, %v534
      %v608 = vpop.permute.xlu0 %607
      %611 = vset.pattern.permute.xlu0 0
      %612 = vperm.xlu0 %611, %v535
      %v613 = vpop.permute.xlu0 %612
      %616 = vset.pattern.permute.xlu0 0
      %617 = vperm.xlu0 %616, %v536
      %v618 = vpop.permute.xlu0 %617
      %621 = vset.pattern.permute.xlu0 0
      %622 = vperm.xlu0 %621, %v537
      %v623 = vpop.permute.xlu0 %622
      %626 = vset.pattern.permute.xlu0 0
      %627 = vperm.xlu0 %626, %v538
      %v628 = vpop.permute.xlu0 %627
      %631 = vset.pattern.permute.xlu0 0
      %632 = vperm.xlu0 %631, %v539
      %v633 = vpop.permute.xlu0 %632
      %636 = vset.pattern.permute.xlu0 0
      %637 = vperm.xlu0 %636, %v540
      %v638 = vpop.permute.xlu0 %637
      %641 = vset.pattern.permute.xlu0 0
      %642 = vperm.xlu0 %641, %v541
      %v643 = vpop.permute.xlu0 %642
      %646 = vset.pattern.permute.xlu0 0
      %647 = vperm.xlu0 %646, %v542
      %v648 = vpop.permute.xlu0 %647
      %651 = vset.pattern.permute.xlu0 0
      %652 = vperm.xlu0 %651, %v543
      %v653 = vpop.permute.xlu0 %652
      %656 = vset.pattern.permute.xlu0 0
      %657 = vperm.xlu0 %656, %v544
      %v658 = vpop.permute.xlu0 %657
      %661 = vset.pattern.permute.xlu0 0
      %662 = vperm.xlu0 %661, %v545
      %v663 = vpop.permute.xlu0 %662
      %666 = vset.pattern.permute.xlu0 0
      %667 = vperm.xlu0 %666, %v546
      %v668 = vpop.permute.xlu0 %667
      %671 = vset.pattern.permute.xlu0 0
      %672 = vperm.xlu0 %671, %v547
      %v673 = vpop.permute.xlu0 %672
      %676 = vset.pattern.permute.xlu0 0
      %677 = vperm.xlu0 %676, %v548
      %v678 = vpop.permute.xlu0 %677
      %681 = vset.pattern.permute.xlu0 0
      %682 = vperm.xlu0 %681, %v549
      %v683 = vpop.permute.xlu0 %682
      %686 = vset.pattern.permute.xlu0 0
      %687 = vperm.xlu0 %686, %v550
      %v688 = vpop.permute.xlu0 %687
      %691 = vset.pattern.permute.xlu0 0
      %692 = vperm.xlu0 %691, %v551
      %v693 = vpop.permute.xlu0 %692
      %696 = vset.pattern.permute.xlu0 0
      %697 = vperm.xlu0 %696, %v552
      %v698 = vpop.permute.xlu0 %697
      %701 = vset.pattern.permute.xlu0 0
      %702 = vperm.xlu0 %701, %v553
      %v703 = vpop.permute.xlu0 %702
      %706 = vset.pattern.permute.xlu0 0
      %707 = vperm.xlu0 %706, %v554
      %v708 = vpop.permute.xlu0 %707
      %711 = vset.pattern.permute.xlu0 0
      %712 = vperm.xlu0 %711, %v555
      %v713 = vpop.permute.xlu0 %712
      %716 = vset.pattern.permute.xlu0 0
      %717 = vperm.xlu0 %716, %v556
      %v718 = vpop.permute.xlu0 %717
      %721 = vset.pattern.permute.xlu0 0
      %722 = vperm.xlu0 %721, %v557
      %v723 = vpop.permute.xlu0 %722
      %726 = vset.pattern.permute.xlu0 0
      %727 = vperm.xlu0 %726, %v558
      %v728 = vpop.permute.xlu0 %727
      %731 = vset.pattern.permute.xlu0 0
      %732 = vperm.xlu0 %731, %v559
      %v733 = vpop.permute.xlu0 %732
      %736 = vset.pattern.permute.xlu0 0
      %737 = vperm.xlu0 %736, %v560
      %v738 = vpop.permute.xlu0 %737
      %741 = vset.pattern.permute.xlu0 0
      %742 = vperm.xlu0 %741, %v561
      %v743 = vpop.permute.xlu0 %742
      %746 = vset.pattern.permute.xlu0 0
      %747 = vperm.xlu0 %746, %v562
      %v748 = vpop.permute.xlu0 %747
      %751 = vset.pattern.permute.xlu0 0
      %752 = vperm.xlu0 %751, %v563
      %v753 = vpop.permute.xlu0 %752
      %756 = vset.pattern.permute.xlu0 0
      %757 = vperm.xlu0 %756, %v564
      %v758 = vpop.permute.xlu0 %757
      %761 = vset.pattern.permute.xlu0 0
      %762 = vperm.xlu0 %761, %v565
      %v763 = vpop.permute.xlu0 %762
      %766 = vset.pattern.permute.xlu0 0
      %767 = vperm.xlu0 %766, %v566
      %v768 = vpop.permute.xlu0 %767
      %771 = vset.pattern.permute.xlu0 0
      %772 = vperm.xlu0 %771, %v567
      %v773 = vpop.permute.xlu0 %772
      %776 = vset.pattern.permute.xlu0 0
      %777 = vperm.xlu0 %776, %v568
      %v778 = vpop.permute.xlu0 %777
      %781 = vset.pattern.permute.xlu0 0
      %782 = vperm.xlu0 %781, %v569
      %v783 = vpop.permute.xlu0 %782
      %v785 = vmul.f32 %v484, %v573
      %v786 = vmul.f32 %v485, %v578
      %v787 = vmul.f32 %v486, %v583
      %v788 = vmul.f32 %v487, %v588
      %v789 = vmul.f32 %v488, %v593
      %v790 = vmul.f32 %v489, %v598
      %v791 = vmul.f32 %v490, %v603
      %v792 = vmul.f32 %v491, %v608
      %v793 = vmul.f32 %v492, %v613
      %v794 = vmul.f32 %v493, %v618
      %v795 = vmul.f32 %v494, %v623
      %v796 = vmul.f32 %v495, %v628
      %v797 = vmul.f32 %v496, %v633
      %v798 = vmul.f32 %v497, %v638
      %v799 = vmul.f32 %v498, %v643
      %v800 = vmul.f32 %v499, %v648
      %v801 = vmul.f32 %v500, %v653
      %v802 = vmul.f32 %v501, %v658
      %v803 = vmul.f32 %v502, %v663
      %v804 = vmul.f32 %v503, %v668
      %v805 = vmul.f32 %v504, %v673
      %v806 = vmul.f32 %v505, %v678
      %v807 = vmul.f32 %v506, %v683
      %v808 = vmul.f32 %v507, %v688
      %v809 = vmul.f32 %v508, %v693
      %v810 = vmul.f32 %v509, %v698
      %v811 = vmul.f32 %v510, %v703
      %v812 = vmul.f32 %v511, %v708
      %v813 = vmul.f32 %v512, %v713
      %v814 = vmul.f32 %v513, %v718
      %v815 = vmul.f32 %v514, %v723
      %v816 = vmul.f32 %v515, %v728
      %v817 = vmul.f32 %v516, %v733
      %v818 = vmul.f32 %v517, %v738
      %v819 = vmul.f32 %v518, %v743
      %v820 = vmul.f32 %v519, %v748
      %v821 = vmul.f32 %v520, %v753
      %v822 = vmul.f32 %v521, %v758
      %v823 = vmul.f32 %v522, %v763
      %v824 = vmul.f32 %v523, %v768
      %v825 = vmul.f32 %v524, %v773
      %v826 = vmul.f32 %v525, %v778
      %v827 = vmul.f32 %v526, %v783
      %vm828 = vcmask 261120
      %829 = vst.msk [vmem:[#allocation2] sm:$0xff] %vm828, %v785
      %830 = vst.msk [vmem:[#allocation2 + $0x8] sm:$0xff] %vm828, %v786
      %831 = vst.msk [vmem:[#allocation2 + $0x10] sm:$0xff] %vm828, %v787
      %832 = vst.msk [vmem:[#allocation2 + $0x18] sm:$0xff] %vm828, %v788
      %833 = vst.msk [vmem:[#allocation2 + $0x20] sm:$0xff] %vm828, %v789
      %834 = vst.msk [vmem:[#allocation2 + $0x28] sm:$0xff] %vm828, %v790
      %835 = vst.msk [vmem:[#allocation2 + $0x30] sm:$0xff] %vm828, %v791
      %836 = vst.msk [vmem:[#allocation2 + $0x38] sm:$0xff] %vm828, %v792
      %837 = vst.msk [vmem:[#allocation2 + $0x40] sm:$0xff] %vm828, %v793
      %838 = vst.msk [vmem:[#allocation2 + $0x48] sm:$0xff] %vm828, %v794
      %839 = vst.msk [vmem:[#allocation2 + $0x50] sm:$0xff] %vm828, %v795
      %840 = vst.msk [vmem:[#allocation2 + $0x58] sm:$0xff] %vm828, %v796
      %841 = vst.msk [vmem:[#allocation2 + $0x60] sm:$0xff] %vm828, %v797
      %842 = vst.msk [vmem:[#allocation2 + $0x68] sm:$0xff] %vm828, %v798
      %843 = vst.msk [vmem:[#allocation2 + $0x70] sm:$0xff] %vm828, %v799
      %844 = vst.msk [vmem:[#allocation2 + $0x78] sm:$0xff] %vm828, %v800
      %845 = vst.msk [vmem:[#allocation2 + $0x80] sm:$0xff] %vm828, %v801
      %846 = vst.msk [vmem:[#allocation2 + $0x88] sm:$0xff] %vm828, %v802
      %847 = vst.msk [vmem:[#allocation2 + $0x90] sm:$0xff] %vm828, %v803
      %848 = vst.msk [vmem:[#allocation2 + $0x98] sm:$0xff] %vm828, %v804
      %849 = vst.msk [vmem:[#allocation2 + $0xa0] sm:$0xff] %vm828, %v805
      %850 = vst.msk [vmem:[#allocation2 + $0xa8] sm:$0xff] %vm828, %v806
      %851 = vst.msk [vmem:[#allocation2 + $0xb0] sm:$0xff] %vm828, %v807
      %852 = vst.msk [vmem:[#allocation2 + $0xb8] sm:$0xff] %vm828, %v808
      %853 = vst.msk [vmem:[#allocation2 + $0xc0] sm:$0xff] %vm828, %v809
      %854 = vst.msk [vmem:[#allocation2 + $0xc8] sm:$0xff] %vm828, %v810
      %855 = vst.msk [vmem:[#allocation2 + $0xd0] sm:$0xff] %vm828, %v811
      %856 = vst.msk [vmem:[#allocation2 + $0xd8] sm:$0xff] %vm828, %v812
      %857 = vst.msk [vmem:[#allocation2 + $0xe0] sm:$0xff] %vm828, %v813
      %858 = vst.msk [vmem:[#allocation2 + $0xe8] sm:$0xff] %vm828, %v814
      %859 = vst.msk [vmem:[#allocation2 + $0xf0] sm:$0xff] %vm828, %v815
      %860 = vst.msk [vmem:[#allocation2 + $0xf8] sm:$0xff] %vm828, %v816
      %861 = vst.msk [vmem:[#allocation2 + $0x100] sm:$0xff] %vm828, %v817
      %862 = vst.msk [vmem:[#allocation2 + $0x108] sm:$0xff] %vm828, %v818
      %863 = vst.msk [vmem:[#allocation2 + $0x110] sm:$0xff] %vm828, %v819
      %864 = vst.msk [vmem:[#allocation2 + $0x118] sm:$0xff] %vm828, %v820
      %865 = vst.msk [vmem:[#allocation2 + $0x120] sm:$0xff] %vm828, %v821
      %866 = vst.msk [vmem:[#allocation2 + $0x128] sm:$0xff] %vm828, %v822
      %867 = vst.msk [vmem:[#allocation2 + $0x130] sm:$0xff] %vm828, %v823
      %868 = vst.msk [vmem:[#allocation2 + $0x138] sm:$0xff] %vm828, %v824
      %869 = vst.msk [vmem:[#allocation2 + $0x140] sm:$0xff] %vm828, %v825
      %870 = vst.msk [vmem:[#allocation2 + $0x148] sm:$0xff] %vm828, %v826
      %vm871 = vcmask 259072
      %872 = vst.msk [vmem:[#allocation2 + $0x150] sm:$0x3f] %vm871, %v827
      %v873 = vld [vmem:[#allocation2] sm:$0xff]
      %v874 = vld [vmem:[#allocation2 + $0x8] sm:$0xff]
      %v875 = vld [vmem:[#allocation2 + $0x10] sm:$0xff]
      %v876 = vld [vmem:[#allocation2 + $0x18] sm:$0xff]
      %v877 = vld [vmem:[#allocation2 + $0x20] sm:$0xff]
      %v878 = vld [vmem:[#allocation2 + $0x28] sm:$0xff]
      %v879 = vld [vmem:[#allocation2 + $0x30] sm:$0xff]
      %v880 = vld [vmem:[#allocation2 + $0x38] sm:$0xff]
      %v881 = vld [vmem:[#allocation2 + $0x40] sm:$0xff]
      %v882 = vld [vmem:[#allocation2 + $0x48] sm:$0xff]
      %v883 = vld [vmem:[#allocation2 + $0x50] sm:$0xff]
      %v884 = vld [vmem:[#allocation2 + $0x58] sm:$0xff]
      %v885 = vld [vmem:[#allocation2 + $0x60] sm:$0xff]
      %v886 = vld [vmem:[#allocation2 + $0x68] sm:$0xff]
      %v887 = vld [vmem:[#allocation2 + $0x70] sm:$0xff]
      %v888 = vld [vmem:[#allocation2 + $0x78] sm:$0xff]
      %v889 = vld [vmem:[#allocation2 + $0x80] sm:$0xff]
      %v890 = vld [vmem:[#allocation2 + $0x88] sm:$0xff]
      %v891 = vld [vmem:[#allocation2 + $0x90] sm:$0xff]
      %v892 = vld [vmem:[#allocation2 + $0x98] sm:$0xff]
      %v893 = vld [vmem:[#allocation2 + $0xa0] sm:$0xff]
      %v894 = vld [vmem:[#allocation2 + $0xa8] sm:$0xff]
      %v895 = vld [vmem:[#allocation2 + $0xb0] sm:$0xff]
      %v896 = vld [vmem:[#allocation2 + $0xb8] sm:$0xff]
      %v897 = vld [vmem:[#allocation2 + $0xc0] sm:$0xff]
      %v898 = vld [vmem:[#allocation2 + $0xc8] sm:$0xff]
      %v899 = vld [vmem:[#allocation2 + $0xd0] sm:$0xff]
      %v900 = vld [vmem:[#allocation2 + $0xd8] sm:$0xff]
      %v901 = vld [vmem:[#allocation2 + $0xe0] sm:$0xff]
      %v902 = vld [vmem:[#allocation2 + $0xe8] sm:$0xff]
      %v903 = vld [vmem:[#allocation2 + $0xf0] sm:$0xff]
      %v904 = vld [vmem:[#allocation2 + $0xf8] sm:$0xff]
      %v905 = vld [vmem:[#allocation2 + $0x100] sm:$0xff]
      %v906 = vld [vmem:[#allocation2 + $0x108] sm:$0xff]
      %v907 = vld [vmem:[#allocation2 + $0x110] sm:$0xff]
      %v908 = vld [vmem:[#allocation2 + $0x118] sm:$0xff]
      %v909 = vpack.c.bf16 %v873, %v873
      %v910 = vpack.c.bf16 %v874, %v874
      %v911 = vpack.c.bf16 %v875, %v875
      %v912 = vpack.c.bf16 %v876, %v876
      %v913 = vpack.c.bf16 %v877, %v877
      %v914 = vpack.c.bf16 %v878, %v878
      %v915 = vpack.c.bf16 %v879, %v879
      %v916 = vpack.c.bf16 %v880, %v880
      %v917 = vpack.c.bf16 %v881, %v881
      %v918 = vpack.c.bf16 %v882, %v882
      %v919 = vpack.c.bf16 %v883, %v883
      %v920 = vpack.c.bf16 %v884, %v884
      %v921 = vpack.c.bf16 %v885, %v885
      %v922 = vpack.c.bf16 %v886, %v886
      %v923 = vpack.c.bf16 %v887, %v887
      %v924 = vpack.c.bf16 %v888, %v888
      %v925 = vpack.c.bf16 %v889, %v889
      %v926 = vpack.c.bf16 %v890, %v890
      %v927 = vpack.c.bf16 %v891, %v891
      %v928 = vpack.c.bf16 %v892, %v892
      %v929 = vpack.c.bf16 %v893, %v893
      %v930 = vpack.c.bf16 %v894, %v894
      %v931 = vpack.c.bf16 %v895, %v895
      %v932 = vpack.c.bf16 %v896, %v896
      %v933 = vpack.c.bf16 %v897, %v897
      %v934 = vpack.c.bf16 %v898, %v898
      %v935 = vpack.c.bf16 %v899, %v899
      %v936 = vpack.c.bf16 %v900, %v900
      %v937 = vpack.c.bf16 %v901, %v901
      %v938 = vpack.c.bf16 %v902, %v902
      %v939 = vpack.c.bf16 %v903, %v903
      %v940 = vpack.c.bf16 %v904, %v904
      %v941 = vpack.c.bf16 %v905, %v905
      %v942 = vpack.c.bf16 %v906, %v906
      %v943 = vpack.c.bf16 %v907, %v907
      %v944 = vpack.c.bf16 %v908, %v908
      %vm945 = vcmask 257024
      %946 = vst.msk [vmem:[#allocation3] sm:$0xf] %vm945, %v909
      %947 = vst.msk [vmem:[#allocation3 + $0xc] sm:$0xf] %vm945, %v910
      %948 = vst.msk [vmem:[#allocation3 + $0x18] sm:$0xf] %vm945, %v911
      %949 = vst.msk [vmem:[#allocation3 + $0x24] sm:$0xf] %vm945, %v912
      %950 = vst.msk [vmem:[#allocation3 + $0x30] sm:$0xf] %vm945, %v913
      %951 = vst.msk [vmem:[#allocation3 + $0x3c] sm:$0xf] %vm945, %v914
      %952 = vst.msk [vmem:[#allocation3 + $0x48] sm:$0xf] %vm945, %v915
      %953 = vst.msk [vmem:[#allocation3 + $0x54] sm:$0xf] %vm945, %v916
      %954 = vst.msk [vmem:[#allocation3 + $0x60] sm:$0xf] %vm945, %v917
      %955 = vst.msk [vmem:[#allocation3 + $0x6c] sm:$0xf] %vm945, %v918
      %956 = vst.msk [vmem:[#allocation3 + $0x78] sm:$0xf] %vm945, %v919
      %957 = vst.msk [vmem:[#allocation3 + $0x84] sm:$0xf] %vm945, %v920
      %958 = vst.msk [vmem:[#allocation3 + $0x90] sm:$0xf] %vm945, %v921
      %959 = vst.msk [vmem:[#allocation3 + $0x9c] sm:$0xf] %vm945, %v922
      %960 = vst.msk [vmem:[#allocation3 + $0xa8] sm:$0xf] %vm945, %v923
      %961 = vst.msk [vmem:[#allocation3 + $0xb4] sm:$0xf] %vm945, %v924
      %962 = vst.msk [vmem:[#allocation3 + $0xc0] sm:$0xf] %vm945, %v925
      %963 = vst.msk [vmem:[#allocation3 + $0xcc] sm:$0xf] %vm945, %v926
      %964 = vst.msk [vmem:[#allocation3 + $0xd8] sm:$0xf] %vm945, %v927
      %965 = vst.msk [vmem:[#allocation3 + $0xe4] sm:$0xf] %vm945, %v928
      %966 = vst.msk [vmem:[#allocation3 + $0xf0] sm:$0xf] %vm945, %v929
      %967 = vst.msk [vmem:[#allocation3 + $0xfc] sm:$0xf] %vm945, %v930
      %968 = vst.msk [vmem:[#allocation3 + $0x108] sm:$0xf] %vm945, %v931
      %969 = vst.msk [vmem:[#allocation3 + $0x114] sm:$0xf] %vm945, %v932
      %970 = vst.msk [vmem:[#allocation3 + $0x120] sm:$0xf] %vm945, %v933
      %971 = vst.msk [vmem:[#allocation3 + $0x12c] sm:$0xf] %vm945, %v934
      %972 = vst.msk [vmem:[#allocation3 + $0x138] sm:$0xf] %vm945, %v935
      %973 = vst.msk [vmem:[#allocation3 + $0x144] sm:$0xf] %vm945, %v936
      %974 = vst.msk [vmem:[#allocation3 + $0x150] sm:$0xf] %vm945, %v937
      %975 = vst.msk [vmem:[#allocation3 + $0x15c] sm:$0xf] %vm945, %v938
      %976 = vst.msk [vmem:[#allocation3 + $0x168] sm:$0xf] %vm945, %v939
      %977 = vst.msk [vmem:[#allocation3 + $0x174] sm:$0xf] %vm945, %v940
      %978 = vst.msk [vmem:[#allocation3 + $0x180] sm:$0xf] %vm945, %v941
      %979 = vst.msk [vmem:[#allocation3 + $0x18c] sm:$0xf] %vm945, %v942
      %980 = vst.msk [vmem:[#allocation3 + $0x198] sm:$0xf] %vm945, %v943
      %981 = vst.msk [vmem:[#allocation3 + $0x1a4] sm:$0xf] %vm945, %v944
      %v982 = vld [vmem:[#allocation2 + $0x1] sm:$0xff]
      %v983 = vld [vmem:[#allocation2 + $0x9] sm:$0xff]
      %v984 = vld [vmem:[#allocation2 + $0x11] sm:$0xff]
      %v985 = vld [vmem:[#allocation2 + $0x19] sm:$0xff]
      %v986 = vld [vmem:[#allocation2 + $0x21] sm:$0xff]
      %v987 = vld [vmem:[#allocation2 + $0x29] sm:$0xff]
      %v988 = vld [vmem:[#allocation2 + $0x31] sm:$0xff]
      %v989 = vld [vmem:[#allocation2 + $0x39] sm:$0xff]
      %v990 = vld [vmem:[#allocation2 + $0x41] sm:$0xff]
      %v991 = vld [vmem:[#allocation2 + $0x49] sm:$0xff]
      %v992 = vld [vmem:[#allocation2 + $0x51] sm:$0xff]
      %v993 = vld [vmem:[#allocation2 + $0x59] sm:$0xff]
      %v994 = vld [vmem:[#allocation2 + $0x61] sm:$0xff]
      %v995 = vld [vmem:[#allocation2 + $0x69] sm:$0xff]
      %v996 = vld [vmem:[#allocation2 + $0x71] sm:$0xff]
      %v997 = vld [vmem:[#allocation2 + $0x79] sm:$0xff]
      %v998 = vld [vmem:[#allocation2 + $0x81] sm:$0xff]
      %v999 = vld [vmem:[#allocation2 + $0x89] sm:$0xff]
      %v1000 = vld [vmem:[#allocation2 + $0x91] sm:$0xff]
      %v1001 = vld [vmem:[#allocation2 + $0x99] sm:$0xff]
      %v1002 = vld [vmem:[#allocation2 + $0xa1] sm:$0xff]
      %v1003 = vld [vmem:[#allocation2 + $0xa9] sm:$0xff]
      %v1004 = vld [vmem:[#allocation2 + $0xb1] sm:$0xff]
      %v1005 = vld [vmem:[#allocation2 + $0xb9] sm:$0xff]
      %v1006 = vld [vmem:[#allocation2 + $0xc1] sm:$0xff]
      %v1007 = vld [vmem:[#allocation2 + $0xc9] sm:$0xff]
      %v1008 = vld [vmem:[#allocation2 + $0xd1] sm:$0xff]
      %v1009 = vld [vmem:[#allocation2 + $0xd9] sm:$0xff]
      %v1010 = vld [vmem:[#allocation2 + $0xe1] sm:$0xff]
      %v1011 = vld [vmem:[#allocation2 + $0xe9] sm:$0xff]
      %v1012 = vld [vmem:[#allocation2 + $0xf1] sm:$0xff]
      %v1013 = vld [vmem:[#allocation2 + $0xf9] sm:$0xff]
      %v1014 = vld [vmem:[#allocation2 + $0x101] sm:$0xff]
      %v1015 = vld [vmem:[#allocation2 + $0x109] sm:$0xff]
      %v1016 = vld [vmem:[#allocation2 + $0x111] sm:$0xff]
      %v1017 = vld [vmem:[#allocation2 + $0x119] sm:$0xff]
      %v1018 = vpack.c.bf16 %v982, %v982
      %v1019 = vpack.c.bf16 %v983, %v983
      %v1020 = vpack.c.bf16 %v984, %v984
      %v1021 = vpack.c.bf16 %v985, %v985
      %v1022 = vpack.c.bf16 %v986, %v986
      %v1023 = vpack.c.bf16 %v987, %v987
      %v1024 = vpack.c.bf16 %v988, %v988
      %v1025 = vpack.c.bf16 %v989, %v989
      %v1026 = vpack.c.bf16 %v990, %v990
      %v1027 = vpack.c.bf16 %v991, %v991
      %v1028 = vpack.c.bf16 %v992, %v992
      %v1029 = vpack.c.bf16 %v993, %v993
      %v1030 = vpack.c.bf16 %v994, %v994
      %v1031 = vpack.c.bf16 %v995, %v995
      %v1032 = vpack.c.bf16 %v996, %v996
      %v1033 = vpack.c.bf16 %v997, %v997
      %v1034 = vpack.c.bf16 %v998, %v998
      %v1035 = vpack.c.bf16 %v999, %v999
      %v1036 = vpack.c.bf16 %v1000, %v1000
      %v1037 = vpack.c.bf16 %v1001, %v1001
      %v1038 = vpack.c.bf16 %v1002, %v1002
      %v1039 = vpack.c.bf16 %v1003, %v1003
      %v1040 = vpack.c.bf16 %v1004, %v1004
      %v1041 = vpack.c.bf16 %v1005, %v1005
      %v1042 = vpack.c.bf16 %v1006, %v1006
      %v1043 = vpack.c.bf16 %v1007, %v1007
      %v1044 = vpack.c.bf16 %v1008, %v1008
      %v1045 = vpack.c.bf16 %v1009, %v1009
      %v1046 = vpack.c.bf16 %v1010, %v1010
      %v1047 = vpack.c.bf16 %v1011, %v1011
      %v1048 = vpack.c.bf16 %v1012, %v1012
      %v1049 = vpack.c.bf16 %v1013, %v1013
      %v1050 = vpack.c.bf16 %v1014, %v1014
      %v1051 = vpack.c.bf16 %v1015, %v1015
      %v1052 = vpack.c.bf16 %v1016, %v1016
      %v1053 = vpack.c.bf16 %v1017, %v1017
      %1090 = vrot.lane.b32.xlu0 %v1018, 32
      %v1091 = vpop.permute.xlu0 %1090
      %1092 = vrot.lane.b32.xlu0 %v1019, 32
      %v1093 = vpop.permute.xlu0 %1092
      %1094 = vrot.lane.b32.xlu0 %v1020, 32
      %v1095 = vpop.permute.xlu0 %1094
      %1096 = vrot.lane.b32.xlu0 %v1021, 32
      %v1097 = vpop.permute.xlu0 %1096
      %1098 = vrot.lane.b32.xlu0 %v1022, 32
      %v1099 = vpop.permute.xlu0 %1098
      %1100 = vrot.lane.b32.xlu0 %v1023, 32
      %v1101 = vpop.permute.xlu0 %1100
      %1102 = vrot.lane.b32.xlu0 %v1024, 32
      %v1103 = vpop.permute.xlu0 %1102
      %1104 = vrot.lane.b32.xlu0 %v1025, 32
      %v1105 = vpop.permute.xlu0 %1104
      %1106 = vrot.lane.b32.xlu0 %v1026, 32
      %v1107 = vpop.permute.xlu0 %1106
      %1108 = vrot.lane.b32.xlu0 %v1027, 32
      %v1109 = vpop.permute.xlu0 %1108
      %1110 = vrot.lane.b32.xlu0 %v1028, 32
      %v1111 = vpop.permute.xlu0 %1110
      %1112 = vrot.lane.b32.xlu0 %v1029, 32
      %v1113 = vpop.permute.xlu0 %1112
      %1114 = vrot.lane.b32.xlu0 %v1030, 32
      %v1115 = vpop.permute.xlu0 %1114
      %1116 = vrot.lane.b32.xlu0 %v1031, 32
      %v1117 = vpop.permute.xlu0 %1116
      %1118 = vrot.lane.b32.xlu0 %v1032, 32
      %v1119 = vpop.permute.xlu0 %1118
      %1120 = vrot.lane.b32.xlu0 %v1033, 32
      %v1121 = vpop.permute.xlu0 %1120
      %1122 = vrot.lane.b32.xlu0 %v1034, 32
      %v1123 = vpop.permute.xlu0 %1122
      %1124 = vrot.lane.b32.xlu0 %v1035, 32
      %v1125 = vpop.permute.xlu0 %1124
      %1126 = vrot.lane.b32.xlu0 %v1036, 32
      %v1127 = vpop.permute.xlu0 %1126
      %1128 = vrot.lane.b32.xlu0 %v1037, 32
      %v1129 = vpop.permute.xlu0 %1128
      %1130 = vrot.lane.b32.xlu0 %v1038, 32
      %v1131 = vpop.permute.xlu0 %1130
      %1132 = vrot.lane.b32.xlu0 %v1039, 32
      %v1133 = vpop.permute.xlu0 %1132
      %1134 = vrot.lane.b32.xlu0 %v1040, 32
      %v1135 = vpop.permute.xlu0 %1134
      %1136 = vrot.lane.b32.xlu0 %v1041, 32
      %v1137 = vpop.permute.xlu0 %1136
      %1138 = vrot.lane.b32.xlu0 %v1042, 32
      %v1139 = vpop.permute.xlu0 %1138
      %1140 = vrot.lane.b32.xlu0 %v1043, 32
      %v1141 = vpop.permute.xlu0 %1140
      %1142 = vrot.lane.b32.xlu0 %v1044, 32
      %v1143 = vpop.permute.xlu0 %1142
      %1144 = vrot.lane.b32.xlu0 %v1045, 32
      %v1145 = vpop.permute.xlu0 %1144
      %1146 = vrot.lane.b32.xlu0 %v1046, 32
      %v1147 = vpop.permute.xlu0 %1146
      %1148 = vrot.lane.b32.xlu0 %v1047, 32
      %v1149 = vpop.permute.xlu0 %1148
      %1150 = vrot.lane.b32.xlu0 %v1048, 32
      %v1151 = vpop.permute.xlu0 %1150
      %1152 = vrot.lane.b32.xlu0 %v1049, 32
      %v1153 = vpop.permute.xlu0 %1152
      %1154 = vrot.lane.b32.xlu0 %v1050, 32
      %v1155 = vpop.permute.xlu0 %1154
      %1156 = vrot.lane.b32.xlu0 %v1051, 32
      %v1157 = vpop.permute.xlu0 %1156
      %1158 = vrot.lane.b32.xlu0 %v1052, 32
      %v1159 = vpop.permute.xlu0 %1158
      %1160 = vrot.lane.b32.xlu0 %v1053, 32
      %v1161 = vpop.permute.xlu0 %1160
      %vm1198 = vcmask 519424
      %1199 = vst.msk [vmem:[#allocation3] sm:$0xf] %vm1198, %v1091
      %1200 = vst.msk [vmem:[#allocation3 + $0xc] sm:$0xf] %vm1198, %v1093
      %1201 = vst.msk [vmem:[#allocation3 + $0x18] sm:$0xf] %vm1198, %v1095
      %1202 = vst.msk [vmem:[#allocation3 + $0x24] sm:$0xf] %vm1198, %v1097
      %1203 = vst.msk [vmem:[#allocation3 + $0x30] sm:$0xf] %vm1198, %v1099
      %1204 = vst.msk [vmem:[#allocation3 + $0x3c] sm:$0xf] %vm1198, %v1101
      %1205 = vst.msk [vmem:[#allocation3 + $0x48] sm:$0xf] %vm1198, %v1103
      %1206 = vst.msk [vmem:[#allocation3 + $0x54] sm:$0xf] %vm1198, %v1105
      %1207 = vst.msk [vmem:[#allocation3 + $0x60] sm:$0xf] %vm1198, %v1107
      %1208 = vst.msk [vmem:[#allocation3 + $0x6c] sm:$0xf] %vm1198, %v1109
      %1209 = vst.msk [vmem:[#allocation3 + $0x78] sm:$0xf] %vm1198, %v1111
      %1210 = vst.msk [vmem:[#allocation3 + $0x84] sm:$0xf] %vm1198, %v1113
      %1211 = vst.msk [vmem:[#allocation3 + $0x90] sm:$0xf] %vm1198, %v1115
      %1212 = vst.msk [vmem:[#allocation3 + $0x9c] sm:$0xf] %vm1198, %v1117
      %1213 = vst.msk [vmem:[#allocation3 + $0xa8] sm:$0xf] %vm1198, %v1119
      %1214 = vst.msk [vmem:[#allocation3 + $0xb4] sm:$0xf] %vm1198, %v1121
      %1215 = vst.msk [vmem:[#allocation3 + $0xc0] sm:$0xf] %vm1198, %v1123
      %1216 = vst.msk [vmem:[#allocation3 + $0xcc] sm:$0xf] %vm1198, %v1125
      %1217 = vst.msk [vmem:[#allocation3 + $0xd8] sm:$0xf] %vm1198, %v1127
      %1218 = vst.msk [vmem:[#allocation3 + $0xe4] sm:$0xf] %vm1198, %v1129
      %1219 = vst.msk [vmem:[#allocation3 + $0xf0] sm:$0xf] %vm1198, %v1131
      %1220 = vst.msk [vmem:[#allocation3 + $0xfc] sm:$0xf] %vm1198, %v1133
      %1221 = vst.msk [vmem:[#allocation3 + $0x108] sm:$0xf] %vm1198, %v1135
      %1222 = vst.msk [vmem:[#allocation3 + $0x114] sm:$0xf] %vm1198, %v1137
      %1223 = vst.msk [vmem:[#allocation3 + $0x120] sm:$0xf] %vm1198, %v1139
      %1224 = vst.msk [vmem:[#allocation3 + $0x12c] sm:$0xf] %vm1198, %v1141
      %1225 = vst.msk [vmem:[#allocation3 + $0x138] sm:$0xf] %vm1198, %v1143
      %1226 = vst.msk [vmem:[#allocation3 + $0x144] sm:$0xf] %vm1198, %v1145
      %1227 = vst.msk [vmem:[#allocation3 + $0x150] sm:$0xf] %vm1198, %v1147
      %1228 = vst.msk [vmem:[#allocation3 + $0x15c] sm:$0xf] %vm1198, %v1149
      %1229 = vst.msk [vmem:[#allocation3 + $0x168] sm:$0xf] %vm1198, %v1151
      %1230 = vst.msk [vmem:[#allocation3 + $0x174] sm:$0xf] %vm1198, %v1153
      %1231 = vst.msk [vmem:[#allocation3 + $0x180] sm:$0xf] %vm1198, %v1155
      %1232 = vst.msk [vmem:[#allocation3 + $0x18c] sm:$0xf] %vm1198, %v1157
      %1233 = vst.msk [vmem:[#allocation3 + $0x198] sm:$0xf] %vm1198, %v1159
      %1234 = vst.msk [vmem:[#allocation3 + $0x1a4] sm:$0xf] %vm1198, %v1161
      %v1235 = vld [vmem:[#allocation2 + $0x2] sm:$0xff]
      %v1236 = vld [vmem:[#allocation2 + $0xa] sm:$0xff]
      %v1237 = vld [vmem:[#allocation2 + $0x12] sm:$0xff]
      %v1238 = vld [vmem:[#allocation2 + $0x1a] sm:$0xff]
      %v1239 = vld [vmem:[#allocation2 + $0x22] sm:$0xff]
      %v1240 = vld [vmem:[#allocation2 + $0x2a] sm:$0xff]
      %v1241 = vld [vmem:[#allocation2 + $0x32] sm:$0xff]
      %v1242 = vld [vmem:[#allocation2 + $0x3a] sm:$0xff]
      %v1243 = vld [vmem:[#allocation2 + $0x42] sm:$0xff]
      %v1244 = vld [vmem:[#allocation2 + $0x4a] sm:$0xff]
      %v1245 = vld [vmem:[#allocation2 + $0x52] sm:$0xff]
      %v1246 = vld [vmem:[#allocation2 + $0x5a] sm:$0xff]
      %v1247 = vld [vmem:[#allocation2 + $0x62] sm:$0xff]
      %v1248 = vld [vmem:[#allocation2 + $0x6a] sm:$0xff]
      %v1249 = vld [vmem:[#allocation2 + $0x72] sm:$0xff]
      %v1250 = vld [vmem:[#allocation2 + $0x7a] sm:$0xff]
      %v1251 = vld [vmem:[#allocation2 + $0x82] sm:$0xff]
      %v1252 = vld [vmem:[#allocation2 + $0x8a] sm:$0xff]
      %v1253 = vld [vmem:[#allocation2 + $0x92] sm:$0xff]
      %v1254 = vld [vmem:[#allocation2 + $0x9a] sm:$0xff]
      %v1255 = vld [vmem:[#allocation2 + $0xa2] sm:$0xff]
      %v1256 = vld [vmem:[#allocation2 + $0xaa] sm:$0xff]
      %v1257 = vld [vmem:[#allocation2 + $0xb2] sm:$0xff]
      %v1258 = vld [vmem:[#allocation2 + $0xba] sm:$0xff]
      %v1259 = vld [vmem:[#allocation2 + $0xc2] sm:$0xff]
      %v1260 = vld [vmem:[#allocation2 + $0xca] sm:$0xff]
      %v1261 = vld [vmem:[#allocation2 + $0xd2] sm:$0xff]
      %v1262 = vld [vmem:[#allocation2 + $0xda] sm:$0xff]
      %v1263 = vld [vmem:[#allocation2 + $0xe2] sm:$0xff]
      %v1264 = vld [vmem:[#allocation2 + $0xea] sm:$0xff]
      %v1265 = vld [vmem:[#allocation2 + $0xf2] sm:$0xff]
      %v1266 = vld [vmem:[#allocation2 + $0xfa] sm:$0xff]
      %v1267 = vld [vmem:[#allocation2 + $0x102] sm:$0xff]
      %v1268 = vld [vmem:[#allocation2 + $0x10a] sm:$0xff]
      %v1269 = vld [vmem:[#allocation2 + $0x112] sm:$0xff]
      %v1270 = vld [vmem:[#allocation2 + $0x11a] sm:$0xff]
      %v1271 = vpack.c.bf16 %v1235, %v1235
      %v1272 = vpack.c.bf16 %v1236, %v1236
      %v1273 = vpack.c.bf16 %v1237, %v1237
      %v1274 = vpack.c.bf16 %v1238, %v1238
      %v1275 = vpack.c.bf16 %v1239, %v1239
      %v1276 = vpack.c.bf16 %v1240, %v1240
      %v1277 = vpack.c.bf16 %v1241, %v1241
      %v1278 = vpack.c.bf16 %v1242, %v1242
      %v1279 = vpack.c.bf16 %v1243, %v1243
      %v1280 = vpack.c.bf16 %v1244, %v1244
      %v1281 = vpack.c.bf16 %v1245, %v1245
      %v1282 = vpack.c.bf16 %v1246, %v1246
      %v1283 = vpack.c.bf16 %v1247, %v1247
      %v1284 = vpack.c.bf16 %v1248, %v1248
      %v1285 = vpack.c.bf16 %v1249, %v1249
      %v1286 = vpack.c.bf16 %v1250, %v1250
      %v1287 = vpack.c.bf16 %v1251, %v1251
      %v1288 = vpack.c.bf16 %v1252, %v1252
      %v1289 = vpack.c.bf16 %v1253, %v1253
      %v1290 = vpack.c.bf16 %v1254, %v1254
      %v1291 = vpack.c.bf16 %v1255, %v1255
      %v1292 = vpack.c.bf16 %v1256, %v1256
      %v1293 = vpack.c.bf16 %v1257, %v1257
      %v1294 = vpack.c.bf16 %v1258, %v1258
      %v1295 = vpack.c.bf16 %v1259, %v1259
      %v1296 = vpack.c.bf16 %v1260, %v1260
      %v1297 = vpack.c.bf16 %v1261, %v1261
      %v1298 = vpack.c.bf16 %v1262, %v1262
      %v1299 = vpack.c.bf16 %v1263, %v1263
      %v1300 = vpack.c.bf16 %v1264, %v1264
      %v1301 = vpack.c.bf16 %v1265, %v1265
      %v1302 = vpack.c.bf16 %v1266, %v1266
      %v1303 = vpack.c.bf16 %v1267, %v1267
      %v1304 = vpack.c.bf16 %v1268, %v1268
      %v1305 = vpack.c.bf16 %v1269, %v1269
      %v1306 = vpack.c.bf16 %v1270, %v1270
      %1343 = vrot.lane.b32.xlu0 %v1271, 64
      %v1344 = vpop.permute.xlu0 %1343
      %1345 = vrot.lane.b32.xlu0 %v1272, 64
      %v1346 = vpop.permute.xlu0 %1345
      %1347 = vrot.lane.b32.xlu0 %v1273, 64
      %v1348 = vpop.permute.xlu0 %1347
      %1349 = vrot.lane.b32.xlu0 %v1274, 64
      %v1350 = vpop.permute.xlu0 %1349
      %1351 = vrot.lane.b32.xlu0 %v1275, 64
      %v1352 = vpop.permute.xlu0 %1351
      %1353 = vrot.lane.b32.xlu0 %v1276, 64
      %v1354 = vpop.permute.xlu0 %1353
      %1355 = vrot.lane.b32.xlu0 %v1277, 64
      %v1356 = vpop.permute.xlu0 %1355
      %1357 = vrot.lane.b32.xlu0 %v1278, 64
      %v1358 = vpop.permute.xlu0 %1357
      %1359 = vrot.lane.b32.xlu0 %v1279, 64
      %v1360 = vpop.permute.xlu0 %1359
      %1361 = vrot.lane.b32.xlu0 %v1280, 64
      %v1362 = vpop.permute.xlu0 %1361
      %1363 = vrot.lane.b32.xlu0 %v1281, 64
      %v1364 = vpop.permute.xlu0 %1363
      %1365 = vrot.lane.b32.xlu0 %v1282, 64
      %v1366 = vpop.permute.xlu0 %1365
      %1367 = vrot.lane.b32.xlu0 %v1283, 64
      %v1368 = vpop.permute.xlu0 %1367
      %1369 = vrot.lane.b32.xlu0 %v1284, 64
      %v1370 = vpop.permute.xlu0 %1369
      %1371 = vrot.lane.b32.xlu0 %v1285, 64
      %v1372 = vpop.permute.xlu0 %1371
      %1373 = vrot.lane.b32.xlu0 %v1286, 64
      %v1374 = vpop.permute.xlu0 %1373
      %1375 = vrot.lane.b32.xlu0 %v1287, 64
      %v1376 = vpop.permute.xlu0 %1375
      %1377 = vrot.lane.b32.xlu0 %v1288, 64
      %v1378 = vpop.permute.xlu0 %1377
      %1379 = vrot.lane.b32.xlu0 %v1289, 64
      %v1380 = vpop.permute.xlu0 %1379
      %1381 = vrot.lane.b32.xlu0 %v1290, 64
      %v1382 = vpop.permute.xlu0 %1381
      %1383 = vrot.lane.b32.xlu0 %v1291, 64
      %v1384 = vpop.permute.xlu0 %1383
      %1385 = vrot.lane.b32.xlu0 %v1292, 64
      %v1386 = vpop.permute.xlu0 %1385
      %1387 = vrot.lane.b32.xlu0 %v1293, 64
      %v1388 = vpop.permute.xlu0 %1387
      %1389 = vrot.lane.b32.xlu0 %v1294, 64
      %v1390 = vpop.permute.xlu0 %1389
      %1391 = vrot.lane.b32.xlu0 %v1295, 64
      %v1392 = vpop.permute.xlu0 %1391
      %1393 = vrot.lane.b32.xlu0 %v1296, 64
      %v1394 = vpop.permute.xlu0 %1393
      %1395 = vrot.lane.b32.xlu0 %v1297, 64
      %v1396 = vpop.permute.xlu0 %1395
      %1397 = vrot.lane.b32.xlu0 %v1298, 64
      %v1398 = vpop.permute.xlu0 %1397
      %1399 = vrot.lane.b32.xlu0 %v1299, 64
      %v1400 = vpop.permute.xlu0 %1399
      %1401 = vrot.lane.b32.xlu0 %v1300, 64
      %v1402 = vpop.permute.xlu0 %1401
      %1403 = vrot.lane.b32.xlu0 %v1301, 64
      %v1404 = vpop.permute.xlu0 %1403
      %1405 = vrot.lane.b32.xlu0 %v1302, 64
      %v1406 = vpop.permute.xlu0 %1405
      %1407 = vrot.lane.b32.xlu0 %v1303, 64
      %v1408 = vpop.permute.xlu0 %1407
      %1409 = vrot.lane.b32.xlu0 %v1304, 64
      %v1410 = vpop.permute.xlu0 %1409
      %1411 = vrot.lane.b32.xlu0 %v1305, 64
      %v1412 = vpop.permute.xlu0 %1411
      %1413 = vrot.lane.b32.xlu0 %v1306, 64
      %v1414 = vpop.permute.xlu0 %1413
      %vm1451 = vcmask 781824
      %1452 = vst.msk [vmem:[#allocation3] sm:$0xf] %vm1451, %v1344
      %1453 = vst.msk [vmem:[#allocation3 + $0xc] sm:$0xf] %vm1451, %v1346
      %1454 = vst.msk [vmem:[#allocation3 + $0x18] sm:$0xf] %vm1451, %v1348
      %1455 = vst.msk [vmem:[#allocation3 + $0x24] sm:$0xf] %vm1451, %v1350
      %1456 = vst.msk [vmem:[#allocation3 + $0x30] sm:$0xf] %vm1451, %v1352
      %1457 = vst.msk [vmem:[#allocation3 + $0x3c] sm:$0xf] %vm1451, %v1354
      %1458 = vst.msk [vmem:[#allocation3 + $0x48] sm:$0xf] %vm1451, %v1356
      %1459 = vst.msk [vmem:[#allocation3 + $0x54] sm:$0xf] %vm1451, %v1358
      %1460 = vst.msk [vmem:[#allocation3 + $0x60] sm:$0xf] %vm1451, %v1360
      %1461 = vst.msk [vmem:[#allocation3 + $0x6c] sm:$0xf] %vm1451, %v1362
      %1462 = vst.msk [vmem:[#allocation3 + $0x78] sm:$0xf] %vm1451, %v1364
      %1463 = vst.msk [vmem:[#allocation3 + $0x84] sm:$0xf] %vm1451, %v1366
      %1464 = vst.msk [vmem:[#allocation3 + $0x90] sm:$0xf] %vm1451, %v1368
      %1465 = vst.msk [vmem:[#allocation3 + $0x9c] sm:$0xf] %vm1451, %v1370
      %1466 = vst.msk [vmem:[#allocation3 + $0xa8] sm:$0xf] %vm1451, %v1372
      %1467 = vst.msk [vmem:[#allocation3 + $0xb4] sm:$0xf] %vm1451, %v1374
      %1468 = vst.msk [vmem:[#allocation3 + $0xc0] sm:$0xf] %vm1451, %v1376
      %1469 = vst.msk [vmem:[#allocation3 + $0xcc] sm:$0xf] %vm1451, %v1378
      %1470 = vst.msk [vmem:[#allocation3 + $0xd8] sm:$0xf] %vm1451, %v1380
      %1471 = vst.msk [vmem:[#allocation3 + $0xe4] sm:$0xf] %vm1451, %v1382
      %1472 = vst.msk [vmem:[#allocation3 + $0xf0] sm:$0xf] %vm1451, %v1384
      %1473 = vst.msk [vmem:[#allocation3 + $0xfc] sm:$0xf] %vm1451, %v1386
      %1474 = vst.msk [vmem:[#allocation3 + $0x108] sm:$0xf] %vm1451, %v1388
      %1475 = vst.msk [vmem:[#allocation3 + $0x114] sm:$0xf] %vm1451, %v1390
      %1476 = vst.msk [vmem:[#allocation3 + $0x120] sm:$0xf] %vm1451, %v1392
      %1477 = vst.msk [vmem:[#allocation3 + $0x12c] sm:$0xf] %vm1451, %v1394
      %1478 = vst.msk [vmem:[#allocation3 + $0x138] sm:$0xf] %vm1451, %v1396
      %1479 = vst.msk [vmem:[#allocation3 + $0x144] sm:$0xf] %vm1451, %v1398
      %1480 = vst.msk [vmem:[#allocation3 + $0x150] sm:$0xf] %vm1451, %v1400
      %1481 = vst.msk [vmem:[#allocation3 + $0x15c] sm:$0xf] %vm1451, %v1402
      %1482 = vst.msk [vmem:[#allocation3 + $0x168] sm:$0xf] %vm1451, %v1404
      %1483 = vst.msk [vmem:[#allocation3 + $0x174] sm:$0xf] %vm1451, %v1406
      %1484 = vst.msk [vmem:[#allocation3 + $0x180] sm:$0xf] %vm1451, %v1408
      %1485 = vst.msk [vmem:[#allocation3 + $0x18c] sm:$0xf] %vm1451, %v1410
      %1486 = vst.msk [vmem:[#allocation3 + $0x198] sm:$0xf] %vm1451, %v1412
      %1487 = vst.msk [vmem:[#allocation3 + $0x1a4] sm:$0xf] %vm1451, %v1414
      %v1488 = vld [vmem:[#allocation2 + $0x12] sm:$0xff]
      %v1489 = vld [vmem:[#allocation2 + $0x1a] sm:$0xff]
      %v1490 = vld [vmem:[#allocation2 + $0x22] sm:$0xff]
      %v1491 = vld [vmem:[#allocation2 + $0x2a] sm:$0xff]
      %v1492 = vld [vmem:[#allocation2 + $0x32] sm:$0xff]
      %v1493 = vld [vmem:[#allocation2 + $0x3a] sm:$0xff]
      %v1494 = vld [vmem:[#allocation2 + $0x42] sm:$0xff]
      %v1495 = vld [vmem:[#allocation2 + $0x4a] sm:$0xff]
      %v1496 = vld [vmem:[#allocation2 + $0x52] sm:$0xff]
      %v1497 = vld [vmem:[#allocation2 + $0x5a] sm:$0xff]
      %v1498 = vld [vmem:[#allocation2 + $0x62] sm:$0xff]
      %v1499 = vld [vmem:[#allocation2 + $0x6a] sm:$0xff]
      %v1500 = vld [vmem:[#allocation2 + $0x72] sm:$0xff]
      %v1501 = vld [vmem:[#allocation2 + $0x7a] sm:$0xff]
      %v1502 = vld [vmem:[#allocation2 + $0x82] sm:$0xff]
      %v1503 = vld [vmem:[#allocation2 + $0x8a] sm:$0xff]
      %v1504 = vld [vmem:[#allocation2 + $0x92] sm:$0xff]
      %v1505 = vld [vmem:[#allocation2 + $0x9a] sm:$0xff]
      %v1506 = vld [vmem:[#allocation2 + $0xa2] sm:$0xff]
      %v1507 = vld [vmem:[#allocation2 + $0xaa] sm:$0xff]
      %v1508 = vld [vmem:[#allocation2 + $0xb2] sm:$0xff]
      %v1509 = vld [vmem:[#allocation2 + $0xba] sm:$0xff]
      %v1510 = vld [vmem:[#allocation2 + $0xc2] sm:$0xff]
      %v1511 = vld [vmem:[#allocation2 + $0xca] sm:$0xff]
      %v1512 = vld [vmem:[#allocation2 + $0xd2] sm:$0xff]
      %v1513 = vld [vmem:[#allocation2 + $0xda] sm:$0xff]
      %v1514 = vld [vmem:[#allocation2 + $0xe2] sm:$0xff]
      %v1515 = vld [vmem:[#allocation2 + $0xea] sm:$0xff]
      %v1516 = vld [vmem:[#allocation2 + $0xf2] sm:$0xff]
      %v1517 = vld [vmem:[#allocation2 + $0xfa] sm:$0xff]
      %v1518 = vld [vmem:[#allocation2 + $0x102] sm:$0xff]
      %v1519 = vld [vmem:[#allocation2 + $0x10a] sm:$0xff]
      %v1520 = vld [vmem:[#allocation2 + $0x112] sm:$0xff]
      %v1521 = vld [vmem:[#allocation2 + $0x11a] sm:$0xff]
      %v1522 = vld [vmem:[#allocation2 + $0x122] sm:$0xff]
      %v1523 = vld [vmem:[#allocation2 + $0x12a] sm:$0xff]
      %v1524 = vpack.c.bf16 %v1488, %v1488
      %v1525 = vpack.c.bf16 %v1489, %v1489
      %v1526 = vpack.c.bf16 %v1490, %v1490
      %v1527 = vpack.c.bf16 %v1491, %v1491
      %v1528 = vpack.c.bf16 %v1492, %v1492
      %v1529 = vpack.c.bf16 %v1493, %v1493
      %v1530 = vpack.c.bf16 %v1494, %v1494
      %v1531 = vpack.c.bf16 %v1495, %v1495
      %v1532 = vpack.c.bf16 %v1496, %v1496
      %v1533 = vpack.c.bf16 %v1497, %v1497
      %v1534 = vpack.c.bf16 %v1498, %v1498
      %v1535 = vpack.c.bf16 %v1499, %v1499
      %v1536 = vpack.c.bf16 %v1500, %v1500
      %v1537 = vpack.c.bf16 %v1501, %v1501
      %v1538 = vpack.c.bf16 %v1502, %v1502
      %v1539 = vpack.c.bf16 %v1503, %v1503
      %v1540 = vpack.c.bf16 %v1504, %v1504
      %v1541 = vpack.c.bf16 %v1505, %v1505
      %v1542 = vpack.c.bf16 %v1506, %v1506
      %v1543 = vpack.c.bf16 %v1507, %v1507
      %v1544 = vpack.c.bf16 %v1508, %v1508
      %v1545 = vpack.c.bf16 %v1509, %v1509
      %v1546 = vpack.c.bf16 %v1510, %v1510
      %v1547 = vpack.c.bf16 %v1511, %v1511
      %v1548 = vpack.c.bf16 %v1512, %v1512
      %v1549 = vpack.c.bf16 %v1513, %v1513
      %v1550 = vpack.c.bf16 %v1514, %v1514
      %v1551 = vpack.c.bf16 %v1515, %v1515
      %v1552 = vpack.c.bf16 %v1516, %v1516
      %v1553 = vpack.c.bf16 %v1517, %v1517
      %v1554 = vpack.c.bf16 %v1518, %v1518
      %v1555 = vpack.c.bf16 %v1519, %v1519
      %v1556 = vpack.c.bf16 %v1520, %v1520
      %v1557 = vpack.c.bf16 %v1521, %v1521
      %v1558 = vpack.c.bf16 %v1522, %v1522
      %v1559 = vpack.c.bf16 %v1523, %v1523
      %1596 = vrot.lane.b32.xlu0 %v1524, 96
      %v1597 = vpop.permute.xlu0 %1596
      %1598 = vrot.lane.b32.xlu0 %v1525, 96
      %v1599 = vpop.permute.xlu0 %1598
      %1600 = vrot.lane.b32.xlu0 %v1526, 96
      %v1601 = vpop.permute.xlu0 %1600
      %1602 = vrot.lane.b32.xlu0 %v1527, 96
      %v1603 = vpop.permute.xlu0 %1602
      %1604 = vrot.lane.b32.xlu0 %v1528, 96
      %v1605 = vpop.permute.xlu0 %1604
      %1606 = vrot.lane.b32.xlu0 %v1529, 96
      %v1607 = vpop.permute.xlu0 %1606
      %1608 = vrot.lane.b32.xlu0 %v1530, 96
      %v1609 = vpop.permute.xlu0 %1608
      %1610 = vrot.lane.b32.xlu0 %v1531, 96
      %v1611 = vpop.permute.xlu0 %1610
      %1612 = vrot.lane.b32.xlu0 %v1532, 96
      %v1613 = vpop.permute.xlu0 %1612
      %1614 = vrot.lane.b32.xlu0 %v1533, 96
      %v1615 = vpop.permute.xlu0 %1614
      %1616 = vrot.lane.b32.xlu0 %v1534, 96
      %v1617 = vpop.permute.xlu0 %1616
      %1618 = vrot.lane.b32.xlu0 %v1535, 96
      %v1619 = vpop.permute.xlu0 %1618
      %1620 = vrot.lane.b32.xlu0 %v1536, 96
      %v1621 = vpop.permute.xlu0 %1620
      %1622 = vrot.lane.b32.xlu0 %v1537, 96
      %v1623 = vpop.permute.xlu0 %1622
      %1624 = vrot.lane.b32.xlu0 %v1538, 96
      %v1625 = vpop.permute.xlu0 %1624
      %1626 = vrot.lane.b32.xlu0 %v1539, 96
      %v1627 = vpop.permute.xlu0 %1626
      %1628 = vrot.lane.b32.xlu0 %v1540, 96
      %v1629 = vpop.permute.xlu0 %1628
      %1630 = vrot.lane.b32.xlu0 %v1541, 96
      %v1631 = vpop.permute.xlu0 %1630
      %1632 = vrot.lane.b32.xlu0 %v1542, 96
      %v1633 = vpop.permute.xlu0 %1632
      %1634 = vrot.lane.b32.xlu0 %v1543, 96
      %v1635 = vpop.permute.xlu0 %1634
      %1636 = vrot.lane.b32.xlu0 %v1544, 96
      %v1637 = vpop.permute.xlu0 %1636
      %1638 = vrot.lane.b32.xlu0 %v1545, 96
      %v1639 = vpop.permute.xlu0 %1638
      %1640 = vrot.lane.b32.xlu0 %v1546, 96
      %v1641 = vpop.permute.xlu0 %1640
      %1642 = vrot.lane.b32.xlu0 %v1547, 96
      %v1643 = vpop.permute.xlu0 %1642
      %1644 = vrot.lane.b32.xlu0 %v1548, 96
      %v1645 = vpop.permute.xlu0 %1644
      %1646 = vrot.lane.b32.xlu0 %v1549, 96
      %v1647 = vpop.permute.xlu0 %1646
      %1648 = vrot.lane.b32.xlu0 %v1550, 96
      %v1649 = vpop.permute.xlu0 %1648
      %1650 = vrot.lane.b32.xlu0 %v1551, 96
      %v1651 = vpop.permute.xlu0 %1650
      %1652 = vrot.lane.b32.xlu0 %v1552, 96
      %v1653 = vpop.permute.xlu0 %1652
      %1654 = vrot.lane.b32.xlu0 %v1553, 96
      %v1655 = vpop.permute.xlu0 %1654
      %1656 = vrot.lane.b32.xlu0 %v1554, 96
      %v1657 = vpop.permute.xlu0 %1656
      %1658 = vrot.lane.b32.xlu0 %v1555, 96
      %v1659 = vpop.permute.xlu0 %1658
      %1660 = vrot.lane.b32.xlu0 %v1556, 96
      %v1661 = vpop.permute.xlu0 %1660
      %1662 = vrot.lane.b32.xlu0 %v1557, 96
      %v1663 = vpop.permute.xlu0 %1662
      %1664 = vrot.lane.b32.xlu0 %v1558, 96
      %v1665 = vpop.permute.xlu0 %1664
      %1666 = vrot.lane.b32.xlu0 %v1559, 96
      %v1667 = vpop.permute.xlu0 %1666
      %vm1704 = vcmask 1044224
      %1705 = vst.msk [vmem:[#allocation3] sm:$0xf] %vm1704, %v1597
      %1706 = vst.msk [vmem:[#allocation3 + $0xc] sm:$0xf] %vm1704, %v1599
      %1707 = vst.msk [vmem:[#allocation3 + $0x18] sm:$0xf] %vm1704, %v1601
      %1708 = vst.msk [vmem:[#allocation3 + $0x24] sm:$0xf] %vm1704, %v1603
      %1709 = vst.msk [vmem:[#allocation3 + $0x30] sm:$0xf] %vm1704, %v1605
      %1710 = vst.msk [vmem:[#allocation3 + $0x3c] sm:$0xf] %vm1704, %v1607
      %1711 = vst.msk [vmem:[#allocation3 + $0x48] sm:$0xf] %vm1704, %v1609
      %1712 = vst.msk [vmem:[#allocation3 + $0x54] sm:$0xf] %vm1704, %v1611
      %1713 = vst.msk [vmem:[#allocation3 + $0x60] sm:$0xf] %vm1704, %v1613
      %1714 = vst.msk [vmem:[#allocation3 + $0x6c] sm:$0xf] %vm1704, %v1615
      %1715 = vst.msk [vmem:[#allocation3 + $0x78] sm:$0xf] %vm1704, %v1617
      %1716 = vst.msk [vmem:[#allocation3 + $0x84] sm:$0xf] %vm1704, %v1619
      %1717 = vst.msk [vmem:[#allocation3 + $0x90] sm:$0xf] %vm1704, %v1621
      %1718 = vst.msk [vmem:[#allocation3 + $0x9c] sm:$0xf] %vm1704, %v1623
      %1719 = vst.msk [vmem:[#allocation3 + $0xa8] sm:$0xf] %vm1704, %v1625
      %1720 = vst.msk [vmem:[#allocation3 + $0xb4] sm:$0xf] %vm1704, %v1627
      %1721 = vst.msk [vmem:[#allocation3 + $0xc0] sm:$0xf] %vm1704, %v1629
      %1722 = vst.msk [vmem:[#allocation3 + $0xcc] sm:$0xf] %vm1704, %v1631
      %1723 = vst.msk [vmem:[#allocation3 + $0xd8] sm:$0xf] %vm1704, %v1633
      %1724 = vst.msk [vmem:[#allocation3 + $0xe4] sm:$0xf] %vm1704, %v1635
      %1725 = vst.msk [vmem:[#allocation3 + $0xf0] sm:$0xf] %vm1704, %v1637
      %1726 = vst.msk [vmem:[#allocation3 + $0xfc] sm:$0xf] %vm1704, %v1639
      %1727 = vst.msk [vmem:[#allocation3 + $0x108] sm:$0xf] %vm1704, %v1641
      %1728 = vst.msk [vmem:[#allocation3 + $0x114] sm:$0xf] %vm1704, %v1643
      %1729 = vst.msk [vmem:[#allocation3 + $0x120] sm:$0xf] %vm1704, %v1645
      %1730 = vst.msk [vmem:[#allocation3 + $0x12c] sm:$0xf] %vm1704, %v1647
      %1731 = vst.msk [vmem:[#allocation3 + $0x138] sm:$0xf] %vm1704, %v1649
      %1732 = vst.msk [vmem:[#allocation3 + $0x144] sm:$0xf] %vm1704, %v1651
      %1733 = vst.msk [vmem:[#allocation3 + $0x150] sm:$0xf] %vm1704, %v1653
      %1734 = vst.msk [vmem:[#allocation3 + $0x15c] sm:$0xf] %vm1704, %v1655
      %1735 = vst.msk [vmem:[#allocation3 + $0x168] sm:$0xf] %vm1704, %v1657
      %1736 = vst.msk [vmem:[#allocation3 + $0x174] sm:$0xf] %vm1704, %v1659
      %1737 = vst.msk [vmem:[#allocation3 + $0x180] sm:$0xf] %vm1704, %v1661
      %1738 = vst.msk [vmem:[#allocation3 + $0x18c] sm:$0xf] %vm1704, %v1663
      %1739 = vst.msk [vmem:[#allocation3 + $0x198] sm:$0xf] %vm1704, %v1665
      %1740 = vst.msk [vmem:[#allocation3 + $0x1a4] sm:$0xf] %vm1704, %v1667
      %v1741 = vld [vmem:[#allocation2 + $0x13] sm:$0xff]
      %v1742 = vld [vmem:[#allocation2 + $0x1b] sm:$0xff]
      %v1743 = vld [vmem:[#allocation2 + $0x23] sm:$0xff]
      %v1744 = vld [vmem:[#allocation2 + $0x2b] sm:$0xff]
      %v1745 = vld [vmem:[#allocation2 + $0x33] sm:$0xff]
      %v1746 = vld [vmem:[#allocation2 + $0x3b] sm:$0xff]
      %v1747 = vld [vmem:[#allocation2 + $0x43] sm:$0xff]
      %v1748 = vld [vmem:[#allocation2 + $0x4b] sm:$0xff]
      %v1749 = vld [vmem:[#allocation2 + $0x53] sm:$0xff]
      %v1750 = vld [vmem:[#allocation2 + $0x5b] sm:$0xff]
      %v1751 = vld [vmem:[#allocation2 + $0x63] sm:$0xff]
      %v1752 = vld [vmem:[#allocation2 + $0x6b] sm:$0xff]
      %v1753 = vld [vmem:[#allocation2 + $0x73] sm:$0xff]
      %v1754 = vld [vmem:[#allocation2 + $0x7b] sm:$0xff]
      %v1755 = vld [vmem:[#allocation2 + $0x83] sm:$0xff]
      %v1756 = vld [vmem:[#allocation2 + $0x8b] sm:$0xff]
      %v1757 = vld [vmem:[#allocation2 + $0x93] sm:$0xff]
      %v1758 = vld [vmem:[#allocation2 + $0x9b] sm:$0xff]
      %v1759 = vld [vmem:[#allocation2 + $0xa3] sm:$0xff]
      %v1760 = vld [vmem:[#allocation2 + $0xab] sm:$0xff]
      %v1761 = vld [vmem:[#allocation2 + $0xb3] sm:$0xff]
      %v1762 = vld [vmem:[#allocation2 + $0xbb] sm:$0xff]
      %v1763 = vld [vmem:[#allocation2 + $0xc3] sm:$0xff]
      %v1764 = vld [vmem:[#allocation2 + $0xcb] sm:$0xff]
      %v1765 = vld [vmem:[#allocation2 + $0xd3] sm:$0xff]
      %v1766 = vld [vmem:[#allocation2 + $0xdb] sm:$0xff]
      %v1767 = vld [vmem:[#allocation2 + $0xe3] sm:$0xff]
      %v1768 = vld [vmem:[#allocation2 + $0xeb] sm:$0xff]
      %v1769 = vld [vmem:[#allocation2 + $0xf3] sm:$0xff]
      %v1770 = vld [vmem:[#allocation2 + $0xfb] sm:$0xff]
      %v1771 = vld [vmem:[#allocation2 + $0x103] sm:$0xff]
      %v1772 = vld [vmem:[#allocation2 + $0x10b] sm:$0xff]
      %v1773 = vld [vmem:[#allocation2 + $0x113] sm:$0xff]
      %v1774 = vld [vmem:[#allocation2 + $0x11b] sm:$0xff]
      %v1775 = vld [vmem:[#allocation2 + $0x123] sm:$0xff]
      %v1776 = vld [vmem:[#allocation2 + $0x12b] sm:$0xff]
      %v1777 = vpack.c.bf16 %v1741, %v1741
      %v1778 = vpack.c.bf16 %v1742, %v1742
      %v1779 = vpack.c.bf16 %v1743, %v1743
      %v1780 = vpack.c.bf16 %v1744, %v1744
      %v1781 = vpack.c.bf16 %v1745, %v1745
      %v1782 = vpack.c.bf16 %v1746, %v1746
      %v1783 = vpack.c.bf16 %v1747, %v1747
      %v1784 = vpack.c.bf16 %v1748, %v1748
      %v1785 = vpack.c.bf16 %v1749, %v1749
      %v1786 = vpack.c.bf16 %v1750, %v1750
      %v1787 = vpack.c.bf16 %v1751, %v1751
      %v1788 = vpack.c.bf16 %v1752, %v1752
      %v1789 = vpack.c.bf16 %v1753, %v1753
      %v1790 = vpack.c.bf16 %v1754, %v1754
      %v1791 = vpack.c.bf16 %v1755, %v1755
      %v1792 = vpack.c.bf16 %v1756, %v1756
      %v1793 = vpack.c.bf16 %v1757, %v1757
      %v1794 = vpack.c.bf16 %v1758, %v1758
      %v1795 = vpack.c.bf16 %v1759, %v1759
      %v1796 = vpack.c.bf16 %v1760, %v1760
      %v1797 = vpack.c.bf16 %v1761, %v1761
      %v1798 = vpack.c.bf16 %v1762, %v1762
      %v1799 = vpack.c.bf16 %v1763, %v1763
      %v1800 = vpack.c.bf16 %v1764, %v1764
      %v1801 = vpack.c.bf16 %v1765, %v1765
      %v1802 = vpack.c.bf16 %v1766, %v1766
      %v1803 = vpack.c.bf16 %v1767, %v1767
      %v1804 = vpack.c.bf16 %v1768, %v1768
      %v1805 = vpack.c.bf16 %v1769, %v1769
      %v1806 = vpack.c.bf16 %v1770, %v1770
      %v1807 = vpack.c.bf16 %v1771, %v1771
      %v1808 = vpack.c.bf16 %v1772, %v1772
      %v1809 = vpack.c.bf16 %v1773, %v1773
      %v1810 = vpack.c.bf16 %v1774, %v1774
      %v1811 = vpack.c.bf16 %v1775, %v1775
      %v1812 = vpack.c.bf16 %v1776, %v1776
      %1813 = vst.msk [vmem:[#allocation3 + $0x4] sm:$0xf] %vm945, %v1777
      %1814 = vst.msk [vmem:[#allocation3 + $0x10] sm:$0xf] %vm945, %v1778
      %1815 = vst.msk [vmem:[#allocation3 + $0x1c] sm:$0xf] %vm945, %v1779
      %1816 = vst.msk [vmem:[#allocation3 + $0x28] sm:$0xf] %vm945, %v1780
      %1817 = vst.msk [vmem:[#allocation3 + $0x34] sm:$0xf] %vm945, %v1781
      %1818 = vst.msk [vmem:[#allocation3 + $0x40] sm:$0xf] %vm945, %v1782
      %1819 = vst.msk [vmem:[#allocation3 + $0x4c] sm:$0xf] %vm945, %v1783
      %1820 = vst.msk [vmem:[#allocation3 + $0x58] sm:$0xf] %vm945, %v1784
      %1821 = vst.msk [vmem:[#allocation3 + $0x64] sm:$0xf] %vm945, %v1785
      %1822 = vst.msk [vmem:[#allocation3 + $0x70] sm:$0xf] %vm945, %v1786
      %1823 = vst.msk [vmem:[#allocation3 + $0x7c] sm:$0xf] %vm945, %v1787
      %1824 = vst.msk [vmem:[#allocation3 + $0x88] sm:$0xf] %vm945, %v1788
      %1825 = vst.msk [vmem:[#allocation3 + $0x94] sm:$0xf] %vm945, %v1789
      %1826 = vst.msk [vmem:[#allocation3 + $0xa0] sm:$0xf] %vm945, %v1790
      %1827 = vst.msk [vmem:[#allocation3 + $0xac] sm:$0xf] %vm945, %v1791
      %1828 = vst.msk [vmem:[#allocation3 + $0xb8] sm:$0xf] %vm945, %v1792
      %1829 = vst.msk [vmem:[#allocation3 + $0xc4] sm:$0xf] %vm945, %v1793
      %1830 = vst.msk [vmem:[#allocation3 + $0xd0] sm:$0xf] %vm945, %v1794
      %1831 = vst.msk [vmem:[#allocation3 + $0xdc] sm:$0xf] %vm945, %v1795
      %1832 = vst.msk [vmem:[#allocation3 + $0xe8] sm:$0xf] %vm945, %v1796
      %1833 = vst.msk [vmem:[#allocation3 + $0xf4] sm:$0xf] %vm945, %v1797
      %1834 = vst.msk [vmem:[#allocation3 + $0x100] sm:$0xf] %vm945, %v1798
      %1835 = vst.msk [vmem:[#allocation3 + $0x10c] sm:$0xf] %vm945, %v1799
      %1836 = vst.msk [vmem:[#allocation3 + $0x118] sm:$0xf] %vm945, %v1800
      %1837 = vst.msk [vmem:[#allocation3 + $0x124] sm:$0xf] %vm945, %v1801
      %1838 = vst.msk [vmem:[#allocation3 + $0x130] sm:$0xf] %vm945, %v1802
      %1839 = vst.msk [vmem:[#allocation3 + $0x13c] sm:$0xf] %vm945, %v1803
      %1840 = vst.msk [vmem:[#allocation3 + $0x148] sm:$0xf] %vm945, %v1804
      %1841 = vst.msk [vmem:[#allocation3 + $0x154] sm:$0xf] %vm945, %v1805
      %1842 = vst.msk [vmem:[#allocation3 + $0x160] sm:$0xf] %vm945, %v1806
      %1843 = vst.msk [vmem:[#allocation3 + $0x16c] sm:$0xf] %vm945, %v1807
      %1844 = vst.msk [vmem:[#allocation3 + $0x178] sm:$0xf] %vm945, %v1808
      %1845 = vst.msk [vmem:[#allocation3 + $0x184] sm:$0xf] %vm945, %v1809
      %1846 = vst.msk [vmem:[#allocation3 + $0x190] sm:$0xf] %vm945, %v1810
      %1847 = vst.msk [vmem:[#allocation3 + $0x19c] sm:$0xf] %vm945, %v1811
      %1848 = vst.msk [vmem:[#allocation3 + $0x1a8] sm:$0xf] %vm945, %v1812
      %v1849 = vld [vmem:[#allocation2 + $0x14] sm:$0xff]
      %v1850 = vld [vmem:[#allocation2 + $0x1c] sm:$0xff]
      %v1851 = vld [vmem:[#allocation2 + $0x24] sm:$0xff]
      %v1852 = vld [vmem:[#allocation2 + $0x2c] sm:$0xff]
      %v1853 = vld [vmem:[#allocation2 + $0x34] sm:$0xff]
      %v1854 = vld [vmem:[#allocation2 + $0x3c] sm:$0xff]
      %v1855 = vld [vmem:[#allocation2 + $0x44] sm:$0xff]
      %v1856 = vld [vmem:[#allocation2 + $0x4c] sm:$0xff]
      %v1857 = vld [vmem:[#allocation2 + $0x54] sm:$0xff]
      %v1858 = vld [vmem:[#allocation2 + $0x5c] sm:$0xff]
      %v1859 = vld [vmem:[#allocation2 + $0x64] sm:$0xff]
      %v1860 = vld [vmem:[#allocation2 + $0x6c] sm:$0xff]
      %v1861 = vld [vmem:[#allocation2 + $0x74] sm:$0xff]
      %v1862 = vld [vmem:[#allocation2 + $0x7c] sm:$0xff]
      %v1863 = vld [vmem:[#allocation2 + $0x84] sm:$0xff]
      %v1864 = vld [vmem:[#allocation2 + $0x8c] sm:$0xff]
      %v1865 = vld [vmem:[#allocation2 + $0x94] sm:$0xff]
      %v1866 = vld [vmem:[#allocation2 + $0x9c] sm:$0xff]
      %v1867 = vld [vmem:[#allocation2 + $0xa4] sm:$0xff]
      %v1868 = vld [vmem:[#allocation2 + $0xac] sm:$0xff]
      %v1869 = vld [vmem:[#allocation2 + $0xb4] sm:$0xff]
      %v1870 = vld [vmem:[#allocation2 + $0xbc] sm:$0xff]
      %v1871 = vld [vmem:[#allocation2 + $0xc4] sm:$0xff]
      %v1872 = vld [vmem:[#allocation2 + $0xcc] sm:$0xff]
      %v1873 = vld [vmem:[#allocation2 + $0xd4] sm:$0xff]
      %v1874 = vld [vmem:[#allocation2 + $0xdc] sm:$0xff]
      %v1875 = vld [vmem:[#allocation2 + $0xe4] sm:$0xff]
      %v1876 = vld [vmem:[#allocation2 + $0xec] sm:$0xff]
      %v1877 = vld [vmem:[#allocation2 + $0xf4] sm:$0xff]
      %v1878 = vld [vmem:[#allocation2 + $0xfc] sm:$0xff]
      %v1879 = vld [vmem:[#allocation2 + $0x104] sm:$0xff]
      %v1880 = vld [vmem:[#allocation2 + $0x10c] sm:$0xff]
      %v1881 = vld [vmem:[#allocation2 + $0x114] sm:$0xff]
      %v1882 = vld [vmem:[#allocation2 + $0x11c] sm:$0xff]
      %v1883 = vld [vmem:[#allocation2 + $0x124] sm:$0xff]
      %v1884 = vld [vmem:[#allocation2 + $0x12c] sm:$0xff]
      %v1885 = vpack.c.bf16 %v1849, %v1849
      %v1886 = vpack.c.bf16 %v1850, %v1850
      %v1887 = vpack.c.bf16 %v1851, %v1851
      %v1888 = vpack.c.bf16 %v1852, %v1852
      %v1889 = vpack.c.bf16 %v1853, %v1853
      %v1890 = vpack.c.bf16 %v1854, %v1854
      %v1891 = vpack.c.bf16 %v1855, %v1855
      %v1892 = vpack.c.bf16 %v1856, %v1856
      %v1893 = vpack.c.bf16 %v1857, %v1857
      %v1894 = vpack.c.bf16 %v1858, %v1858
      %v1895 = vpack.c.bf16 %v1859, %v1859
      %v1896 = vpack.c.bf16 %v1860, %v1860
      %v1897 = vpack.c.bf16 %v1861, %v1861
      %v1898 = vpack.c.bf16 %v1862, %v1862
      %v1899 = vpack.c.bf16 %v1863, %v1863
      %v1900 = vpack.c.bf16 %v1864, %v1864
      %v1901 = vpack.c.bf16 %v1865, %v1865
      %v1902 = vpack.c.bf16 %v1866, %v1866
      %v1903 = vpack.c.bf16 %v1867, %v1867
      %v1904 = vpack.c.bf16 %v1868, %v1868
      %v1905 = vpack.c.bf16 %v1869, %v1869
      %v1906 = vpack.c.bf16 %v1870, %v1870
      %v1907 = vpack.c.bf16 %v1871, %v1871
      %v1908 = vpack.c.bf16 %v1872, %v1872
      %v1909 = vpack.c.bf16 %v1873, %v1873
      %v1910 = vpack.c.bf16 %v1874, %v1874
      %v1911 = vpack.c.bf16 %v1875, %v1875
      %v1912 = vpack.c.bf16 %v1876, %v1876
      %v1913 = vpack.c.bf16 %v1877, %v1877
      %v1914 = vpack.c.bf16 %v1878, %v1878
      %v1915 = vpack.c.bf16 %v1879, %v1879
      %v1916 = vpack.c.bf16 %v1880, %v1880
      %v1917 = vpack.c.bf16 %v1881, %v1881
      %v1918 = vpack.c.bf16 %v1882, %v1882
      %v1919 = vpack.c.bf16 %v1883, %v1883
      %v1920 = vpack.c.bf16 %v1884, %v1884
      %1957 = vrot.lane.b32.xlu0 %v1885, 32
      %v1958 = vpop.permute.xlu0 %1957
      %1959 = vrot.lane.b32.xlu0 %v1886, 32
      %v1960 = vpop.permute.xlu0 %1959
      %1961 = vrot.lane.b32.xlu0 %v1887, 32
      %v1962 = vpop.permute.xlu0 %1961
      %1963 = vrot.lane.b32.xlu0 %v1888, 32
      %v1964 = vpop.permute.xlu0 %1963
      %1965 = vrot.lane.b32.xlu0 %v1889, 32
      %v1966 = vpop.permute.xlu0 %1965
      %1967 = vrot.lane.b32.xlu0 %v1890, 32
      %v1968 = vpop.permute.xlu0 %1967
      %1969 = vrot.lane.b32.xlu0 %v1891, 32
      %v1970 = vpop.permute.xlu0 %1969
      %1971 = vrot.lane.b32.xlu0 %v1892, 32
      %v1972 = vpop.permute.xlu0 %1971
      %1973 = vrot.lane.b32.xlu0 %v1893, 32
      %v1974 = vpop.permute.xlu0 %1973
      %1975 = vrot.lane.b32.xlu0 %v1894, 32
      %v1976 = vpop.permute.xlu0 %1975
      %1977 = vrot.lane.b32.xlu0 %v1895, 32
      %v1978 = vpop.permute.xlu0 %1977
      %1979 = vrot.lane.b32.xlu0 %v1896, 32
      %v1980 = vpop.permute.xlu0 %1979
      %1981 = vrot.lane.b32.xlu0 %v1897, 32
      %v1982 = vpop.permute.xlu0 %1981
      %1983 = vrot.lane.b32.xlu0 %v1898, 32
      %v1984 = vpop.permute.xlu0 %1983
      %1985 = vrot.lane.b32.xlu0 %v1899, 32
      %v1986 = vpop.permute.xlu0 %1985
      %1987 = vrot.lane.b32.xlu0 %v1900, 32
      %v1988 = vpop.permute.xlu0 %1987
      %1989 = vrot.lane.b32.xlu0 %v1901, 32
      %v1990 = vpop.permute.xlu0 %1989
      %1991 = vrot.lane.b32.xlu0 %v1902, 32
      %v1992 = vpop.permute.xlu0 %1991
      %1993 = vrot.lane.b32.xlu0 %v1903, 32
      %v1994 = vpop.permute.xlu0 %1993
      %1995 = vrot.lane.b32.xlu0 %v1904, 32
      %v1996 = vpop.permute.xlu0 %1995
      %1997 = vrot.lane.b32.xlu0 %v1905, 32
      %v1998 = vpop.permute.xlu0 %1997
      %1999 = vrot.lane.b32.xlu0 %v1906, 32
      %v2000 = vpop.permute.xlu0 %1999
      %2001 = vrot.lane.b32.xlu0 %v1907, 32
      %v2002 = vpop.permute.xlu0 %2001
      %2003 = vrot.lane.b32.xlu0 %v1908, 32
      %v2004 = vpop.permute.xlu0 %2003
      %2005 = vrot.lane.b32.xlu0 %v1909, 32
      %v2006 = vpop.permute.xlu0 %2005
      %2007 = vrot.lane.b32.xlu0 %v1910, 32
      %v2008 = vpop.permute.xlu0 %2007
      %2009 = vrot.lane.b32.xlu0 %v1911, 32
      %v2010 = vpop.permute.xlu0 %2009
      %2011 = vrot.lane.b32.xlu0 %v1912, 32
      %v2012 = vpop.permute.xlu0 %2011
      %2013 = vrot.lane.b32.xlu0 %v1913, 32
      %v2014 = vpop.permute.xlu0 %2013
      %2015 = vrot.lane.b32.xlu0 %v1914, 32
      %v2016 = vpop.permute.xlu0 %2015
      %2017 = vrot.lane.b32.xlu0 %v1915, 32
      %v2018 = vpop.permute.xlu0 %2017
      %2019 = vrot.lane.b32.xlu0 %v1916, 32
      %v2020 = vpop.permute.xlu0 %2019
      %2021 = vrot.lane.b32.xlu0 %v1917, 32
      %v2022 = vpop.permute.xlu0 %2021
      %2023 = vrot.lane.b32.xlu0 %v1918, 32
      %v2024 = vpop.permute.xlu0 %2023
      %2025 = vrot.lane.b32.xlu0 %v1919, 32
      %v2026 = vpop.permute.xlu0 %2025
      %2027 = vrot.lane.b32.xlu0 %v1920, 32
      %v2028 = vpop.permute.xlu0 %2027
      %2065 = vst.msk [vmem:[#allocation3 + $0x4] sm:$0xf] %vm1198, %v1958
      %2066 = vst.msk [vmem:[#allocation3 + $0x10] sm:$0xf] %vm1198, %v1960
      %2067 = vst.msk [vmem:[#allocation3 + $0x1c] sm:$0xf] %vm1198, %v1962
      %2068 = vst.msk [vmem:[#allocation3 + $0x28] sm:$0xf] %vm1198, %v1964
      %2069 = vst.msk [vmem:[#allocation3 + $0x34] sm:$0xf] %vm1198, %v1966
      %2070 = vst.msk [vmem:[#allocation3 + $0x40] sm:$0xf] %vm1198, %v1968
      %2071 = vst.msk [vmem:[#allocation3 + $0x4c] sm:$0xf] %vm1198, %v1970
      %2072 = vst.msk [vmem:[#allocation3 + $0x58] sm:$0xf] %vm1198, %v1972
      %2073 = vst.msk [vmem:[#allocation3 + $0x64] sm:$0xf] %vm1198, %v1974
      %2074 = vst.msk [vmem:[#allocation3 + $0x70] sm:$0xf] %vm1198, %v1976
      %2075 = vst.msk [vmem:[#allocation3 + $0x7c] sm:$0xf] %vm1198, %v1978
      %2076 = vst.msk [vmem:[#allocation3 + $0x88] sm:$0xf] %vm1198, %v1980
      %2077 = vst.msk [vmem:[#allocation3 + $0x94] sm:$0xf] %vm1198, %v1982
      %2078 = vst.msk [vmem:[#allocation3 + $0xa0] sm:$0xf] %vm1198, %v1984
      %2079 = vst.msk [vmem:[#allocation3 + $0xac] sm:$0xf] %vm1198, %v1986
      %2080 = vst.msk [vmem:[#allocation3 + $0xb8] sm:$0xf] %vm1198, %v1988
      %2081 = vst.msk [vmem:[#allocation3 + $0xc4] sm:$0xf] %vm1198, %v1990
      %2082 = vst.msk [vmem:[#allocation3 + $0xd0] sm:$0xf] %vm1198, %v1992
      %2083 = vst.msk [vmem:[#allocation3 + $0xdc] sm:$0xf] %vm1198, %v1994
      %2084 = vst.msk [vmem:[#allocation3 + $0xe8] sm:$0xf] %vm1198, %v1996
      %2085 = vst.msk [vmem:[#allocation3 + $0xf4] sm:$0xf] %vm1198, %v1998
      %2086 = vst.msk [vmem:[#allocation3 + $0x100] sm:$0xf] %vm1198, %v2000
      %2087 = vst.msk [vmem:[#allocation3 + $0x10c] sm:$0xf] %vm1198, %v2002
      %2088 = vst.msk [vmem:[#allocation3 + $0x118] sm:$0xf] %vm1198, %v2004
      %2089 = vst.msk [vmem:[#allocation3 + $0x124] sm:$0xf] %vm1198, %v2006
      %2090 = vst.msk [vmem:[#allocation3 + $0x130] sm:$0xf] %vm1198, %v2008
      %2091 = vst.msk [vmem:[#allocation3 + $0x13c] sm:$0xf] %vm1198, %v2010
      %2092 = vst.msk [vmem:[#allocation3 + $0x148] sm:$0xf] %vm1198, %v2012
      %2093 = vst.msk [vmem:[#allocation3 + $0x154] sm:$0xf] %vm1198, %v2014
      %2094 = vst.msk [vmem:[#allocation3 + $0x160] sm:$0xf] %vm1198, %v2016
      %2095 = vst.msk [vmem:[#allocation3 + $0x16c] sm:$0xf] %vm1198, %v2018
      %2096 = vst.msk [vmem:[#allocation3 + $0x178] sm:$0xf] %vm1198, %v2020
      %2097 = vst.msk [vmem:[#allocation3 + $0x184] sm:$0xf] %vm1198, %v2022
      %2098 = vst.msk [vmem:[#allocation3 + $0x190] sm:$0xf] %vm1198, %v2024
      %2099 = vst.msk [vmem:[#allocation3 + $0x19c] sm:$0xf] %vm1198, %v2026
      %2100 = vst.msk [vmem:[#allocation3 + $0x1a8] sm:$0xf] %vm1198, %v2028
      %v2101 = vld [vmem:[#allocation2 + $0x24] sm:$0xff]
      %v2102 = vld [vmem:[#allocation2 + $0x2c] sm:$0xff]
      %v2103 = vld [vmem:[#allocation2 + $0x34] sm:$0xff]
      %v2104 = vld [vmem:[#allocation2 + $0x3c] sm:$0xff]
      %v2105 = vld [vmem:[#allocation2 + $0x44] sm:$0xff]
      %v2106 = vld [vmem:[#allocation2 + $0x4c] sm:$0xff]
      %v2107 = vld [vmem:[#allocation2 + $0x54] sm:$0xff]
      %v2108 = vld [vmem:[#allocation2 + $0x5c] sm:$0xff]
      %v2109 = vld [vmem:[#allocation2 + $0x64] sm:$0xff]
      %v2110 = vld [vmem:[#allocation2 + $0x6c] sm:$0xff]
      %v2111 = vld [vmem:[#allocation2 + $0x74] sm:$0xff]
      %v2112 = vld [vmem:[#allocation2 + $0x7c] sm:$0xff]
      %v2113 = vld [vmem:[#allocation2 + $0x84] sm:$0xff]
      %v2114 = vld [vmem:[#allocation2 + $0x8c] sm:$0xff]
      %v2115 = vld [vmem:[#allocation2 + $0x94] sm:$0xff]
      %v2116 = vld [vmem:[#allocation2 + $0x9c] sm:$0xff]
      %v2117 = vld [vmem:[#allocation2 + $0xa4] sm:$0xff]
      %v2118 = vld [vmem:[#allocation2 + $0xac] sm:$0xff]
      %v2119 = vld [vmem:[#allocation2 + $0xb4] sm:$0xff]
      %v2120 = vld [vmem:[#allocation2 + $0xbc] sm:$0xff]
      %v2121 = vld [vmem:[#allocation2 + $0xc4] sm:$0xff]
      %v2122 = vld [vmem:[#allocation2 + $0xcc] sm:$0xff]
      %v2123 = vld [vmem:[#allocation2 + $0xd4] sm:$0xff]
      %v2124 = vld [vmem:[#allocation2 + $0xdc] sm:$0xff]
      %v2125 = vld [vmem:[#allocation2 + $0xe4] sm:$0xff]
      %v2126 = vld [vmem:[#allocation2 + $0xec] sm:$0xff]
      %v2127 = vld [vmem:[#allocation2 + $0xf4] sm:$0xff]
      %v2128 = vld [vmem:[#allocation2 + $0xfc] sm:$0xff]
      %v2129 = vld [vmem:[#allocation2 + $0x104] sm:$0xff]
      %v2130 = vld [vmem:[#allocation2 + $0x10c] sm:$0xff]
      %v2131 = vld [vmem:[#allocation2 + $0x114] sm:$0xff]
      %v2132 = vld [vmem:[#allocation2 + $0x11c] sm:$0xff]
      %v2133 = vld [vmem:[#allocation2 + $0x124] sm:$0xff]
      %v2134 = vld [vmem:[#allocation2 + $0x12c] sm:$0xff]
      %v2135 = vld [vmem:[#allocation2 + $0x134] sm:$0xff]
      %v2136 = vld [vmem:[#allocation2 + $0x13c] sm:$0xff]
      %v2137 = vpack.c.bf16 %v2101, %v2101
      %v2138 = vpack.c.bf16 %v2102, %v2102
      %v2139 = vpack.c.bf16 %v2103, %v2103
      %v2140 = vpack.c.bf16 %v2104, %v2104
      %v2141 = vpack.c.bf16 %v2105, %v2105
      %v2142 = vpack.c.bf16 %v2106, %v2106
      %v2143 = vpack.c.bf16 %v2107, %v2107
      %v2144 = vpack.c.bf16 %v2108, %v2108
      %v2145 = vpack.c.bf16 %v2109, %v2109
      %v2146 = vpack.c.bf16 %v2110, %v2110
      %v2147 = vpack.c.bf16 %v2111, %v2111
      %v2148 = vpack.c.bf16 %v2112, %v2112
      %v2149 = vpack.c.bf16 %v2113, %v2113
      %v2150 = vpack.c.bf16 %v2114, %v2114
      %v2151 = vpack.c.bf16 %v2115, %v2115
      %v2152 = vpack.c.bf16 %v2116, %v2116
      %v2153 = vpack.c.bf16 %v2117, %v2117
      %v2154 = vpack.c.bf16 %v2118, %v2118
      %v2155 = vpack.c.bf16 %v2119, %v2119
      %v2156 = vpack.c.bf16 %v2120, %v2120
      %v2157 = vpack.c.bf16 %v2121, %v2121
      %v2158 = vpack.c.bf16 %v2122, %v2122
      %v2159 = vpack.c.bf16 %v2123, %v2123
      %v2160 = vpack.c.bf16 %v2124, %v2124
      %v2161 = vpack.c.bf16 %v2125, %v2125
      %v2162 = vpack.c.bf16 %v2126, %v2126
      %v2163 = vpack.c.bf16 %v2127, %v2127
      %v2164 = vpack.c.bf16 %v2128, %v2128
      %v2165 = vpack.c.bf16 %v2129, %v2129
      %v2166 = vpack.c.bf16 %v2130, %v2130
      %v2167 = vpack.c.bf16 %v2131, %v2131
      %v2168 = vpack.c.bf16 %v2132, %v2132
      %v2169 = vpack.c.bf16 %v2133, %v2133
      %v2170 = vpack.c.bf16 %v2134, %v2134
      %v2171 = vpack.c.bf16 %v2135, %v2135
      %v2172 = vpack.c.bf16 %v2136, %v2136
      %2209 = vrot.lane.b32.xlu0 %v2137, 64
      %v2210 = vpop.permute.xlu0 %2209
      %2211 = vrot.lane.b32.xlu0 %v2138, 64
      %v2212 = vpop.permute.xlu0 %2211
      %2213 = vrot.lane.b32.xlu0 %v2139, 64
      %v2214 = vpop.permute.xlu0 %2213
      %2215 = vrot.lane.b32.xlu0 %v2140, 64
      %v2216 = vpop.permute.xlu0 %2215
      %2217 = vrot.lane.b32.xlu0 %v2141, 64
      %v2218 = vpop.permute.xlu0 %2217
      %2219 = vrot.lane.b32.xlu0 %v2142, 64
      %v2220 = vpop.permute.xlu0 %2219
      %2221 = vrot.lane.b32.xlu0 %v2143, 64
      %v2222 = vpop.permute.xlu0 %2221
      %2223 = vrot.lane.b32.xlu0 %v2144, 64
      %v2224 = vpop.permute.xlu0 %2223
      %2225 = vrot.lane.b32.xlu0 %v2145, 64
      %v2226 = vpop.permute.xlu0 %2225
      %2227 = vrot.lane.b32.xlu0 %v2146, 64
      %v2228 = vpop.permute.xlu0 %2227
      %2229 = vrot.lane.b32.xlu0 %v2147, 64
      %v2230 = vpop.permute.xlu0 %2229
      %2231 = vrot.lane.b32.xlu0 %v2148, 64
      %v2232 = vpop.permute.xlu0 %2231
      %2233 = vrot.lane.b32.xlu0 %v2149, 64
      %v2234 = vpop.permute.xlu0 %2233
      %2235 = vrot.lane.b32.xlu0 %v2150, 64
      %v2236 = vpop.permute.xlu0 %2235
      %2237 = vrot.lane.b32.xlu0 %v2151, 64
      %v2238 = vpop.permute.xlu0 %2237
      %2239 = vrot.lane.b32.xlu0 %v2152, 64
      %v2240 = vpop.permute.xlu0 %2239
      %2241 = vrot.lane.b32.xlu0 %v2153, 64
      %v2242 = vpop.permute.xlu0 %2241
      %2243 = vrot.lane.b32.xlu0 %v2154, 64
      %v2244 = vpop.permute.xlu0 %2243
      %2245 = vrot.lane.b32.xlu0 %v2155, 64
      %v2246 = vpop.permute.xlu0 %2245
      %2247 = vrot.lane.b32.xlu0 %v2156, 64
      %v2248 = vpop.permute.xlu0 %2247
      %2249 = vrot.lane.b32.xlu0 %v2157, 64
      %v2250 = vpop.permute.xlu0 %2249
      %2251 = vrot.lane.b32.xlu0 %v2158, 64
      %v2252 = vpop.permute.xlu0 %2251
      %2253 = vrot.lane.b32.xlu0 %v2159, 64
      %v2254 = vpop.permute.xlu0 %2253
      %2255 = vrot.lane.b32.xlu0 %v2160, 64
      %v2256 = vpop.permute.xlu0 %2255
      %2257 = vrot.lane.b32.xlu0 %v2161, 64
      %v2258 = vpop.permute.xlu0 %2257
      %2259 = vrot.lane.b32.xlu0 %v2162, 64
      %v2260 = vpop.permute.xlu0 %2259
      %2261 = vrot.lane.b32.xlu0 %v2163, 64
      %v2262 = vpop.permute.xlu0 %2261
      %2263 = vrot.lane.b32.xlu0 %v2164, 64
      %v2264 = vpop.permute.xlu0 %2263
      %2265 = vrot.lane.b32.xlu0 %v2165, 64
      %v2266 = vpop.permute.xlu0 %2265
      %2267 = vrot.lane.b32.xlu0 %v2166, 64
      %v2268 = vpop.permute.xlu0 %2267
      %2269 = vrot.lane.b32.xlu0 %v2167, 64
      %v2270 = vpop.permute.xlu0 %2269
      %2271 = vrot.lane.b32.xlu0 %v2168, 64
      %v2272 = vpop.permute.xlu0 %2271
      %2273 = vrot.lane.b32.xlu0 %v2169, 64
      %v2274 = vpop.permute.xlu0 %2273
      %2275 = vrot.lane.b32.xlu0 %v2170, 64
      %v2276 = vpop.permute.xlu0 %2275
      %2277 = vrot.lane.b32.xlu0 %v2171, 64
      %v2278 = vpop.permute.xlu0 %2277
      %2279 = vrot.lane.b32.xlu0 %v2172, 64
      %v2280 = vpop.permute.xlu0 %2279
      %2317 = vst.msk [vmem:[#allocation3 + $0x4] sm:$0xf] %vm1451, %v2210
      %2318 = vst.msk [vmem:[#allocation3 + $0x10] sm:$0xf] %vm1451, %v2212
      %2319 = vst.msk [vmem:[#allocation3 + $0x1c] sm:$0xf] %vm1451, %v2214
      %2320 = vst.msk [vmem:[#allocation3 + $0x28] sm:$0xf] %vm1451, %v2216
      %2321 = vst.msk [vmem:[#allocation3 + $0x34] sm:$0xf] %vm1451, %v2218
      %2322 = vst.msk [vmem:[#allocation3 + $0x40] sm:$0xf] %vm1451, %v2220
      %2323 = vst.msk [vmem:[#allocation3 + $0x4c] sm:$0xf] %vm1451, %v2222
      %2324 = vst.msk [vmem:[#allocation3 + $0x58] sm:$0xf] %vm1451, %v2224
      %2325 = vst.msk [vmem:[#allocation3 + $0x64] sm:$0xf] %vm1451, %v2226
      %2326 = vst.msk [vmem:[#allocation3 + $0x70] sm:$0xf] %vm1451, %v2228
      %2327 = vst.msk [vmem:[#allocation3 + $0x7c] sm:$0xf] %vm1451, %v2230
      %2328 = vst.msk [vmem:[#allocation3 + $0x88] sm:$0xf] %vm1451, %v2232
      %2329 = vst.msk [vmem:[#allocation3 + $0x94] sm:$0xf] %vm1451, %v2234
      %2330 = vst.msk [vmem:[#allocation3 + $0xa0] sm:$0xf] %vm1451, %v2236
      %2331 = vst.msk [vmem:[#allocation3 + $0xac] sm:$0xf] %vm1451, %v2238
      %2332 = vst.msk [vmem:[#allocation3 + $0xb8] sm:$0xf] %vm1451, %v2240
      %2333 = vst.msk [vmem:[#allocation3 + $0xc4] sm:$0xf] %vm1451, %v2242
      %2334 = vst.msk [vmem:[#allocation3 + $0xd0] sm:$0xf] %vm1451, %v2244
      %2335 = vst.msk [vmem:[#allocation3 + $0xdc] sm:$0xf] %vm1451, %v2246
      %2336 = vst.msk [vmem:[#allocation3 + $0xe8] sm:$0xf] %vm1451, %v2248
      %2337 = vst.msk [vmem:[#allocation3 + $0xf4] sm:$0xf] %vm1451, %v2250
      %2338 = vst.msk [vmem:[#allocation3 + $0x100] sm:$0xf] %vm1451, %v2252
      %2339 = vst.msk [vmem:[#allocation3 + $0x10c] sm:$0xf] %vm1451, %v2254
      %2340 = vst.msk [vmem:[#allocation3 + $0x118] sm:$0xf] %vm1451, %v2256
      %2341 = vst.msk [vmem:[#allocation3 + $0x124] sm:$0xf] %vm1451, %v2258
      %2342 = vst.msk [vmem:[#allocation3 + $0x130] sm:$0xf] %vm1451, %v2260
      %2343 = vst.msk [vmem:[#allocation3 + $0x13c] sm:$0xf] %vm1451, %v2262
      %2344 = vst.msk [vmem:[#allocation3 + $0x148] sm:$0xf] %vm1451, %v2264
      %2345 = vst.msk [vmem:[#allocation3 + $0x154] sm:$0xf] %vm1451, %v2266
      %2346 = vst.msk [vmem:[#allocation3 + $0x160] sm:$0xf] %vm1451, %v2268
      %2347 = vst.msk [vmem:[#allocation3 + $0x16c] sm:$0xf] %vm1451, %v2270
      %2348 = vst.msk [vmem:[#allocation3 + $0x178] sm:$0xf] %vm1451, %v2272
      %2349 = vst.msk [vmem:[#allocation3 + $0x184] sm:$0xf] %vm1451, %v2274
      %2350 = vst.msk [vmem:[#allocation3 + $0x190] sm:$0xf] %vm1451, %v2276
      %2351 = vst.msk [vmem:[#allocation3 + $0x19c] sm:$0xf] %vm1451, %v2278
      %2352 = vst.msk [vmem:[#allocation3 + $0x1a8] sm:$0xf] %vm1451, %v2280
      %v2353 = vld [vmem:[#allocation2 + $0x25] sm:$0xff]
      %v2354 = vld [vmem:[#allocation2 + $0x2d] sm:$0xff]
      %v2355 = vld [vmem:[#allocation2 + $0x35] sm:$0xff]
      %v2356 = vld [vmem:[#allocation2 + $0x3d] sm:$0xff]
      %v2357 = vld [vmem:[#allocation2 + $0x45] sm:$0xff]
      %v2358 = vld [vmem:[#allocation2 + $0x4d] sm:$0xff]
      %v2359 = vld [vmem:[#allocation2 + $0x55] sm:$0xff]
      %v2360 = vld [vmem:[#allocation2 + $0x5d] sm:$0xff]
      %v2361 = vld [vmem:[#allocation2 + $0x65] sm:$0xff]
      %v2362 = vld [vmem:[#allocation2 + $0x6d] sm:$0xff]
      %v2363 = vld [vmem:[#allocation2 + $0x75] sm:$0xff]
      %v2364 = vld [vmem:[#allocation2 + $0x7d] sm:$0xff]
      %v2365 = vld [vmem:[#allocation2 + $0x85] sm:$0xff]
      %v2366 = vld [vmem:[#allocation2 + $0x8d] sm:$0xff]
      %v2367 = vld [vmem:[#allocation2 + $0x95] sm:$0xff]
      %v2368 = vld [vmem:[#allocation2 + $0x9d] sm:$0xff]
      %v2369 = vld [vmem:[#allocation2 + $0xa5] sm:$0xff]
      %v2370 = vld [vmem:[#allocation2 + $0xad] sm:$0xff]
      %v2371 = vld [vmem:[#allocation2 + $0xb5] sm:$0xff]
      %v2372 = vld [vmem:[#allocation2 + $0xbd] sm:$0xff]
      %v2373 = vld [vmem:[#allocation2 + $0xc5] sm:$0xff]
      %v2374 = vld [vmem:[#allocation2 + $0xcd] sm:$0xff]
      %v2375 = vld [vmem:[#allocation2 + $0xd5] sm:$0xff]
      %v2376 = vld [vmem:[#allocation2 + $0xdd] sm:$0xff]
      %v2377 = vld [vmem:[#allocation2 + $0xe5] sm:$0xff]
      %v2378 = vld [vmem:[#allocation2 + $0xed] sm:$0xff]
      %v2379 = vld [vmem:[#allocation2 + $0xf5] sm:$0xff]
      %v2380 = vld [vmem:[#allocation2 + $0xfd] sm:$0xff]
      %v2381 = vld [vmem:[#allocation2 + $0x105] sm:$0xff]
      %v2382 = vld [vmem:[#allocation2 + $0x10d] sm:$0xff]
      %v2383 = vld [vmem:[#allocation2 + $0x115] sm:$0xff]
      %v2384 = vld [vmem:[#allocation2 + $0x11d] sm:$0xff]
      %v2385 = vld [vmem:[#allocation2 + $0x125] sm:$0xff]
      %v2386 = vld [vmem:[#allocation2 + $0x12d] sm:$0xff]
      %v2387 = vld [vmem:[#allocation2 + $0x135] sm:$0xff]
      %v2388 = vld [vmem:[#allocation2 + $0x13d] sm:$0xff]
      %v2389 = vpack.c.bf16 %v2353, %v2353
      %v2390 = vpack.c.bf16 %v2354, %v2354
      %v2391 = vpack.c.bf16 %v2355, %v2355
      %v2392 = vpack.c.bf16 %v2356, %v2356
      %v2393 = vpack.c.bf16 %v2357, %v2357
      %v2394 = vpack.c.bf16 %v2358, %v2358
      %v2395 = vpack.c.bf16 %v2359, %v2359
      %v2396 = vpack.c.bf16 %v2360, %v2360
      %v2397 = vpack.c.bf16 %v2361, %v2361
      %v2398 = vpack.c.bf16 %v2362, %v2362
      %v2399 = vpack.c.bf16 %v2363, %v2363
      %v2400 = vpack.c.bf16 %v2364, %v2364
      %v2401 = vpack.c.bf16 %v2365, %v2365
      %v2402 = vpack.c.bf16 %v2366, %v2366
      %v2403 = vpack.c.bf16 %v2367, %v2367
      %v2404 = vpack.c.bf16 %v2368, %v2368
      %v2405 = vpack.c.bf16 %v2369, %v2369
      %v2406 = vpack.c.bf16 %v2370, %v2370
      %v2407 = vpack.c.bf16 %v2371, %v2371
      %v2408 = vpack.c.bf16 %v2372, %v2372
      %v2409 = vpack.c.bf16 %v2373, %v2373
      %v2410 = vpack.c.bf16 %v2374, %v2374
      %v2411 = vpack.c.bf16 %v2375, %v2375
      %v2412 = vpack.c.bf16 %v2376, %v2376
      %v2413 = vpack.c.bf16 %v2377, %v2377
      %v2414 = vpack.c.bf16 %v2378, %v2378
      %v2415 = vpack.c.bf16 %v2379, %v2379
      %v2416 = vpack.c.bf16 %v2380, %v2380
      %v2417 = vpack.c.bf16 %v2381, %v2381
      %v2418 = vpack.c.bf16 %v2382, %v2382
      %v2419 = vpack.c.bf16 %v2383, %v2383
      %v2420 = vpack.c.bf16 %v2384, %v2384
      %v2421 = vpack.c.bf16 %v2385, %v2385
      %v2422 = vpack.c.bf16 %v2386, %v2386
      %v2423 = vpack.c.bf16 %v2387, %v2387
      %v2424 = vpack.c.bf16 %v2388, %v2388
      %2461 = vrot.lane.b32.xlu0 %v2389, 96
      %v2462 = vpop.permute.xlu0 %2461
      %2463 = vrot.lane.b32.xlu0 %v2390, 96
      %v2464 = vpop.permute.xlu0 %2463
      %2465 = vrot.lane.b32.xlu0 %v2391, 96
      %v2466 = vpop.permute.xlu0 %2465
      %2467 = vrot.lane.b32.xlu0 %v2392, 96
      %v2468 = vpop.permute.xlu0 %2467
      %2469 = vrot.lane.b32.xlu0 %v2393, 96
      %v2470 = vpop.permute.xlu0 %2469
      %2471 = vrot.lane.b32.xlu0 %v2394, 96
      %v2472 = vpop.permute.xlu0 %2471
      %2473 = vrot.lane.b32.xlu0 %v2395, 96
      %v2474 = vpop.permute.xlu0 %2473
      %2475 = vrot.lane.b32.xlu0 %v2396, 96
      %v2476 = vpop.permute.xlu0 %2475
      %2477 = vrot.lane.b32.xlu0 %v2397, 96
      %v2478 = vpop.permute.xlu0 %2477
      %2479 = vrot.lane.b32.xlu0 %v2398, 96
      %v2480 = vpop.permute.xlu0 %2479
      %2481 = vrot.lane.b32.xlu0 %v2399, 96
      %v2482 = vpop.permute.xlu0 %2481
      %2483 = vrot.lane.b32.xlu0 %v2400, 96
      %v2484 = vpop.permute.xlu0 %2483
      %2485 = vrot.lane.b32.xlu0 %v2401, 96
      %v2486 = vpop.permute.xlu0 %2485
      %2487 = vrot.lane.b32.xlu0 %v2402, 96
      %v2488 = vpop.permute.xlu0 %2487
      %2489 = vrot.lane.b32.xlu0 %v2403, 96
      %v2490 = vpop.permute.xlu0 %2489
      %2491 = vrot.lane.b32.xlu0 %v2404, 96
      %v2492 = vpop.permute.xlu0 %2491
      %2493 = vrot.lane.b32.xlu0 %v2405, 96
      %v2494 = vpop.permute.xlu0 %2493
      %2495 = vrot.lane.b32.xlu0 %v2406, 96
      %v2496 = vpop.permute.xlu0 %2495
      %2497 = vrot.lane.b32.xlu0 %v2407, 96
      %v2498 = vpop.permute.xlu0 %2497
      %2499 = vrot.lane.b32.xlu0 %v2408, 96
      %v2500 = vpop.permute.xlu0 %2499
      %2501 = vrot.lane.b32.xlu0 %v2409, 96
      %v2502 = vpop.permute.xlu0 %2501
      %2503 = vrot.lane.b32.xlu0 %v2410, 96
      %v2504 = vpop.permute.xlu0 %2503
      %2505 = vrot.lane.b32.xlu0 %v2411, 96
      %v2506 = vpop.permute.xlu0 %2505
      %2507 = vrot.lane.b32.xlu0 %v2412, 96
      %v2508 = vpop.permute.xlu0 %2507
      %2509 = vrot.lane.b32.xlu0 %v2413, 96
      %v2510 = vpop.permute.xlu0 %2509
      %2511 = vrot.lane.b32.xlu0 %v2414, 96
      %v2512 = vpop.permute.xlu0 %2511
      %2513 = vrot.lane.b32.xlu0 %v2415, 96
      %v2514 = vpop.permute.xlu0 %2513
      %2515 = vrot.lane.b32.xlu0 %v2416, 96
      %v2516 = vpop.permute.xlu0 %2515
      %2517 = vrot.lane.b32.xlu0 %v2417, 96
      %v2518 = vpop.permute.xlu0 %2517
      %2519 = vrot.lane.b32.xlu0 %v2418, 96
      %v2520 = vpop.permute.xlu0 %2519
      %2521 = vrot.lane.b32.xlu0 %v2419, 96
      %v2522 = vpop.permute.xlu0 %2521
      %2523 = vrot.lane.b32.xlu0 %v2420, 96
      %v2524 = vpop.permute.xlu0 %2523
      %2525 = vrot.lane.b32.xlu0 %v2421, 96
      %v2526 = vpop.permute.xlu0 %2525
      %2527 = vrot.lane.b32.xlu0 %v2422, 96
      %v2528 = vpop.permute.xlu0 %2527
      %2529 = vrot.lane.b32.xlu0 %v2423, 96
      %v2530 = vpop.permute.xlu0 %2529
      %2531 = vrot.lane.b32.xlu0 %v2424, 96
      %v2532 = vpop.permute.xlu0 %2531
      %2569 = vst.msk [vmem:[#allocation3 + $0x4] sm:$0xf] %vm1704, %v2462
      %2570 = vst.msk [vmem:[#allocation3 + $0x10] sm:$0xf] %vm1704, %v2464
      %2571 = vst.msk [vmem:[#allocation3 + $0x1c] sm:$0xf] %vm1704, %v2466
      %2572 = vst.msk [vmem:[#allocation3 + $0x28] sm:$0xf] %vm1704, %v2468
      %2573 = vst.msk [vmem:[#allocation3 + $0x34] sm:$0xf] %vm1704, %v2470
      %2574 = vst.msk [vmem:[#allocation3 + $0x40] sm:$0xf] %vm1704, %v2472
      %2575 = vst.msk [vmem:[#allocation3 + $0x4c] sm:$0xf] %vm1704, %v2474
      %2576 = vst.msk [vmem:[#allocation3 + $0x58] sm:$0xf] %vm1704, %v2476
      %2577 = vst.msk [vmem:[#allocation3 + $0x64] sm:$0xf] %vm1704, %v2478
      %2578 = vst.msk [vmem:[#allocation3 + $0x70] sm:$0xf] %vm1704, %v2480
      %2579 = vst.msk [vmem:[#allocation3 + $0x7c] sm:$0xf] %vm1704, %v2482
      %2580 = vst.msk [vmem:[#allocation3 + $0x88] sm:$0xf] %vm1704, %v2484
      %2581 = vst.msk [vmem:[#allocation3 + $0x94] sm:$0xf] %vm1704, %v2486
      %2582 = vst.msk [vmem:[#allocation3 + $0xa0] sm:$0xf] %vm1704, %v2488
      %2583 = vst.msk [vmem:[#allocation3 + $0xac] sm:$0xf] %vm1704, %v2490
      %2584 = vst.msk [vmem:[#allocation3 + $0xb8] sm:$0xf] %vm1704, %v2492
      %2585 = vst.msk [vmem:[#allocation3 + $0xc4] sm:$0xf] %vm1704, %v2494
      %2586 = vst.msk [vmem:[#allocation3 + $0xd0] sm:$0xf] %vm1704, %v2496
      %2587 = vst.msk [vmem:[#allocation3 + $0xdc] sm:$0xf] %vm1704, %v2498
      %2588 = vst.msk [vmem:[#allocation3 + $0xe8] sm:$0xf] %vm1704, %v2500
      %2589 = vst.msk [vmem:[#allocation3 + $0xf4] sm:$0xf] %vm1704, %v2502
      %2590 = vst.msk [vmem:[#allocation3 + $0x100] sm:$0xf] %vm1704, %v2504
      %2591 = vst.msk [vmem:[#allocation3 + $0x10c] sm:$0xf] %vm1704, %v2506
      %2592 = vst.msk [vmem:[#allocation3 + $0x118] sm:$0xf] %vm1704, %v2508
      %2593 = vst.msk [vmem:[#allocation3 + $0x124] sm:$0xf] %vm1704, %v2510
      %2594 = vst.msk [vmem:[#allocation3 + $0x130] sm:$0xf] %vm1704, %v2512
      %2595 = vst.msk [vmem:[#allocation3 + $0x13c] sm:$0xf] %vm1704, %v2514
      %2596 = vst.msk [vmem:[#allocation3 + $0x148] sm:$0xf] %vm1704, %v2516
      %2597 = vst.msk [vmem:[#allocation3 + $0x154] sm:$0xf] %vm1704, %v2518
      %2598 = vst.msk [vmem:[#allocation3 + $0x160] sm:$0xf] %vm1704, %v2520
      %2599 = vst.msk [vmem:[#allocation3 + $0x16c] sm:$0xf] %vm1704, %v2522
      %2600 = vst.msk [vmem:[#allocation3 + $0x178] sm:$0xf] %vm1704, %v2524
      %2601 = vst.msk [vmem:[#allocation3 + $0x184] sm:$0xf] %vm1704, %v2526
      %2602 = vst.msk [vmem:[#allocation3 + $0x190] sm:$0xf] %vm1704, %v2528
      %2603 = vst.msk [vmem:[#allocation3 + $0x19c] sm:$0xf] %vm1704, %v2530
      %2604 = vst.msk [vmem:[#allocation3 + $0x1a8] sm:$0xf] %vm1704, %v2532
      %v2605 = vld [vmem:[#allocation2 + $0x26] sm:$0xff]
      %v2606 = vld [vmem:[#allocation2 + $0x2e] sm:$0xff]
      %v2607 = vld [vmem:[#allocation2 + $0x36] sm:$0xff]
      %v2608 = vld [vmem:[#allocation2 + $0x3e] sm:$0xff]
      %v2609 = vld [vmem:[#allocation2 + $0x46] sm:$0xff]
      %v2610 = vld [vmem:[#allocation2 + $0x4e] sm:$0xff]
      %v2611 = vld [vmem:[#allocation2 + $0x56] sm:$0xff]
      %v2612 = vld [vmem:[#allocation2 + $0x5e] sm:$0xff]
      %v2613 = vld [vmem:[#allocation2 + $0x66] sm:$0xff]
      %v2614 = vld [vmem:[#allocation2 + $0x6e] sm:$0xff]
      %v2615 = vld [vmem:[#allocation2 + $0x76] sm:$0xff]
      %v2616 = vld [vmem:[#allocation2 + $0x7e] sm:$0xff]
      %v2617 = vld [vmem:[#allocation2 + $0x86] sm:$0xff]
      %v2618 = vld [vmem:[#allocation2 + $0x8e] sm:$0xff]
      %v2619 = vld [vmem:[#allocation2 + $0x96] sm:$0xff]
      %v2620 = vld [vmem:[#allocation2 + $0x9e] sm:$0xff]
      %v2621 = vld [vmem:[#allocation2 + $0xa6] sm:$0xff]
      %v2622 = vld [vmem:[#allocation2 + $0xae] sm:$0xff]
      %v2623 = vld [vmem:[#allocation2 + $0xb6] sm:$0xff]
      %v2624 = vld [vmem:[#allocation2 + $0xbe] sm:$0xff]
      %v2625 = vld [vmem:[#allocation2 + $0xc6] sm:$0xff]
      %v2626 = vld [vmem:[#allocation2 + $0xce] sm:$0xff]
      %v2627 = vld [vmem:[#allocation2 + $0xd6] sm:$0xff]
      %v2628 = vld [vmem:[#allocation2 + $0xde] sm:$0xff]
      %v2629 = vld [vmem:[#allocation2 + $0xe6] sm:$0xff]
      %v2630 = vld [vmem:[#allocation2 + $0xee] sm:$0xff]
      %v2631 = vld [vmem:[#allocation2 + $0xf6] sm:$0xff]
      %v2632 = vld [vmem:[#allocation2 + $0xfe] sm:$0xff]
      %v2633 = vld [vmem:[#allocation2 + $0x106] sm:$0xff]
      %v2634 = vld [vmem:[#allocation2 + $0x10e] sm:$0xff]
      %v2635 = vld [vmem:[#allocation2 + $0x116] sm:$0xff]
      %v2636 = vld [vmem:[#allocation2 + $0x11e] sm:$0xff]
      %v2637 = vld [vmem:[#allocation2 + $0x126] sm:$0xff]
      %v2638 = vld [vmem:[#allocation2 + $0x12e] sm:$0xff]
      %v2639 = vld [vmem:[#allocation2 + $0x136] sm:$0xff]
      %v2640 = vld [vmem:[#allocation2 + $0x13e] sm:$0xff]
      %v2641 = vpack.c.bf16 %v2605, %v2605
      %v2642 = vpack.c.bf16 %v2606, %v2606
      %v2643 = vpack.c.bf16 %v2607, %v2607
      %v2644 = vpack.c.bf16 %v2608, %v2608
      %v2645 = vpack.c.bf16 %v2609, %v2609
      %v2646 = vpack.c.bf16 %v2610, %v2610
      %v2647 = vpack.c.bf16 %v2611, %v2611
      %v2648 = vpack.c.bf16 %v2612, %v2612
      %v2649 = vpack.c.bf16 %v2613, %v2613
      %v2650 = vpack.c.bf16 %v2614, %v2614
      %v2651 = vpack.c.bf16 %v2615, %v2615
      %v2652 = vpack.c.bf16 %v2616, %v2616
      %v2653 = vpack.c.bf16 %v2617, %v2617
      %v2654 = vpack.c.bf16 %v2618, %v2618
      %v2655 = vpack.c.bf16 %v2619, %v2619
      %v2656 = vpack.c.bf16 %v2620, %v2620
      %v2657 = vpack.c.bf16 %v2621, %v2621
      %v2658 = vpack.c.bf16 %v2622, %v2622
      %v2659 = vpack.c.bf16 %v2623, %v2623
      %v2660 = vpack.c.bf16 %v2624, %v2624
      %v2661 = vpack.c.bf16 %v2625, %v2625
      %v2662 = vpack.c.bf16 %v2626, %v2626
      %v2663 = vpack.c.bf16 %v2627, %v2627
      %v2664 = vpack.c.bf16 %v2628, %v2628
      %v2665 = vpack.c.bf16 %v2629, %v2629
      %v2666 = vpack.c.bf16 %v2630, %v2630
      %v2667 = vpack.c.bf16 %v2631, %v2631
      %v2668 = vpack.c.bf16 %v2632, %v2632
      %v2669 = vpack.c.bf16 %v2633, %v2633
      %v2670 = vpack.c.bf16 %v2634, %v2634
      %v2671 = vpack.c.bf16 %v2635, %v2635
      %v2672 = vpack.c.bf16 %v2636, %v2636
      %v2673 = vpack.c.bf16 %v2637, %v2637
      %v2674 = vpack.c.bf16 %v2638, %v2638
      %v2675 = vpack.c.bf16 %v2639, %v2639
      %v2676 = vpack.c.bf16 %v2640, %v2640
      %2677 = vst.msk [vmem:[#allocation3 + $0x8] sm:$0xf] %vm945, %v2641
      %2678 = vst.msk [vmem:[#allocation3 + $0x14] sm:$0xf] %vm945, %v2642
      %2679 = vst.msk [vmem:[#allocation3 + $0x20] sm:$0xf] %vm945, %v2643
      %2680 = vst.msk [vmem:[#allocation3 + $0x2c] sm:$0xf] %vm945, %v2644
      %2681 = vst.msk [vmem:[#allocation3 + $0x38] sm:$0xf] %vm945, %v2645
      %2682 = vst.msk [vmem:[#allocation3 + $0x44] sm:$0xf] %vm945, %v2646
      %2683 = vst.msk [vmem:[#allocation3 + $0x50] sm:$0xf] %vm945, %v2647
      %2684 = vst.msk [vmem:[#allocation3 + $0x5c] sm:$0xf] %vm945, %v2648
      %2685 = vst.msk [vmem:[#allocation3 + $0x68] sm:$0xf] %vm945, %v2649
      %2686 = vst.msk [vmem:[#allocation3 + $0x74] sm:$0xf] %vm945, %v2650
      %2687 = vst.msk [vmem:[#allocation3 + $0x80] sm:$0xf] %vm945, %v2651
      %2688 = vst.msk [vmem:[#allocation3 + $0x8c] sm:$0xf] %vm945, %v2652
      %2689 = vst.msk [vmem:[#allocation3 + $0x98] sm:$0xf] %vm945, %v2653
      %2690 = vst.msk [vmem:[#allocation3 + $0xa4] sm:$0xf] %vm945, %v2654
      %2691 = vst.msk [vmem:[#allocation3 + $0xb0] sm:$0xf] %vm945, %v2655
      %2692 = vst.msk [vmem:[#allocation3 + $0xbc] sm:$0xf] %vm945, %v2656
      %2693 = vst.msk [vmem:[#allocation3 + $0xc8] sm:$0xf] %vm945, %v2657
      %2694 = vst.msk [vmem:[#allocation3 + $0xd4] sm:$0xf] %vm945, %v2658
      %2695 = vst.msk [vmem:[#allocation3 + $0xe0] sm:$0xf] %vm945, %v2659
      %2696 = vst.msk [vmem:[#allocation3 + $0xec] sm:$0xf] %vm945, %v2660
      %2697 = vst.msk [vmem:[#allocation3 + $0xf8] sm:$0xf] %vm945, %v2661
      %2698 = vst.msk [vmem:[#allocation3 + $0x104] sm:$0xf] %vm945, %v2662
      %2699 = vst.msk [vmem:[#allocation3 + $0x110] sm:$0xf] %vm945, %v2663
      %2700 = vst.msk [vmem:[#allocation3 + $0x11c] sm:$0xf] %vm945, %v2664
      %2701 = vst.msk [vmem:[#allocation3 + $0x128] sm:$0xf] %vm945, %v2665
      %2702 = vst.msk [vmem:[#allocation3 + $0x134] sm:$0xf] %vm945, %v2666
      %2703 = vst.msk [vmem:[#allocation3 + $0x140] sm:$0xf] %vm945, %v2667
      %2704 = vst.msk [vmem:[#allocation3 + $0x14c] sm:$0xf] %vm945, %v2668
      %2705 = vst.msk [vmem:[#allocation3 + $0x158] sm:$0xf] %vm945, %v2669
      %2706 = vst.msk [vmem:[#allocation3 + $0x164] sm:$0xf] %vm945, %v2670
      %2707 = vst.msk [vmem:[#allocation3 + $0x170] sm:$0xf] %vm945, %v2671
      %2708 = vst.msk [vmem:[#allocation3 + $0x17c] sm:$0xf] %vm945, %v2672
      %2709 = vst.msk [vmem:[#allocation3 + $0x188] sm:$0xf] %vm945, %v2673
      %2710 = vst.msk [vmem:[#allocation3 + $0x194] sm:$0xf] %vm945, %v2674
      %2711 = vst.msk [vmem:[#allocation3 + $0x1a0] sm:$0xf] %vm945, %v2675
      %2712 = vst.msk [vmem:[#allocation3 + $0x1ac] sm:$0xf] %vm945, %v2676
      %v2713 = vld [vmem:[#allocation3] sm:$0xff]
      %v2714 = vld [vmem:[#allocation3 + $0x8] sm:$0xf]
      %v2715 = vld [vmem:[#allocation3 + $0xc] sm:$0xff]
      %v2716 = vld [vmem:[#allocation3 + $0x14] sm:$0xf]
      %v2717 = vld [vmem:[#allocation3 + $0x18] sm:$0xff]
      %v2718 = vld [vmem:[#allocation3 + $0x20] sm:$0xf]
      %v2719 = vld [vmem:[#allocation3 + $0x24] sm:$0xff]
      %v2720 = vld [vmem:[#allocation3 + $0x2c] sm:$0xf]
      %v2721 = vld [vmem:[#allocation3 + $0x30] sm:$0xff]
      %v2722 = vld [vmem:[#allocation3 + $0x38] sm:$0xf]
      %v2723 = vld [vmem:[#allocation3 + $0x3c] sm:$0xff]
      %v2724 = vld [vmem:[#allocation3 + $0x44] sm:$0xf]
      %v2725 = vld [vmem:[#allocation3 + $0x48] sm:$0xff]
      %v2726 = vld [vmem:[#allocation3 + $0x50] sm:$0xf]
      %v2727 = vld [vmem:[#allocation3 + $0x54] sm:$0xff]
      %v2728 = vld [vmem:[#allocation3 + $0x5c] sm:$0xf]
      %v2729 = vld [vmem:[#allocation3 + $0x60] sm:$0xff]
      %v2730 = vld [vmem:[#allocation3 + $0x68] sm:$0xf]
      %v2731 = vld [vmem:[#allocation3 + $0x6c] sm:$0xff]
      %v2732 = vld [vmem:[#allocation3 + $0x74] sm:$0xf]
      %v2733 = vld [vmem:[#allocation3 + $0x78] sm:$0xff]
      %v2734 = vld [vmem:[#allocation3 + $0x80] sm:$0xf]
      %v2735 = vld [vmem:[#allocation3 + $0x84] sm:$0xff]
      %v2736 = vld [vmem:[#allocation3 + $0x8c] sm:$0xf]
      %v2737 = vld [vmem:[#allocation3 + $0x90] sm:$0xff]
      %v2738 = vld [vmem:[#allocation3 + $0x98] sm:$0xf]
      %v2739 = vld [vmem:[#allocation3 + $0x9c] sm:$0xff]
      %v2740 = vld [vmem:[#allocation3 + $0xa4] sm:$0xf]
      %v2741 = vld [vmem:[#allocation3 + $0xa8] sm:$0xff]
      %v2742 = vld [vmem:[#allocation3 + $0xb0] sm:$0xf]
      %v2743 = vld [vmem:[#allocation3 + $0xb4] sm:$0xff]
      %v2744 = vld [vmem:[#allocation3 + $0xbc] sm:$0xf]
      %v2745 = vld [vmem:[#allocation3 + $0xc0] sm:$0xff]
      %v2746 = vld [vmem:[#allocation3 + $0xc8] sm:$0xf]
      %v2747 = vld [vmem:[#allocation3 + $0xcc] sm:$0xff]
      %v2748 = vld [vmem:[#allocation3 + $0xd4] sm:$0xf]
      %v2749 = vld [vmem:[#allocation3 + $0xd8] sm:$0xff]
      %v2750 = vld [vmem:[#allocation3 + $0xe0] sm:$0xf]
      %v2751 = vld [vmem:[#allocation3 + $0xe4] sm:$0xff]
      %v2752 = vld [vmem:[#allocation3 + $0xec] sm:$0xf]
      %v2753 = vld [vmem:[#allocation3 + $0xf0] sm:$0xff]
      %v2754 = vld [vmem:[#allocation3 + $0xf8] sm:$0xf]
      %v2755 = vld [vmem:[#allocation3 + $0xfc] sm:$0xff]
      %v2756 = vld [vmem:[#allocation3 + $0x104] sm:$0xf]
      %v2757 = vld [vmem:[#allocation3 + $0x108] sm:$0xff]
      %v2758 = vld [vmem:[#allocation3 + $0x110] sm:$0xf]
      %v2759 = vld [vmem:[#allocation3 + $0x114] sm:$0xff]
      %v2760 = vld [vmem:[#allocation3 + $0x11c] sm:$0xf]
      %v2761 = vld [vmem:[#allocation3 + $0x120] sm:$0xff]
      %v2762 = vld [vmem:[#allocation3 + $0x128] sm:$0xf]
      %v2763 = vld [vmem:[#allocation3 + $0x12c] sm:$0xff]
      %v2764 = vld [vmem:[#allocation3 + $0x134] sm:$0xf]
      %v2765 = vld [vmem:[#allocation3 + $0x138] sm:$0xff]
      %v2766 = vld [vmem:[#allocation3 + $0x140] sm:$0xf]
      %v2767 = vld [vmem:[#allocation3 + $0x144] sm:$0xff]
      %v2768 = vld [vmem:[#allocation3 + $0x14c] sm:$0xf]
      %v2769 = vld [vmem:[#allocation3 + $0x150] sm:$0xff]
      %v2770 = vld [vmem:[#allocation3 + $0x158] sm:$0xf]
      %v2771 = vld [vmem:[#allocation3 + $0x15c] sm:$0xff]
      %v2772 = vld [vmem:[#allocation3 + $0x164] sm:$0xf]
      %v2773 = vld [vmem:[#allocation3 + $0x168] sm:$0xff]
      %v2774 = vld [vmem:[#allocation3 + $0x170] sm:$0xf]
      %v2775 = vld [vmem:[#allocation3 + $0x174] sm:$0xff]
      %v2776 = vld [vmem:[#allocation3 + $0x17c] sm:$0xf]
      %v2777 = vld [vmem:[#allocation3 + $0x180] sm:$0xff]
      %v2778 = vld [vmem:[#allocation3 + $0x188] sm:$0xf]
      %v2779 = vld [vmem:[#allocation3 + $0x18c] sm:$0xff]
      %v2780 = vld [vmem:[#allocation3 + $0x194] sm:$0xf]
      %v2781 = vld [vmem:[#allocation3 + $0x198] sm:$0xff]
      %v2782 = vld [vmem:[#allocation3 + $0x1a0] sm:$0xf]
      %v2783 = vld [vmem:[#allocation3 + $0x1a4] sm:$0xff]
      %v2784 = vld [vmem:[#allocation3 + $0x1ac] sm:$0xf]
      %v2785 = vld [vmem:[%s4] sm:$0xf]
      %v2786 = vld [vmem:[%s4 + $0x4] sm:$0xf]
      %v2787 = vld [vmem:[%s4 + $0x8] sm:$0xf]
      %v2788 = vld [vmem:[%s4 + $0xc] sm:$0xf]
      %v2789 = vld [vmem:[%s4 + $0x10] sm:$0xf]
      %v2790 = vld [vmem:[%s4 + $0x14] sm:$0xf]
      %v2791 = vld [vmem:[%s4 + $0x18] sm:$0xf]
      %v2792 = vld [vmem:[%s4 + $0x1c] sm:$0xf]
      %v2793 = vld [vmem:[%s4 + $0x20] sm:$0xf]
      %v2794 = vld [vmem:[%s4 + $0x24] sm:$0xf]
      %v2795 = vld [vmem:[%s4 + $0x28] sm:$0xf]
      %v2796 = vld [vmem:[%s4 + $0x2c] sm:$0xf]
      %v2797 = vld [vmem:[%s4 + $0x30] sm:$0xf]
      %v2798 = vld [vmem:[%s4 + $0x34] sm:$0xf]
      %v2799 = vld [vmem:[%s4 + $0x38] sm:$0xf]
      %v2800 = vld [vmem:[%s4 + $0x3c] sm:$0xf]
      %v2801 = vld [vmem:[%s4 + $0x40] sm:$0xf]
      %v2802 = vld [vmem:[%s4 + $0x44] sm:$0xf]
      %v2803 = vld [vmem:[%s4 + $0x48] sm:$0xf]
      %v2804 = vld [vmem:[%s4 + $0x4c] sm:$0xf]
      %v2805 = vld [vmem:[%s4 + $0x50] sm:$0xf]
      %v2806 = vld [vmem:[%s4 + $0x54] sm:$0xf]
      %v2807 = vld [vmem:[%s4 + $0x58] sm:$0xf]
      %v2808 = vld [vmem:[%s4 + $0x5c] sm:$0xf]
      %v2809 = vld [vmem:[%s4 + $0x60] sm:$0xf]
      %v2810 = vld [vmem:[%s4 + $0x64] sm:$0xf]
      %v2811 = vld [vmem:[%s4 + $0x68] sm:$0xf]
      %v2812 = vld [vmem:[%s4 + $0x6c] sm:$0xf]
      %v2813 = vld [vmem:[%s4 + $0x70] sm:$0xf]
      %v2814 = vld [vmem:[%s4 + $0x74] sm:$0xf]
      %v2815 = vld [vmem:[%s4 + $0x78] sm:$0xf]
      %v2816 = vld [vmem:[%s4 + $0x7c] sm:$0xf]
      %v2817 = vld [vmem:[%s4 + $0x80] sm:$0xf]
      %v2818 = vld [vmem:[%s4 + $0x84] sm:$0xf]
      %v2819 = vld [vmem:[%s4 + $0x88] sm:$0xf]
      %v2820 = vld [vmem:[%s4 + $0x8c] sm:$0xf]
      %v2893 = vunpack.c.l.b16 %v2713
      %v2894 = vunpack.c.h.b16 %v2713
      %v2895 = vunpack.c.l.b16 %v2714
      %v2896 = vunpack.c.l.b16 %v2715
      %v2897 = vunpack.c.h.b16 %v2715
      %v2898 = vunpack.c.l.b16 %v2716
      %v2899 = vunpack.c.l.b16 %v2717
      %v2900 = vunpack.c.h.b16 %v2717
      %v2901 = vunpack.c.l.b16 %v2718
      %v2902 = vunpack.c.l.b16 %v2719
      %v2903 = vunpack.c.h.b16 %v2719
      %v2904 = vunpack.c.l.b16 %v2720
      %v2905 = vunpack.c.l.b16 %v2721
      %v2906 = vunpack.c.h.b16 %v2721
      %v2907 = vunpack.c.l.b16 %v2722
      %v2908 = vunpack.c.l.b16 %v2723
      %v2909 = vunpack.c.h.b16 %v2723
      %v2910 = vunpack.c.l.b16 %v2724
      %v2911 = vunpack.c.l.b16 %v2725
      %v2912 = vunpack.c.h.b16 %v2725
      %v2913 = vunpack.c.l.b16 %v2726
      %v2914 = vunpack.c.l.b16 %v2727
      %v2915 = vunpack.c.h.b16 %v2727
      %v2916 = vunpack.c.l.b16 %v2728
      %v2917 = vunpack.c.l.b16 %v2729
      %v2918 = vunpack.c.h.b16 %v2729
      %v2919 = vunpack.c.l.b16 %v2730
      %v2920 = vunpack.c.l.b16 %v2731
      %v2921 = vunpack.c.h.b16 %v2731
      %v2922 = vunpack.c.l.b16 %v2732
      %v2923 = vunpack.c.l.b16 %v2733
      %v2924 = vunpack.c.h.b16 %v2733
      %v2925 = vunpack.c.l.b16 %v2734
      %v2926 = vunpack.c.l.b16 %v2735
      %v2927 = vunpack.c.h.b16 %v2735
      %v2928 = vunpack.c.l.b16 %v2736
      %v2929 = vunpack.c.l.b16 %v2737
      %v2930 = vunpack.c.h.b16 %v2737
      %v2931 = vunpack.c.l.b16 %v2738
      %v2932 = vunpack.c.l.b16 %v2739
      %v2933 = vunpack.c.h.b16 %v2739
      %v2934 = vunpack.c.l.b16 %v2740
      %v2935 = vunpack.c.l.b16 %v2741
      %v2936 = vunpack.c.h.b16 %v2741
      %v2937 = vunpack.c.l.b16 %v2742
      %v2938 = vunpack.c.l.b16 %v2743
      %v2939 = vunpack.c.h.b16 %v2743
      %v2940 = vunpack.c.l.b16 %v2744
      %v2941 = vunpack.c.l.b16 %v2745
      %v2942 = vunpack.c.h.b16 %v2745
      %v2943 = vunpack.c.l.b16 %v2746
      %v2944 = vunpack.c.l.b16 %v2747
      %v2945 = vunpack.c.h.b16 %v2747
      %v2946 = vunpack.c.l.b16 %v2748
      %v2947 = vunpack.c.l.b16 %v2749
      %v2948 = vunpack.c.h.b16 %v2749
      %v2949 = vunpack.c.l.b16 %v2750
      %v2950 = vunpack.c.l.b16 %v2751
      %v2951 = vunpack.c.h.b16 %v2751
      %v2952 = vunpack.c.l.b16 %v2752
      %v2953 = vunpack.c.l.b16 %v2753
      %v2954 = vunpack.c.h.b16 %v2753
      %v2955 = vunpack.c.l.b16 %v2754
      %v2956 = vunpack.c.l.b16 %v2755
      %v2957 = vunpack.c.h.b16 %v2755
      %v2958 = vunpack.c.l.b16 %v2756
      %v2959 = vunpack.c.l.b16 %v2757
      %v2960 = vunpack.c.h.b16 %v2757
      %v2961 = vunpack.c.l.b16 %v2758
      %v2962 = vunpack.c.l.b16 %v2759
      %v2963 = vunpack.c.h.b16 %v2759
      %v2964 = vunpack.c.l.b16 %v2760
      %v2965 = vunpack.c.l.b16 %v2761
      %v2966 = vunpack.c.h.b16 %v2761
      %v2967 = vunpack.c.l.b16 %v2762
      %v2968 = vunpack.c.l.b16 %v2763
      %v2969 = vunpack.c.h.b16 %v2763
      %v2970 = vunpack.c.l.b16 %v2764
      %v2971 = vunpack.c.l.b16 %v2765
      %v2972 = vunpack.c.h.b16 %v2765
      %v2973 = vunpack.c.l.b16 %v2766
      %v2974 = vunpack.c.l.b16 %v2767
      %v2975 = vunpack.c.h.b16 %v2767
      %v2976 = vunpack.c.l.b16 %v2768
      %v2977 = vunpack.c.l.b16 %v2769
      %v2978 = vunpack.c.h.b16 %v2769
      %v2979 = vunpack.c.l.b16 %v2770
      %v2980 = vunpack.c.l.b16 %v2771
      %v2981 = vunpack.c.h.b16 %v2771
      %v2982 = vunpack.c.l.b16 %v2772
      %v2983 = vunpack.c.l.b16 %v2773
      %v2984 = vunpack.c.h.b16 %v2773
      %v2985 = vunpack.c.l.b16 %v2774
      %v2986 = vunpack.c.l.b16 %v2775
      %v2987 = vunpack.c.h.b16 %v2775
      %v2988 = vunpack.c.l.b16 %v2776
      %v2989 = vunpack.c.l.b16 %v2777
      %v2990 = vunpack.c.h.b16 %v2777
      %v2991 = vunpack.c.l.b16 %v2778
      %v2992 = vunpack.c.l.b16 %v2779
      %v2993 = vunpack.c.h.b16 %v2779
      %v2994 = vunpack.c.l.b16 %v2780
      %v2995 = vunpack.c.l.b16 %v2781
      %v2996 = vunpack.c.h.b16 %v2781
      %v2997 = vunpack.c.l.b16 %v2782
      %v2998 = vunpack.c.l.b16 %v2783
      %v2999 = vunpack.c.h.b16 %v2783
      %v3000 = vunpack.c.l.b16 %v2784
      %v3001 = vpack.c.b16 %v2896, %v2893
      %v3002 = vpack.c.b16 %v2897, %v2894
      %v3003 = vpack.c.b16 %v2898, %v2895
      %v3004 = vpack.c.b16 %v2902, %v2899
      %v3005 = vpack.c.b16 %v2903, %v2900
      %v3006 = vpack.c.b16 %v2904, %v2901
      %v3007 = vpack.c.b16 %v2908, %v2905
      %v3008 = vpack.c.b16 %v2909, %v2906
      %v3009 = vpack.c.b16 %v2910, %v2907
      %v3010 = vpack.c.b16 %v2914, %v2911
      %v3011 = vpack.c.b16 %v2915, %v2912
      %v3012 = vpack.c.b16 %v2916, %v2913
      %v3013 = vpack.c.b16 %v2920, %v2917
      %v3014 = vpack.c.b16 %v2921, %v2918
      %v3015 = vpack.c.b16 %v2922, %v2919
      %v3016 = vpack.c.b16 %v2926, %v2923
      %v3017 = vpack.c.b16 %v2927, %v2924
      %v3018 = vpack.c.b16 %v2928, %v2925
      %v3019 = vpack.c.b16 %v2932, %v2929
      %v3020 = vpack.c.b16 %v2933, %v2930
      %v3021 = vpack.c.b16 %v2934, %v2931
      %v3022 = vpack.c.b16 %v2938, %v2935
      %v3023 = vpack.c.b16 %v2939, %v2936
      %v3024 = vpack.c.b16 %v2940, %v2937
      %v3025 = vpack.c.b16 %v2944, %v2941
      %v3026 = vpack.c.b16 %v2945, %v2942
      %v3027 = vpack.c.b16 %v2946, %v2943
      %v3028 = vpack.c.b16 %v2950, %v2947
      %v3029 = vpack.c.b16 %v2951, %v2948
      %v3030 = vpack.c.b16 %v2952, %v2949
      %v3031 = vpack.c.b16 %v2956, %v2953
      %v3032 = vpack.c.b16 %v2957, %v2954
      %v3033 = vpack.c.b16 %v2958, %v2955
      %v3034 = vpack.c.b16 %v2962, %v2959
      %v3035 = vpack.c.b16 %v2963, %v2960
      %v3036 = vpack.c.b16 %v2964, %v2961
      %v3037 = vpack.c.b16 %v2968, %v2965
      %v3038 = vpack.c.b16 %v2969, %v2966
      %v3039 = vpack.c.b16 %v2970, %v2967
      %v3040 = vpack.c.b16 %v2974, %v2971
      %v3041 = vpack.c.b16 %v2975, %v2972
      %v3042 = vpack.c.b16 %v2976, %v2973
      %v3043 = vpack.c.b16 %v2980, %v2977
      %v3044 = vpack.c.b16 %v2981, %v2978
      %v3045 = vpack.c.b16 %v2982, %v2979
      %v3046 = vpack.c.b16 %v2986, %v2983
      %v3047 = vpack.c.b16 %v2987, %v2984
      %v3048 = vpack.c.b16 %v2988, %v2985
      %v3049 = vpack.c.b16 %v2992, %v2989
      %v3050 = vpack.c.b16 %v2993, %v2990
      %v3051 = vpack.c.b16 %v2994, %v2991
      %v3052 = vpack.c.b16 %v2998, %v2995
      %v3053 = vpack.c.b16 %v2999, %v2996
      %v3054 = vpack.c.b16 %v3000, %v2997
      %v3127 = vunpack.c.l.b16 %v2785
      %v3128 = vunpack.c.l.b16 %v2786
      %v3129 = vunpack.c.l.b16 %v2787
      %v3130 = vunpack.c.l.b16 %v2788
      %v3131 = vunpack.c.l.b16 %v2789
      %v3132 = vunpack.c.l.b16 %v2790
      %v3133 = vunpack.c.l.b16 %v2791
      %v3134 = vunpack.c.l.b16 %v2792
      %v3135 = vunpack.c.l.b16 %v2793
      %v3136 = vunpack.c.l.b16 %v2794
      %v3137 = vunpack.c.l.b16 %v2795
      %v3138 = vunpack.c.l.b16 %v2796
      %v3139 = vunpack.c.l.b16 %v2797
      %v3140 = vunpack.c.l.b16 %v2798
      %v3141 = vunpack.c.l.b16 %v2799
      %v3142 = vunpack.c.l.b16 %v2800
      %v3143 = vunpack.c.l.b16 %v2801
      %v3144 = vunpack.c.l.b16 %v2802
      %v3145 = vunpack.c.l.b16 %v2803
      %v3146 = vunpack.c.l.b16 %v2804
      %v3147 = vunpack.c.l.b16 %v2805
      %v3148 = vunpack.c.l.b16 %v2806
      %v3149 = vunpack.c.l.b16 %v2807
      %v3150 = vunpack.c.l.b16 %v2808
      %v3151 = vunpack.c.l.b16 %v2809
      %v3152 = vunpack.c.l.b16 %v2810
      %v3153 = vunpack.c.l.b16 %v2811
      %v3154 = vunpack.c.l.b16 %v2812
      %v3155 = vunpack.c.l.b16 %v2813
      %v3156 = vunpack.c.l.b16 %v2814
      %v3157 = vunpack.c.l.b16 %v2815
      %v3158 = vunpack.c.l.b16 %v2816
      %v3159 = vunpack.c.l.b16 %v2817
      %v3160 = vunpack.c.l.b16 %v2818
      %v3161 = vunpack.c.l.b16 %v2819
      %v3162 = vunpack.c.l.b16 %v2820
      %v3163 = vpack.c.b16 %v3128, %v3127
      %v3164 = vpack.c.b16 %v3130, %v3129
      %v3165 = vpack.c.b16 %v3132, %v3131
      %v3166 = vpack.c.b16 %v3134, %v3133
      %v3167 = vpack.c.b16 %v3136, %v3135
      %v3168 = vpack.c.b16 %v3138, %v3137
      %v3169 = vpack.c.b16 %v3140, %v3139
      %v3170 = vpack.c.b16 %v3142, %v3141
      %v3171 = vpack.c.b16 %v3144, %v3143
      %v3172 = vpack.c.b16 %v3146, %v3145
      %v3173 = vpack.c.b16 %v3148, %v3147
      %v3174 = vpack.c.b16 %v3150, %v3149
      %v3175 = vpack.c.b16 %v3152, %v3151
      %v3176 = vpack.c.b16 %v3154, %v3153
      %v3177 = vpack.c.b16 %v3156, %v3155
      %v3178 = vpack.c.b16 %v3158, %v3157
      %v3179 = vpack.c.b16 %v3160, %v3159
      %v3180 = vpack.c.b16 %v3162, %v3161
      %v3200 = vsel %vm828, %v3003, 0
      %v3203 = vsel %vm828, %v3006, 0
      %v3206 = vsel %vm828, %v3009, 0
      %v3209 = vsel %vm828, %v3012, 0
      %v3212 = vsel %vm828, %v3015, 0
      %v3215 = vsel %vm828, %v3018, 0
      %v3218 = vsel %vm828, %v3021, 0
      %v3221 = vsel %vm828, %v3024, 0
      %v3224 = vsel %vm828, %v3027, 0
      %v3227 = vsel %vm828, %v3030, 0
      %v3230 = vsel %vm828, %v3033, 0
      %v3233 = vsel %vm828, %v3036, 0
      %v3236 = vsel %vm828, %v3039, 0
      %v3239 = vsel %vm828, %v3042, 0
      %v3242 = vsel %vm828, %v3045, 0
      %v3245 = vsel %vm828, %v3048, 0
      %v3248 = vsel %vm828, %v3051, 0
      %v3251 = vsel %vm828, %v3054, 0
      %3253 = vmatpush.bf16.msra.mxu0 %v3170
      %3254 = vmatpush.bf16.msra.mxu0 %v3169
      %3255 = vmatpush.bf16.msra.mxu0 %v3168
      %3256 = vmatpush.bf16.msra.mxu0 %v3167
      %3257 = vmatpush.bf16.msra.mxu0 %v3166
      %3258 = vmatpush.bf16.msra.mxu0 %v3165
      %3259 = vmatpush.bf16.msra.mxu0 %v3164
      %3260 = vmatpush.bf16.msra.mxu0 %v3163
      %3261 = vmatmul.bf16.gmra.mxu0 %v3001
      %v3262 = vpop.f32.mrf.mxu0
      %v3263 = vadd.f32 0.0, %v3262
      %v3264 = vpop.f32.mrf.mxu0
      %v3265 = vadd.f32 0.0, %v3264
      %3266 = vmatmul.bf16.gmra.mxu0 %v3004
      %v3267 = vpop.f32.mrf.mxu0
      %v3268 = vadd.f32 0.0, %v3267
      %v3269 = vpop.f32.mrf.mxu0
      %v3270 = vadd.f32 0.0, %v3269
      %3271 = vmatmul.bf16.gmra.mxu0 %v3007
      %v3272 = vpop.f32.mrf.mxu0
      %v3273 = vadd.f32 0.0, %v3272
      %v3274 = vpop.f32.mrf.mxu0
      %v3275 = vadd.f32 0.0, %v3274
      %3276 = vmatmul.bf16.gmra.mxu0 %v3010
      %v3277 = vpop.f32.mrf.mxu0
      %v3278 = vadd.f32 0.0, %v3277
      %v3279 = vpop.f32.mrf.mxu0
      %v3280 = vadd.f32 0.0, %v3279
      %3281 = vmatmul.bf16.gmra.mxu0 %v3013
      %v3282 = vpop.f32.mrf.mxu0
      %v3283 = vadd.f32 0.0, %v3282
      %v3284 = vpop.f32.mrf.mxu0
      %v3285 = vadd.f32 0.0, %v3284
      %3286 = vmatmul.bf16.gmra.mxu0 %v3016
      %v3287 = vpop.f32.mrf.mxu0
      %v3288 = vadd.f32 0.0, %v3287
      %v3289 = vpop.f32.mrf.mxu0
      %v3290 = vadd.f32 0.0, %v3289
      %3291 = vmatmul.bf16.gmra.mxu0 %v3019
      %v3292 = vpop.f32.mrf.mxu0
      %v3293 = vadd.f32 0.0, %v3292
      %v3294 = vpop.f32.mrf.mxu0
      %v3295 = vadd.f32 0.0, %v3294
      %3296 = vmatmul.bf16.gmra.mxu0 %v3022
      %v3297 = vpop.f32.mrf.mxu0
      %v3298 = vadd.f32 0.0, %v3297
      %v3299 = vpop.f32.mrf.mxu0
      %v3300 = vadd.f32 0.0, %v3299
      %3301 = vmatmul.bf16.gmra.mxu0 %v3025
      %v3302 = vpop.f32.mrf.mxu0
      %v3303 = vadd.f32 0.0, %v3302
      %v3304 = vpop.f32.mrf.mxu0
      %v3305 = vadd.f32 0.0, %v3304
      %3306 = vmatmul.bf16.gmra.mxu0 %v3028
      %v3307 = vpop.f32.mrf.mxu0
      %v3308 = vadd.f32 0.0, %v3307
      %v3309 = vpop.f32.mrf.mxu0
      %v3310 = vadd.f32 0.0, %v3309
      %3311 = vmatmul.bf16.gmra.mxu0 %v3031
      %v3312 = vpop.f32.mrf.mxu0
      %v3313 = vadd.f32 0.0, %v3312
      %v3314 = vpop.f32.mrf.mxu0
      %v3315 = vadd.f32 0.0, %v3314
      %3316 = vmatmul.bf16.gmra.mxu0 %v3034
      %v3317 = vpop.f32.mrf.mxu0
      %v3318 = vadd.f32 0.0, %v3317
      %v3319 = vpop.f32.mrf.mxu0
      %v3320 = vadd.f32 0.0, %v3319
      %3321 = vmatmul.bf16.gmra.mxu0 %v3037
      %v3322 = vpop.f32.mrf.mxu0
      %v3323 = vadd.f32 0.0, %v3322
      %v3324 = vpop.f32.mrf.mxu0
      %v3325 = vadd.f32 0.0, %v3324
      %3326 = vmatmul.bf16.gmra.mxu0 %v3040
      %v3327 = vpop.f32.mrf.mxu0
      %v3328 = vadd.f32 0.0, %v3327
      %v3329 = vpop.f32.mrf.mxu0
      %v3330 = vadd.f32 0.0, %v3329
      %3331 = vmatmul.bf16.gmra.mxu0 %v3043
      %v3332 = vpop.f32.mrf.mxu0
      %v3333 = vadd.f32 0.0, %v3332
      %v3334 = vpop.f32.mrf.mxu0
      %v3335 = vadd.f32 0.0, %v3334
      %3336 = vmatmul.bf16.gmra.mxu0 %v3046
      %v3337 = vpop.f32.mrf.mxu0
      %v3338 = vadd.f32 0.0, %v3337
      %v3339 = vpop.f32.mrf.mxu0
      %v3340 = vadd.f32 0.0, %v3339
      %3341 = vmatmul.bf16.gmra.mxu0 %v3049
      %v3342 = vpop.f32.mrf.mxu0
      %v3343 = vadd.f32 0.0, %v3342
      %v3344 = vpop.f32.mrf.mxu0
      %v3345 = vadd.f32 0.0, %v3344
      %3346 = vmatmul.bf16.gmra.mxu0 %v3052
      %v3347 = vpop.f32.mrf.mxu0
      %v3348 = vadd.f32 0.0, %v3347
      %v3349 = vpop.f32.mrf.mxu0
      %v3350 = vadd.f32 0.0, %v3349
      %3351 = vdwg.mxu0
      %3352 = vmatpush.bf16.msra.mxu0 %v3178
      %3353 = vmatpush.bf16.msra.mxu0 %v3177
      %3354 = vmatpush.bf16.msra.mxu0 %v3176
      %3355 = vmatpush.bf16.msra.mxu0 %v3175
      %3356 = vmatpush.bf16.msra.mxu0 %v3174
      %3357 = vmatpush.bf16.msra.mxu0 %v3173
      %3358 = vmatpush.bf16.msra.mxu0 %v3172
      %3359 = vmatpush.bf16.msra.mxu0 %v3171
      %3360 = vmatmul.bf16.gmra.mxu0 %v3002
      %v3361 = vpop.f32.mrf.mxu0
      %v3362 = vadd.f32 %v3263, %v3361
      %v3363 = vpop.f32.mrf.mxu0
      %v3364 = vadd.f32 %v3265, %v3363
      %3365 = vmatmul.bf16.gmra.mxu0 %v3005
      %v3366 = vpop.f32.mrf.mxu0
      %v3367 = vadd.f32 %v3268, %v3366
      %v3368 = vpop.f32.mrf.mxu0
      %v3369 = vadd.f32 %v3270, %v3368
      %3370 = vmatmul.bf16.gmra.mxu0 %v3008
      %v3371 = vpop.f32.mrf.mxu0
      %v3372 = vadd.f32 %v3273, %v3371
      %v3373 = vpop.f32.mrf.mxu0
      %v3374 = vadd.f32 %v3275, %v3373
      %3375 = vmatmul.bf16.gmra.mxu0 %v3011
      %v3376 = vpop.f32.mrf.mxu0
      %v3377 = vadd.f32 %v3278, %v3376
      %v3378 = vpop.f32.mrf.mxu0
      %v3379 = vadd.f32 %v3280, %v3378
      %3380 = vmatmul.bf16.gmra.mxu0 %v3014
      %v3381 = vpop.f32.mrf.mxu0
      %v3382 = vadd.f32 %v3283, %v3381
      %v3383 = vpop.f32.mrf.mxu0
      %v3384 = vadd.f32 %v3285, %v3383
      %3385 = vmatmul.bf16.gmra.mxu0 %v3017
      %v3386 = vpop.f32.mrf.mxu0
      %v3387 = vadd.f32 %v3288, %v3386
      %v3388 = vpop.f32.mrf.mxu0
      %v3389 = vadd.f32 %v3290, %v3388
      %3390 = vmatmul.bf16.gmra.mxu0 %v3020
      %v3391 = vpop.f32.mrf.mxu0
      %v3392 = vadd.f32 %v3293, %v3391
      %v3393 = vpop.f32.mrf.mxu0
      %v3394 = vadd.f32 %v3295, %v3393
      %3395 = vmatmul.bf16.gmra.mxu0 %v3023
      %v3396 = vpop.f32.mrf.mxu0
      %v3397 = vadd.f32 %v3298, %v3396
      %v3398 = vpop.f32.mrf.mxu0
      %v3399 = vadd.f32 %v3300, %v3398
      %3400 = vmatmul.bf16.gmra.mxu0 %v3026
      %v3401 = vpop.f32.mrf.mxu0
      %v3402 = vadd.f32 %v3303, %v3401
      %v3403 = vpop.f32.mrf.mxu0
      %v3404 = vadd.f32 %v3305, %v3403
      %3405 = vmatmul.bf16.gmra.mxu0 %v3029
      %v3406 = vpop.f32.mrf.mxu0
      %v3407 = vadd.f32 %v3308, %v3406
      %v3408 = vpop.f32.mrf.mxu0
      %v3409 = vadd.f32 %v3310, %v3408
      %3410 = vmatmul.bf16.gmra.mxu0 %v3032
      %v3411 = vpop.f32.mrf.mxu0
      %v3412 = vadd.f32 %v3313, %v3411
      %v3413 = vpop.f32.mrf.mxu0
      %v3414 = vadd.f32 %v3315, %v3413
      %3415 = vmatmul.bf16.gmra.mxu0 %v3035
      %v3416 = vpop.f32.mrf.mxu0
      %v3417 = vadd.f32 %v3318, %v3416
      %v3418 = vpop.f32.mrf.mxu0
      %v3419 = vadd.f32 %v3320, %v3418
      %3420 = vmatmul.bf16.gmra.mxu0 %v3038
      %v3421 = vpop.f32.mrf.mxu0
      %v3422 = vadd.f32 %v3323, %v3421
      %v3423 = vpop.f32.mrf.mxu0
      %v3424 = vadd.f32 %v3325, %v3423
      %3425 = vmatmul.bf16.gmra.mxu0 %v3041
      %v3426 = vpop.f32.mrf.mxu0
      %v3427 = vadd.f32 %v3328, %v3426
      %v3428 = vpop.f32.mrf.mxu0
      %v3429 = vadd.f32 %v3330, %v3428
      %3430 = vmatmul.bf16.gmra.mxu0 %v3044
      %v3431 = vpop.f32.mrf.mxu0
      %v3432 = vadd.f32 %v3333, %v3431
      %v3433 = vpop.f32.mrf.mxu0
      %v3434 = vadd.f32 %v3335, %v3433
      %3435 = vmatmul.bf16.gmra.mxu0 %v3047
      %v3436 = vpop.f32.mrf.mxu0
      %v3437 = vadd.f32 %v3338, %v3436
      %v3438 = vpop.f32.mrf.mxu0
      %v3439 = vadd.f32 %v3340, %v3438
      %3440 = vmatmul.bf16.gmra.mxu0 %v3050
      %v3441 = vpop.f32.mrf.mxu0
      %v3442 = vadd.f32 %v3343, %v3441
      %v3443 = vpop.f32.mrf.mxu0
      %v3444 = vadd.f32 %v3345, %v3443
      %3445 = vmatmul.bf16.gmra.mxu0 %v3053
      %v3446 = vpop.f32.mrf.mxu0
      %v3447 = vadd.f32 %v3348, %v3446
      %v3448 = vpop.f32.mrf.mxu0
      %v3449 = vadd.f32 %v3350, %v3448
      %3450 = vdwg.mxu0
      %3451 = vmatpush.bf16.msra.mxu0 0
      %3452 = vmatpush.bf16.msra.mxu0 0
      %3453 = vmatpush.bf16.msra.mxu0 0
      %3454 = vmatpush.bf16.msra.mxu0 0
      %3455 = vmatpush.bf16.msra.mxu0 0
      %3456 = vmatpush.bf16.msra.mxu0 0
      %3457 = vmatpush.bf16.msra.mxu0 %v3180
      %3458 = vmatpush.bf16.msra.mxu0 %v3179
      %3459 = vmatmul.bf16.gmra.mxu0 %v3200
      %v3460 = vpop.f32.mrf.mxu0
      %v3461 = vadd.f32 %v3362, %v3460
      %v3462 = vpop.f32.mrf.mxu0
      %v3463 = vadd.f32 %v3364, %v3462
      %3464 = vmatmul.bf16.gmra.mxu0 %v3203
      %v3465 = vpop.f32.mrf.mxu0
      %v3466 = vadd.f32 %v3367, %v3465
      %v3467 = vpop.f32.mrf.mxu0
      %v3468 = vadd.f32 %v3369, %v3467
      %3469 = vmatmul.bf16.gmra.mxu0 %v3206
      %v3470 = vpop.f32.mrf.mxu0
      %v3471 = vadd.f32 %v3372, %v3470
      %v3472 = vpop.f32.mrf.mxu0
      %v3473 = vadd.f32 %v3374, %v3472
      %3474 = vmatmul.bf16.gmra.mxu0 %v3209
      %v3475 = vpop.f32.mrf.mxu0
      %v3476 = vadd.f32 %v3377, %v3475
      %v3477 = vpop.f32.mrf.mxu0
      %v3478 = vadd.f32 %v3379, %v3477
      %3479 = vmatmul.bf16.gmra.mxu0 %v3212
      %v3480 = vpop.f32.mrf.mxu0
      %v3481 = vadd.f32 %v3382, %v3480
      %v3482 = vpop.f32.mrf.mxu0
      %v3483 = vadd.f32 %v3384, %v3482
      %3484 = vmatmul.bf16.gmra.mxu0 %v3215
      %v3485 = vpop.f32.mrf.mxu0
      %v3486 = vadd.f32 %v3387, %v3485
      %v3487 = vpop.f32.mrf.mxu0
      %v3488 = vadd.f32 %v3389, %v3487
      %3489 = vmatmul.bf16.gmra.mxu0 %v3218
      %v3490 = vpop.f32.mrf.mxu0
      %v3491 = vadd.f32 %v3392, %v3490
      %v3492 = vpop.f32.mrf.mxu0
      %v3493 = vadd.f32 %v3394, %v3492
      %3494 = vmatmul.bf16.gmra.mxu0 %v3221
      %v3495 = vpop.f32.mrf.mxu0
      %v3496 = vadd.f32 %v3397, %v3495
      %v3497 = vpop.f32.mrf.mxu0
      %v3498 = vadd.f32 %v3399, %v3497
      %3499 = vmatmul.bf16.gmra.mxu0 %v3224
      %v3500 = vpop.f32.mrf.mxu0
      %v3501 = vadd.f32 %v3402, %v3500
      %v3502 = vpop.f32.mrf.mxu0
      %v3503 = vadd.f32 %v3404, %v3502
      %3504 = vmatmul.bf16.gmra.mxu0 %v3227
      %v3505 = vpop.f32.mrf.mxu0
      %v3506 = vadd.f32 %v3407, %v3505
      %v3507 = vpop.f32.mrf.mxu0
      %v3508 = vadd.f32 %v3409, %v3507
      %3509 = vmatmul.bf16.gmra.mxu0 %v3230
      %v3510 = vpop.f32.mrf.mxu0
      %v3511 = vadd.f32 %v3412, %v3510
      %v3512 = vpop.f32.mrf.mxu0
      %v3513 = vadd.f32 %v3414, %v3512
      %3514 = vmatmul.bf16.gmra.mxu0 %v3233
      %v3515 = vpop.f32.mrf.mxu0
      %v3516 = vadd.f32 %v3417, %v3515
      %v3517 = vpop.f32.mrf.mxu0
      %v3518 = vadd.f32 %v3419, %v3517
      %3519 = vmatmul.bf16.gmra.mxu0 %v3236
      %v3520 = vpop.f32.mrf.mxu0
      %v3521 = vadd.f32 %v3422, %v3520
      %v3522 = vpop.f32.mrf.mxu0
      %v3523 = vadd.f32 %v3424, %v3522
      %3524 = vmatmul.bf16.gmra.mxu0 %v3239
      %v3525 = vpop.f32.mrf.mxu0
      %v3526 = vadd.f32 %v3427, %v3525
      %v3527 = vpop.f32.mrf.mxu0
      %v3528 = vadd.f32 %v3429, %v3527
      %3529 = vmatmul.bf16.gmra.mxu0 %v3242
      %v3530 = vpop.f32.mrf.mxu0
      %v3531 = vadd.f32 %v3432, %v3530
      %v3532 = vpop.f32.mrf.mxu0
      %v3533 = vadd.f32 %v3434, %v3532
      %3534 = vmatmul.bf16.gmra.mxu0 %v3245
      %v3535 = vpop.f32.mrf.mxu0
      %v3536 = vadd.f32 %v3437, %v3535
      %v3537 = vpop.f32.mrf.mxu0
      %v3538 = vadd.f32 %v3439, %v3537
      %3539 = vmatmul.bf16.gmra.mxu0 %v3248
      %v3540 = vpop.f32.mrf.mxu0
      %v3541 = vadd.f32 %v3442, %v3540
      %v3542 = vpop.f32.mrf.mxu0
      %v3543 = vadd.f32 %v3444, %v3542
      %3544 = vmatmul.bf16.gmra.mxu0 %v3251
      %v3545 = vpop.f32.mrf.mxu0
      %v3546 = vadd.f32 %v3447, %v3545
      %v3547 = vpop.f32.mrf.mxu0
      %v3548 = vadd.f32 %v3449, %v3547
      %3549 = vdwg.mxu0
      %v3550 = vld [vmem:[%s5] sm:$0x1]
      %v3552 = vperm.slane %v3550, 0
      %v3554 = vmul.f32 %v3461, %v3552
      %v3555 = vmul.f32 %v3463, %v3552
      %v3556 = vmul.f32 %v3466, %v3552
      %v3557 = vmul.f32 %v3468, %v3552
      %v3558 = vmul.f32 %v3471, %v3552
      %v3559 = vmul.f32 %v3473, %v3552
      %v3560 = vmul.f32 %v3476, %v3552
      %v3561 = vmul.f32 %v3478, %v3552
      %v3562 = vmul.f32 %v3481, %v3552
      %v3563 = vmul.f32 %v3483, %v3552
      %v3564 = vmul.f32 %v3486, %v3552
      %v3565 = vmul.f32 %v3488, %v3552
      %v3566 = vmul.f32 %v3491, %v3552
      %v3567 = vmul.f32 %v3493, %v3552
      %v3568 = vmul.f32 %v3496, %v3552
      %v3569 = vmul.f32 %v3498, %v3552
      %v3570 = vmul.f32 %v3501, %v3552
      %v3571 = vmul.f32 %v3503, %v3552
      %v3572 = vmul.f32 %v3506, %v3552
      %v3573 = vmul.f32 %v3508, %v3552
      %v3574 = vmul.f32 %v3511, %v3552
      %v3575 = vmul.f32 %v3513, %v3552
      %v3576 = vmul.f32 %v3516, %v3552
      %v3577 = vmul.f32 %v3518, %v3552
      %v3578 = vmul.f32 %v3521, %v3552
      %v3579 = vmul.f32 %v3523, %v3552
      %v3580 = vmul.f32 %v3526, %v3552
      %v3581 = vmul.f32 %v3528, %v3552
      %v3582 = vmul.f32 %v3531, %v3552
      %v3583 = vmul.f32 %v3533, %v3552
      %v3584 = vmul.f32 %v3536, %v3552
      %v3585 = vmul.f32 %v3538, %v3552
      %v3586 = vmul.f32 %v3541, %v3552
      %v3587 = vmul.f32 %v3543, %v3552
      %v3588 = vmul.f32 %v3546, %v3552
      %v3589 = vmul.f32 %v3548, %v3552
      %v3590 = vld [vmem:[%s6] sm:$0x1]
      %v3592 = vperm.slane %v3590, 0
      %v3594 = vadd.f32 %v3554, %v3592
      %v3595 = vadd.f32 %v3555, %v3592
      %v3596 = vadd.f32 %v3556, %v3592
      %v3597 = vadd.f32 %v3557, %v3592
      %v3598 = vadd.f32 %v3558, %v3592
      %v3599 = vadd.f32 %v3559, %v3592
      %v3600 = vadd.f32 %v3560, %v3592
      %v3601 = vadd.f32 %v3561, %v3592
      %v3602 = vadd.f32 %v3562, %v3592
      %v3603 = vadd.f32 %v3563, %v3592
      %v3604 = vadd.f32 %v3564, %v3592
      %v3605 = vadd.f32 %v3565, %v3592
      %v3606 = vadd.f32 %v3566, %v3592
      %v3607 = vadd.f32 %v3567, %v3592
      %v3608 = vadd.f32 %v3568, %v3592
      %v3609 = vadd.f32 %v3569, %v3592
      %v3610 = vadd.f32 %v3570, %v3592
      %v3611 = vadd.f32 %v3571, %v3592
      %v3612 = vadd.f32 %v3572, %v3592
      %v3613 = vadd.f32 %v3573, %v3592
      %v3614 = vadd.f32 %v3574, %v3592
      %v3615 = vadd.f32 %v3575, %v3592
      %v3616 = vadd.f32 %v3576, %v3592
      %v3617 = vadd.f32 %v3577, %v3592
      %v3618 = vadd.f32 %v3578, %v3592
      %v3619 = vadd.f32 %v3579, %v3592
      %v3620 = vadd.f32 %v3580, %v3592
      %v3621 = vadd.f32 %v3581, %v3592
      %v3622 = vadd.f32 %v3582, %v3592
      %v3623 = vadd.f32 %v3583, %v3592
      %v3624 = vadd.f32 %v3584, %v3592
      %v3625 = vadd.f32 %v3585, %v3592
      %v3626 = vadd.f32 %v3586, %v3592
      %v3627 = vadd.f32 %v3587, %v3592
      %v3628 = vadd.f32 %v3588, %v3592
      %v3629 = vadd.f32 %v3589, %v3592
      %v3630 = vmax.f32 %v3594, 0.0
      %v3631 = vmax.f32 %v3595, 0.0
      %v3632 = vmax.f32 %v3596, 0.0
      %v3633 = vmax.f32 %v3597, 0.0
      %v3634 = vmax.f32 %v3598, 0.0
      %v3635 = vmax.f32 %v3599, 0.0
      %v3636 = vmax.f32 %v3600, 0.0
      %v3637 = vmax.f32 %v3601, 0.0
      %v3638 = vmax.f32 %v3602, 0.0
      %v3639 = vmax.f32 %v3603, 0.0
      %v3640 = vmax.f32 %v3604, 0.0
      %v3641 = vmax.f32 %v3605, 0.0
      %v3642 = vmax.f32 %v3606, 0.0
      %v3643 = vmax.f32 %v3607, 0.0
      %v3644 = vmax.f32 %v3608, 0.0
      %v3645 = vmax.f32 %v3609, 0.0
      %v3646 = vmax.f32 %v3610, 0.0
      %v3647 = vmax.f32 %v3611, 0.0
      %v3648 = vmax.f32 %v3612, 0.0
      %v3649 = vmax.f32 %v3613, 0.0
      %v3650 = vmax.f32 %v3614, 0.0
      %v3651 = vmax.f32 %v3615, 0.0
      %v3652 = vmax.f32 %v3616, 0.0
      %v3653 = vmax.f32 %v3617, 0.0
      %v3654 = vmax.f32 %v3618, 0.0
      %v3655 = vmax.f32 %v3619, 0.0
      %v3656 = vmax.f32 %v3620, 0.0
      %v3657 = vmax.f32 %v3621, 0.0
      %v3658 = vmax.f32 %v3622, 0.0
      %v3659 = vmax.f32 %v3623, 0.0
      %v3660 = vmax.f32 %v3624, 0.0
      %v3661 = vmax.f32 %v3625, 0.0
      %v3662 = vmax.f32 %v3626, 0.0
      %v3663 = vmax.f32 %v3627, 0.0
      %v3664 = vmax.f32 %v3628, 0.0
      %v3665 = vmax.f32 %v3629, 0.0
      %v3666 = vld [vmem:[%s7] sm:$0xff]
      %v3667 = vld [vmem:[%s7 + $0x8] sm:$0xff]
      %v3668 = vld [vmem:[%s7 + $0x10] sm:$0xff]
      %v3669 = vld [vmem:[%s7 + $0x18] sm:$0xff]
      %v3670 = vld [vmem:[%s7 + $0x20] sm:$0xff]
      %v3671 = vld [vmem:[%s7 + $0x28] sm:$0xff]
      %v3672 = vld [vmem:[%s7 + $0x30] sm:$0xff]
      %v3673 = vld [vmem:[%s7 + $0x38] sm:$0xff]
      %v3674 = vld [vmem:[%s7 + $0x40] sm:$0xff]
      %v3675 = vld [vmem:[%s7 + $0x48] sm:$0xff]
      %v3676 = vld [vmem:[%s7 + $0x50] sm:$0xff]
      %v3677 = vld [vmem:[%s7 + $0x58] sm:$0xff]
      %v3678 = vld [vmem:[%s7 + $0x60] sm:$0xff]
      %v3679 = vld [vmem:[%s7 + $0x68] sm:$0xff]
      %v3680 = vld [vmem:[%s7 + $0x70] sm:$0xff]
      %v3681 = vld [vmem:[%s7 + $0x78] sm:$0xff]
      %v3682 = vld [vmem:[%s7 + $0x80] sm:$0xff]
      %v3683 = vld [vmem:[%s7 + $0x88] sm:$0xff]
      %v3684 = vld [vmem:[%s7 + $0x90] sm:$0xff]
      %v3685 = vld [vmem:[%s7 + $0x98] sm:$0xff]
      %v3686 = vld [vmem:[%s7 + $0xa0] sm:$0xff]
      %v3687 = vld [vmem:[%s7 + $0xa8] sm:$0xff]
      %v3688 = vld [vmem:[%s7 + $0xb0] sm:$0xff]
      %v3689 = vld [vmem:[%s7 + $0xb8] sm:$0xff]
      %v3690 = vld [vmem:[%s7 + $0xc0] sm:$0xff]
      %v3691 = vld [vmem:[%s7 + $0xc8] sm:$0xff]
      %v3692 = vld [vmem:[%s7 + $0xd0] sm:$0xff]
      %v3693 = vld [vmem:[%s7 + $0xd8] sm:$0xff]
      %v3694 = vld [vmem:[%s7 + $0xe0] sm:$0xff]
      %v3695 = vld [vmem:[%s7 + $0xe8] sm:$0xff]
      %v3696 = vld [vmem:[%s7 + $0xf0] sm:$0xff]
      %v3697 = vld [vmem:[%s7 + $0xf8] sm:$0xff]
      %v3698 = vld [vmem:[%s7 + $0x100] sm:$0xff]
      %v3699 = vld [vmem:[%s7 + $0x108] sm:$0xff]
      %v3700 = vld [vmem:[%s7 + $0x110] sm:$0xff]
      %v3701 = vld [vmem:[%s7 + $0x118] sm:$0xff]
      %3703 = vset.pattern.permute.xlu0 0
      %3704 = vperm.xlu0 %3703, %v3666
      %v3705 = vpop.permute.xlu0 %3704
      %3708 = vset.pattern.permute.xlu0 0
      %3709 = vperm.xlu0 %3708, %v3667
      %v3710 = vpop.permute.xlu0 %3709
      %3713 = vset.pattern.permute.xlu0 0
      %3714 = vperm.xlu0 %3713, %v3668
      %v3715 = vpop.permute.xlu0 %3714
      %3718 = vset.pattern.permute.xlu0 0
      %3719 = vperm.xlu0 %3718, %v3669
      %v3720 = vpop.permute.xlu0 %3719
      %3723 = vset.pattern.permute.xlu0 0
      %3724 = vperm.xlu0 %3723, %v3670
      %v3725 = vpop.permute.xlu0 %3724
      %3728 = vset.pattern.permute.xlu0 0
      %3729 = vperm.xlu0 %3728, %v3671
      %v3730 = vpop.permute.xlu0 %3729
      %3733 = vset.pattern.permute.xlu0 0
      %3734 = vperm.xlu0 %3733, %v3672
      %v3735 = vpop.permute.xlu0 %3734
      %3738 = vset.pattern.permute.xlu0 0
      %3739 = vperm.xlu0 %3738, %v3673
      %v3740 = vpop.permute.xlu0 %3739
      %3743 = vset.pattern.permute.xlu0 0
      %3744 = vperm.xlu0 %3743, %v3674
      %v3745 = vpop.permute.xlu0 %3744
      %3748 = vset.pattern.permute.xlu0 0
      %3749 = vperm.xlu0 %3748, %v3675
      %v3750 = vpop.permute.xlu0 %3749
      %3753 = vset.pattern.permute.xlu0 0
      %3754 = vperm.xlu0 %3753, %v3676
      %v3755 = vpop.permute.xlu0 %3754
      %3758 = vset.pattern.permute.xlu0 0
      %3759 = vperm.xlu0 %3758, %v3677
      %v3760 = vpop.permute.xlu0 %3759
      %3763 = vset.pattern.permute.xlu0 0
      %3764 = vperm.xlu0 %3763, %v3678
      %v3765 = vpop.permute.xlu0 %3764
      %3768 = vset.pattern.permute.xlu0 0
      %3769 = vperm.xlu0 %3768, %v3679
      %v3770 = vpop.permute.xlu0 %3769
      %3773 = vset.pattern.permute.xlu0 0
      %3774 = vperm.xlu0 %3773, %v3680
      %v3775 = vpop.permute.xlu0 %3774
      %3778 = vset.pattern.permute.xlu0 0
      %3779 = vperm.xlu0 %3778, %v3681
      %v3780 = vpop.permute.xlu0 %3779
      %3783 = vset.pattern.permute.xlu0 0
      %3784 = vperm.xlu0 %3783, %v3682
      %v3785 = vpop.permute.xlu0 %3784
      %3788 = vset.pattern.permute.xlu0 0
      %3789 = vperm.xlu0 %3788, %v3683
      %v3790 = vpop.permute.xlu0 %3789
      %3793 = vset.pattern.permute.xlu0 0
      %3794 = vperm.xlu0 %3793, %v3684
      %v3795 = vpop.permute.xlu0 %3794
      %3798 = vset.pattern.permute.xlu0 0
      %3799 = vperm.xlu0 %3798, %v3685
      %v3800 = vpop.permute.xlu0 %3799
      %3803 = vset.pattern.permute.xlu0 0
      %3804 = vperm.xlu0 %3803, %v3686
      %v3805 = vpop.permute.xlu0 %3804
      %3808 = vset.pattern.permute.xlu0 0
      %3809 = vperm.xlu0 %3808, %v3687
      %v3810 = vpop.permute.xlu0 %3809
      %3813 = vset.pattern.permute.xlu0 0
      %3814 = vperm.xlu0 %3813, %v3688
      %v3815 = vpop.permute.xlu0 %3814
      %3818 = vset.pattern.permute.xlu0 0
      %3819 = vperm.xlu0 %3818, %v3689
      %v3820 = vpop.permute.xlu0 %3819
      %3823 = vset.pattern.permute.xlu0 0
      %3824 = vperm.xlu0 %3823, %v3690
      %v3825 = vpop.permute.xlu0 %3824
      %3828 = vset.pattern.permute.xlu0 0
      %3829 = vperm.xlu0 %3828, %v3691
      %v3830 = vpop.permute.xlu0 %3829
      %3833 = vset.pattern.permute.xlu0 0
      %3834 = vperm.xlu0 %3833, %v3692
      %v3835 = vpop.permute.xlu0 %3834
      %3838 = vset.pattern.permute.xlu0 0
      %3839 = vperm.xlu0 %3838, %v3693
      %v3840 = vpop.permute.xlu0 %3839
      %3843 = vset.pattern.permute.xlu0 0
      %3844 = vperm.xlu0 %3843, %v3694
      %v3845 = vpop.permute.xlu0 %3844
      %3848 = vset.pattern.permute.xlu0 0
      %3849 = vperm.xlu0 %3848, %v3695
      %v3850 = vpop.permute.xlu0 %3849
      %3853 = vset.pattern.permute.xlu0 0
      %3854 = vperm.xlu0 %3853, %v3696
      %v3855 = vpop.permute.xlu0 %3854
      %3858 = vset.pattern.permute.xlu0 0
      %3859 = vperm.xlu0 %3858, %v3697
      %v3860 = vpop.permute.xlu0 %3859
      %3863 = vset.pattern.permute.xlu0 0
      %3864 = vperm.xlu0 %3863, %v3698
      %v3865 = vpop.permute.xlu0 %3864
      %3868 = vset.pattern.permute.xlu0 0
      %3869 = vperm.xlu0 %3868, %v3699
      %v3870 = vpop.permute.xlu0 %3869
      %3873 = vset.pattern.permute.xlu0 0
      %3874 = vperm.xlu0 %3873, %v3700
      %v3875 = vpop.permute.xlu0 %3874
      %3878 = vset.pattern.permute.xlu0 0
      %3879 = vperm.xlu0 %3878, %v3701
      %v3880 = vpop.permute.xlu0 %3879
      %v3882 = vmul.f32 %v3630, %v3705
      %v3883 = vmul.f32 %v3631, %v3710
      %v3884 = vmul.f32 %v3632, %v3715
      %v3885 = vmul.f32 %v3633, %v3720
      %v3886 = vmul.f32 %v3634, %v3725
      %v3887 = vmul.f32 %v3635, %v3730
      %v3888 = vmul.f32 %v3636, %v3735
      %v3889 = vmul.f32 %v3637, %v3740
      %v3890 = vmul.f32 %v3638, %v3745
      %v3891 = vmul.f32 %v3639, %v3750
      %v3892 = vmul.f32 %v3640, %v3755
      %v3893 = vmul.f32 %v3641, %v3760
      %v3894 = vmul.f32 %v3642, %v3765
      %v3895 = vmul.f32 %v3643, %v3770
      %v3896 = vmul.f32 %v3644, %v3775
      %v3897 = vmul.f32 %v3645, %v3780
      %v3898 = vmul.f32 %v3646, %v3785
      %v3899 = vmul.f32 %v3647, %v3790
      %v3900 = vmul.f32 %v3648, %v3795
      %v3901 = vmul.f32 %v3649, %v3800
      %v3902 = vmul.f32 %v3650, %v3805
      %v3903 = vmul.f32 %v3651, %v3810
      %v3904 = vmul.f32 %v3652, %v3815
      %v3905 = vmul.f32 %v3653, %v3820
      %v3906 = vmul.f32 %v3654, %v3825
      %v3907 = vmul.f32 %v3655, %v3830
      %v3908 = vmul.f32 %v3656, %v3835
      %v3909 = vmul.f32 %v3657, %v3840
      %v3910 = vmul.f32 %v3658, %v3845
      %v3911 = vmul.f32 %v3659, %v3850
      %v3912 = vmul.f32 %v3660, %v3855
      %v3913 = vmul.f32 %v3661, %v3860
      %v3914 = vmul.f32 %v3662, %v3865
      %v3915 = vmul.f32 %v3663, %v3870
      %v3916 = vmul.f32 %v3664, %v3875
      %v3917 = vmul.f32 %v3665, %v3880
      %vm3918 = vcmask 523264
      %3919 = vst.msk [vmem:[%s340] sm:$0xff] %vm3918, 0.0
      %3920 = vst.msk [vmem:[%s340 + $0x8] sm:$0xff] %vm3918, 0.0
      %vm3921 = vcmask 518144
      %3922 = vst.msk [vmem:[%s340 + $0x10] sm:$0x7] %vm3921, 0.0
      %3923 = vst.msk [vmem:[%s340 + $0x13] sm:$0xff] %vm3918, %v3882
      %3924 = vst.msk [vmem:[%s340 + $0x1b] sm:$0xff] %vm3918, %v3883
      %3925 = vst.msk [vmem:[%s340 + $0x23] sm:$0xff] %vm3918, %v3884
      %3926 = vst.msk [vmem:[%s340 + $0x2b] sm:$0xff] %vm3918, %v3885
      %3927 = vst.msk [vmem:[%s340 + $0x33] sm:$0xff] %vm3918, %v3886
      %3928 = vst.msk [vmem:[%s340 + $0x3b] sm:$0xff] %vm3918, %v3887
      %3929 = vst.msk [vmem:[%s340 + $0x43] sm:$0xff] %vm3918, %v3888
      %3930 = vst.msk [vmem:[%s340 + $0x4b] sm:$0xff] %vm3918, %v3889
      %3931 = vst.msk [vmem:[%s340 + $0x53] sm:$0xff] %vm3918, %v3890
      %3932 = vst.msk [vmem:[%s340 + $0x5b] sm:$0xff] %vm3918, %v3891
      %3933 = vst.msk [vmem:[%s340 + $0x63] sm:$0xff] %vm3918, %v3892
      %3934 = vst.msk [vmem:[%s340 + $0x6b] sm:$0xff] %vm3918, %v3893
      %3935 = vst.msk [vmem:[%s340 + $0x73] sm:$0xff] %vm3918, %v3894
      %3936 = vst.msk [vmem:[%s340 + $0x7b] sm:$0xff] %vm3918, %v3895
      %3937 = vst.msk [vmem:[%s340 + $0x83] sm:$0xff] %vm3918, %v3896
      %3938 = vst.msk [vmem:[%s340 + $0x8b] sm:$0xff] %vm3918, %v3897
      %3939 = vst.msk [vmem:[%s340 + $0x93] sm:$0xff] %vm3918, %v3898
      %3940 = vst.msk [vmem:[%s340 + $0x9b] sm:$0xff] %vm3918, %v3899
      %3941 = vst.msk [vmem:[%s340 + $0xa3] sm:$0xff] %vm3918, %v3900
      %3942 = vst.msk [vmem:[%s340 + $0xab] sm:$0xff] %vm3918, %v3901
      %3943 = vst.msk [vmem:[%s340 + $0xb3] sm:$0xff] %vm3918, %v3902
      %3944 = vst.msk [vmem:[%s340 + $0xbb] sm:$0xff] %vm3918, %v3903
      %3945 = vst.msk [vmem:[%s340 + $0xc3] sm:$0xff] %vm3918, %v3904
      %3946 = vst.msk [vmem:[%s340 + $0xcb] sm:$0xff] %vm3918, %v3905
      %3947 = vst.msk [vmem:[%s340 + $0xd3] sm:$0xff] %vm3918, %v3906
      %3948 = vst.msk [vmem:[%s340 + $0xdb] sm:$0xff] %vm3918, %v3907
      %3949 = vst.msk [vmem:[%s340 + $0xe3] sm:$0xff] %vm3918, %v3908
      %3950 = vst.msk [vmem:[%s340 + $0xeb] sm:$0xff] %vm3918, %v3909
      %3951 = vst.msk [vmem:[%s340 + $0xf3] sm:$0xff] %vm3918, %v3910
      %3952 = vst.msk [vmem:[%s340 + $0xfb] sm:$0xff] %vm3918, %v3911
      %3953 = vst.msk [vmem:[%s340 + $0x103] sm:$0xff] %vm3918, %v3912
      %3954 = vst.msk [vmem:[%s340 + $0x10b] sm:$0xff] %vm3918, %v3913
      %3955 = vst.msk [vmem:[%s340 + $0x113] sm:$0xff] %vm3918, %v3914
      %3956 = vst.msk [vmem:[%s340 + $0x11b] sm:$0xff] %vm3918, %v3915
      %3957 = vst.msk [vmem:[%s340 + $0x123] sm:$0xff] %vm3918, %v3916
      %3958 = vst.msk [vmem:[%s340 + $0x12b] sm:$0xff] %vm3918, %v3917
      %3959 = vst.msk [vmem:[%s340 + $0x133] sm:$0xff] %vm3918, 0.0
      %3960 = vst.msk [vmem:[%s340 + $0x13b] sm:$0xff] %vm3918, 0.0
      %3961 = vst.msk [vmem:[%s340 + $0x143] sm:$0xff] %vm3918, 0.0
      %3962 = vst.msk [vmem:[%s340 + $0x14b] sm:$0xff] %vm3918, 0.0
      %3963 = vst.msk [vmem:[%s340 + $0x153] sm:$0x7] %vm3921, 0.0
      %4000 = vrot.lane.b32.xlu0 %v3461, 64
      %v4001 = vpop.permute.xlu0 %4000
      %4002 = vrot.lane.b32.xlu0 %v3463, 64
      %v4003 = vpop.permute.xlu0 %4002
      %4004 = vrot.lane.b32.xlu0 %v3466, 64
      %v4005 = vpop.permute.xlu0 %4004
      %4006 = vrot.lane.b32.xlu0 %v3468, 64
      %v4007 = vpop.permute.xlu0 %4006
      %4008 = vrot.lane.b32.xlu0 %v3471, 64
      %v4009 = vpop.permute.xlu0 %4008
      %4010 = vrot.lane.b32.xlu0 %v3473, 64
      %v4011 = vpop.permute.xlu0 %4010
      %4012 = vrot.lane.b32.xlu0 %v3476, 64
      %v4013 = vpop.permute.xlu0 %4012
      %4014 = vrot.lane.b32.xlu0 %v3478, 64
      %v4015 = vpop.permute.xlu0 %4014
      %4016 = vrot.lane.b32.xlu0 %v3481, 64
      %v4017 = vpop.permute.xlu0 %4016
      %4018 = vrot.lane.b32.xlu0 %v3483, 64
      %v4019 = vpop.permute.xlu0 %4018
      %4020 = vrot.lane.b32.xlu0 %v3486, 64
      %v4021 = vpop.permute.xlu0 %4020
      %4022 = vrot.lane.b32.xlu0 %v3488, 64
      %v4023 = vpop.permute.xlu0 %4022
      %4024 = vrot.lane.b32.xlu0 %v3491, 64
      %v4025 = vpop.permute.xlu0 %4024
      %4026 = vrot.lane.b32.xlu0 %v3493, 64
      %v4027 = vpop.permute.xlu0 %4026
      %4028 = vrot.lane.b32.xlu0 %v3496, 64
      %v4029 = vpop.permute.xlu0 %4028
      %4030 = vrot.lane.b32.xlu0 %v3498, 64
      %v4031 = vpop.permute.xlu0 %4030
      %4032 = vrot.lane.b32.xlu0 %v3501, 64
      %v4033 = vpop.permute.xlu0 %4032
      %4034 = vrot.lane.b32.xlu0 %v3503, 64
      %v4035 = vpop.permute.xlu0 %4034
      %4036 = vrot.lane.b32.xlu0 %v3506, 64
      %v4037 = vpop.permute.xlu0 %4036
      %4038 = vrot.lane.b32.xlu0 %v3508, 64
      %v4039 = vpop.permute.xlu0 %4038
      %4040 = vrot.lane.b32.xlu0 %v3511, 64
      %v4041 = vpop.permute.xlu0 %4040
      %4042 = vrot.lane.b32.xlu0 %v3513, 64
      %v4043 = vpop.permute.xlu0 %4042
      %4044 = vrot.lane.b32.xlu0 %v3516, 64
      %v4045 = vpop.permute.xlu0 %4044
      %4046 = vrot.lane.b32.xlu0 %v3518, 64
      %v4047 = vpop.permute.xlu0 %4046
      %4048 = vrot.lane.b32.xlu0 %v3521, 64
      %v4049 = vpop.permute.xlu0 %4048
      %4050 = vrot.lane.b32.xlu0 %v3523, 64
      %v4051 = vpop.permute.xlu0 %4050
      %4052 = vrot.lane.b32.xlu0 %v3526, 64
      %v4053 = vpop.permute.xlu0 %4052
      %4054 = vrot.lane.b32.xlu0 %v3528, 64
      %v4055 = vpop.permute.xlu0 %4054
      %4056 = vrot.lane.b32.xlu0 %v3531, 64
      %v4057 = vpop.permute.xlu0 %4056
      %4058 = vrot.lane.b32.xlu0 %v3533, 64
      %v4059 = vpop.permute.xlu0 %4058
      %4060 = vrot.lane.b32.xlu0 %v3536, 64
      %v4061 = vpop.permute.xlu0 %4060
      %4062 = vrot.lane.b32.xlu0 %v3538, 64
      %v4063 = vpop.permute.xlu0 %4062
      %4064 = vrot.lane.b32.xlu0 %v3541, 64
      %v4065 = vpop.permute.xlu0 %4064
      %4066 = vrot.lane.b32.xlu0 %v3543, 64
      %v4067 = vpop.permute.xlu0 %4066
      %4068 = vrot.lane.b32.xlu0 %v3546, 64
      %v4069 = vpop.permute.xlu0 %4068
      %4070 = vrot.lane.b32.xlu0 %v3548, 64
      %v4071 = vpop.permute.xlu0 %4070
      %4108 = vst.msk [vmem:[%s345] sm:$0xff] %vm3918, %v4001
      %4109 = vst.msk [vmem:[%s345 + $0x8] sm:$0xff] %vm3918, %v4003
      %4110 = vst.msk [vmem:[%s345 + $0x10] sm:$0xff] %vm3918, %v4005
      %4111 = vst.msk [vmem:[%s345 + $0x18] sm:$0xff] %vm3918, %v4007
      %4112 = vst.msk [vmem:[%s345 + $0x20] sm:$0xff] %vm3918, %v4009
      %4113 = vst.msk [vmem:[%s345 + $0x28] sm:$0xff] %vm3918, %v4011
      %4114 = vst.msk [vmem:[%s345 + $0x30] sm:$0xff] %vm3918, %v4013
      %4115 = vst.msk [vmem:[%s345 + $0x38] sm:$0xff] %vm3918, %v4015
      %4116 = vst.msk [vmem:[%s345 + $0x40] sm:$0xff] %vm3918, %v4017
      %4117 = vst.msk [vmem:[%s345 + $0x48] sm:$0xff] %vm3918, %v4019
      %4118 = vst.msk [vmem:[%s345 + $0x50] sm:$0xff] %vm3918, %v4021
      %4119 = vst.msk [vmem:[%s345 + $0x58] sm:$0xff] %vm3918, %v4023
      %4120 = vst.msk [vmem:[%s345 + $0x60] sm:$0xff] %vm3918, %v4025
      %4121 = vst.msk [vmem:[%s345 + $0x68] sm:$0xff] %vm3918, %v4027
      %4122 = vst.msk [vmem:[%s345 + $0x70] sm:$0xff] %vm3918, %v4029
      %4123 = vst.msk [vmem:[%s345 + $0x78] sm:$0xff] %vm3918, %v4031
      %4124 = vst.msk [vmem:[%s345 + $0x80] sm:$0xff] %vm3918, %v4033
      %4125 = vst.msk [vmem:[%s345 + $0x88] sm:$0xff] %vm3918, %v4035
      %4126 = vst.msk [vmem:[%s345 + $0x90] sm:$0xff] %vm3918, %v4037
      %4127 = vst.msk [vmem:[%s345 + $0x98] sm:$0xff] %vm3918, %v4039
      %4128 = vst.msk [vmem:[%s345 + $0xa0] sm:$0xff] %vm3918, %v4041
      %4129 = vst.msk [vmem:[%s345 + $0xa8] sm:$0xff] %vm3918, %v4043
      %4130 = vst.msk [vmem:[%s345 + $0xb0] sm:$0xff] %vm3918, %v4045
      %4131 = vst.msk [vmem:[%s345 + $0xb8] sm:$0xff] %vm3918, %v4047
      %4132 = vst.msk [vmem:[%s345 + $0xc0] sm:$0xff] %vm3918, %v4049
      %4133 = vst.msk [vmem:[%s345 + $0xc8] sm:$0xff] %vm3918, %v4051
      %4134 = vst.msk [vmem:[%s345 + $0xd0] sm:$0xff] %vm3918, %v4053
      %4135 = vst.msk [vmem:[%s345 + $0xd8] sm:$0xff] %vm3918, %v4055
      %4136 = vst.msk [vmem:[%s345 + $0xe0] sm:$0xff] %vm3918, %v4057
      %4137 = vst.msk [vmem:[%s345 + $0xe8] sm:$0xff] %vm3918, %v4059
      %4138 = vst.msk [vmem:[%s345 + $0xf0] sm:$0xff] %vm3918, %v4061
      %4139 = vst.msk [vmem:[%s345 + $0xf8] sm:$0xff] %vm3918, %v4063
      %4140 = vst.msk [vmem:[%s345 + $0x100] sm:$0xff] %vm3918, %v4065
      %4141 = vst.msk [vmem:[%s345 + $0x108] sm:$0xff] %vm3918, %v4067
      %4142 = vst.msk [vmem:[%s345 + $0x110] sm:$0xff] %vm3918, %v4069
      %4143 = vst.msk [vmem:[%s345 + $0x118] sm:$0xff] %vm3918, %v4071
      %p4144 = scmp.lt.s32.totalorder %s21, 1
      %s4145 = scalar_select %p4144, %s21, 1
      %s4146 = smul.addr %s4145, 43
      %s4147 = smul.addr %s4146, 8
      %s4148 = scalar_lea.vmem %s8, %s4147
      %p4149 = scmp.lt.s32.totalorder %s21, 1
      %s4150 = scalar_select %p4149, %s21, 1
      %s4151 = smul.addr %s4150, 36
      %s4152 = smul.addr %s4151, 8
      %s4153 = scalar_lea.vmem %s9, %s4152
      // Predicated region
      $region53: #{preact_block_forward.3} parent=51 // pred_check
        %p4154 = pneg %p212
      $region54: #{preact_block_forward.3} parent=51 // pred_check_branch
        %4156 = sbr.rel (%p4154) target = $region56
      $region55: #{preact_block_forward.3} parent=51 // pred_region
        _
      $region56: #{preact_block_forward.3} parent=51 // pred_fallthru
        _
      // Predicated region
      $region57: #{preact_block_forward.3} parent=51 // pred_check
        %p4157 = pneg %p238
      $region58: #{preact_block_forward.3} parent=51 // pred_check_branch
        %4159 = sbr.rel (%p4157) target = $region60
      $region59: #{preact_block_forward.3} parent=51 // pred_region
        _
      $region60: #{preact_block_forward.3} parent=51 // pred_fallthru
        _
    $region52: #{preact_block_forward.3} parent=5 // pred_fallthru
      _
    %p4160 = scmp.le.s32.totalorder 2, %s16
    // Predicated region
    $region61: #{preact_block_forward.3} parent=5 // pred_check
      %p4161 = pneg %p4160
    $region62: #{preact_block_forward.3} parent=5 // pred_check_branch
      %4163 = sbr.rel (%p4161) target = $region64
    $region63: #{preact_block_forward.3} parent=5 // pred_region
      %s4164 = ssub.s32 %s16, 2
      // Predicated region
      $region65: #{preact_block_forward.3} parent=63 // pred_check
        %p4165 = pneg %p218
      $region66: #{preact_block_forward.3} parent=63 // pred_check_branch
        %4167 = sbr.rel (%p4165) target = $region68
      $region67: #{preact_block_forward.3} parent=63 // pred_region
        %p4168 = scmp.lt.s32.totalorder %s22, 1
        %s4169 = scalar_select %p4168, %s22, 1
        %s4170 = smul.addr %s4169, 43
        %s4171 = smul.addr %s4170, 8
        %s4172 = scalar_lea.vmem %s8, %s4171
      $region68: #{preact_block_forward.3} parent=63 // pred_fallthru
        _
      // Predicated region
      $region69: #{preact_block_forward.3} parent=63 // pred_check
        %p4173 = pneg %p244
      $region70: #{preact_block_forward.3} parent=63 // pred_check_branch
        %4175 = sbr.rel (%p4173) target = $region72
      $region71: #{preact_block_forward.3} parent=63 // pred_region
        %p4176 = scmp.lt.s32.totalorder %s22, 1
        %s4177 = scalar_select %p4176, %s22, 1
        %s4178 = smul.addr %s4177, 36
        %s4179 = smul.addr %s4178, 8
        %s4180 = scalar_lea.vmem %s9, %s4179
      $region72: #{preact_block_forward.3} parent=63 // pred_fallthru
        _
    $region64: #{preact_block_forward.3} parent=5 // pred_fallthru
      _
  $region6: #{preact_block_forward.3} parent=0 // loop_footer
    %s20 = sadd.s32 1, %s16
  $region7: #{preact_block_forward.3} parent=0 // loop_footer_branch
    %15 = sbr.rel target = $region3
  $region8: #{preact_block_forward.3} parent=0 // loop_exit
    _

</llo_original>
